<compile_context>
chip_gen: v7x
topology: tpu7x:2x2x1
jax: 0.10.0
libtpu: 0.0.40
codegen_flags: <defaults>
</compile_context>

<pallas_src>
import functools

import jax
import jax.numpy as jnp
from jax.experimental import pallas as pl
from jax.experimental.pallas import tpu as pltpu

# bf16 MXU inputs (v6e / v7x win, harmless on v5e); accumulation and all epilogues stay float32.
# Set to jnp.float32 to reproduce the reference eval-mode numerics as closely as possible.
MATMUL_DTYPE = jnp.bfloat16


def _mxu_dot(a, b):
    # b (the folded weight) is already MATMUL_DTYPE host-side; a is cast here (no-op for f32).
    return jnp.dot(a.astype(MATMUL_DTYPE), b, preferred_element_type=jnp.float32)


# ----------------------------------------------------------------------------
# Fused kernel: one batch block of B samples per grid step.
# ----------------------------------------------------------------------------
def _fused_kernel(xf_ref, w1_ref, sh1_ref,
                  wt1_ref, sht1_ref, wt2_ref, sht2_ref,
                  out1_ref, out2_ref,
                  gpad1_ref, gpad2_ref, acc1_ref, acc2_ref,
                  *, B, T, V, O1, O2, kt1, kt2):
    VO1, VO2 = V * O1, V * O2
    pad1, pad2 = (kt1 - 1) // 2, (kt2 - 1) // 2

    # ---- stage 1: ONE merged lane-dense matmul producing [g1 | g2 | d1 | d2] -------------------
    xf = xf_ref[...]                                   # (B, T, C*V)   rows (b,t), lanes (c,v)
    xf2 = xf.reshape(B * T, xf.shape[-1])              # leading-dim collapse only (T % 8 == 0)
    z = _mxu_dot(xf2, w1_ref[...])                     # (B*T, VO1+VO2+VO1+VO2)
    z = jnp.maximum(z + sh1_ref[...], 0.0)             # fused conv-bias + BN shift + ReLU
    g1 = z[:, :VO1]                                    # all slice boundaries are 128-multiples
    g2 = z[:, VO1:VO1 + VO2]
    d1 = z[:, VO1 + VO2:VO1 + VO2 + VO1]
    d2 = z[:, VO1 + VO2 + VO1:]

    # residual branches go straight into the output blocks (kept live in VMEM, not vregs)
    out1_ref[...] = d1.reshape(B, T, VO1)
    out2_ref[...] = d2.reshape(B, T, VO2)

    # per-sample zero-padded temporal buffers; every store here is full lane width
    if pad1 > 0:
        gpad1_ref[:, :pad1, :] = jnp.zeros((B, pad1, VO1), jnp.float32)
        gpad1_ref[:, pad1 + T:, :] = jnp.zeros((B, pad1, VO1), jnp.float32)
    gpad1_ref[:, pad1:pad1 + T, :] = g1.reshape(B, T, VO1)
    if pad2 > 0:
        gpad2_ref[:, :pad2, :] = jnp.zeros((B, pad2, VO2), jnp.float32)
        gpad2_ref[:, pad2 + T:, :] = jnp.zeros((B, pad2, VO2), jnp.float32)
    gpad2_ref[:, pad2:pad2 + T, :] = g2.reshape(B, T, VO2)

    # ---- stage 2: temporal conv = kt accumulating lane-dense matmuls per unit ------------------
    # h[b,t,(v,o)] = sum_dt gpad[b,t+dt,(v,:)] @ Wt[dt]   with Wt[dt] block-diagonal over v,
    # so the layout never leaves (rows=(b,t), lanes=(v,o)) and no pivot / im2col copies exist.
    def tcn(gpad_ref, wt_ref, sht_ref, acc_ref, out_ref, kt, VO):
        for dt in range(kt):                                        # static unroll, VMEM-backed acc
            win = gpad_ref[:, dt:dt + T, :].reshape(B * T, VO)      # full-width sublane-offset read
            part = _mxu_dot(win, wt_ref[dt])                        # (B*T, VO) f32
            if dt == 0:
                acc_ref[...] = part
            else:
                acc_ref[...] += part
        h = jnp.maximum(acc_ref[...] + sht_ref[...], 0.0)           # TCN bias + BN + ReLU
        out_ref[...] = out_ref[...] + h.reshape(B, T, VO)           # + residual (no post-sum act.)

    tcn(gpad1_ref, wt1_ref, sht1_ref, acc1_ref, out1_ref, kt1, VO1)
    tcn(gpad2_ref, wt2_ref, sht2_ref, acc2_ref, out2_ref, kt2, VO2)


# ----------------------------------------------------------------------------
# Host-side parameter folding (weight-only preprocessing)
# ----------------------------------------------------------------------------
def _bn_fold(bn, eps=1e-5):
    gamma, beta, mean, var = bn
    s = gamma * jax.lax.rsqrt(var + eps)
    return s, beta - mean * s


def _fold_unit(p, A):
    """Fold adjacency, conv biases and eval-mode BatchNorm into lane-dense matmul weights."""
    K, C, O = p["wg"].shape
    V = A.shape[-1]
    kt = p["wt"].shape[0]
    sg, hg = _bn_fold(p["bn_g"])
    st, ht = _bn_fold(p["bn_t"])
    sd, hd = _bn_fold(p["bn_d"])
    eye = jnp.eye(V, dtype=jnp.float32)
    # GCN:  G[(c,v),(w,o)] = sum_k A[k,v,w] * Wg[k,c,o] * sg[o]   (rows (c,v_in), cols (w_out,o))
    G = jnp.einsum("kvw,kco->cvwo", A, p["wg"] * sg[None, None, :]).reshape(C * V, V * O)
    shg = jnp.tile(jnp.sum(p["bg"], axis=0) * sg + hg, V)                       # (V*O,)
    # residual 1x1 down projection, expanded to the same (c,v)->(w,o) lane layout
    D = jnp.einsum("co,vw->cvwo", p["wd"] * sd[None, :], eye).reshape(C * V, V * O)
    shd = jnp.tile(p["bd"] * sd + hd, V)                                        # (V*O,)
    # temporal taps, block-diagonal over vertices: Wt[dt,(v,i),(w,o)] = wt[dt,i,o]*st[o]*I[v,w]
    Wt = jnp.einsum("dio,vw->dviwo", p["wt"] * st[None, None, :], eye).reshape(kt, V * O, V * O)
    sht = jnp.tile(p["bt"] * st + ht, V)[None, :]                               # (1, V*O)
    return G, shg, D, shd, Wt, sht


# ----------------------------------------------------------------------------
# Wrapper: layout glue + single fused pallas_call
# ----------------------------------------------------------------------------
def tcn_gcn_unit_multiscale(x, A, params1, params2, *, kt1, kt2, stride=1):
    """x: (N, C, T, V) NCHW float32  ->  (N, O1 + O2, T, V)."""
    assert stride == 1  # TODO(synk): stride > 1 temporal down-sampling not implemented.
    N, C, T, V = x.shape
    G1, shg1, D1, shd1, Wt1, sht1 = _fold_unit(params1, A)
    G2, shg2, D2, shd2, Wt2, sht2 = _fold_unit(params2, A)
    O1 = params1["wg"].shape[2]
    O2 = params2["wg"].shape[2]
    VO1, VO2 = V * O1, V * O2
    pad1, pad2 = (kt1 - 1) // 2, (kt2 - 1) // 2

    # merged stage-1 weight: [GCN_1 | GCN_2 | down_1 | down_2] columns -> ONE matmul in-kernel
    W1 = jnp.concatenate([G1, G2, D1, D2], axis=1).astype(MATMUL_DTYPE)
    sh1 = jnp.concatenate([shg1, shg2, shd1, shd2])[None, :].astype(jnp.float32)
    Wt1 = Wt1.astype(MATMUL_DTYPE)
    Wt2 = Wt2.astype(MATMUL_DTYPE)
    sht1 = sht1.astype(jnp.float32)
    sht2 = sht2.astype(jnp.float32)

    # Batch block: fill one MXU row pass per step (128 rows f32 / 256 rows bf16) but keep the
    # grid >= 2 steps whenever N >= 2 so v7x's two TensorCores both get work (v5e/v6e: 1 TC).
    rows = 256 if MATMUL_DTYPE == jnp.bfloat16 else 128
    B = max(1, min(max(1, rows // T), N // 2)) if N >= 2 else 1
    Np = -(-N // B) * B
    grid = (Np // B,)

    # layout glue: NCHW -> (N, T, C*V); rows (b,t), lanes (c,v)
    xf = jnp.transpose(x, (0, 2, 1, 3)).reshape(N, T, C * V).astype(MATMUL_DTYPE)
    if Np != N:
        xf = jnp.pad(xf, ((0, Np - N), (0, 0), (0, 0)))

    def batched(last):
        return pl.BlockSpec((B, T, last), lambda n: (n, 0, 0))

    def resident(shape):
        nd = len(shape)
        return pl.BlockSpec(shape, lambda n, _nd=nd: (0,) * _nd)

    kernel = functools.partial(_fused_kernel, B=B, T=T, V=V, O1=O1, O2=O2, kt1=kt1, kt2=kt2)

    out1, out2 = pl.pallas_call(
        kernel,
        out_shape=(jax.ShapeDtypeStruct((Np, T, VO1), jnp.float32),
                   jax.ShapeDtypeStruct((Np, T, VO2), jnp.float32)),
        grid_spec=pltpu.PrefetchScalarGridSpec(
            num_scalar_prefetch=0,
            grid=grid,
            in_specs=[batched(C * V),
                      resident(W1.shape), resident(sh1.shape),
                      resident(Wt1.shape), resident(sht1.shape),
                      resident(Wt2.shape), resident(sht2.shape)],
            out_specs=[batched(VO1), batched(VO2)],
            scratch_shapes=[
                pltpu.VMEM((B, T + 2 * pad1, VO1), jnp.float32),   # zero-padded GCN out, unit 1
                pltpu.VMEM((B, T + 2 * pad2, VO2), jnp.float32),   # zero-padded GCN out, unit 2
                pltpu.VMEM((B * T, VO1), jnp.float32),             # TCN accumulator, unit 1
                pltpu.VMEM((B * T, VO2), jnp.float32),             # TCN accumulator, unit 2
            ]),
        compiler_params=pltpu.CompilerParams(
            dimension_semantics=("parallel",),
            vmem_limit_bytes=32 * 1024 * 1024),
    )(xf, W1, sh1, Wt1, sht1, Wt2, sht2)

    # glue: back to NCHW and concat along channels (torch.cat(dim=1))
    y1 = jnp.transpose(out1[:N].reshape(N, T, V, O1), (0, 3, 1, 2))
    y2 = jnp.transpose(out2[:N].reshape(N, T, V, O2), (0, 3, 1, 2))
    return jnp.concatenate([y1, y2], axis=1)


# ----------------------------------------------------------------------------
# Deterministic parameter construction (shapes implied by __init__, eval mode)
# ----------------------------------------------------------------------------
def init_unit_params(key, C, O, K, kt):
    ks = jax.random.split(key, 6)
    fresh_bn = (jnp.ones((O,), jnp.float32), jnp.zeros((O,), jnp.float32),
                jnp.zeros((O,), jnp.float32), jnp.ones((O,), jnp.float32))
    return dict(
        wg=jax.random.normal(ks[0], (K, C, O), jnp.float32) / jnp.sqrt(float(C)),
        bg=0.01 * jax.random.normal(ks[1], (K, O), jnp.float32),
        wt=jax.random.normal(ks[2], (kt, O, O), jnp.float32) / jnp.sqrt(float(O * kt)),
        bt=0.01 * jax.random.normal(ks[3], (O,), jnp.float32),
        wd=jax.random.normal(ks[4], (C, O), jnp.float32) / jnp.sqrt(float(C)),
        bd=0.01 * jax.random.normal(ks[5], (O,), jnp.float32),
        # fresh BatchNorm2d (gamma=1, beta=0, running_mean=0, running_var=1), eval mode
        bn_g=fresh_bn, bn_t=fresh_bn, bn_d=fresh_bn,
    )


if __name__ == "__main__":
    key = jax.random.PRNGKey(0)
    kx, ka, k1, k2 = jax.random.split(key, 4)

    N, C_in, T, V = 2, 4, 16, 16          # batch, in_channels, frames, joints
    out_channels, K, kernel_size = 32, 3, 9
    O1 = out_channels // 2                # unit_1: out_channels / 2
    O2 = out_channels - O1                # unit_2: out_channels - out_channels / 2
    kt1 = kernel_size                     # unit_1 temporal kernel
    kt2 = kernel_size * 2 - 1             # unit_2 temporal kernel

    x = jax.random.normal(kx, (N, C_in, T, V), jnp.float32)
    A = jax.random.uniform(ka, (K, V, V), jnp.float32)
    A = A / jnp.sum(A, axis=1, keepdims=True)      # normalized adjacency-like stack

    p1 = init_unit_params(k1, C_in, O1, K, kt1)
    p2 = init_unit_params(k2, C_in, O2, K, kt2)

    fwd = jax.jit(functools.partial(tcn_gcn_unit_multiscale, kt1=kt1, kt2=kt2))
    y = fwd(x, A, p1, p2)
    jax.block_until_ready(y)
    assert y.shape == (N, out_channels, T, V), y.shape
    print("KERNEL_OK")
</pallas_src>

<mosaic_0001>
module attributes {stable_mosaic.version = 11 : i64} {
  func.func @_fused_kernel(%arg0: i32, %arg1: memref<1x16x64xbf16, #tpu.memory_space<vmem>>, %arg2: memref<64x1024xbf16, #tpu.memory_space<vmem>>, %arg3: memref<1x1024xf32, #tpu.memory_space<vmem>>, %arg4: memref<9x256x256xbf16, #tpu.memory_space<vmem>>, %arg5: memref<1x256xf32, #tpu.memory_space<vmem>>, %arg6: memref<17x256x256xbf16, #tpu.memory_space<vmem>>, %arg7: memref<1x256xf32, #tpu.memory_space<vmem>>, %arg8: memref<1x16x256xf32, #tpu.memory_space<vmem>>, %arg9: memref<1x16x256xf32, #tpu.memory_space<vmem>>, %arg10: memref<1x24x256xf32, #tpu.memory_space<vmem>>, %arg11: memref<1x32x256xf32, #tpu.memory_space<vmem>>, %arg12: memref<16x256xf32, #tpu.memory_space<vmem>>, %arg13: memref<16x256xf32, #tpu.memory_space<vmem>>) attributes {dimension_semantics = [#tpu.dimension_semantics<parallel>], iteration_bounds = array<i64: 2>, scalar_prefetch = 0 : i64, scratch_operands = 4 : i64, tpu.core_type = #tpu.core_type<tc>, window_params = [{transform_indices = @transform_0, window_bounds = array<i64: 1, 16, 64>}, {pipeline_mode = #tpu.pipeline_mode<synchronous>, transform_indices = @transform_1, window_bounds = array<i64: 64, 1024>}, {pipeline_mode = #tpu.pipeline_mode<synchronous>, transform_indices = @transform_2, window_bounds = array<i64: 1, 1024>}, {pipeline_mode = #tpu.pipeline_mode<synchronous>, transform_indices = @transform_3, window_bounds = array<i64: 9, 256, 256>}, {pipeline_mode = #tpu.pipeline_mode<synchronous>, transform_indices = @transform_4, window_bounds = array<i64: 1, 256>}, {pipeline_mode = #tpu.pipeline_mode<synchronous>, transform_indices = @transform_5, window_bounds = array<i64: 17, 256, 256>}, {pipeline_mode = #tpu.pipeline_mode<synchronous>, transform_indices = @transform_6, window_bounds = array<i64: 1, 256>}, {transform_indices = @transform_7, window_bounds = array<i64: 1, 16, 256>}, {transform_indices = @transform_8, window_bounds = array<i64: 1, 16, 256>}]} {
    %c0 = arith.constant 0 : index
    %c0_0 = arith.constant 0 : index
    %c0_1 = arith.constant 0 : index
    %0 = vector.load %arg1[%c0, %c0_0, %c0_1] : memref<1x16x64xbf16, #tpu.memory_space<vmem>>, vector<1x16x64xbf16>
    %1 = vector.shape_cast %0 : vector<1x16x64xbf16> to vector<16x64xbf16>
    %c0_2 = arith.constant 0 : index
    %c0_3 = arith.constant 0 : index
    %2 = vector.load %arg2[%c0_2, %c0_3] : memref<64x1024xbf16, #tpu.memory_space<vmem>>, vector<64x1024xbf16>
    %cst = arith.constant dense<0.000000e+00> : vector<16x1024xf32>
    %3 = tpu.matmul %1, %2, %cst {dimension_numbers = #tpu.dot_dimension_numbers<[1], [0], [0], [1], [0, 0, 1, 1], [], []>} : vector<16x64xbf16>, vector<64x1024xbf16>, vector<16x1024xf32> -> vector<16x1024xf32>
    %c0_4 = arith.constant 0 : index
    %c0_5 = arith.constant 0 : index
    %4 = vector.load %arg3[%c0_4, %c0_5] : memref<1x1024xf32, #tpu.memory_space<vmem>>, vector<1x1024xf32>
    %5 = vector.broadcast %4 : vector<1x1024xf32> to vector<16x1024xf32>
    %6 = arith.addf %3, %5 : vector<16x1024xf32>
    %cst_6 = arith.constant 0.000000e+00 : f32
    %7 = vector.broadcast %cst_6 : f32 to vector<16x1024xf32>
    %8 = arith.maximumf %6, %7 : vector<16x1024xf32>
    %9 = vector.extract_strided_slice %8 {offsets = [0, 0], sizes = [16, 256], strides = [1, 1]} : vector<16x1024xf32> to vector<16x256xf32>
    %10 = vector.extract_strided_slice %8 {offsets = [0, 256], sizes = [16, 256], strides = [1, 1]} : vector<16x1024xf32> to vector<16x256xf32>
    %11 = vector.extract_strided_slice %8 {offsets = [0, 512], sizes = [16, 256], strides = [1, 1]} : vector<16x1024xf32> to vector<16x256xf32>
    %12 = vector.extract_strided_slice %8 {offsets = [0, 768], sizes = [16, 256], strides = [1, 1]} : vector<16x1024xf32> to vector<16x256xf32>
    %13 = vector.shape_cast %11 : vector<16x256xf32> to vector<1x16x256xf32>
    %c0_7 = arith.constant 0 : index
    %c0_8 = arith.constant 0 : index
    %c0_9 = arith.constant 0 : index
    %14 = vector.load %arg8[%c0_7, %c0_8, %c0_9] : memref<1x16x256xf32, #tpu.memory_space<vmem>>, vector<1x16x256xf32>
    tpu.vector_store %arg8[%c0_7, %c0_8, %c0_9], %13 {strides = array<i32>} : memref<1x16x256xf32, #tpu.memory_space<vmem>>, vector<1x16x256xf32>,
    %15 = vector.shape_cast %12 : vector<16x256xf32> to vector<1x16x256xf32>
    %c0_10 = arith.constant 0 : index
    %c0_11 = arith.constant 0 : index
    %c0_12 = arith.constant 0 : index
    %16 = vector.load %arg9[%c0_10, %c0_11, %c0_12] : memref<1x16x256xf32, #tpu.memory_space<vmem>>, vector<1x16x256xf32>
    tpu.vector_store %arg9[%c0_10, %c0_11, %c0_12], %15 {strides = array<i32>} : memref<1x16x256xf32, #tpu.memory_space<vmem>>, vector<1x16x256xf32>,
    %cst_13 = arith.constant 0.000000e+00 : f32
    %17 = vector.broadcast %cst_13 : f32 to vector<1x4x256xf32>
    %c0_14 = arith.constant 0 : index
    %c0_15 = arith.constant 0 : index
    %c0_16 = arith.constant 0 : index
    %18 = vector.load %arg10[%c0_14, %c0_15, %c0_16] : memref<1x24x256xf32, #tpu.memory_space<vmem>>, vector<1x4x256xf32>
    tpu.vector_store %arg10[%c0_14, %c0_15, %c0_16], %17 {strides = array<i32>} : memref<1x24x256xf32, #tpu.memory_space<vmem>>, vector<1x4x256xf32>,
    %cst_17 = arith.constant 0.000000e+00 : f32
    %19 = vector.broadcast %cst_17 : f32 to vector<1x4x256xf32>
    %c0_18 = arith.constant 0 : index
    %c20 = arith.constant 20 : index
    %c0_19 = arith.constant 0 : index
    %20 = vector.load %arg10[%c0_18, %c20, %c0_19] : memref<1x24x256xf32, #tpu.memory_space<vmem>>, vector<1x4x256xf32>
    tpu.vector_store %arg10[%c0_18, %c20, %c0_19], %19 {strides = array<i32>} : memref<1x24x256xf32, #tpu.memory_space<vmem>>, vector<1x4x256xf32>,
    %21 = vector.shape_cast %9 : vector<16x256xf32> to vector<1x16x256xf32>
    %c0_20 = arith.constant 0 : index
    %c4 = arith.constant 4 : index
    %c0_21 = arith.constant 0 : index
    %22 = vector.load %arg10[%c0_20, %c4, %c0_21] : memref<1x24x256xf32, #tpu.memory_space<vmem>>, vector<1x16x256xf32>
    tpu.vector_store %arg10[%c0_20, %c4, %c0_21], %21 {strides = array<i32>} : memref<1x24x256xf32, #tpu.memory_space<vmem>>, vector<1x16x256xf32>,
    %cst_22 = arith.constant 0.000000e+00 : f32
    %23 = vector.broadcast %cst_22 : f32 to vector<1x8x256xf32>
    %c0_23 = arith.constant 0 : index
    %c0_24 = arith.constant 0 : index
    %c0_25 = arith.constant 0 : index
    %24 = vector.load %arg11[%c0_23, %c0_24, %c0_25] : memref<1x32x256xf32, #tpu.memory_space<vmem>>, vector<1x8x256xf32>
    tpu.vector_store %arg11[%c0_23, %c0_24, %c0_25], %23 {strides = array<i32>} : memref<1x32x256xf32, #tpu.memory_space<vmem>>, vector<1x8x256xf32>,
    %cst_26 = arith.constant 0.000000e+00 : f32
    %25 = vector.broadcast %cst_26 : f32 to vector<1x8x256xf32>
    %c0_27 = arith.constant 0 : index
    %c24 = arith.constant 24 : index
    %c0_28 = arith.constant 0 : index
    %26 = vector.load %arg11[%c0_27, %c24, %c0_28] : memref<1x32x256xf32, #tpu.memory_space<vmem>>, vector<1x8x256xf32>
    tpu.vector_store %arg11[%c0_27, %c24, %c0_28], %25 {strides = array<i32>} : memref<1x32x256xf32, #tpu.memory_space<vmem>>, vector<1x8x256xf32>,
    %27 = vector.shape_cast %10 : vector<16x256xf32> to vector<1x16x256xf32>
    %c0_29 = arith.constant 0 : index
    %c8 = arith.constant 8 : index
    %c0_30 = arith.constant 0 : index
    %28 = vector.load %arg11[%c0_29, %c8, %c0_30] : memref<1x32x256xf32, #tpu.memory_space<vmem>>, vector<1x16x256xf32>
    tpu.vector_store %arg11[%c0_29, %c8, %c0_30], %27 {strides = array<i32>} : memref<1x32x256xf32, #tpu.memory_space<vmem>>, vector<1x16x256xf32>,
    %c0_31 = arith.constant 0 : index
    %c0_32 = arith.constant 0 : index
    %c0_33 = arith.constant 0 : index
    %29 = vector.load %arg10[%c0_31, %c0_32, %c0_33] : memref<1x24x256xf32, #tpu.memory_space<vmem>>, vector<1x16x256xf32>
    %30 = vector.shape_cast %29 : vector<1x16x256xf32> to vector<16x256xf32>
    %c0_34 = arith.constant 0 : index
    %c0_35 = arith.constant 0 : index
    %c0_36 = arith.constant 0 : index
    %31 = vector.load %arg4[%c0_34, %c0_35, %c0_36] : memref<9x256x256xbf16, #tpu.memory_space<vmem>>, vector<1x256x256xbf16>
    %32 = vector.shape_cast %31 : vector<1x256x256xbf16> to vector<256x256xbf16>
    %33 = arith.truncf %30 : vector<16x256xf32> to vector<16x256xbf16>
    %cst_37 = arith.constant dense<0.000000e+00> : vector<16x256xf32>
    %34 = tpu.matmul %33, %32, %cst_37 {dimension_numbers = #tpu.dot_dimension_numbers<[1], [0], [0], [1], [0, 0, 1, 1], [], []>} : vector<16x256xbf16>, vector<256x256xbf16>, vector<16x256xf32> -> vector<16x256xf32>
    %c0_38 = arith.constant 0 : index
    %c0_39 = arith.constant 0 : index
    %35 = vector.load %arg12[%c0_38, %c0_39] : memref<16x256xf32, #tpu.memory_space<vmem>>, vector<16x256xf32>
    tpu.vector_store %arg12[%c0_38, %c0_39], %34 {strides = array<i32>} : memref<16x256xf32, #tpu.memory_space<vmem>>, vector<16x256xf32>,
    %c0_40 = arith.constant 0 : index
    %c1 = arith.constant 1 : index
    %c0_41 = arith.constant 0 : index
    %36 = vector.load %arg10[%c0_40, %c1, %c0_41] : memref<1x24x256xf32, #tpu.memory_space<vmem>>, vector<1x16x256xf32>
    %37 = vector.shape_cast %36 : vector<1x16x256xf32> to vector<16x256xf32>
    %c1_42 = arith.constant 1 : index
    %c0_43 = arith.constant 0 : index
    %c0_44 = arith.constant 0 : index
    %38 = vector.load %arg4[%c1_42, %c0_43, %c0_44] : memref<9x256x256xbf16, #tpu.memory_space<vmem>>, vector<1x256x256xbf16>
    %39 = vector.shape_cast %38 : vector<1x256x256xbf16> to vector<256x256xbf16>
    %40 = arith.truncf %37 : vector<16x256xf32> to vector<16x256xbf16>
    %cst_45 = arith.constant dense<0.000000e+00> : vector<16x256xf32>
    %41 = tpu.matmul %40, %39, %cst_45 {dimension_numbers = #tpu.dot_dimension_numbers<[1], [0], [0], [1], [0, 0, 1, 1], [], []>} : vector<16x256xbf16>, vector<256x256xbf16>, vector<16x256xf32> -> vector<16x256xf32>
    %c0_46 = arith.constant 0 : index
    %c0_47 = arith.constant 0 : index
    %42 = vector.load %arg12[%c0_46, %c0_47] : memref<16x256xf32, #tpu.memory_space<vmem>>, vector<16x256xf32>
    %43 = arith.addf %42, %41 : vector<16x256xf32>
    %c0_48 = arith.constant 0 : index
    %c0_49 = arith.constant 0 : index
    %44 = vector.load %arg12[%c0_48, %c0_49] : memref<16x256xf32, #tpu.memory_space<vmem>>, vector<16x256xf32>
    tpu.vector_store %arg12[%c0_48, %c0_49], %43 {strides = array<i32>} : memref<16x256xf32, #tpu.memory_space<vmem>>, vector<16x256xf32>,
    %c0_50 = arith.constant 0 : index
    %c2 = arith.constant 2 : index
    %c0_51 = arith.constant 0 : index
    %45 = vector.load %arg10[%c0_50, %c2, %c0_51] : memref<1x24x256xf32, #tpu.memory_space<vmem>>, vector<1x16x256xf32>
    %46 = vector.shape_cast %45 : vector<1x16x256xf32> to vector<16x256xf32>
    %c2_52 = arith.constant 2 : index
    %c0_53 = arith.constant 0 : index
    %c0_54 = arith.constant 0 : index
    %47 = vector.load %arg4[%c2_52, %c0_53, %c0_54] : memref<9x256x256xbf16, #tpu.memory_space<vmem>>, vector<1x256x256xbf16>
    %48 = vector.shape_cast %47 : vector<1x256x256xbf16> to vector<256x256xbf16>
    %49 = arith.truncf %46 : vector<16x256xf32> to vector<16x256xbf16>
    %cst_55 = arith.constant dense<0.000000e+00> : vector<16x256xf32>
    %50 = tpu.matmul %49, %48, %cst_55 {dimension_numbers = #tpu.dot_dimension_numbers<[1], [0], [0], [1], [0, 0, 1, 1], [], []>} : vector<16x256xbf16>, vector<256x256xbf16>, vector<16x256xf32> -> vector<16x256xf32>
    %c0_56 = arith.constant 0 : index
    %c0_57 = arith.constant 0 : index
    %51 = vector.load %arg12[%c0_56, %c0_57] : memref<16x256xf32, #tpu.memory_space<vmem>>, vector<16x256xf32>
    %52 = arith.addf %51, %50 : vector<16x256xf32>
    %c0_58 = arith.constant 0 : index
    %c0_59 = arith.constant 0 : index
    %53 = vector.load %arg12[%c0_58, %c0_59] : memref<16x256xf32, #tpu.memory_space<vmem>>, vector<16x256xf32>
    tpu.vector_store %arg12[%c0_58, %c0_59], %52 {strides = array<i32>} : memref<16x256xf32, #tpu.memory_space<vmem>>, vector<16x256xf32>,
    %c0_60 = arith.constant 0 : index
    %c3 = arith.constant 3 : index
    %c0_61 = arith.constant 0 : index
    %54 = vector.load %arg10[%c0_60, %c3, %c0_61] : memref<1x24x256xf32, #tpu.memory_space<vmem>>, vector<1x16x256xf32>
    %55 = vector.shape_cast %54 : vector<1x16x256xf32> to vector<16x256xf32>
    %c3_62 = arith.constant 3 : index
    %c0_63 = arith.constant 0 : index
    %c0_64 = arith.constant 0 : index
    %56 = vector.load %arg4[%c3_62, %c0_63, %c0_64] : memref<9x256x256xbf16, #tpu.memory_space<vmem>>, vector<1x256x256xbf16>
    %57 = vector.shape_cast %56 : vector<1x256x256xbf16> to vector<256x256xbf16>
    %58 = arith.truncf %55 : vector<16x256xf32> to vector<16x256xbf16>
    %cst_65 = arith.constant dense<0.000000e+00> : vector<16x256xf32>
    %59 = tpu.matmul %58, %57, %cst_65 {dimension_numbers = #tpu.dot_dimension_numbers<[1], [0], [0], [1], [0, 0, 1, 1], [], []>} : vector<16x256xbf16>, vector<256x256xbf16>, vector<16x256xf32> -> vector<16x256xf32>
    %c0_66 = arith.constant 0 : index
    %c0_67 = arith.constant 0 : index
    %60 = vector.load %arg12[%c0_66, %c0_67] : memref<16x256xf32, #tpu.memory_space<vmem>>, vector<16x256xf32>
    %61 = arith.addf %60, %59 : vector<16x256xf32>
    %c0_68 = arith.constant 0 : index
    %c0_69 = arith.constant 0 : index
    %62 = vector.load %arg12[%c0_68, %c0_69] : memref<16x256xf32, #tpu.memory_space<vmem>>, vector<16x256xf32>
    tpu.vector_store %arg12[%c0_68, %c0_69], %61 {strides = array<i32>} : memref<16x256xf32, #tpu.memory_space<vmem>>, vector<16x256xf32>,
    %c0_70 = arith.constant 0 : index
    %c4_71 = arith.constant 4 : index
    %c0_72 = arith.constant 0 : index
    %63 = vector.load %arg10[%c0_70, %c4_71, %c0_72] : memref<1x24x256xf32, #tpu.memory_space<vmem>>, vector<1x16x256xf32>
    %64 = vector.shape_cast %63 : vector<1x16x256xf32> to vector<16x256xf32>
    %c4_73 = arith.constant 4 : index
    %c0_74 = arith.constant 0 : index
    %c0_75 = arith.constant 0 : index
    %65 = vector.load %arg4[%c4_73, %c0_74, %c0_75] : memref<9x256x256xbf16, #tpu.memory_space<vmem>>, vector<1x256x256xbf16>
    %66 = vector.shape_cast %65 : vector<1x256x256xbf16> to vector<256x256xbf16>
    %67 = arith.truncf %64 : vector<16x256xf32> to vector<16x256xbf16>
    %cst_76 = arith.constant dense<0.000000e+00> : vector<16x256xf32>
    %68 = tpu.matmul %67, %66, %cst_76 {dimension_numbers = #tpu.dot_dimension_numbers<[1], [0], [0], [1], [0, 0, 1, 1], [], []>} : vector<16x256xbf16>, vector<256x256xbf16>, vector<16x256xf32> -> vector<16x256xf32>
    %c0_77 = arith.constant 0 : index
    %c0_78 = arith.constant 0 : index
    %69 = vector.load %arg12[%c0_77, %c0_78] : memref<16x256xf32, #tpu.memory_space<vmem>>, vector<16x256xf32>
    %70 = arith.addf %69, %68 : vector<16x256xf32>
    %c0_79 = arith.constant 0 : index
    %c0_80 = arith.constant 0 : index
    %71 = vector.load %arg12[%c0_79, %c0_80] : memref<16x256xf32, #tpu.memory_space<vmem>>, vector<16x256xf32>
    tpu.vector_store %arg12[%c0_79, %c0_80], %70 {strides = array<i32>} : memref<16x256xf32, #tpu.memory_space<vmem>>, vector<16x256xf32>,
    %c0_81 = arith.constant 0 : index
    %c5 = arith.constant 5 : index
    %c0_82 = arith.constant 0 : index
    %72 = vector.load %arg10[%c0_81, %c5, %c0_82] : memref<1x24x256xf32, #tpu.memory_space<vmem>>, vector<1x16x256xf32>
    %73 = vector.shape_cast %72 : vector<1x16x256xf32> to vector<16x256xf32>
    %c5_83 = arith.constant 5 : index
    %c0_84 = arith.constant 0 : index
    %c0_85 = arith.constant 0 : index
    %74 = vector.load %arg4[%c5_83, %c0_84, %c0_85] : memref<9x256x256xbf16, #tpu.memory_space<vmem>>, vector<1x256x256xbf16>
    %75 = vector.shape_cast %74 : vector<1x256x256xbf16> to vector<256x256xbf16>
    %76 = arith.truncf %73 : vector<16x256xf32> to vector<16x256xbf16>
    %cst_86 = arith.constant dense<0.000000e+00> : vector<16x256xf32>
    %77 = tpu.matmul %76, %75, %cst_86 {dimension_numbers = #tpu.dot_dimension_numbers<[1], [0], [0], [1], [0, 0, 1, 1], [], []>} : vector<16x256xbf16>, vector<256x256xbf16>, vector<16x256xf32> -> vector<16x256xf32>
    %c0_87 = arith.constant 0 : index
    %c0_88 = arith.constant 0 : index
    %78 = vector.load %arg12[%c0_87, %c0_88] : memref<16x256xf32, #tpu.memory_space<vmem>>, vector<16x256xf32>
    %79 = arith.addf %78, %77 : vector<16x256xf32>
    %c0_89 = arith.constant 0 : index
    %c0_90 = arith.constant 0 : index
    %80 = vector.load %arg12[%c0_89, %c0_90] : memref<16x256xf32, #tpu.memory_space<vmem>>, vector<16x256xf32>
    tpu.vector_store %arg12[%c0_89, %c0_90], %79 {strides = array<i32>} : memref<16x256xf32, #tpu.memory_space<vmem>>, vector<16x256xf32>,
    %c0_91 = arith.constant 0 : index
    %c6 = arith.constant 6 : index
    %c0_92 = arith.constant 0 : index
    %81 = vector.load %arg10[%c0_91, %c6, %c0_92] : memref<1x24x256xf32, #tpu.memory_space<vmem>>, vector<1x16x256xf32>
    %82 = vector.shape_cast %81 : vector<1x16x256xf32> to vector<16x256xf32>
    %c6_93 = arith.constant 6 : index
    %c0_94 = arith.constant 0 : index
    %c0_95 = arith.constant 0 : index
    %83 = vector.load %arg4[%c6_93, %c0_94, %c0_95] : memref<9x256x256xbf16, #tpu.memory_space<vmem>>, vector<1x256x256xbf16>
    %84 = vector.shape_cast %83 : vector<1x256x256xbf16> to vector<256x256xbf16>
    %85 = arith.truncf %82 : vector<16x256xf32> to vector<16x256xbf16>
    %cst_96 = arith.constant dense<0.000000e+00> : vector<16x256xf32>
    %86 = tpu.matmul %85, %84, %cst_96 {dimension_numbers = #tpu.dot_dimension_numbers<[1], [0], [0], [1], [0, 0, 1, 1], [], []>} : vector<16x256xbf16>, vector<256x256xbf16>, vector<16x256xf32> -> vector<16x256xf32>
    %c0_97 = arith.constant 0 : index
    %c0_98 = arith.constant 0 : index
    %87 = vector.load %arg12[%c0_97, %c0_98] : memref<16x256xf32, #tpu.memory_space<vmem>>, vector<16x256xf32>
    %88 = arith.addf %87, %86 : vector<16x256xf32>
    %c0_99 = arith.constant 0 : index
    %c0_100 = arith.constant 0 : index
    %89 = vector.load %arg12[%c0_99, %c0_100] : memref<16x256xf32, #tpu.memory_space<vmem>>, vector<16x256xf32>
    tpu.vector_store %arg12[%c0_99, %c0_100], %88 {strides = array<i32>} : memref<16x256xf32, #tpu.memory_space<vmem>>, vector<16x256xf32>,
    %c0_101 = arith.constant 0 : index
    %c7 = arith.constant 7 : index
    %c0_102 = arith.constant 0 : index
    %90 = vector.load %arg10[%c0_101, %c7, %c0_102] : memref<1x24x256xf32, #tpu.memory_space<vmem>>, vector<1x16x256xf32>
    %91 = vector.shape_cast %90 : vector<1x16x256xf32> to vector<16x256xf32>
    %c7_103 = arith.constant 7 : index
    %c0_104 = arith.constant 0 : index
    %c0_105 = arith.constant 0 : index
    %92 = vector.load %arg4[%c7_103, %c0_104, %c0_105] : memref<9x256x256xbf16, #tpu.memory_space<vmem>>, vector<1x256x256xbf16>
    %93 = vector.shape_cast %92 : vector<1x256x256xbf16> to vector<256x256xbf16>
    %94 = arith.truncf %91 : vector<16x256xf32> to vector<16x256xbf16>
    %cst_106 = arith.constant dense<0.000000e+00> : vector<16x256xf32>
    %95 = tpu.matmul %94, %93, %cst_106 {dimension_numbers = #tpu.dot_dimension_numbers<[1], [0], [0], [1], [0, 0, 1, 1], [], []>} : vector<16x256xbf16>, vector<256x256xbf16>, vector<16x256xf32> -> vector<16x256xf32>
    %c0_107 = arith.constant 0 : index
    %c0_108 = arith.constant 0 : index
    %96 = vector.load %arg12[%c0_107, %c0_108] : memref<16x256xf32, #tpu.memory_space<vmem>>, vector<16x256xf32>
    %97 = arith.addf %96, %95 : vector<16x256xf32>
    %c0_109 = arith.constant 0 : index
    %c0_110 = arith.constant 0 : index
    %98 = vector.load %arg12[%c0_109, %c0_110] : memref<16x256xf32, #tpu.memory_space<vmem>>, vector<16x256xf32>
    tpu.vector_store %arg12[%c0_109, %c0_110], %97 {strides = array<i32>} : memref<16x256xf32, #tpu.memory_space<vmem>>, vector<16x256xf32>,
    %c0_111 = arith.constant 0 : index
    %c8_112 = arith.constant 8 : index
    %c0_113 = arith.constant 0 : index
    %99 = vector.load %arg10[%c0_111, %c8_112, %c0_113] : memref<1x24x256xf32, #tpu.memory_space<vmem>>, vector<1x16x256xf32>
    %100 = vector.shape_cast %99 : vector<1x16x256xf32> to vector<16x256xf32>
    %c8_114 = arith.constant 8 : index
    %c0_115 = arith.constant 0 : index
    %c0_116 = arith.constant 0 : index
    %101 = vector.load %arg4[%c8_114, %c0_115, %c0_116] : memref<9x256x256xbf16, #tpu.memory_space<vmem>>, vector<1x256x256xbf16>
    %102 = vector.shape_cast %101 : vector<1x256x256xbf16> to vector<256x256xbf16>
    %103 = arith.truncf %100 : vector<16x256xf32> to vector<16x256xbf16>
    %cst_117 = arith.constant dense<0.000000e+00> : vector<16x256xf32>
    %104 = tpu.matmul %103, %102, %cst_117 {dimension_numbers = #tpu.dot_dimension_numbers<[1], [0], [0], [1], [0, 0, 1, 1], [], []>} : vector<16x256xbf16>, vector<256x256xbf16>, vector<16x256xf32> -> vector<16x256xf32>
    %c0_118 = arith.constant 0 : index
    %c0_119 = arith.constant 0 : index
    %105 = vector.load %arg12[%c0_118, %c0_119] : memref<16x256xf32, #tpu.memory_space<vmem>>, vector<16x256xf32>
    %106 = arith.addf %105, %104 : vector<16x256xf32>
    %c0_120 = arith.constant 0 : index
    %c0_121 = arith.constant 0 : index
    %107 = vector.load %arg12[%c0_120, %c0_121] : memref<16x256xf32, #tpu.memory_space<vmem>>, vector<16x256xf32>
    tpu.vector_store %arg12[%c0_120, %c0_121], %106 {strides = array<i32>} : memref<16x256xf32, #tpu.memory_space<vmem>>, vector<16x256xf32>,
    %c0_122 = arith.constant 0 : index
    %c0_123 = arith.constant 0 : index
    %108 = vector.load %arg12[%c0_122, %c0_123] : memref<16x256xf32, #tpu.memory_space<vmem>>, vector<16x256xf32>
    %c0_124 = arith.constant 0 : index
    %c0_125 = arith.constant 0 : index
    %109 = vector.load %arg5[%c0_124, %c0_125] : memref<1x256xf32, #tpu.memory_space<vmem>>, vector<1x256xf32>
    %110 = vector.broadcast %109 : vector<1x256xf32> to vector<16x256xf32>
    %111 = arith.addf %108, %110 : vector<16x256xf32>
    %cst_126 = arith.constant 0.000000e+00 : f32
    %112 = vector.broadcast %cst_126 : f32 to vector<16x256xf32>
    %113 = arith.maximumf %111, %112 : vector<16x256xf32>
    %c0_127 = arith.constant 0 : index
    %c0_128 = arith.constant 0 : index
    %c0_129 = arith.constant 0 : index
    %114 = vector.load %arg8[%c0_127, %c0_128, %c0_129] : memref<1x16x256xf32, #tpu.memory_space<vmem>>, vector<1x16x256xf32>
    %115 = vector.shape_cast %113 : vector<16x256xf32> to vector<1x16x256xf32>
    %116 = arith.addf %114, %115 : vector<1x16x256xf32>
    %c0_130 = arith.constant 0 : index
    %c0_131 = arith.constant 0 : index
    %c0_132 = arith.constant 0 : index
    %117 = vector.load %arg8[%c0_130, %c0_131, %c0_132] : memref<1x16x256xf32, #tpu.memory_space<vmem>>, vector<1x16x256xf32>
    tpu.vector_store %arg8[%c0_130, %c0_131, %c0_132], %116 {strides = array<i32>} : memref<1x16x256xf32, #tpu.memory_space<vmem>>, vector<1x16x256xf32>,
    %c0_133 = arith.constant 0 : index
    %c0_134 = arith.constant 0 : index
    %c0_135 = arith.constant 0 : index
    %118 = vector.load %arg11[%c0_133, %c0_134, %c0_135] : memref<1x32x256xf32, #tpu.memory_space<vmem>>, vector<1x16x256xf32>
    %119 = vector.shape_cast %118 : vector<1x16x256xf32> to vector<16x256xf32>
    %c0_136 = arith.constant 0 : index
    %c0_137 = arith.constant 0 : index
    %c0_138 = arith.constant 0 : index
    %120 = vector.load %arg6[%c0_136, %c0_137, %c0_138] : memref<17x256x256xbf16, #tpu.memory_space<vmem>>, vector<1x256x256xbf16>
    %121 = vector.shape_cast %120 : vector<1x256x256xbf16> to vector<256x256xbf16>
    %122 = arith.truncf %119 : vector<16x256xf32> to vector<16x256xbf16>
    %cst_139 = arith.constant dense<0.000000e+00> : vector<16x256xf32>
    %123 = tpu.matmul %122, %121, %cst_139 {dimension_numbers = #tpu.dot_dimension_numbers<[1], [0], [0], [1], [0, 0, 1, 1], [], []>} : vector<16x256xbf16>, vector<256x256xbf16>, vector<16x256xf32> -> vector<16x256xf32>
    %c0_140 = arith.constant 0 : index
    %c0_141 = arith.constant 0 : index
    %124 = vector.load %arg13[%c0_140, %c0_141] : memref<16x256xf32, #tpu.memory_space<vmem>>, vector<16x256xf32>
    tpu.vector_store %arg13[%c0_140, %c0_141], %123 {strides = array<i32>} : memref<16x256xf32, #tpu.memory_space<vmem>>, vector<16x256xf32>,
    %c0_142 = arith.constant 0 : index
    %c1_143 = arith.constant 1 : index
    %c0_144 = arith.constant 0 : index
    %125 = vector.load %arg11[%c0_142, %c1_143, %c0_144] : memref<1x32x256xf32, #tpu.memory_space<vmem>>, vector<1x16x256xf32>
    %126 = vector.shape_cast %125 : vector<1x16x256xf32> to vector<16x256xf32>
    %c1_145 = arith.constant 1 : index
    %c0_146 = arith.constant 0 : index
    %c0_147 = arith.constant 0 : index
    %127 = vector.load %arg6[%c1_145, %c0_146, %c0_147] : memref<17x256x256xbf16, #tpu.memory_space<vmem>>, vector<1x256x256xbf16>
    %128 = vector.shape_cast %127 : vector<1x256x256xbf16> to vector<256x256xbf16>
    %129 = arith.truncf %126 : vector<16x256xf32> to vector<16x256xbf16>
    %cst_148 = arith.constant dense<0.000000e+00> : vector<16x256xf32>
    %130 = tpu.matmul %129, %128, %cst_148 {dimension_numbers = #tpu.dot_dimension_numbers<[1], [0], [0], [1], [0, 0, 1, 1], [], []>} : vector<16x256xbf16>, vector<256x256xbf16>, vector<16x256xf32> -> vector<16x256xf32>
    %c0_149 = arith.constant 0 : index
    %c0_150 = arith.constant 0 : index
    %131 = vector.load %arg13[%c0_149, %c0_150] : memref<16x256xf32, #tpu.memory_space<vmem>>, vector<16x256xf32>
    %132 = arith.addf %131, %130 : vector<16x256xf32>
    %c0_151 = arith.constant 0 : index
    %c0_152 = arith.constant 0 : index
    %133 = vector.load %arg13[%c0_151, %c0_152] : memref<16x256xf32, #tpu.memory_space<vmem>>, vector<16x256xf32>
    tpu.vector_store %arg13[%c0_151, %c0_152], %132 {strides = array<i32>} : memref<16x256xf32, #tpu.memory_space<vmem>>, vector<16x256xf32>,
    %c0_153 = arith.constant 0 : index
    %c2_154 = arith.constant 2 : index
    %c0_155 = arith.constant 0 : index
    %134 = vector.load %arg11[%c0_153, %c2_154, %c0_155] : memref<1x32x256xf32, #tpu.memory_space<vmem>>, vector<1x16x256xf32>
    %135 = vector.shape_cast %134 : vector<1x16x256xf32> to vector<16x256xf32>
    %c2_156 = arith.constant 2 : index
    %c0_157 = arith.constant 0 : index
    %c0_158 = arith.constant 0 : index
    %136 = vector.load %arg6[%c2_156, %c0_157, %c0_158] : memref<17x256x256xbf16, #tpu.memory_space<vmem>>, vector<1x256x256xbf16>
    %137 = vector.shape_cast %136 : vector<1x256x256xbf16> to vector<256x256xbf16>
    %138 = arith.truncf %135 : vector<16x256xf32> to vector<16x256xbf16>
    %cst_159 = arith.constant dense<0.000000e+00> : vector<16x256xf32>
    %139 = tpu.matmul %138, %137, %cst_159 {dimension_numbers = #tpu.dot_dimension_numbers<[1], [0], [0], [1], [0, 0, 1, 1], [], []>} : vector<16x256xbf16>, vector<256x256xbf16>, vector<16x256xf32> -> vector<16x256xf32>
    %c0_160 = arith.constant 0 : index
    %c0_161 = arith.constant 0 : index
    %140 = vector.load %arg13[%c0_160, %c0_161] : memref<16x256xf32, #tpu.memory_space<vmem>>, vector<16x256xf32>
    %141 = arith.addf %140, %139 : vector<16x256xf32>
    %c0_162 = arith.constant 0 : index
    %c0_163 = arith.constant 0 : index
    %142 = vector.load %arg13[%c0_162, %c0_163] : memref<16x256xf32, #tpu.memory_space<vmem>>, vector<16x256xf32>
    tpu.vector_store %arg13[%c0_162, %c0_163], %141 {strides = array<i32>} : memref<16x256xf32, #tpu.memory_space<vmem>>, vector<16x256xf32>,
    %c0_164 = arith.constant 0 : index
    %c3_165 = arith.constant 3 : index
    %c0_166 = arith.constant 0 : index
    %143 = vector.load %arg11[%c0_164, %c3_165, %c0_166] : memref<1x32x256xf32, #tpu.memory_space<vmem>>, vector<1x16x256xf32>
    %144 = vector.shape_cast %143 : vector<1x16x256xf32> to vector<16x256xf32>
    %c3_167 = arith.constant 3 : index
    %c0_168 = arith.constant 0 : index
    %c0_169 = arith.constant 0 : index
    %145 = vector.load %arg6[%c3_167, %c0_168, %c0_169] : memref<17x256x256xbf16, #tpu.memory_space<vmem>>, vector<1x256x256xbf16>
    %146 = vector.shape_cast %145 : vector<1x256x256xbf16> to vector<256x256xbf16>
    %147 = arith.truncf %144 : vector<16x256xf32> to vector<16x256xbf16>
    %cst_170 = arith.constant dense<0.000000e+00> : vector<16x256xf32>
    %148 = tpu.matmul %147, %146, %cst_170 {dimension_numbers = #tpu.dot_dimension_numbers<[1], [0], [0], [1], [0, 0, 1, 1], [], []>} : vector<16x256xbf16>, vector<256x256xbf16>, vector<16x256xf32> -> vector<16x256xf32>
    %c0_171 = arith.constant 0 : index
    %c0_172 = arith.constant 0 : index
    %149 = vector.load %arg13[%c0_171, %c0_172] : memref<16x256xf32, #tpu.memory_space<vmem>>, vector<16x256xf32>
    %150 = arith.addf %149, %148 : vector<16x256xf32>
    %c0_173 = arith.constant 0 : index
    %c0_174 = arith.constant 0 : index
    %151 = vector.load %arg13[%c0_173, %c0_174] : memref<16x256xf32, #tpu.memory_space<vmem>>, vector<16x256xf32>
    tpu.vector_store %arg13[%c0_173, %c0_174], %150 {strides = array<i32>} : memref<16x256xf32, #tpu.memory_space<vmem>>, vector<16x256xf32>,
    %c0_175 = arith.constant 0 : index
    %c4_176 = arith.constant 4 : index
    %c0_177 = arith.constant 0 : index
    %152 = vector.load %arg11[%c0_175, %c4_176, %c0_177] : memref<1x32x256xf32, #tpu.memory_space<vmem>>, vector<1x16x256xf32>
    %153 = vector.shape_cast %152 : vector<1x16x256xf32> to vector<16x256xf32>
    %c4_178 = arith.constant 4 : index
    %c0_179 = arith.constant 0 : index
    %c0_180 = arith.constant 0 : index
    %154 = vector.load %arg6[%c4_178, %c0_179, %c0_180] : memref<17x256x256xbf16, #tpu.memory_space<vmem>>, vector<1x256x256xbf16>
    %155 = vector.shape_cast %154 : vector<1x256x256xbf16> to vector<256x256xbf16>
    %156 = arith.truncf %153 : vector<16x256xf32> to vector<16x256xbf16>
    %cst_181 = arith.constant dense<0.000000e+00> : vector<16x256xf32>
    %157 = tpu.matmul %156, %155, %cst_181 {dimension_numbers = #tpu.dot_dimension_numbers<[1], [0], [0], [1], [0, 0, 1, 1], [], []>} : vector<16x256xbf16>, vector<256x256xbf16>, vector<16x256xf32> -> vector<16x256xf32>
    %c0_182 = arith.constant 0 : index
    %c0_183 = arith.constant 0 : index
    %158 = vector.load %arg13[%c0_182, %c0_183] : memref<16x256xf32, #tpu.memory_space<vmem>>, vector<16x256xf32>
    %159 = arith.addf %158, %157 : vector<16x256xf32>
    %c0_184 = arith.constant 0 : index
    %c0_185 = arith.constant 0 : index
    %160 = vector.load %arg13[%c0_184, %c0_185] : memref<16x256xf32, #tpu.memory_space<vmem>>, vector<16x256xf32>
    tpu.vector_store %arg13[%c0_184, %c0_185], %159 {strides = array<i32>} : memref<16x256xf32, #tpu.memory_space<vmem>>, vector<16x256xf32>,
    %c0_186 = arith.constant 0 : index
    %c5_187 = arith.constant 5 : index
    %c0_188 = arith.constant 0 : index
    %161 = vector.load %arg11[%c0_186, %c5_187, %c0_188] : memref<1x32x256xf32, #tpu.memory_space<vmem>>, vector<1x16x256xf32>
    %162 = vector.shape_cast %161 : vector<1x16x256xf32> to vector<16x256xf32>
    %c5_189 = arith.constant 5 : index
    %c0_190 = arith.constant 0 : index
    %c0_191 = arith.constant 0 : index
    %163 = vector.load %arg6[%c5_189, %c0_190, %c0_191] : memref<17x256x256xbf16, #tpu.memory_space<vmem>>, vector<1x256x256xbf16>
    %164 = vector.shape_cast %163 : vector<1x256x256xbf16> to vector<256x256xbf16>
    %165 = arith.truncf %162 : vector<16x256xf32> to vector<16x256xbf16>
    %cst_192 = arith.constant dense<0.000000e+00> : vector<16x256xf32>
    %166 = tpu.matmul %165, %164, %cst_192 {dimension_numbers = #tpu.dot_dimension_numbers<[1], [0], [0], [1], [0, 0, 1, 1], [], []>} : vector<16x256xbf16>, vector<256x256xbf16>, vector<16x256xf32> -> vector<16x256xf32>
    %c0_193 = arith.constant 0 : index
    %c0_194 = arith.constant 0 : index
    %167 = vector.load %arg13[%c0_193, %c0_194] : memref<16x256xf32, #tpu.memory_space<vmem>>, vector<16x256xf32>
    %168 = arith.addf %167, %166 : vector<16x256xf32>
    %c0_195 = arith.constant 0 : index
    %c0_196 = arith.constant 0 : index
    %169 = vector.load %arg13[%c0_195, %c0_196] : memref<16x256xf32, #tpu.memory_space<vmem>>, vector<16x256xf32>
    tpu.vector_store %arg13[%c0_195, %c0_196], %168 {strides = array<i32>} : memref<16x256xf32, #tpu.memory_space<vmem>>, vector<16x256xf32>,
    %c0_197 = arith.constant 0 : index
    %c6_198 = arith.constant 6 : index
    %c0_199 = arith.constant 0 : index
    %170 = vector.load %arg11[%c0_197, %c6_198, %c0_199] : memref<1x32x256xf32, #tpu.memory_space<vmem>>, vector<1x16x256xf32>
    %171 = vector.shape_cast %170 : vector<1x16x256xf32> to vector<16x256xf32>
    %c6_200 = arith.constant 6 : index
    %c0_201 = arith.constant 0 : index
    %c0_202 = arith.constant 0 : index
    %172 = vector.load %arg6[%c6_200, %c0_201, %c0_202] : memref<17x256x256xbf16, #tpu.memory_space<vmem>>, vector<1x256x256xbf16>
    %173 = vector.shape_cast %172 : vector<1x256x256xbf16> to vector<256x256xbf16>
    %174 = arith.truncf %171 : vector<16x256xf32> to vector<16x256xbf16>
    %cst_203 = arith.constant dense<0.000000e+00> : vector<16x256xf32>
    %175 = tpu.matmul %174, %173, %cst_203 {dimension_numbers = #tpu.dot_dimension_numbers<[1], [0], [0], [1], [0, 0, 1, 1], [], []>} : vector<16x256xbf16>, vector<256x256xbf16>, vector<16x256xf32> -> vector<16x256xf32>
    %c0_204 = arith.constant 0 : index
    %c0_205 = arith.constant 0 : index
    %176 = vector.load %arg13[%c0_204, %c0_205] : memref<16x256xf32, #tpu.memory_space<vmem>>, vector<16x256xf32>
    %177 = arith.addf %176, %175 : vector<16x256xf32>
    %c0_206 = arith.constant 0 : index
    %c0_207 = arith.constant 0 : index
    %178 = vector.load %arg13[%c0_206, %c0_207] : memref<16x256xf32, #tpu.memory_space<vmem>>, vector<16x256xf32>
    tpu.vector_store %arg13[%c0_206, %c0_207], %177 {strides = array<i32>} : memref<16x256xf32, #tpu.memory_space<vmem>>, vector<16x256xf32>,
    %c0_208 = arith.constant 0 : index
    %c7_209 = arith.constant 7 : index
    %c0_210 = arith.constant 0 : index
    %179 = vector.load %arg11[%c0_208, %c7_209, %c0_210] : memref<1x32x256xf32, #tpu.memory_space<vmem>>, vector<1x16x256xf32>
    %180 = vector.shape_cast %179 : vector<1x16x256xf32> to vector<16x256xf32>
    %c7_211 = arith.constant 7 : index
    %c0_212 = arith.constant 0 : index
    %c0_213 = arith.constant 0 : index
    %181 = vector.load %arg6[%c7_211, %c0_212, %c0_213] : memref<17x256x256xbf16, #tpu.memory_space<vmem>>, vector<1x256x256xbf16>
    %182 = vector.shape_cast %181 : vector<1x256x256xbf16> to vector<256x256xbf16>
    %183 = arith.truncf %180 : vector<16x256xf32> to vector<16x256xbf16>
    %cst_214 = arith.constant dense<0.000000e+00> : vector<16x256xf32>
    %184 = tpu.matmul %183, %182, %cst_214 {dimension_numbers = #tpu.dot_dimension_numbers<[1], [0], [0], [1], [0, 0, 1, 1], [], []>} : vector<16x256xbf16>, vector<256x256xbf16>, vector<16x256xf32> -> vector<16x256xf32>
    %c0_215 = arith.constant 0 : index
    %c0_216 = arith.constant 0 : index
    %185 = vector.load %arg13[%c0_215, %c0_216] : memref<16x256xf32, #tpu.memory_space<vmem>>, vector<16x256xf32>
    %186 = arith.addf %185, %184 : vector<16x256xf32>
    %c0_217 = arith.constant 0 : index
    %c0_218 = arith.constant 0 : index
    %187 = vector.load %arg13[%c0_217, %c0_218] : memref<16x256xf32, #tpu.memory_space<vmem>>, vector<16x256xf32>
    tpu.vector_store %arg13[%c0_217, %c0_218], %186 {strides = array<i32>} : memref<16x256xf32, #tpu.memory_space<vmem>>, vector<16x256xf32>,
    %c0_219 = arith.constant 0 : index
    %c8_220 = arith.constant 8 : index
    %c0_221 = arith.constant 0 : index
    %188 = vector.load %arg11[%c0_219, %c8_220, %c0_221] : memref<1x32x256xf32, #tpu.memory_space<vmem>>, vector<1x16x256xf32>
    %189 = vector.shape_cast %188 : vector<1x16x256xf32> to vector<16x256xf32>
    %c8_222 = arith.constant 8 : index
    %c0_223 = arith.constant 0 : index
    %c0_224 = arith.constant 0 : index
    %190 = vector.load %arg6[%c8_222, %c0_223, %c0_224] : memref<17x256x256xbf16, #tpu.memory_space<vmem>>, vector<1x256x256xbf16>
    %191 = vector.shape_cast %190 : vector<1x256x256xbf16> to vector<256x256xbf16>
    %192 = arith.truncf %189 : vector<16x256xf32> to vector<16x256xbf16>
    %cst_225 = arith.constant dense<0.000000e+00> : vector<16x256xf32>
    %193 = tpu.matmul %192, %191, %cst_225 {dimension_numbers = #tpu.dot_dimension_numbers<[1], [0], [0], [1], [0, 0, 1, 1], [], []>} : vector<16x256xbf16>, vector<256x256xbf16>, vector<16x256xf32> -> vector<16x256xf32>
    %c0_226 = arith.constant 0 : index
    %c0_227 = arith.constant 0 : index
    %194 = vector.load %arg13[%c0_226, %c0_227] : memref<16x256xf32, #tpu.memory_space<vmem>>, vector<16x256xf32>
    %195 = arith.addf %194, %193 : vector<16x256xf32>
    %c0_228 = arith.constant 0 : index
    %c0_229 = arith.constant 0 : index
    %196 = vector.load %arg13[%c0_228, %c0_229] : memref<16x256xf32, #tpu.memory_space<vmem>>, vector<16x256xf32>
    tpu.vector_store %arg13[%c0_228, %c0_229], %195 {strides = array<i32>} : memref<16x256xf32, #tpu.memory_space<vmem>>, vector<16x256xf32>,
    %c0_230 = arith.constant 0 : index
    %c9 = arith.constant 9 : index
    %c0_231 = arith.constant 0 : index
    %197 = vector.load %arg11[%c0_230, %c9, %c0_231] : memref<1x32x256xf32, #tpu.memory_space<vmem>>, vector<1x16x256xf32>
    %198 = vector.shape_cast %197 : vector<1x16x256xf32> to vector<16x256xf32>
    %c9_232 = arith.constant 9 : index
    %c0_233 = arith.constant 0 : index
    %c0_234 = arith.constant 0 : index
    %199 = vector.load %arg6[%c9_232, %c0_233, %c0_234] : memref<17x256x256xbf16, #tpu.memory_space<vmem>>, vector<1x256x256xbf16>
    %200 = vector.shape_cast %199 : vector<1x256x256xbf16> to vector<256x256xbf16>
    %201 = arith.truncf %198 : vector<16x256xf32> to vector<16x256xbf16>
    %cst_235 = arith.constant dense<0.000000e+00> : vector<16x256xf32>
    %202 = tpu.matmul %201, %200, %cst_235 {dimension_numbers = #tpu.dot_dimension_numbers<[1], [0], [0], [1], [0, 0, 1, 1], [], []>} : vector<16x256xbf16>, vector<256x256xbf16>, vector<16x256xf32> -> vector<16x256xf32>
    %c0_236 = arith.constant 0 : index
    %c0_237 = arith.constant 0 : index
    %203 = vector.load %arg13[%c0_236, %c0_237] : memref<16x256xf32, #tpu.memory_space<vmem>>, vector<16x256xf32>
    %204 = arith.addf %203, %202 : vector<16x256xf32>
    %c0_238 = arith.constant 0 : index
    %c0_239 = arith.constant 0 : index
    %205 = vector.load %arg13[%c0_238, %c0_239] : memref<16x256xf32, #tpu.memory_space<vmem>>, vector<16x256xf32>
    tpu.vector_store %arg13[%c0_238, %c0_239], %204 {strides = array<i32>} : memref<16x256xf32, #tpu.memory_space<vmem>>, vector<16x256xf32>,
    %c0_240 = arith.constant 0 : index
    %c10 = arith.constant 10 : index
    %c0_241 = arith.constant 0 : index
    %206 = vector.load %arg11[%c0_240, %c10, %c0_241] : memref<1x32x256xf32, #tpu.memory_space<vmem>>, vector<1x16x256xf32>
    %207 = vector.shape_cast %206 : vector<1x16x256xf32> to vector<16x256xf32>
    %c10_242 = arith.constant 10 : index
    %c0_243 = arith.constant 0 : index
    %c0_244 = arith.constant 0 : index
    %208 = vector.load %arg6[%c10_242, %c0_243, %c0_244] : memref<17x256x256xbf16, #tpu.memory_space<vmem>>, vector<1x256x256xbf16>
    %209 = vector.shape_cast %208 : vector<1x256x256xbf16> to vector<256x256xbf16>
    %210 = arith.truncf %207 : vector<16x256xf32> to vector<16x256xbf16>
    %cst_245 = arith.constant dense<0.000000e+00> : vector<16x256xf32>
    %211 = tpu.matmul %210, %209, %cst_245 {dimension_numbers = #tpu.dot_dimension_numbers<[1], [0], [0], [1], [0, 0, 1, 1], [], []>} : vector<16x256xbf16>, vector<256x256xbf16>, vector<16x256xf32> -> vector<16x256xf32>
    %c0_246 = arith.constant 0 : index
    %c0_247 = arith.constant 0 : index
    %212 = vector.load %arg13[%c0_246, %c0_247] : memref<16x256xf32, #tpu.memory_space<vmem>>, vector<16x256xf32>
    %213 = arith.addf %212, %211 : vector<16x256xf32>
    %c0_248 = arith.constant 0 : index
    %c0_249 = arith.constant 0 : index
    %214 = vector.load %arg13[%c0_248, %c0_249] : memref<16x256xf32, #tpu.memory_space<vmem>>, vector<16x256xf32>
    tpu.vector_store %arg13[%c0_248, %c0_249], %213 {strides = array<i32>} : memref<16x256xf32, #tpu.memory_space<vmem>>, vector<16x256xf32>,
    %c0_250 = arith.constant 0 : index
    %c11 = arith.constant 11 : index
    %c0_251 = arith.constant 0 : index
    %215 = vector.load %arg11[%c0_250, %c11, %c0_251] : memref<1x32x256xf32, #tpu.memory_space<vmem>>, vector<1x16x256xf32>
    %216 = vector.shape_cast %215 : vector<1x16x256xf32> to vector<16x256xf32>
    %c11_252 = arith.constant 11 : index
    %c0_253 = arith.constant 0 : index
    %c0_254 = arith.constant 0 : index
    %217 = vector.load %arg6[%c11_252, %c0_253, %c0_254] : memref<17x256x256xbf16, #tpu.memory_space<vmem>>, vector<1x256x256xbf16>
    %218 = vector.shape_cast %217 : vector<1x256x256xbf16> to vector<256x256xbf16>
    %219 = arith.truncf %216 : vector<16x256xf32> to vector<16x256xbf16>
    %cst_255 = arith.constant dense<0.000000e+00> : vector<16x256xf32>
    %220 = tpu.matmul %219, %218, %cst_255 {dimension_numbers = #tpu.dot_dimension_numbers<[1], [0], [0], [1], [0, 0, 1, 1], [], []>} : vector<16x256xbf16>, vector<256x256xbf16>, vector<16x256xf32> -> vector<16x256xf32>
    %c0_256 = arith.constant 0 : index
    %c0_257 = arith.constant 0 : index
    %221 = vector.load %arg13[%c0_256, %c0_257] : memref<16x256xf32, #tpu.memory_space<vmem>>, vector<16x256xf32>
    %222 = arith.addf %221, %220 : vector<16x256xf32>
    %c0_258 = arith.constant 0 : index
    %c0_259 = arith.constant 0 : index
    %223 = vector.load %arg13[%c0_258, %c0_259] : memref<16x256xf32, #tpu.memory_space<vmem>>, vector<16x256xf32>
    tpu.vector_store %arg13[%c0_258, %c0_259], %222 {strides = array<i32>} : memref<16x256xf32, #tpu.memory_space<vmem>>, vector<16x256xf32>,
    %c0_260 = arith.constant 0 : index
    %c12 = arith.constant 12 : index
    %c0_261 = arith.constant 0 : index
    %224 = vector.load %arg11[%c0_260, %c12, %c0_261] : memref<1x32x256xf32, #tpu.memory_space<vmem>>, vector<1x16x256xf32>
    %225 = vector.shape_cast %224 : vector<1x16x256xf32> to vector<16x256xf32>
    %c12_262 = arith.constant 12 : index
    %c0_263 = arith.constant 0 : index
    %c0_264 = arith.constant 0 : index
    %226 = vector.load %arg6[%c12_262, %c0_263, %c0_264] : memref<17x256x256xbf16, #tpu.memory_space<vmem>>, vector<1x256x256xbf16>
    %227 = vector.shape_cast %226 : vector<1x256x256xbf16> to vector<256x256xbf16>
    %228 = arith.truncf %225 : vector<16x256xf32> to vector<16x256xbf16>
    %cst_265 = arith.constant dense<0.000000e+00> : vector<16x256xf32>
    %229 = tpu.matmul %228, %227, %cst_265 {dimension_numbers = #tpu.dot_dimension_numbers<[1], [0], [0], [1], [0, 0, 1, 1], [], []>} : vector<16x256xbf16>, vector<256x256xbf16>, vector<16x256xf32> -> vector<16x256xf32>
    %c0_266 = arith.constant 0 : index
    %c0_267 = arith.constant 0 : index
    %230 = vector.load %arg13[%c0_266, %c0_267] : memref<16x256xf32, #tpu.memory_space<vmem>>, vector<16x256xf32>
    %231 = arith.addf %230, %229 : vector<16x256xf32>
    %c0_268 = arith.constant 0 : index
    %c0_269 = arith.constant 0 : index
    %232 = vector.load %arg13[%c0_268, %c0_269] : memref<16x256xf32, #tpu.memory_space<vmem>>, vector<16x256xf32>
    tpu.vector_store %arg13[%c0_268, %c0_269], %231 {strides = array<i32>} : memref<16x256xf32, #tpu.memory_space<vmem>>, vector<16x256xf32>,
    %c0_270 = arith.constant 0 : index
    %c13 = arith.constant 13 : index
    %c0_271 = arith.constant 0 : index
    %233 = vector.load %arg11[%c0_270, %c13, %c0_271] : memref<1x32x256xf32, #tpu.memory_space<vmem>>, vector<1x16x256xf32>
    %234 = vector.shape_cast %233 : vector<1x16x256xf32> to vector<16x256xf32>
    %c13_272 = arith.constant 13 : index
    %c0_273 = arith.constant 0 : index
    %c0_274 = arith.constant 0 : index
    %235 = vector.load %arg6[%c13_272, %c0_273, %c0_274] : memref<17x256x256xbf16, #tpu.memory_space<vmem>>, vector<1x256x256xbf16>
    %236 = vector.shape_cast %235 : vector<1x256x256xbf16> to vector<256x256xbf16>
    %237 = arith.truncf %234 : vector<16x256xf32> to vector<16x256xbf16>
    %cst_275 = arith.constant dense<0.000000e+00> : vector<16x256xf32>
    %238 = tpu.matmul %237, %236, %cst_275 {dimension_numbers = #tpu.dot_dimension_numbers<[1], [0], [0], [1], [0, 0, 1, 1], [], []>} : vector<16x256xbf16>, vector<256x256xbf16>, vector<16x256xf32> -> vector<16x256xf32>
    %c0_276 = arith.constant 0 : index
    %c0_277 = arith.constant 0 : index
    %239 = vector.load %arg13[%c0_276, %c0_277] : memref<16x256xf32, #tpu.memory_space<vmem>>, vector<16x256xf32>
    %240 = arith.addf %239, %238 : vector<16x256xf32>
    %c0_278 = arith.constant 0 : index
    %c0_279 = arith.constant 0 : index
    %241 = vector.load %arg13[%c0_278, %c0_279] : memref<16x256xf32, #tpu.memory_space<vmem>>, vector<16x256xf32>
    tpu.vector_store %arg13[%c0_278, %c0_279], %240 {strides = array<i32>} : memref<16x256xf32, #tpu.memory_space<vmem>>, vector<16x256xf32>,
    %c0_280 = arith.constant 0 : index
    %c14 = arith.constant 14 : index
    %c0_281 = arith.constant 0 : index
    %242 = vector.load %arg11[%c0_280, %c14, %c0_281] : memref<1x32x256xf32, #tpu.memory_space<vmem>>, vector<1x16x256xf32>
    %243 = vector.shape_cast %242 : vector<1x16x256xf32> to vector<16x256xf32>
    %c14_282 = arith.constant 14 : index
    %c0_283 = arith.constant 0 : index
    %c0_284 = arith.constant 0 : index
    %244 = vector.load %arg6[%c14_282, %c0_283, %c0_284] : memref<17x256x256xbf16, #tpu.memory_space<vmem>>, vector<1x256x256xbf16>
    %245 = vector.shape_cast %244 : vector<1x256x256xbf16> to vector<256x256xbf16>
    %246 = arith.truncf %243 : vector<16x256xf32> to vector<16x256xbf16>
    %cst_285 = arith.constant dense<0.000000e+00> : vector<16x256xf32>
    %247 = tpu.matmul %246, %245, %cst_285 {dimension_numbers = #tpu.dot_dimension_numbers<[1], [0], [0], [1], [0, 0, 1, 1], [], []>} : vector<16x256xbf16>, vector<256x256xbf16>, vector<16x256xf32> -> vector<16x256xf32>
    %c0_286 = arith.constant 0 : index
    %c0_287 = arith.constant 0 : index
    %248 = vector.load %arg13[%c0_286, %c0_287] : memref<16x256xf32, #tpu.memory_space<vmem>>, vector<16x256xf32>
    %249 = arith.addf %248, %247 : vector<16x256xf32>
    %c0_288 = arith.constant 0 : index
    %c0_289 = arith.constant 0 : index
    %250 = vector.load %arg13[%c0_288, %c0_289] : memref<16x256xf32, #tpu.memory_space<vmem>>, vector<16x256xf32>
    tpu.vector_store %arg13[%c0_288, %c0_289], %249 {strides = array<i32>} : memref<16x256xf32, #tpu.memory_space<vmem>>, vector<16x256xf32>,
    %c0_290 = arith.constant 0 : index
    %c15 = arith.constant 15 : index
    %c0_291 = arith.constant 0 : index
    %251 = vector.load %arg11[%c0_290, %c15, %c0_291] : memref<1x32x256xf32, #tpu.memory_space<vmem>>, vector<1x16x256xf32>
    %252 = vector.shape_cast %251 : vector<1x16x256xf32> to vector<16x256xf32>
    %c15_292 = arith.constant 15 : index
    %c0_293 = arith.constant 0 : index
    %c0_294 = arith.constant 0 : index
    %253 = vector.load %arg6[%c15_292, %c0_293, %c0_294] : memref<17x256x256xbf16, #tpu.memory_space<vmem>>, vector<1x256x256xbf16>
    %254 = vector.shape_cast %253 : vector<1x256x256xbf16> to vector<256x256xbf16>
    %255 = arith.truncf %252 : vector<16x256xf32> to vector<16x256xbf16>
    %cst_295 = arith.constant dense<0.000000e+00> : vector<16x256xf32>
    %256 = tpu.matmul %255, %254, %cst_295 {dimension_numbers = #tpu.dot_dimension_numbers<[1], [0], [0], [1], [0, 0, 1, 1], [], []>} : vector<16x256xbf16>, vector<256x256xbf16>, vector<16x256xf32> -> vector<16x256xf32>
    %c0_296 = arith.constant 0 : index
    %c0_297 = arith.constant 0 : index
    %257 = vector.load %arg13[%c0_296, %c0_297] : memref<16x256xf32, #tpu.memory_space<vmem>>, vector<16x256xf32>
    %258 = arith.addf %257, %256 : vector<16x256xf32>
    %c0_298 = arith.constant 0 : index
    %c0_299 = arith.constant 0 : index
    %259 = vector.load %arg13[%c0_298, %c0_299] : memref<16x256xf32, #tpu.memory_space<vmem>>, vector<16x256xf32>
    tpu.vector_store %arg13[%c0_298, %c0_299], %258 {strides = array<i32>} : memref<16x256xf32, #tpu.memory_space<vmem>>, vector<16x256xf32>,
    %c0_300 = arith.constant 0 : index
    %c16 = arith.constant 16 : index
    %c0_301 = arith.constant 0 : index
    %260 = vector.load %arg11[%c0_300, %c16, %c0_301] : memref<1x32x256xf32, #tpu.memory_space<vmem>>, vector<1x16x256xf32>
    %261 = vector.shape_cast %260 : vector<1x16x256xf32> to vector<16x256xf32>
    %c16_302 = arith.constant 16 : index
    %c0_303 = arith.constant 0 : index
    %c0_304 = arith.constant 0 : index
    %262 = vector.load %arg6[%c16_302, %c0_303, %c0_304] : memref<17x256x256xbf16, #tpu.memory_space<vmem>>, vector<1x256x256xbf16>
    %263 = vector.shape_cast %262 : vector<1x256x256xbf16> to vector<256x256xbf16>
    %264 = arith.truncf %261 : vector<16x256xf32> to vector<16x256xbf16>
    %cst_305 = arith.constant dense<0.000000e+00> : vector<16x256xf32>
    %265 = tpu.matmul %264, %263, %cst_305 {dimension_numbers = #tpu.dot_dimension_numbers<[1], [0], [0], [1], [0, 0, 1, 1], [], []>} : vector<16x256xbf16>, vector<256x256xbf16>, vector<16x256xf32> -> vector<16x256xf32>
    %c0_306 = arith.constant 0 : index
    %c0_307 = arith.constant 0 : index
    %266 = vector.load %arg13[%c0_306, %c0_307] : memref<16x256xf32, #tpu.memory_space<vmem>>, vector<16x256xf32>
    %267 = arith.addf %266, %265 : vector<16x256xf32>
    %c0_308 = arith.constant 0 : index
    %c0_309 = arith.constant 0 : index
    %268 = vector.load %arg13[%c0_308, %c0_309] : memref<16x256xf32, #tpu.memory_space<vmem>>, vector<16x256xf32>
    tpu.vector_store %arg13[%c0_308, %c0_309], %267 {strides = array<i32>} : memref<16x256xf32, #tpu.memory_space<vmem>>, vector<16x256xf32>,
    %c0_310 = arith.constant 0 : index
    %c0_311 = arith.constant 0 : index
    %269 = vector.load %arg13[%c0_310, %c0_311] : memref<16x256xf32, #tpu.memory_space<vmem>>, vector<16x256xf32>
    %c0_312 = arith.constant 0 : index
    %c0_313 = arith.constant 0 : index
    %270 = vector.load %arg7[%c0_312, %c0_313] : memref<1x256xf32, #tpu.memory_space<vmem>>, vector<1x256xf32>
    %271 = vector.broadcast %270 : vector<1x256xf32> to vector<16x256xf32>
    %272 = arith.addf %269, %271 : vector<16x256xf32>
    %cst_314 = arith.constant 0.000000e+00 : f32
    %273 = vector.broadcast %cst_314 : f32 to vector<16x256xf32>
    %274 = arith.maximumf %272, %273 : vector<16x256xf32>
    %c0_315 = arith.constant 0 : index
    %c0_316 = arith.constant 0 : index
    %c0_317 = arith.constant 0 : index
    %275 = vector.load %arg9[%c0_315, %c0_316, %c0_317] : memref<1x16x256xf32, #tpu.memory_space<vmem>>, vector<1x16x256xf32>
    %276 = vector.shape_cast %274 : vector<16x256xf32> to vector<1x16x256xf32>
    %277 = arith.addf %275, %276 : vector<1x16x256xf32>
    %c0_318 = arith.constant 0 : index
    %c0_319 = arith.constant 0 : index
    %c0_320 = arith.constant 0 : index
    %278 = vector.load %arg9[%c0_318, %c0_319, %c0_320] : memref<1x16x256xf32, #tpu.memory_space<vmem>>, vector<1x16x256xf32>
    tpu.vector_store %arg9[%c0_318, %c0_319, %c0_320], %277 {strides = array<i32>} : memref<1x16x256xf32, #tpu.memory_space<vmem>>, vector<1x16x256xf32>,
    return
  }
  func.func @transform_0(%arg0: i32) -> (i32, i32, i32) {
    %c0_i32 = arith.constant 0 : i32
    %c0_i32_0 = arith.constant 0 : i32
    %c0_i32_1 = arith.constant 0 : i32
    return %arg0, %c0_i32, %c0_i32_0 : i32, i32, i32
  }
  func.func @transform_1(%arg0: i32) -> (i32, i32) {
    %c0_i32 = arith.constant 0 : i32
    %c0_i32_0 = arith.constant 0 : i32
    %c0_i32_1 = arith.constant 0 : i32
    return %c0_i32, %c0_i32_0 : i32, i32
  }
  func.func @transform_2(%arg0: i32) -> (i32, i32) {
    %c0_i32 = arith.constant 0 : i32
    %c0_i32_0 = arith.constant 0 : i32
    %c0_i32_1 = arith.constant 0 : i32
    return %c0_i32, %c0_i32_0 : i32, i32
  }
  func.func @transform_3(%arg0: i32) -> (i32, i32, i32) {
    %c0_i32 = arith.constant 0 : i32
    %c0_i32_0 = arith.constant 0 : i32
    %c0_i32_1 = arith.constant 0 : i32
    %c0_i32_2 = arith.constant 0 : i32
    return %c0_i32, %c0_i32_0, %c0_i32_1 : i32, i32, i32
  }
  func.func @transform_4(%arg0: i32) -> (i32, i32) {
    %c0_i32 = arith.constant 0 : i32
    %c0_i32_0 = arith.constant 0 : i32
    %c0_i32_1 = arith.constant 0 : i32
    return %c0_i32, %c0_i32_0 : i32, i32
  }
  func.func @transform_5(%arg0: i32) -> (i32, i32, i32) {
    %c0_i32 = arith.constant 0 : i32
    %c0_i32_0 = arith.constant 0 : i32
    %c0_i32_1 = arith.constant 0 : i32
    %c0_i32_2 = arith.constant 0 : i32
    return %c0_i32, %c0_i32_0, %c0_i32_1 : i32, i32, i32
  }
  func.func @transform_6(%arg0: i32) -> (i32, i32) {
    %c0_i32 = arith.constant 0 : i32
    %c0_i32_0 = arith.constant 0 : i32
    %c0_i32_1 = arith.constant 0 : i32
    return %c0_i32, %c0_i32_0 : i32, i32
  }
  func.func @transform_7(%arg0: i32) -> (i32, i32, i32) {
    %c0_i32 = arith.constant 0 : i32
    %c0_i32_0 = arith.constant 0 : i32
    %c0_i32_1 = arith.constant 0 : i32
    return %arg0, %c0_i32, %c0_i32_0 : i32, i32, i32
  }
  func.func @transform_8(%arg0: i32) -> (i32, i32, i32) {
    %c0_i32 = arith.constant 0 : i32
    %c0_i32_0 = arith.constant 0 : i32
    %c0_i32_1 = arith.constant 0 : i32
    return %arg0, %c0_i32, %c0_i32_0 : i32, i32, i32
  }
}

</mosaic_0001>

<llo_original>
// kernel: tile.33
$region0: #{tile.33}
  #allocation0 [shape = 's32[1]{0}', space=sflag, size = 0x4, scoped, tag = 'scoped memory for tile.33']
  %s0 = inlined_call_operand.vmem [shape: f32[16], index: 0, kind: input, shape index: {}]
  %s1 = inlined_call_operand.vmem [shape: f32[16,16], index: 1, kind: output, shape index: {}]
  // Predicated region
  $region2: #{tile.33} parent=0 // pred_check
    _
  $region3: #{tile.33} parent=0 // pred_check_branch
    %3 = sbr.rel (0) target = $region5
  $region4: #{tile.33} parent=0 // pred_region
    _
  $region5: #{tile.33} parent=0 // pred_fallthru
    _
  %v4 = vld [vmem:[%s0] ss:$0 sm:$0xff]
  %5 = vst [vmem:[%s1] sm:$0xff] %v4
  %s6 = scalar_lea.vmem %s1, 8
  %7 = vst [vmem:[%s6] sm:$0xff] %v4

// kernel: tile.34
$region0: #{tile.34}
  %s0 = inlined_call_operand.vmem [shape: f32[16,16], index: 0, kind: input, shape index: {}]
  %s1 = inlined_call_operand.vmem [shape: f32[256], index: 1, kind: output, shape index: {}]
  $region1: #{tile.34} parent=0
    #allocation0 [shape = 'u8[4096]{0}', space=vmem, size = 0x1000, scoped, tag = 'scoped mem for output reshape']
    %s2 = smov 3
    %v3 = vld [vmem:[%s0] ss:$8 sm:%s2]
    %vm4 = vcmask 130048
    %5 = vst.msk [vmem:[#allocation0] sm:$0x3] %vm4, %v3
    %s6 = scalar_lea.vmem %s0, 7
    %s7 = smov 3
    %v8 = vld [vmem:[%s6] ss:$8 sm:%s7]
    %9 = vrot.lane.b32.xlu0 %v8, 112
    %v10 = vpop.permute.xlu0 %9
    %vm11 = vcmask 1048448
    %12 = vst.msk [vmem:[#allocation0] sm:$0x3] %vm11, %v10
    %s13 = scalar_lea.vmem %s0, 6
    %s14 = smov 3
    %v15 = vld [vmem:[%s13] ss:$8 sm:%s14]
    %16 = vrot.lane.b32.xlu0 %v15, 96
    %v17 = vpop.permute.xlu0 %16
    %vm18 = vcmask 917248
    %19 = vst.msk [vmem:[#allocation0] sm:$0x3] %vm18, %v17
    %s20 = scalar_lea.vmem %s0, 5
    %s21 = smov 3
    %v22 = vld [vmem:[%s20] ss:$8 sm:%s21]
    %23 = vrot.lane.b32.xlu0 %v22, 80
    %v24 = vpop.permute.xlu0 %23
    %vm25 = vcmask 786048
    %26 = vst.msk [vmem:[#allocation0] sm:$0x3] %vm25, %v24
    %s27 = scalar_lea.vmem %s0, 4
    %s28 = smov 3
    %v29 = vld [vmem:[%s27] ss:$8 sm:%s28]
    %30 = vrot.lane.b32.xlu0 %v29, 64
    %v31 = vpop.permute.xlu0 %30
    %vm32 = vcmask 654848
    %33 = vst.msk [vmem:[#allocation0] sm:$0x3] %vm32, %v31
    %s34 = scalar_lea.vmem %s0, 3
    %s35 = smov 3
    %v36 = vld [vmem:[%s34] ss:$8 sm:%s35]
    %37 = vrot.lane.b32.xlu0 %v36, 48
    %v38 = vpop.permute.xlu0 %37
    %vm39 = vcmask 523648
    %40 = vst.msk [vmem:[#allocation0] sm:$0x3] %vm39, %v38
    %s41 = scalar_lea.vmem %s0, 2
    %s42 = smov 3
    %v43 = vld [vmem:[%s41] ss:$8 sm:%s42]
    %44 = vrot.lane.b32.xlu0 %v43, 32
    %v45 = vpop.permute.xlu0 %44
    %vm46 = vcmask 392448
    %47 = vst.msk [vmem:[#allocation0] sm:$0x3] %vm46, %v45
    %s48 = scalar_lea.vmem %s0, 1
    %s49 = smov 3
    %v50 = vld [vmem:[%s48] ss:$8 sm:%s49]
    %51 = vrot.lane.b32.xlu0 %v50, 16
    %v52 = vpop.permute.xlu0 %51
    %vm53 = vcmask 261248
    %54 = vst.msk [vmem:[#allocation0] sm:$0x3] %vm53, %v52
    %s56 = sshllo.u32 0, 2
    %v58 = vld [vmem:[#allocation0] sm:%s56]
    %s59 = sshllo.u32 0, 2
    %60 = vst [vmem:[%s1] sm:%s59] %v58

// kernel: tile.44
$region0: #{tile.44}
  %s0 = inlined_call_operand.vmem [shape: f32[16,16], index: 0, kind: input, shape index: {}]
  %s1 = inlined_call_operand.vmem [shape: f32[1,256], index: 1, kind: output, shape index: {}]
  $region1: #{tile.44} parent=0
    #allocation0 [shape = 'u8[8192]{0}', space=vmem, size = 0x2000, scoped, tag = 'scoped mem for output reshape']
    %s2 = smov 3
    %v3 = vld [vmem:[%s0] ss:$8 sm:%s2]
    %vm4 = vcmask 130048
    %5 = vst.msk [vmem:[#allocation0] ss:$8 sm:$0x3] %vm4, %v3
    %s6 = scalar_lea.vmem %s0, 7
    %s7 = smov 3
    %v8 = vld [vmem:[%s6] ss:$8 sm:%s7]
    %9 = vrot.lane.b32.xlu0 %v8, 112
    %v10 = vpop.permute.xlu0 %9
    %vm11 = vcmask 1048448
    %12 = vst.msk [vmem:[#allocation0] ss:$8 sm:$0x3] %vm11, %v10
    %s13 = scalar_lea.vmem %s0, 6
    %s14 = smov 3
    %v15 = vld [vmem:[%s13] ss:$8 sm:%s14]
    %16 = vrot.lane.b32.xlu0 %v15, 96
    %v17 = vpop.permute.xlu0 %16
    %vm18 = vcmask 917248
    %19 = vst.msk [vmem:[#allocation0] ss:$8 sm:$0x3] %vm18, %v17
    %s20 = scalar_lea.vmem %s0, 5
    %s21 = smov 3
    %v22 = vld [vmem:[%s20] ss:$8 sm:%s21]
    %23 = vrot.lane.b32.xlu0 %v22, 80
    %v24 = vpop.permute.xlu0 %23
    %vm25 = vcmask 786048
    %26 = vst.msk [vmem:[#allocation0] ss:$8 sm:$0x3] %vm25, %v24
    %s27 = scalar_lea.vmem %s0, 4
    %s28 = smov 3
    %v29 = vld [vmem:[%s27] ss:$8 sm:%s28]
    %30 = vrot.lane.b32.xlu0 %v29, 64
    %v31 = vpop.permute.xlu0 %30
    %vm32 = vcmask 654848
    %33 = vst.msk [vmem:[#allocation0] ss:$8 sm:$0x3] %vm32, %v31
    %s34 = scalar_lea.vmem %s0, 3
    %s35 = smov 3
    %v36 = vld [vmem:[%s34] ss:$8 sm:%s35]
    %37 = vrot.lane.b32.xlu0 %v36, 48
    %v38 = vpop.permute.xlu0 %37
    %vm39 = vcmask 523648
    %40 = vst.msk [vmem:[#allocation0] ss:$8 sm:$0x3] %vm39, %v38
    %s41 = scalar_lea.vmem %s0, 2
    %s42 = smov 3
    %v43 = vld [vmem:[%s41] ss:$8 sm:%s42]
    %44 = vrot.lane.b32.xlu0 %v43, 32
    %v45 = vpop.permute.xlu0 %44
    %vm46 = vcmask 392448
    %47 = vst.msk [vmem:[#allocation0] ss:$8 sm:$0x3] %vm46, %v45
    %s48 = scalar_lea.vmem %s0, 1
    %s49 = smov 3
    %v50 = vld [vmem:[%s48] ss:$8 sm:%s49]
    %51 = vrot.lane.b32.xlu0 %v50, 16
    %v52 = vpop.permute.xlu0 %51
    %vm53 = vcmask 261248
    %54 = vst.msk [vmem:[#allocation0] ss:$8 sm:$0x3] %vm53, %v52
    %s56 = sshllo.u32 0, 1
    %v58 = vld [vmem:[#allocation0] sm:%s56]
    %s59 = sshllo.u32 0, 1
    %60 = vst [vmem:[%s1] sm:%s59] %v58
    %s61 = scalar_lea.vmem [#allocation0], 8
    %v62 = vld [vmem:[%s61] sm:%s56]
    %s63 = sshllo.u32 0, 1
    %s64 = scalar_lea.vmem %s1, 1
    %65 = vst [vmem:[%s64] sm:%s63] %v62

// kernel: tcn_gcn_unit_multiscale.1
$region0: #{tcn_gcn_unit_multiscale.1}
  #allocation0 [shape = 'u32[]', space=smem, size = 0x4, offset = 0x4, fixed_abs, tag = 'smem constant byte address 0x4 - core index']
  #allocation1 [shape = 'u32[144,128]{1,0:T(1,128)}', space=vmem, size = 0x12000, scoped, tag = 'internal scratch']
  #allocation2 [shape = 'f32[1,24,256]{2,1,0:T(8,128)}', space=vmem, size = 0x6000, scoped, tag = 'scratch operand']
  #allocation3 [shape = 'f32[1,32,256]{2,1,0:T(8,128)}', space=vmem, size = 0x8000, scoped, tag = 'scratch operand']
  #allocation4 [shape = 'f32[16,256]{1,0:T(8,128)}', space=vmem, size = 0x4000, scoped, tag = 'scratch operand']
  #allocation5 [shape = 'f32[16,256]{1,0:T(8,128)}', space=vmem, size = 0x4000, scoped, tag = 'scratch operand']
  %s0 = inlined_call_operand.vmem [shape: bf16[2,16,64], index: 0, kind: input, shape index: {}]
  %s1 = inlined_call_operand.vmem [shape: bf16[64,1024], index: 1, kind: input, shape index: {}]
  %s2 = inlined_call_operand.vmem [shape: f32[1,1024], index: 2, kind: input, shape index: {}]
  %s3 = inlined_call_operand.vmem [shape: bf16[9,256,256], index: 3, kind: input, shape index: {}]
  %s4 = inlined_call_operand.vmem [shape: f32[1,256], index: 4, kind: input, shape index: {}]
  %s5 = inlined_call_operand.vmem [shape: bf16[17,256,256], index: 5, kind: input, shape index: {}]
  %s6 = inlined_call_operand.vmem [shape: f32[1,256], index: 6, kind: input, shape index: {}]
  %s7 = inlined_call_operand.vmem [shape: f32[2,16,256], index: 7, kind: output, shape index: {0}]
  %s8 = inlined_call_operand.vmem [shape: f32[2,16,256], index: 8, kind: output, shape index: {1}]
  %9 = xla_tuple %s7, %s8
  %s10 = sld [smem:[#allocation0]]
  $region69: #{tcn_gcn_unit_multiscale.1} parent=0
    _
  %s12 = ssub.s32 1, %s10
  %s13 = scalar_select 0, %s12, %s10
  loop: start=0, step=1, limit=4
  $region2: #{tcn_gcn_unit_multiscale.1} parent=0 // loop_pre_header
    _
  $region3: #{tcn_gcn_unit_multiscale.1} parent=0 // loop_header
    %s15 = sphi 0, %s19
    %p16 = scmp.ge.s32.totalorder %s15, 4
    %s25 = sphi 0, %s27
    %s28 = sphi 0, %s25
    %s29 = sphi 0, %s28
    %s45 = sphi 0, %s29
    %s49 = sphi 0, %s49
    %s51 = sphi 0, %s49
    %s52 = sphi 0, %s51
    %s66 = sphi 0, %s52
    %s70 = sphi 0, %s70
    %s72 = sphi 0, %s70
    %s73 = sphi 0, %s72
    %s87 = sphi 0, %s73
    %s91 = sphi 0, %s91
    %s93 = sphi 0, %s91
    %s94 = sphi 0, %s93
    %s108 = sphi 0, %s94
    %s112 = sphi 0, %s112
    %s114 = sphi 0, %s112
    %s115 = sphi 0, %s114
    %s129 = sphi 0, %s115
    %s133 = sphi 0, %s133
    %s135 = sphi 0, %s133
    %s136 = sphi 0, %s135
    %s150 = sphi 0, %s136
    %s154 = sphi 0, %s154
    %s156 = sphi 0, %s154
    %s157 = sphi 0, %s156
    %s171 = sphi 0, %s157
    %s177 = sphi 0, %s179
    %s180 = sphi 0, %s177
    %s181 = sphi 0, %s180
    %s197 = sphi 0, %s181
    %s203 = sphi 0, %s205
    %s206 = sphi 0, %s203
    %s207 = sphi 0, %s206
    %s223 = sphi 0, %s207
  $region4: #{tcn_gcn_unit_multiscale.1} parent=0 // loop_header_branch
    %18 = sbr.rel (%p16) target = $region8
  $region5: #{tcn_gcn_unit_multiscale.1} parent=0 // loop_body
    %s20 = ssub.s32 %s15, 1
    %s21 = ssub.s32 %s15, 2
    %s22 = sadd.s32 %s15, 1
    %s23 = ssub.s32 %s15, %s22
    %p24 = scmp.eq.s32.totalorder %s23, 0
    %s26 = sadd.s32 %s25, 1
    %s27 = scalar_select %p24, %s25, %s26
    %p30 = pneg %p24
    %p31 = scmp.eq.s32.totalorder %s15, 1
    %p32 = por %p30, %p31
    %p33 = scmp.ne.s32.totalorder %s25, %s28
    %p34 = scmp.eq.s32.totalorder %s15, 0
    %p35 = por %p33, %p34
    %p36 = scmp.ne.s32.totalorder %s25, %s28
    %p37 = scmp.eq.s32.totalorder %s20, 1
    %p38 = por %p36, %p37
    %p39 = scmp.ne.s32.totalorder %s28, %s29
    %p40 = scmp.eq.s32.totalorder %s20, 0
    %p41 = por %p39, %p40
    %p42 = scmp.ne.s32.totalorder %s28, %s29
    %p43 = scmp.eq.s32.totalorder %s21, 1
    %p44 = por %p42, %p43
    %p46 = scmp.ne.s32.totalorder %s29, %s45
    %p47 = scmp.eq.s32.totalorder %s21, 0
    %p48 = por %p46, %p47
    %s50 = sadd.s32 %s49, 1
    %p53 = scmp.eq.s32.totalorder %s15, 1
    %p54 = scmp.ne.s32.totalorder %s49, %s51
    %p55 = scmp.eq.s32.totalorder %s15, 0
    %p56 = por %p54, %p55
    %p57 = scmp.ne.s32.totalorder %s49, %s51
    %p58 = scmp.eq.s32.totalorder %s20, 1
    %p59 = por %p57, %p58
    %p60 = scmp.ne.s32.totalorder %s51, %s52
    %p61 = scmp.eq.s32.totalorder %s20, 0
    %p62 = por %p60, %p61
    %p63 = scmp.ne.s32.totalorder %s51, %s52
    %p64 = scmp.eq.s32.totalorder %s21, 1
    %p65 = por %p63, %p64
    %p67 = scmp.ne.s32.totalorder %s52, %s66
    %p68 = scmp.eq.s32.totalorder %s21, 0
    %p69 = por %p67, %p68
    %s71 = sadd.s32 %s70, 1
    %p74 = scmp.eq.s32.totalorder %s15, 1
    %p75 = scmp.ne.s32.totalorder %s70, %s72
    %p76 = scmp.eq.s32.totalorder %s15, 0
    %p77 = por %p75, %p76
    %p78 = scmp.ne.s32.totalorder %s70, %s72
    %p79 = scmp.eq.s32.totalorder %s20, 1
    %p80 = por %p78, %p79
    %p81 = scmp.ne.s32.totalorder %s72, %s73
    %p82 = scmp.eq.s32.totalorder %s20, 0
    %p83 = por %p81, %p82
    %p84 = scmp.ne.s32.totalorder %s72, %s73
    %p85 = scmp.eq.s32.totalorder %s21, 1
    %p86 = por %p84, %p85
    %p88 = scmp.ne.s32.totalorder %s73, %s87
    %p89 = scmp.eq.s32.totalorder %s21, 0
    %p90 = por %p88, %p89
    %s92 = sadd.s32 %s91, 1
    %p95 = scmp.eq.s32.totalorder %s15, 1
    %p96 = scmp.ne.s32.totalorder %s91, %s93
    %p97 = scmp.eq.s32.totalorder %s15, 0
    %p98 = por %p96, %p97
    %p99 = scmp.ne.s32.totalorder %s91, %s93
    %p100 = scmp.eq.s32.totalorder %s20, 1
    %p101 = por %p99, %p100
    %p102 = scmp.ne.s32.totalorder %s93, %s94
    %p103 = scmp.eq.s32.totalorder %s20, 0
    %p104 = por %p102, %p103
    %p105 = scmp.ne.s32.totalorder %s93, %s94
    %p106 = scmp.eq.s32.totalorder %s21, 1
    %p107 = por %p105, %p106
    %p109 = scmp.ne.s32.totalorder %s94, %s108
    %p110 = scmp.eq.s32.totalorder %s21, 0
    %p111 = por %p109, %p110
    %s113 = sadd.s32 %s112, 1
    %p116 = scmp.eq.s32.totalorder %s15, 1
    %p117 = scmp.ne.s32.totalorder %s112, %s114
    %p118 = scmp.eq.s32.totalorder %s15, 0
    %p119 = por %p117, %p118
    %p120 = scmp.ne.s32.totalorder %s112, %s114
    %p121 = scmp.eq.s32.totalorder %s20, 1
    %p122 = por %p120, %p121
    %p123 = scmp.ne.s32.totalorder %s114, %s115
    %p124 = scmp.eq.s32.totalorder %s20, 0
    %p125 = por %p123, %p124
    %p126 = scmp.ne.s32.totalorder %s114, %s115
    %p127 = scmp.eq.s32.totalorder %s21, 1
    %p128 = por %p126, %p127
    %p130 = scmp.ne.s32.totalorder %s115, %s129
    %p131 = scmp.eq.s32.totalorder %s21, 0
    %p132 = por %p130, %p131
    %s134 = sadd.s32 %s133, 1
    %p137 = scmp.eq.s32.totalorder %s15, 1
    %p138 = scmp.ne.s32.totalorder %s133, %s135
    %p139 = scmp.eq.s32.totalorder %s15, 0
    %p140 = por %p138, %p139
    %p141 = scmp.ne.s32.totalorder %s133, %s135
    %p142 = scmp.eq.s32.totalorder %s20, 1
    %p143 = por %p141, %p142
    %p144 = scmp.ne.s32.totalorder %s135, %s136
    %p145 = scmp.eq.s32.totalorder %s20, 0
    %p146 = por %p144, %p145
    %p147 = scmp.ne.s32.totalorder %s135, %s136
    %p148 = scmp.eq.s32.totalorder %s21, 1
    %p149 = por %p147, %p148
    %p151 = scmp.ne.s32.totalorder %s136, %s150
    %p152 = scmp.eq.s32.totalorder %s21, 0
    %p153 = por %p151, %p152
    %s155 = sadd.s32 %s154, 1
    %p158 = scmp.eq.s32.totalorder %s15, 1
    %p159 = scmp.ne.s32.totalorder %s154, %s156
    %p160 = scmp.eq.s32.totalorder %s15, 0
    %p161 = por %p159, %p160
    %p162 = scmp.ne.s32.totalorder %s154, %s156
    %p163 = scmp.eq.s32.totalorder %s20, 1
    %p164 = por %p162, %p163
    %p165 = scmp.ne.s32.totalorder %s156, %s157
    %p166 = scmp.eq.s32.totalorder %s20, 0
    %p167 = por %p165, %p166
    %p168 = scmp.ne.s32.totalorder %s156, %s157
    %p169 = scmp.eq.s32.totalorder %s21, 1
    %p170 = por %p168, %p169
    %p172 = scmp.ne.s32.totalorder %s157, %s171
    %p173 = scmp.eq.s32.totalorder %s21, 0
    %p174 = por %p172, %p173
    %s175 = ssub.s32 %s15, %s22
    %p176 = scmp.eq.s32.totalorder %s175, 0
    %s178 = sadd.s32 %s177, 1
    %s179 = scalar_select %p176, %s177, %s178
    %p182 = pneg %p176
    %p183 = scmp.eq.s32.totalorder %s15, 1
    %p184 = por %p182, %p183
    %p185 = scmp.ne.s32.totalorder %s177, %s180
    %p186 = scmp.eq.s32.totalorder %s15, 0
    %p187 = por %p185, %p186
    %p188 = scmp.ne.s32.totalorder %s177, %s180
    %p189 = scmp.eq.s32.totalorder %s20, 1
    %p190 = por %p188, %p189
    %p191 = scmp.ne.s32.totalorder %s180, %s181
    %p192 = scmp.eq.s32.totalorder %s20, 0
    %p193 = por %p191, %p192
    %p194 = scmp.ne.s32.totalorder %s180, %s181
    %p195 = scmp.eq.s32.totalorder %s21, 1
    %p196 = por %p194, %p195
    %p198 = scmp.ne.s32.totalorder %s181, %s197
    %p199 = scmp.eq.s32.totalorder %s21, 0
    %p200 = por %p198, %p199
    %s201 = ssub.s32 %s15, %s22
    %p202 = scmp.eq.s32.totalorder %s201, 0
    %s204 = sadd.s32 %s203, 1
    %s205 = scalar_select %p202, %s203, %s204
    %p208 = pneg %p202
    %p209 = scmp.eq.s32.totalorder %s15, 1
    %p210 = por %p208, %p209
    %p211 = scmp.ne.s32.totalorder %s203, %s206
    %p212 = scmp.eq.s32.totalorder %s15, 0
    %p213 = por %p211, %p212
    %p214 = scmp.ne.s32.totalorder %s203, %s206
    %p215 = scmp.eq.s32.totalorder %s20, 1
    %p216 = por %p214, %p215
    %p217 = scmp.ne.s32.totalorder %s206, %s207
    %p218 = scmp.eq.s32.totalorder %s20, 0
    %p219 = por %p217, %p218
    %p220 = scmp.ne.s32.totalorder %s206, %s207
    %p221 = scmp.eq.s32.totalorder %s21, 1
    %p222 = por %p220, %p221
    %p224 = scmp.ne.s32.totalorder %s207, %s223
    %p225 = scmp.eq.s32.totalorder %s21, 0
    %p226 = por %p224, %p225
    %p227 = scmp.le.s32.totalorder 1, %s15
    %p228 = scmp.lt.s32.totalorder %s15, 3
    %p229 = pnand %p227, %p228
    %p230 = pneg %p229
    // Predicated region
    $region9: #{tcn_gcn_unit_multiscale.1} parent=5 // pred_check
      _
    $region10: #{tcn_gcn_unit_multiscale.1} parent=5 // pred_check_branch
      %232 = sbr.rel (%p229) target = $region12
    $region11: #{tcn_gcn_unit_multiscale.1} parent=5 // pred_region
      %s233 = ssub.s32 %s15, 1
      // Predicated region
      $region13: #{tcn_gcn_unit_multiscale.1} parent=11 // pred_check
        %p234 = pneg %p62
      $region14: #{tcn_gcn_unit_multiscale.1} parent=11 // pred_check_branch
        %236 = sbr.rel (%p234) target = $region16
      $region15: #{tcn_gcn_unit_multiscale.1} parent=11 // pred_region
        _
      $region16: #{tcn_gcn_unit_multiscale.1} parent=11 // pred_fallthru
        _
      // Predicated region
      $region17: #{tcn_gcn_unit_multiscale.1} parent=11 // pred_check
        %p237 = pneg %p83
      $region18: #{tcn_gcn_unit_multiscale.1} parent=11 // pred_check_branch
        %239 = sbr.rel (%p237) target = $region20
      $region19: #{tcn_gcn_unit_multiscale.1} parent=11 // pred_region
        _
      $region20: #{tcn_gcn_unit_multiscale.1} parent=11 // pred_fallthru
        _
      // Predicated region
      $region21: #{tcn_gcn_unit_multiscale.1} parent=11 // pred_check
        %p240 = pneg %p104
      $region22: #{tcn_gcn_unit_multiscale.1} parent=11 // pred_check_branch
        %242 = sbr.rel (%p240) target = $region24
      $region23: #{tcn_gcn_unit_multiscale.1} parent=11 // pred_region
        _
      $region24: #{tcn_gcn_unit_multiscale.1} parent=11 // pred_fallthru
        _
      // Predicated region
      $region25: #{tcn_gcn_unit_multiscale.1} parent=11 // pred_check
        %p243 = pneg %p125
      $region26: #{tcn_gcn_unit_multiscale.1} parent=11 // pred_check_branch
        %245 = sbr.rel (%p243) target = $region28
      $region27: #{tcn_gcn_unit_multiscale.1} parent=11 // pred_region
        _
      $region28: #{tcn_gcn_unit_multiscale.1} parent=11 // pred_fallthru
        _
      // Predicated region
      $region29: #{tcn_gcn_unit_multiscale.1} parent=11 // pred_check
        %p246 = pneg %p146
      $region30: #{tcn_gcn_unit_multiscale.1} parent=11 // pred_check_branch
        %248 = sbr.rel (%p246) target = $region32
      $region31: #{tcn_gcn_unit_multiscale.1} parent=11 // pred_region
        _
      $region32: #{tcn_gcn_unit_multiscale.1} parent=11 // pred_fallthru
        _
      // Predicated region
      $region33: #{tcn_gcn_unit_multiscale.1} parent=11 // pred_check
        %p249 = pneg %p167
      $region34: #{tcn_gcn_unit_multiscale.1} parent=11 // pred_check_branch
        %251 = sbr.rel (%p249) target = $region36
      $region35: #{tcn_gcn_unit_multiscale.1} parent=11 // pred_region
        _
      $region36: #{tcn_gcn_unit_multiscale.1} parent=11 // pred_fallthru
        _
    $region12: #{tcn_gcn_unit_multiscale.1} parent=5 // pred_fallthru
      _
    %p252 = scmp.lt.s32.totalorder %s15, 2
    // Predicated region
    $region37: #{tcn_gcn_unit_multiscale.1} parent=5 // pred_check
      %p253 = pneg %p252
    $region38: #{tcn_gcn_unit_multiscale.1} parent=5 // pred_check_branch
      %255 = sbr.rel (%p253) target = $region40
    $region39: #{tcn_gcn_unit_multiscale.1} parent=5 // pred_region
      // Predicated region
      $region41: #{tcn_gcn_unit_multiscale.1} parent=39 // pred_check
        %p256 = pneg %p35
      $region42: #{tcn_gcn_unit_multiscale.1} parent=39 // pred_check_branch
        %258 = sbr.rel (%p256) target = $region44
      $region43: #{tcn_gcn_unit_multiscale.1} parent=39 // pred_region
        %p259 = scmp.lt.s32.totalorder %s15, 1
        %s260 = scalar_select %p259, %s15, 1
        %s261 = smul.addr %s260, 2
        %s262 = smul.addr %s261, 4
        %s263 = scalar_lea.vmem %s0, %s262
      $region44: #{tcn_gcn_unit_multiscale.1} parent=39 // pred_fallthru
        _
    $region40: #{tcn_gcn_unit_multiscale.1} parent=5 // pred_fallthru
      _
    %p264 = scmp.le.s32.totalorder 1, %s15
    %p265 = scmp.lt.s32.totalorder %s15, 3
    %p266 = pnand %p264, %p265
    %p267 = pneg %p266
    // Predicated region
    $region45: #{tcn_gcn_unit_multiscale.1} parent=5 // pred_check
      _
    $region46: #{tcn_gcn_unit_multiscale.1} parent=5 // pred_check_branch
      %269 = sbr.rel (%p266) target = $region48
    $region47: #{tcn_gcn_unit_multiscale.1} parent=5 // pred_region
      %s270 = ssub.s32 %s15, 1
      %p271 = scmp.lt.s32.totalorder %s20, 1
      %s272 = scalar_select %p271, %s20, 1
      %s273 = smul.addr %s272, 2
      %s274 = smul.addr %s273, 4
      %s275 = scalar_lea.vmem %s0, %s274
      %p276 = pneg %p41
      %p277 = pneg %p38
      %p278 = pneg %p62
      %p279 = pneg %p59
      %p280 = pneg %p83
      %p281 = pneg %p80
      %p282 = pneg %p104
      %p283 = pneg %p101
      %p284 = pneg %p125
      %p285 = pneg %p122
      %p286 = pneg %p146
      %p287 = pneg %p143
      %p288 = pneg %p167
      %p289 = pneg %p164
      %p290 = pneg %p193
      %p291 = pneg %p190
      %p292 = scmp.lt.s32.totalorder %s20, 1
      %s293 = scalar_select %p292, %s20, 1
      %s294 = smul.addr %s293, 4
      %s295 = smul.addr %s294, 8
      %s296 = scalar_lea.vmem %s7, %s295
      %p297 = pneg %p219
      %p298 = pneg %p216
      %p299 = scmp.lt.s32.totalorder %s20, 1
      %s300 = scalar_select %p299, %s20, 1
      %s301 = smul.addr %s300, 4
      %s302 = smul.addr %s301, 8
      %s303 = scalar_lea.vmem %s8, %s302
      %p304 = scmp.lt.s32.totalorder %s20, 1
      %s305 = scalar_select %p304, %s20, 1
      %s306 = smul.addr %s305, 2
      %s307 = smul.addr %s306, 4
      %s308 = scalar_lea.vmem %s0, %s307
      %p309 = scmp.lt.s32.totalorder %s20, 1
      %s310 = scalar_select %p309, %s20, 1
      %s311 = smul.addr %s310, 4
      %s312 = smul.addr %s311, 8
      %s313 = scalar_lea.vmem %s7, %s312
      %p314 = scmp.lt.s32.totalorder %s20, 1
      %s315 = scalar_select %p314, %s20, 1
      %s316 = smul.addr %s315, 4
      %s317 = smul.addr %s316, 8
      %s318 = scalar_lea.vmem %s8, %s317
      %v320 = vld [vmem:[%s308] sm:$0xf]
      %v321 = vld [vmem:[%s308 + $0x4] sm:$0xf]
      %v322 = vld [vmem:[%s1] sm:$0xff]
      %v323 = vld [vmem:[%s1 + $0x8] sm:$0xff]
      %v324 = vld [vmem:[%s1 + $0x10] sm:$0xff]
      %v325 = vld [vmem:[%s1 + $0x18] sm:$0xff]
      %v326 = vld [vmem:[%s1 + $0x20] sm:$0xff]
      %v327 = vld [vmem:[%s1 + $0x28] sm:$0xff]
      %v328 = vld [vmem:[%s1 + $0x30] sm:$0xff]
      %v329 = vld [vmem:[%s1 + $0x38] sm:$0xff]
      %v330 = vld [vmem:[%s1 + $0x40] sm:$0xff]
      %v331 = vld [vmem:[%s1 + $0x48] sm:$0xff]
      %v332 = vld [vmem:[%s1 + $0x50] sm:$0xff]
      %v333 = vld [vmem:[%s1 + $0x58] sm:$0xff]
      %v334 = vld [vmem:[%s1 + $0x60] sm:$0xff]
      %v335 = vld [vmem:[%s1 + $0x68] sm:$0xff]
      %v336 = vld [vmem:[%s1 + $0x70] sm:$0xff]
      %v337 = vld [vmem:[%s1 + $0x78] sm:$0xff]
      %v338 = vld [vmem:[%s1 + $0x80] sm:$0xff]
      %v339 = vld [vmem:[%s1 + $0x88] sm:$0xff]
      %v340 = vld [vmem:[%s1 + $0x90] sm:$0xff]
      %v341 = vld [vmem:[%s1 + $0x98] sm:$0xff]
      %v342 = vld [vmem:[%s1 + $0xa0] sm:$0xff]
      %v343 = vld [vmem:[%s1 + $0xa8] sm:$0xff]
      %v344 = vld [vmem:[%s1 + $0xb0] sm:$0xff]
      %v345 = vld [vmem:[%s1 + $0xb8] sm:$0xff]
      %v346 = vld [vmem:[%s1 + $0xc0] sm:$0xff]
      %v347 = vld [vmem:[%s1 + $0xc8] sm:$0xff]
      %v348 = vld [vmem:[%s1 + $0xd0] sm:$0xff]
      %v349 = vld [vmem:[%s1 + $0xd8] sm:$0xff]
      %v350 = vld [vmem:[%s1 + $0xe0] sm:$0xff]
      %v351 = vld [vmem:[%s1 + $0xe8] sm:$0xff]
      %v352 = vld [vmem:[%s1 + $0xf0] sm:$0xff]
      %v353 = vld [vmem:[%s1 + $0xf8] sm:$0xff]
      %v354 = vld [vmem:[%s2] sm:$0xff]
      %v356 = vlaneseq
      %v357 = vshrl.u32 %v356, 7
      %v358 = vsub.s32 0, %v357
      %v359 = vrot.slane %v354, %v358
      %v360 = vlaneseq
      %v361 = vshrl.u32 %v360, 7
      %v362 = vsub.s32 1, %v361
      %v363 = vrot.slane %v354, %v362
      %v364 = vlaneseq
      %v365 = vshrl.u32 %v364, 7
      %v366 = vsub.s32 2, %v365
      %v367 = vrot.slane %v354, %v366
      %v368 = vlaneseq
      %v369 = vshrl.u32 %v368, 7
      %v370 = vsub.s32 3, %v369
      %v371 = vrot.slane %v354, %v370
      %v372 = vlaneseq
      %v373 = vshrl.u32 %v372, 7
      %v374 = vsub.s32 4, %v373
      %v375 = vrot.slane %v354, %v374
      %v376 = vlaneseq
      %v377 = vshrl.u32 %v376, 7
      %v378 = vsub.s32 5, %v377
      %v379 = vrot.slane %v354, %v378
      %v380 = vlaneseq
      %v381 = vshrl.u32 %v380, 7
      %v382 = vsub.s32 6, %v381
      %v383 = vrot.slane %v354, %v382
      %v384 = vlaneseq
      %v385 = vshrl.u32 %v384, 7
      %v386 = vsub.s32 7, %v385
      %v387 = vrot.slane %v354, %v386
      %v398 = vunpack.c.l.b16 %v320
      %v399 = vunpack.c.l.b16 %v321
      %v400 = vpack.c.b16 %v399, %v398
      %v433 = vunpack.c.l.b16 %v322
      %v434 = vunpack.c.h.b16 %v322
      %v435 = vunpack.c.l.b16 %v323
      %v436 = vunpack.c.h.b16 %v323
      %v437 = vunpack.c.l.b16 %v324
      %v438 = vunpack.c.h.b16 %v324
      %v439 = vunpack.c.l.b16 %v325
      %v440 = vunpack.c.h.b16 %v325
      %v441 = vunpack.c.l.b16 %v326
      %v442 = vunpack.c.h.b16 %v326
      %v443 = vunpack.c.l.b16 %v327
      %v444 = vunpack.c.h.b16 %v327
      %v445 = vunpack.c.l.b16 %v328
      %v446 = vunpack.c.h.b16 %v328
      %v447 = vunpack.c.l.b16 %v329
      %v448 = vunpack.c.h.b16 %v329
      %v449 = vunpack.c.l.b16 %v330
      %v450 = vunpack.c.h.b16 %v330
      %v451 = vunpack.c.l.b16 %v331
      %v452 = vunpack.c.h.b16 %v331
      %v453 = vunpack.c.l.b16 %v332
      %v454 = vunpack.c.h.b16 %v332
      %v455 = vunpack.c.l.b16 %v333
      %v456 = vunpack.c.h.b16 %v333
      %v457 = vunpack.c.l.b16 %v334
      %v458 = vunpack.c.h.b16 %v334
      %v459 = vunpack.c.l.b16 %v335
      %v460 = vunpack.c.h.b16 %v335
      %v461 = vunpack.c.l.b16 %v336
      %v462 = vunpack.c.h.b16 %v336
      %v463 = vunpack.c.l.b16 %v337
      %v464 = vunpack.c.h.b16 %v337
      %v465 = vunpack.c.l.b16 %v338
      %v466 = vunpack.c.h.b16 %v338
      %v467 = vunpack.c.l.b16 %v339
      %v468 = vunpack.c.h.b16 %v339
      %v469 = vunpack.c.l.b16 %v340
      %v470 = vunpack.c.h.b16 %v340
      %v471 = vunpack.c.l.b16 %v341
      %v472 = vunpack.c.h.b16 %v341
      %v473 = vunpack.c.l.b16 %v342
      %v474 = vunpack.c.h.b16 %v342
      %v475 = vunpack.c.l.b16 %v343
      %v476 = vunpack.c.h.b16 %v343
      %v477 = vunpack.c.l.b16 %v344
      %v478 = vunpack.c.h.b16 %v344
      %v479 = vunpack.c.l.b16 %v345
      %v480 = vunpack.c.h.b16 %v345
      %v481 = vunpack.c.l.b16 %v346
      %v482 = vunpack.c.h.b16 %v346
      %v483 = vunpack.c.l.b16 %v347
      %v484 = vunpack.c.h.b16 %v347
      %v485 = vunpack.c.l.b16 %v348
      %v486 = vunpack.c.h.b16 %v348
      %v487 = vunpack.c.l.b16 %v349
      %v488 = vunpack.c.h.b16 %v349
      %v489 = vunpack.c.l.b16 %v350
      %v490 = vunpack.c.h.b16 %v350
      %v491 = vunpack.c.l.b16 %v351
      %v492 = vunpack.c.h.b16 %v351
      %v493 = vunpack.c.l.b16 %v352
      %v494 = vunpack.c.h.b16 %v352
      %v495 = vunpack.c.l.b16 %v353
      %v496 = vunpack.c.h.b16 %v353
      %v497 = vpack.c.b16 %v441, %v433
      %v498 = vpack.c.b16 %v442, %v434
      %v499 = vpack.c.b16 %v443, %v435
      %v500 = vpack.c.b16 %v444, %v436
      %v501 = vpack.c.b16 %v445, %v437
      %v502 = vpack.c.b16 %v446, %v438
      %v503 = vpack.c.b16 %v447, %v439
      %v504 = vpack.c.b16 %v448, %v440
      %v505 = vpack.c.b16 %v457, %v449
      %v506 = vpack.c.b16 %v458, %v450
      %v507 = vpack.c.b16 %v459, %v451
      %v508 = vpack.c.b16 %v460, %v452
      %v509 = vpack.c.b16 %v461, %v453
      %v510 = vpack.c.b16 %v462, %v454
      %v511 = vpack.c.b16 %v463, %v455
      %v512 = vpack.c.b16 %v464, %v456
      %v513 = vpack.c.b16 %v473, %v465
      %v514 = vpack.c.b16 %v474, %v466
      %v515 = vpack.c.b16 %v475, %v467
      %v516 = vpack.c.b16 %v476, %v468
      %v517 = vpack.c.b16 %v477, %v469
      %v518 = vpack.c.b16 %v478, %v470
      %v519 = vpack.c.b16 %v479, %v471
      %v520 = vpack.c.b16 %v480, %v472
      %v521 = vpack.c.b16 %v489, %v481
      %v522 = vpack.c.b16 %v490, %v482
      %v523 = vpack.c.b16 %v491, %v483
      %v524 = vpack.c.b16 %v492, %v484
      %v525 = vpack.c.b16 %v493, %v485
      %v526 = vpack.c.b16 %v494, %v486
      %v527 = vpack.c.b16 %v495, %v487
      %v528 = vpack.c.b16 %v496, %v488
      %vm561 = vcmask 523264
      %v563 = vsel %vm561, %v400, 0
      %565 = vmatprep.subr.bf16.mxu0 %v498
      %566 = vmatpush1.bf16.msra.mxu0 %v497
      %567 = vmatprep.subr.bf16.mxu0 %v506
      %568 = vmatpush1.bf16.msra.mxu0 %v505
      %569 = vmatprep.subr.bf16.mxu0 %v514
      %570 = vmatpush1.bf16.msra.mxu0 %v513
      %571 = vmatprep.subr.bf16.mxu0 %v522
      %572 = vmatpush1.bf16.msra.mxu0 %v521
      %573 = vmatprep.subr.bf16.mxu0 0
      %574 = vmatpush1.bf16.msra.mxu0 0
      %575 = vmatprep.subr.bf16.mxu0 0
      %576 = vmatpush1.bf16.msra.mxu0 0
      %577 = vmatprep.subr.bf16.mxu0 0
      %578 = vmatpush1.bf16.msra.mxu0 0
      %579 = vmatprep.subr.bf16.mxu0 0
      %580 = vmatpush1.bf16.msra.mxu0 0
      %581 = vmatprep.subr.bf16.mxu0 0
      %582 = vmatpush1.bf16.msra.mxu0 0
      %583 = vmatprep.subr.bf16.mxu0 0
      %584 = vmatpush1.bf16.msra.mxu0 0
      %585 = vmatprep.subr.bf16.mxu0 0
      %586 = vmatpush1.bf16.msra.mxu0 0
      %587 = vmatprep.subr.bf16.mxu0 0
      %588 = vmatpush1.bf16.msra.mxu0 0
      %589 = vmatprep.subr.bf16.mxu0 0
      %590 = vmatpush1.bf16.msra.mxu0 0
      %591 = vmatprep.subr.bf16.mxu0 0
      %592 = vmatpush1.bf16.msra.mxu0 0
      %593 = vmatprep.subr.bf16.mxu0 0
      %594 = vmatpush1.bf16.msra.mxu0 0
      %595 = vmatprep.subr.bf16.mxu0 0
      %596 = vmatpush1.bf16.msra.mxu0 0
      %597 = vmatprep.mubr.bf16.mxu0 0
      %598 = vmatmul.mubr.bf16.gmra.mrb[0].mxu0 %v563
      %v599 = vpop.f32.mrb[0].mxu0
      %v600 = vadd.f32 %v359, %v599
      %v601 = vpop.f32.mrb[0].mxu0
      %v602 = vadd.f32 %v363, %v601
      %v603 = vpop.f32.mrb[0].mxu0
      %v604 = vadd.f32 %v359, %v603
      %v605 = vpop.f32.mrb[0].mxu0
      %v606 = vadd.f32 %v363, %v605
      %607 = vdwg.mxu0
      %608 = vmatprep.subr.bf16.mxu0 %v500
      %609 = vmatpush1.bf16.msra.mxu0 %v499
      %610 = vmatprep.subr.bf16.mxu0 %v508
      %611 = vmatpush1.bf16.msra.mxu0 %v507
      %612 = vmatprep.subr.bf16.mxu0 %v516
      %613 = vmatpush1.bf16.msra.mxu0 %v515
      %614 = vmatprep.subr.bf16.mxu0 %v524
      %615 = vmatpush1.bf16.msra.mxu0 %v523
      %616 = vmatprep.subr.bf16.mxu0 0
      %617 = vmatpush1.bf16.msra.mxu0 0
      %618 = vmatprep.subr.bf16.mxu0 0
      %619 = vmatpush1.bf16.msra.mxu0 0
      %620 = vmatprep.subr.bf16.mxu0 0
      %621 = vmatpush1.bf16.msra.mxu0 0
      %622 = vmatprep.subr.bf16.mxu0 0
      %623 = vmatpush1.bf16.msra.mxu0 0
      %624 = vmatprep.subr.bf16.mxu0 0
      %625 = vmatpush1.bf16.msra.mxu0 0
      %626 = vmatprep.subr.bf16.mxu0 0
      %627 = vmatpush1.bf16.msra.mxu0 0
      %628 = vmatprep.subr.bf16.mxu0 0
      %629 = vmatpush1.bf16.msra.mxu0 0
      %630 = vmatprep.subr.bf16.mxu0 0
      %631 = vmatpush1.bf16.msra.mxu0 0
      %632 = vmatprep.subr.bf16.mxu0 0
      %633 = vmatpush1.bf16.msra.mxu0 0
      %634 = vmatprep.subr.bf16.mxu0 0
      %635 = vmatpush1.bf16.msra.mxu0 0
      %636 = vmatprep.subr.bf16.mxu0 0
      %637 = vmatpush1.bf16.msra.mxu0 0
      %638 = vmatprep.subr.bf16.mxu0 0
      %639 = vmatpush1.bf16.msra.mxu0 0
      %640 = vmatprep.mubr.bf16.mxu0 0
      %641 = vmatmul.mubr.bf16.gmra.mrb[0].mxu0 %v563
      %v642 = vpop.f32.mrb[0].mxu0
      %v643 = vadd.f32 %v367, %v642
      %v644 = vpop.f32.mrb[0].mxu0
      %v645 = vadd.f32 %v371, %v644
      %v646 = vpop.f32.mrb[0].mxu0
      %v647 = vadd.f32 %v367, %v646
      %v648 = vpop.f32.mrb[0].mxu0
      %v649 = vadd.f32 %v371, %v648
      %650 = vdwg.mxu0
      %651 = vmatprep.subr.bf16.mxu0 %v502
      %652 = vmatpush1.bf16.msra.mxu0 %v501
      %653 = vmatprep.subr.bf16.mxu0 %v510
      %654 = vmatpush1.bf16.msra.mxu0 %v509
      %655 = vmatprep.subr.bf16.mxu0 %v518
      %656 = vmatpush1.bf16.msra.mxu0 %v517
      %657 = vmatprep.subr.bf16.mxu0 %v526
      %658 = vmatpush1.bf16.msra.mxu0 %v525
      %659 = vmatprep.subr.bf16.mxu0 0
      %660 = vmatpush1.bf16.msra.mxu0 0
      %661 = vmatprep.subr.bf16.mxu0 0
      %662 = vmatpush1.bf16.msra.mxu0 0
      %663 = vmatprep.subr.bf16.mxu0 0
      %664 = vmatpush1.bf16.msra.mxu0 0
      %665 = vmatprep.subr.bf16.mxu0 0
      %666 = vmatpush1.bf16.msra.mxu0 0
      %667 = vmatprep.subr.bf16.mxu0 0
      %668 = vmatpush1.bf16.msra.mxu0 0
      %669 = vmatprep.subr.bf16.mxu0 0
      %670 = vmatpush1.bf16.msra.mxu0 0
      %671 = vmatprep.subr.bf16.mxu0 0
      %672 = vmatpush1.bf16.msra.mxu0 0
      %673 = vmatprep.subr.bf16.mxu0 0
      %674 = vmatpush1.bf16.msra.mxu0 0
      %675 = vmatprep.subr.bf16.mxu0 0
      %676 = vmatpush1.bf16.msra.mxu0 0
      %677 = vmatprep.subr.bf16.mxu0 0
      %678 = vmatpush1.bf16.msra.mxu0 0
      %679 = vmatprep.subr.bf16.mxu0 0
      %680 = vmatpush1.bf16.msra.mxu0 0
      %681 = vmatprep.subr.bf16.mxu0 0
      %682 = vmatpush1.bf16.msra.mxu0 0
      %683 = vmatprep.mubr.bf16.mxu0 0
      %684 = vmatmul.mubr.bf16.gmra.mrb[0].mxu0 %v563
      %v685 = vpop.f32.mrb[0].mxu0
      %v686 = vadd.f32 %v375, %v685
      %v687 = vpop.f32.mrb[0].mxu0
      %v688 = vadd.f32 %v379, %v687
      %v689 = vpop.f32.mrb[0].mxu0
      %v690 = vadd.f32 %v375, %v689
      %v691 = vpop.f32.mrb[0].mxu0
      %v692 = vadd.f32 %v379, %v691
      %693 = vdwg.mxu0
      %694 = vmatprep.subr.bf16.mxu0 %v504
      %695 = vmatpush1.bf16.msra.mxu0 %v503
      %696 = vmatprep.subr.bf16.mxu0 %v512
      %697 = vmatpush1.bf16.msra.mxu0 %v511
      %698 = vmatprep.subr.bf16.mxu0 %v520
      %699 = vmatpush1.bf16.msra.mxu0 %v519
      %700 = vmatprep.subr.bf16.mxu0 %v528
      %701 = vmatpush1.bf16.msra.mxu0 %v527
      %702 = vmatprep.subr.bf16.mxu0 0
      %703 = vmatpush1.bf16.msra.mxu0 0
      %704 = vmatprep.subr.bf16.mxu0 0
      %705 = vmatpush1.bf16.msra.mxu0 0
      %706 = vmatprep.subr.bf16.mxu0 0
      %707 = vmatpush1.bf16.msra.mxu0 0
      %708 = vmatprep.subr.bf16.mxu0 0
      %709 = vmatpush1.bf16.msra.mxu0 0
      %710 = vmatprep.subr.bf16.mxu0 0
      %711 = vmatpush1.bf16.msra.mxu0 0
      %712 = vmatprep.subr.bf16.mxu0 0
      %713 = vmatpush1.bf16.msra.mxu0 0
      %714 = vmatprep.subr.bf16.mxu0 0
      %715 = vmatpush1.bf16.msra.mxu0 0
      %716 = vmatprep.subr.bf16.mxu0 0
      %717 = vmatpush1.bf16.msra.mxu0 0
      %718 = vmatprep.subr.bf16.mxu0 0
      %719 = vmatpush1.bf16.msra.mxu0 0
      %720 = vmatprep.subr.bf16.mxu0 0
      %721 = vmatpush1.bf16.msra.mxu0 0
      %722 = vmatprep.subr.bf16.mxu0 0
      %723 = vmatpush1.bf16.msra.mxu0 0
      %724 = vmatprep.subr.bf16.mxu0 0
      %725 = vmatpush1.bf16.msra.mxu0 0
      %726 = vmatprep.mubr.bf16.mxu0 0
      %727 = vmatmul.mubr.bf16.gmra.mrb[0].mxu0 %v563
      %v728 = vpop.f32.mrb[0].mxu0
      %v729 = vadd.f32 %v383, %v728
      %v730 = vpop.f32.mrb[0].mxu0
      %v731 = vadd.f32 %v387, %v730
      %v732 = vpop.f32.mrb[0].mxu0
      %v733 = vadd.f32 %v383, %v732
      %v734 = vpop.f32.mrb[0].mxu0
      %v735 = vadd.f32 %v387, %v734
      %736 = vdwg.mxu0
      %v737 = vmax.f32 %v600, 0.0
      %v738 = vmax.f32 %v602, 0.0
      %v739 = vmax.f32 %v643, 0.0
      %v740 = vmax.f32 %v645, 0.0
      %v741 = vmax.f32 %v686, 0.0
      %v742 = vmax.f32 %v688, 0.0
      %v743 = vmax.f32 %v729, 0.0
      %v744 = vmax.f32 %v731, 0.0
      %v745 = vmax.f32 %v604, 0.0
      %v746 = vmax.f32 %v606, 0.0
      %v747 = vmax.f32 %v647, 0.0
      %v748 = vmax.f32 %v649, 0.0
      %v749 = vmax.f32 %v690, 0.0
      %v750 = vmax.f32 %v692, 0.0
      %v751 = vmax.f32 %v733, 0.0
      %v752 = vmax.f32 %v735, 0.0
      %753 = vst [vmem:[%s313] sm:$0xff] %v741
      %754 = vst [vmem:[%s313 + $0x8] sm:$0xff] %v742
      %755 = vst [vmem:[%s313 + $0x10] sm:$0xff] %v749
      %756 = vst [vmem:[%s313 + $0x18] sm:$0xff] %v750
      %757 = vst [vmem:[%s318] sm:$0xff] %v743
      %758 = vst [vmem:[%s318 + $0x8] sm:$0xff] %v744
      %759 = vst [vmem:[%s318 + $0x10] sm:$0xff] %v751
      %760 = vst [vmem:[%s318 + $0x18] sm:$0xff] %v752
      %761 = vst [vmem:[#allocation2] sm:$0xf] 0.0
      %762 = vst [vmem:[#allocation2 + $0x8] sm:$0xf] 0.0
      %763 = vst [vmem:[#allocation2 + $0x20] sm:$0xf0] 0.0
      %764 = vst [vmem:[#allocation2 + $0x28] sm:$0xf0] 0.0
      %vm769 = vcmask 1043456
      %v770 = vrot.slane %v737, 4
      %v771 = vrot.slane %v738, 4
      %v772 = vrot.slane %v745, 4
      %v773 = vsel %vm769, %v770, %v772
      %v774 = vrot.slane %v746, 4
      %v775 = vsel %vm769, %v771, %v774
      %782 = vst [vmem:[#allocation2] sm:$0xf0] %v770
      %783 = vst [vmem:[#allocation2 + $0x8] sm:$0xf0] %v771
      %784 = vst [vmem:[#allocation2 + $0x10] sm:$0xff] %v773
      %785 = vst [vmem:[#allocation2 + $0x18] sm:$0xff] %v775
      %786 = vst [vmem:[#allocation2 + $0x20] sm:$0xf] %v772
      %787 = vst [vmem:[#allocation2 + $0x28] sm:$0xf] %v774
      %788 = vst [vmem:[#allocation3] sm:$0xff] 0.0
      %789 = vst [vmem:[#allocation3 + $0x8] sm:$0xff] 0.0
      %790 = vst [vmem:[#allocation3 + $0x30] sm:$0xff] 0.0
      %791 = vst [vmem:[#allocation3 + $0x38] sm:$0xff] 0.0
      %792 = vst [vmem:[#allocation3 + $0x10] sm:$0xff] %v739
      %793 = vst [vmem:[#allocation3 + $0x18] sm:$0xff] %v740
      %794 = vst [vmem:[#allocation3 + $0x20] sm:$0xff] %v747
      %795 = vst [vmem:[#allocation3 + $0x28] sm:$0xff] %v748
      %v796 = vld [vmem:[#allocation2] sm:$0xff]
      %v797 = vld [vmem:[#allocation2 + $0x8] sm:$0xff]
      %v798 = vld [vmem:[#allocation2 + $0x10] sm:$0xff]
      %v799 = vld [vmem:[#allocation2 + $0x18] sm:$0xff]
      %v800 = vld [vmem:[%s3] sm:$0xff]
      %v801 = vld [vmem:[%s3 + $0x8] sm:$0xff]
      %v802 = vld [vmem:[%s3 + $0x10] sm:$0xff]
      %v803 = vld [vmem:[%s3 + $0x18] sm:$0xff]
      %v804 = vld [vmem:[%s3 + $0x20] sm:$0xff]
      %v805 = vld [vmem:[%s3 + $0x28] sm:$0xff]
      %v806 = vld [vmem:[%s3 + $0x30] sm:$0xff]
      %v807 = vld [vmem:[%s3 + $0x38] sm:$0xff]
      %v808 = vld [vmem:[%s3 + $0x40] sm:$0xff]
      %v809 = vld [vmem:[%s3 + $0x48] sm:$0xff]
      %v810 = vld [vmem:[%s3 + $0x50] sm:$0xff]
      %v811 = vld [vmem:[%s3 + $0x58] sm:$0xff]
      %v812 = vld [vmem:[%s3 + $0x60] sm:$0xff]
      %v813 = vld [vmem:[%s3 + $0x68] sm:$0xff]
      %v814 = vld [vmem:[%s3 + $0x70] sm:$0xff]
      %v815 = vld [vmem:[%s3 + $0x78] sm:$0xff]
      %v816 = vld [vmem:[%s3 + $0x80] sm:$0xff]
      %v817 = vld [vmem:[%s3 + $0x88] sm:$0xff]
      %v818 = vld [vmem:[%s3 + $0x90] sm:$0xff]
      %v819 = vld [vmem:[%s3 + $0x98] sm:$0xff]
      %v820 = vld [vmem:[%s3 + $0xa0] sm:$0xff]
      %v821 = vld [vmem:[%s3 + $0xa8] sm:$0xff]
      %v822 = vld [vmem:[%s3 + $0xb0] sm:$0xff]
      %v823 = vld [vmem:[%s3 + $0xb8] sm:$0xff]
      %v824 = vld [vmem:[%s3 + $0xc0] sm:$0xff]
      %v825 = vld [vmem:[%s3 + $0xc8] sm:$0xff]
      %v826 = vld [vmem:[%s3 + $0xd0] sm:$0xff]
      %v827 = vld [vmem:[%s3 + $0xd8] sm:$0xff]
      %v828 = vld [vmem:[%s3 + $0xe0] sm:$0xff]
      %v829 = vld [vmem:[%s3 + $0xe8] sm:$0xff]
      %v830 = vld [vmem:[%s3 + $0xf0] sm:$0xff]
      %v831 = vld [vmem:[%s3 + $0xf8] sm:$0xff]
      %v832 = vpack.c.bf16 %v798, %v796
      %v833 = vpack.c.bf16 %v799, %v797
      %v866 = vunpack.c.l.b16 %v800
      %v867 = vunpack.c.h.b16 %v800
      %v868 = vunpack.c.l.b16 %v801
      %v869 = vunpack.c.h.b16 %v801
      %v870 = vunpack.c.l.b16 %v802
      %v871 = vunpack.c.h.b16 %v802
      %v872 = vunpack.c.l.b16 %v803
      %v873 = vunpack.c.h.b16 %v803
      %v874 = vunpack.c.l.b16 %v804
      %v875 = vunpack.c.h.b16 %v804
      %v876 = vunpack.c.l.b16 %v805
      %v877 = vunpack.c.h.b16 %v805
      %v878 = vunpack.c.l.b16 %v806
      %v879 = vunpack.c.h.b16 %v806
      %v880 = vunpack.c.l.b16 %v807
      %v881 = vunpack.c.h.b16 %v807
      %v882 = vunpack.c.l.b16 %v808
      %v883 = vunpack.c.h.b16 %v808
      %v884 = vunpack.c.l.b16 %v809
      %v885 = vunpack.c.h.b16 %v809
      %v886 = vunpack.c.l.b16 %v810
      %v887 = vunpack.c.h.b16 %v810
      %v888 = vunpack.c.l.b16 %v811
      %v889 = vunpack.c.h.b16 %v811
      %v890 = vunpack.c.l.b16 %v812
      %v891 = vunpack.c.h.b16 %v812
      %v892 = vunpack.c.l.b16 %v813
      %v893 = vunpack.c.h.b16 %v813
      %v894 = vunpack.c.l.b16 %v814
      %v895 = vunpack.c.h.b16 %v814
      %v896 = vunpack.c.l.b16 %v815
      %v897 = vunpack.c.h.b16 %v815
      %v898 = vunpack.c.l.b16 %v816
      %v899 = vunpack.c.h.b16 %v816
      %v900 = vunpack.c.l.b16 %v817
      %v901 = vunpack.c.h.b16 %v817
      %v902 = vunpack.c.l.b16 %v818
      %v903 = vunpack.c.h.b16 %v818
      %v904 = vunpack.c.l.b16 %v819
      %v905 = vunpack.c.h.b16 %v819
      %v906 = vunpack.c.l.b16 %v820
      %v907 = vunpack.c.h.b16 %v820
      %v908 = vunpack.c.l.b16 %v821
      %v909 = vunpack.c.h.b16 %v821
      %v910 = vunpack.c.l.b16 %v822
      %v911 = vunpack.c.h.b16 %v822
      %v912 = vunpack.c.l.b16 %v823
      %v913 = vunpack.c.h.b16 %v823
      %v914 = vunpack.c.l.b16 %v824
      %v915 = vunpack.c.h.b16 %v824
      %v916 = vunpack.c.l.b16 %v825
      %v917 = vunpack.c.h.b16 %v825
      %v918 = vunpack.c.l.b16 %v826
      %v919 = vunpack.c.h.b16 %v826
      %v920 = vunpack.c.l.b16 %v827
      %v921 = vunpack.c.h.b16 %v827
      %v922 = vunpack.c.l.b16 %v828
      %v923 = vunpack.c.h.b16 %v828
      %v924 = vunpack.c.l.b16 %v829
      %v925 = vunpack.c.h.b16 %v829
      %v926 = vunpack.c.l.b16 %v830
      %v927 = vunpack.c.h.b16 %v830
      %v928 = vunpack.c.l.b16 %v831
      %v929 = vunpack.c.h.b16 %v831
      %v930 = vpack.c.b16 %v868, %v866
      %v931 = vpack.c.b16 %v869, %v867
      %v932 = vpack.c.b16 %v872, %v870
      %v933 = vpack.c.b16 %v873, %v871
      %v934 = vpack.c.b16 %v876, %v874
      %v935 = vpack.c.b16 %v877, %v875
      %v936 = vpack.c.b16 %v880, %v878
      %v937 = vpack.c.b16 %v881, %v879
      %v938 = vpack.c.b16 %v884, %v882
      %v939 = vpack.c.b16 %v885, %v883
      %v940 = vpack.c.b16 %v888, %v886
      %v941 = vpack.c.b16 %v889, %v887
      %v942 = vpack.c.b16 %v892, %v890
      %v943 = vpack.c.b16 %v893, %v891
      %v944 = vpack.c.b16 %v896, %v894
      %v945 = vpack.c.b16 %v897, %v895
      %v946 = vpack.c.b16 %v900, %v898
      %v947 = vpack.c.b16 %v901, %v899
      %v948 = vpack.c.b16 %v904, %v902
      %v949 = vpack.c.b16 %v905, %v903
      %v950 = vpack.c.b16 %v908, %v906
      %v951 = vpack.c.b16 %v909, %v907
      %v952 = vpack.c.b16 %v912, %v910
      %v953 = vpack.c.b16 %v913, %v911
      %v954 = vpack.c.b16 %v916, %v914
      %v955 = vpack.c.b16 %v917, %v915
      %v956 = vpack.c.b16 %v920, %v918
      %v957 = vpack.c.b16 %v921, %v919
      %v958 = vpack.c.b16 %v924, %v922
      %v959 = vpack.c.b16 %v925, %v923
      %v960 = vpack.c.b16 %v928, %v926
      %v961 = vpack.c.b16 %v929, %v927
      %994 = vmatprep.subr.bf16.mxu0 %v931
      %995 = vmatpush1.bf16.msra.mxu0 %v930
      %996 = vmatprep.subr.bf16.mxu0 %v933
      %997 = vmatpush1.bf16.msra.mxu0 %v932
      %998 = vmatprep.subr.bf16.mxu0 %v935
      %999 = vmatpush1.bf16.msra.mxu0 %v934
      %1000 = vmatprep.subr.bf16.mxu0 %v937
      %1001 = vmatpush1.bf16.msra.mxu0 %v936
      %1002 = vmatprep.subr.bf16.mxu0 %v939
      %1003 = vmatpush1.bf16.msra.mxu0 %v938
      %1004 = vmatprep.subr.bf16.mxu0 %v941
      %1005 = vmatpush1.bf16.msra.mxu0 %v940
      %1006 = vmatprep.subr.bf16.mxu0 %v943
      %1007 = vmatpush1.bf16.msra.mxu0 %v942
      %1008 = vmatprep.subr.bf16.mxu0 %v945
      %1009 = vmatpush1.bf16.msra.mxu0 %v944
      %1010 = vmatprep.subr.bf16.mxu0 %v947
      %1011 = vmatpush1.bf16.msra.mxu0 %v946
      %1012 = vmatprep.subr.bf16.mxu0 %v949
      %1013 = vmatpush1.bf16.msra.mxu0 %v948
      %1014 = vmatprep.subr.bf16.mxu0 %v951
      %1015 = vmatpush1.bf16.msra.mxu0 %v950
      %1016 = vmatprep.subr.bf16.mxu0 %v953
      %1017 = vmatpush1.bf16.msra.mxu0 %v952
      %1018 = vmatprep.subr.bf16.mxu0 %v955
      %1019 = vmatpush1.bf16.msra.mxu0 %v954
      %1020 = vmatprep.subr.bf16.mxu0 %v957
      %1021 = vmatpush1.bf16.msra.mxu0 %v956
      %1022 = vmatprep.subr.bf16.mxu0 %v959
      %1023 = vmatpush1.bf16.msra.mxu0 %v958
      %1024 = vmatprep.subr.bf16.mxu0 %v961
      %1025 = vmatpush1.bf16.msra.mxu0 %v960
      %1026 = vmatprep.mubr.bf16.mxu0 %v833
      %1027 = vmatmul.mubr.bf16.gmra.mrb[0].mxu0 %v832
      %v1028 = vpop.f32.mrb[0].mxu0
      %v1029 = vadd.f32 0.0, %v1028
      %v1030 = vpop.f32.mrb[0].mxu0
      %v1031 = vadd.f32 0.0, %v1030
      %v1032 = vpop.f32.mrb[0].mxu0
      %v1033 = vadd.f32 0.0, %v1032
      %v1034 = vpop.f32.mrb[0].mxu0
      %v1035 = vadd.f32 0.0, %v1034
      %1036 = vdwg.mxu0
      %1037 = vst [vmem:[#allocation4] sm:$0xff] %v1029
      %1038 = vst [vmem:[#allocation4 + $0x8] sm:$0xff] %v1031
      %1039 = vst [vmem:[#allocation4 + $0x10] sm:$0xff] %v1033
      %1040 = vst [vmem:[#allocation4 + $0x18] sm:$0xff] %v1035
      %v1041 = vld [vmem:[#allocation2] sm:$0xfe]
      %v1042 = vld [vmem:[#allocation2 + $0x8] sm:$0xfe]
      %v1043 = vld [vmem:[#allocation2 + $0x10] sm:$0xff]
      %v1044 = vld [vmem:[#allocation2 + $0x18] sm:$0xff]
      %v1045 = vld [vmem:[#allocation2 + $0x20] sm:$0x1]
      %v1046 = vld [vmem:[#allocation2 + $0x28] sm:$0x1]
      %s1047 = scalar_lea.vmem %s3, 256
      %v1048 = vld [vmem:[%s1047] sm:$0xff]
      %v1049 = vld [vmem:[%s1047 + $0x8] sm:$0xff]
      %v1050 = vld [vmem:[%s1047 + $0x10] sm:$0xff]
      %v1051 = vld [vmem:[%s1047 + $0x18] sm:$0xff]
      %v1052 = vld [vmem:[%s1047 + $0x20] sm:$0xff]
      %v1053 = vld [vmem:[%s1047 + $0x28] sm:$0xff]
      %v1054 = vld [vmem:[%s1047 + $0x30] sm:$0xff]
      %v1055 = vld [vmem:[%s1047 + $0x38] sm:$0xff]
      %v1056 = vld [vmem:[%s1047 + $0x40] sm:$0xff]
      %v1057 = vld [vmem:[%s1047 + $0x48] sm:$0xff]
      %v1058 = vld [vmem:[%s1047 + $0x50] sm:$0xff]
      %v1059 = vld [vmem:[%s1047 + $0x58] sm:$0xff]
      %v1060 = vld [vmem:[%s1047 + $0x60] sm:$0xff]
      %v1061 = vld [vmem:[%s1047 + $0x68] sm:$0xff]
      %v1062 = vld [vmem:[%s1047 + $0x70] sm:$0xff]
      %v1063 = vld [vmem:[%s1047 + $0x78] sm:$0xff]
      %v1064 = vld [vmem:[%s1047 + $0x80] sm:$0xff]
      %v1065 = vld [vmem:[%s1047 + $0x88] sm:$0xff]
      %v1066 = vld [vmem:[%s1047 + $0x90] sm:$0xff]
      %v1067 = vld [vmem:[%s1047 + $0x98] sm:$0xff]
      %v1068 = vld [vmem:[%s1047 + $0xa0] sm:$0xff]
      %v1069 = vld [vmem:[%s1047 + $0xa8] sm:$0xff]
      %v1070 = vld [vmem:[%s1047 + $0xb0] sm:$0xff]
      %v1071 = vld [vmem:[%s1047 + $0xb8] sm:$0xff]
      %v1072 = vld [vmem:[%s1047 + $0xc0] sm:$0xff]
      %v1073 = vld [vmem:[%s1047 + $0xc8] sm:$0xff]
      %v1074 = vld [vmem:[%s1047 + $0xd0] sm:$0xff]
      %v1075 = vld [vmem:[%s1047 + $0xd8] sm:$0xff]
      %v1076 = vld [vmem:[%s1047 + $0xe0] sm:$0xff]
      %v1077 = vld [vmem:[%s1047 + $0xe8] sm:$0xff]
      %v1078 = vld [vmem:[%s1047 + $0xf0] sm:$0xff]
      %v1079 = vld [vmem:[%s1047 + $0xf8] sm:$0xff]
      %v1080 = vpack.c.bf16 %v1043, %v1041
      %v1081 = vpack.c.bf16 %v1044, %v1042
      %v1082 = vpack.c.bf16 %v1045, %v1045
      %v1083 = vpack.c.bf16 %v1046, %v1046
      %vm1084 = vsmask.f32 7424
      %v1086 = vshrl.u32 %v1080, 16
      %v1088 = vshll.u32 %v1080, 16
      %v1090 = vrot.slane %v1088, 1
      %v1091 = vor.u32 %v1086, %v1090
      %v1093 = vshll.u32 %v1082, 16
      %v1095 = vrot.slane %v1093, 1
      %v1096 = vsel %vm1084, %v1091, %v1095
      %v1098 = vshrl.u32 %v1081, 16
      %v1100 = vshll.u32 %v1081, 16
      %v1102 = vrot.slane %v1100, 1
      %v1103 = vor.u32 %v1098, %v1102
      %v1105 = vshll.u32 %v1083, 16
      %v1107 = vrot.slane %v1105, 1
      %v1108 = vsel %vm1084, %v1103, %v1107
      %v1143 = vunpack.c.l.b16 %v1048
      %v1144 = vunpack.c.h.b16 %v1048
      %v1145 = vunpack.c.l.b16 %v1049
      %v1146 = vunpack.c.h.b16 %v1049
      %v1147 = vunpack.c.l.b16 %v1050
      %v1148 = vunpack.c.h.b16 %v1050
      %v1149 = vunpack.c.l.b16 %v1051
      %v1150 = vunpack.c.h.b16 %v1051
      %v1151 = vunpack.c.l.b16 %v1052
      %v1152 = vunpack.c.h.b16 %v1052
      %v1153 = vunpack.c.l.b16 %v1053
      %v1154 = vunpack.c.h.b16 %v1053
      %v1155 = vunpack.c.l.b16 %v1054
      %v1156 = vunpack.c.h.b16 %v1054
      %v1157 = vunpack.c.l.b16 %v1055
      %v1158 = vunpack.c.h.b16 %v1055
      %v1159 = vunpack.c.l.b16 %v1056
      %v1160 = vunpack.c.h.b16 %v1056
      %v1161 = vunpack.c.l.b16 %v1057
      %v1162 = vunpack.c.h.b16 %v1057
      %v1163 = vunpack.c.l.b16 %v1058
      %v1164 = vunpack.c.h.b16 %v1058
      %v1165 = vunpack.c.l.b16 %v1059
      %v1166 = vunpack.c.h.b16 %v1059
      %v1167 = vunpack.c.l.b16 %v1060
      %v1168 = vunpack.c.h.b16 %v1060
      %v1169 = vunpack.c.l.b16 %v1061
      %v1170 = vunpack.c.h.b16 %v1061
      %v1171 = vunpack.c.l.b16 %v1062
      %v1172 = vunpack.c.h.b16 %v1062
      %v1173 = vunpack.c.l.b16 %v1063
      %v1174 = vunpack.c.h.b16 %v1063
      %v1175 = vunpack.c.l.b16 %v1064
      %v1176 = vunpack.c.h.b16 %v1064
      %v1177 = vunpack.c.l.b16 %v1065
      %v1178 = vunpack.c.h.b16 %v1065
      %v1179 = vunpack.c.l.b16 %v1066
      %v1180 = vunpack.c.h.b16 %v1066
      %v1181 = vunpack.c.l.b16 %v1067
      %v1182 = vunpack.c.h.b16 %v1067
      %v1183 = vunpack.c.l.b16 %v1068
      %v1184 = vunpack.c.h.b16 %v1068
      %v1185 = vunpack.c.l.b16 %v1069
      %v1186 = vunpack.c.h.b16 %v1069
      %v1187 = vunpack.c.l.b16 %v1070
      %v1188 = vunpack.c.h.b16 %v1070
      %v1189 = vunpack.c.l.b16 %v1071
      %v1190 = vunpack.c.h.b16 %v1071
      %v1191 = vunpack.c.l.b16 %v1072
      %v1192 = vunpack.c.h.b16 %v1072
      %v1193 = vunpack.c.l.b16 %v1073
      %v1194 = vunpack.c.h.b16 %v1073
      %v1195 = vunpack.c.l.b16 %v1074
      %v1196 = vunpack.c.h.b16 %v1074
      %v1197 = vunpack.c.l.b16 %v1075
      %v1198 = vunpack.c.h.b16 %v1075
      %v1199 = vunpack.c.l.b16 %v1076
      %v1200 = vunpack.c.h.b16 %v1076
      %v1201 = vunpack.c.l.b16 %v1077
      %v1202 = vunpack.c.h.b16 %v1077
      %v1203 = vunpack.c.l.b16 %v1078
      %v1204 = vunpack.c.h.b16 %v1078
      %v1205 = vunpack.c.l.b16 %v1079
      %v1206 = vunpack.c.h.b16 %v1079
      %v1207 = vpack.c.b16 %v1145, %v1143
      %v1208 = vpack.c.b16 %v1146, %v1144
      %v1209 = vpack.c.b16 %v1149, %v1147
      %v1210 = vpack.c.b16 %v1150, %v1148
      %v1211 = vpack.c.b16 %v1153, %v1151
      %v1212 = vpack.c.b16 %v1154, %v1152
      %v1213 = vpack.c.b16 %v1157, %v1155
      %v1214 = vpack.c.b16 %v1158, %v1156
      %v1215 = vpack.c.b16 %v1161, %v1159
      %v1216 = vpack.c.b16 %v1162, %v1160
      %v1217 = vpack.c.b16 %v1165, %v1163
      %v1218 = vpack.c.b16 %v1166, %v1164
      %v1219 = vpack.c.b16 %v1169, %v1167
      %v1220 = vpack.c.b16 %v1170, %v1168
      %v1221 = vpack.c.b16 %v1173, %v1171
      %v1222 = vpack.c.b16 %v1174, %v1172
      %v1223 = vpack.c.b16 %v1177, %v1175
      %v1224 = vpack.c.b16 %v1178, %v1176
      %v1225 = vpack.c.b16 %v1181, %v1179
      %v1226 = vpack.c.b16 %v1182, %v1180
      %v1227 = vpack.c.b16 %v1185, %v1183
      %v1228 = vpack.c.b16 %v1186, %v1184
      %v1229 = vpack.c.b16 %v1189, %v1187
      %v1230 = vpack.c.b16 %v1190, %v1188
      %v1231 = vpack.c.b16 %v1193, %v1191
      %v1232 = vpack.c.b16 %v1194, %v1192
      %v1233 = vpack.c.b16 %v1197, %v1195
      %v1234 = vpack.c.b16 %v1198, %v1196
      %v1235 = vpack.c.b16 %v1201, %v1199
      %v1236 = vpack.c.b16 %v1202, %v1200
      %v1237 = vpack.c.b16 %v1205, %v1203
      %v1238 = vpack.c.b16 %v1206, %v1204
      %1271 = vmatprep.subr.bf16.mxu0 %v1208
      %1272 = vmatpush1.bf16.msra.mxu0 %v1207
      %1273 = vmatprep.subr.bf16.mxu0 %v1210
      %1274 = vmatpush1.bf16.msra.mxu0 %v1209
      %1275 = vmatprep.subr.bf16.mxu0 %v1212
      %1276 = vmatpush1.bf16.msra.mxu0 %v1211
      %1277 = vmatprep.subr.bf16.mxu0 %v1214
      %1278 = vmatpush1.bf16.msra.mxu0 %v1213
      %1279 = vmatprep.subr.bf16.mxu0 %v1216
      %1280 = vmatpush1.bf16.msra.mxu0 %v1215
      %1281 = vmatprep.subr.bf16.mxu0 %v1218
      %1282 = vmatpush1.bf16.msra.mxu0 %v1217
      %1283 = vmatprep.subr.bf16.mxu0 %v1220
      %1284 = vmatpush1.bf16.msra.mxu0 %v1219
      %1285 = vmatprep.subr.bf16.mxu0 %v1222
      %1286 = vmatpush1.bf16.msra.mxu0 %v1221
      %1287 = vmatprep.subr.bf16.mxu0 %v1224
      %1288 = vmatpush1.bf16.msra.mxu0 %v1223
      %1289 = vmatprep.subr.bf16.mxu0 %v1226
      %1290 = vmatpush1.bf16.msra.mxu0 %v1225
      %1291 = vmatprep.subr.bf16.mxu0 %v1228
      %1292 = vmatpush1.bf16.msra.mxu0 %v1227
      %1293 = vmatprep.subr.bf16.mxu0 %v1230
      %1294 = vmatpush1.bf16.msra.mxu0 %v1229
      %1295 = vmatprep.subr.bf16.mxu0 %v1232
      %1296 = vmatpush1.bf16.msra.mxu0 %v1231
      %1297 = vmatprep.subr.bf16.mxu0 %v1234
      %1298 = vmatpush1.bf16.msra.mxu0 %v1233
      %1299 = vmatprep.subr.bf16.mxu0 %v1236
      %1300 = vmatpush1.bf16.msra.mxu0 %v1235
      %1301 = vmatprep.subr.bf16.mxu0 %v1238
      %1302 = vmatpush1.bf16.msra.mxu0 %v1237
      %1303 = vmatprep.mubr.bf16.mxu0 %v1108
      %1304 = vmatmul.mubr.bf16.gmra.mrb[0].mxu0 %v1096
      %v1305 = vpop.f32.mrb[0].mxu0
      %v1306 = vadd.f32 0.0, %v1305
      %v1307 = vpop.f32.mrb[0].mxu0
      %v1308 = vadd.f32 0.0, %v1307
      %v1309 = vpop.f32.mrb[0].mxu0
      %v1310 = vadd.f32 0.0, %v1309
      %v1311 = vpop.f32.mrb[0].mxu0
      %v1312 = vadd.f32 0.0, %v1311
      %1313 = vdwg.mxu0
      %v1314 = vld [vmem:[#allocation4] sm:$0xff]
      %v1315 = vld [vmem:[#allocation4 + $0x8] sm:$0xff]
      %v1316 = vld [vmem:[#allocation4 + $0x10] sm:$0xff]
      %v1317 = vld [vmem:[#allocation4 + $0x18] sm:$0xff]
      %v1318 = vadd.f32 %v1314, %v1306
      %v1319 = vadd.f32 %v1315, %v1308
      %v1320 = vadd.f32 %v1316, %v1310
      %v1321 = vadd.f32 %v1317, %v1312
      %1322 = vst [vmem:[#allocation4] sm:$0xff] %v1318
      %1323 = vst [vmem:[#allocation4 + $0x8] sm:$0xff] %v1319
      %1324 = vst [vmem:[#allocation4 + $0x10] sm:$0xff] %v1320
      %1325 = vst [vmem:[#allocation4 + $0x18] sm:$0xff] %v1321
      %v1326 = vld [vmem:[#allocation2] sm:$0xfc]
      %v1327 = vld [vmem:[#allocation2 + $0x8] sm:$0xfc]
      %v1328 = vld [vmem:[#allocation2 + $0x10] sm:$0xff]
      %v1329 = vld [vmem:[#allocation2 + $0x18] sm:$0xff]
      %v1330 = vld [vmem:[#allocation2 + $0x20] sm:$0x3]
      %v1331 = vld [vmem:[#allocation2 + $0x28] sm:$0x3]
      %s1332 = scalar_lea.vmem %s3, 512
      %v1333 = vld [vmem:[%s1332] sm:$0xff]
      %v1334 = vld [vmem:[%s1332 + $0x8] sm:$0xff]
      %v1335 = vld [vmem:[%s1332 + $0x10] sm:$0xff]
      %v1336 = vld [vmem:[%s1332 + $0x18] sm:$0xff]
      %v1337 = vld [vmem:[%s1332 + $0x20] sm:$0xff]
      %v1338 = vld [vmem:[%s1332 + $0x28] sm:$0xff]
      %v1339 = vld [vmem:[%s1332 + $0x30] sm:$0xff]
      %v1340 = vld [vmem:[%s1332 + $0x38] sm:$0xff]
      %v1341 = vld [vmem:[%s1332 + $0x40] sm:$0xff]
      %v1342 = vld [vmem:[%s1332 + $0x48] sm:$0xff]
      %v1343 = vld [vmem:[%s1332 + $0x50] sm:$0xff]
      %v1344 = vld [vmem:[%s1332 + $0x58] sm:$0xff]
      %v1345 = vld [vmem:[%s1332 + $0x60] sm:$0xff]
      %v1346 = vld [vmem:[%s1332 + $0x68] sm:$0xff]
      %v1347 = vld [vmem:[%s1332 + $0x70] sm:$0xff]
      %v1348 = vld [vmem:[%s1332 + $0x78] sm:$0xff]
      %v1349 = vld [vmem:[%s1332 + $0x80] sm:$0xff]
      %v1350 = vld [vmem:[%s1332 + $0x88] sm:$0xff]
      %v1351 = vld [vmem:[%s1332 + $0x90] sm:$0xff]
      %v1352 = vld [vmem:[%s1332 + $0x98] sm:$0xff]
      %v1353 = vld [vmem:[%s1332 + $0xa0] sm:$0xff]
      %v1354 = vld [vmem:[%s1332 + $0xa8] sm:$0xff]
      %v1355 = vld [vmem:[%s1332 + $0xb0] sm:$0xff]
      %v1356 = vld [vmem:[%s1332 + $0xb8] sm:$0xff]
      %v1357 = vld [vmem:[%s1332 + $0xc0] sm:$0xff]
      %v1358 = vld [vmem:[%s1332 + $0xc8] sm:$0xff]
      %v1359 = vld [vmem:[%s1332 + $0xd0] sm:$0xff]
      %v1360 = vld [vmem:[%s1332 + $0xd8] sm:$0xff]
      %v1361 = vld [vmem:[%s1332 + $0xe0] sm:$0xff]
      %v1362 = vld [vmem:[%s1332 + $0xe8] sm:$0xff]
      %v1363 = vld [vmem:[%s1332 + $0xf0] sm:$0xff]
      %v1364 = vld [vmem:[%s1332 + $0xf8] sm:$0xff]
      %v1365 = vpack.c.bf16 %v1328, %v1326
      %v1366 = vpack.c.bf16 %v1329, %v1327
      %v1367 = vpack.c.bf16 %v1330, %v1330
      %v1368 = vpack.c.bf16 %v1331, %v1331
      %vm1373 = vcmask 1046528
      %v1374 = vrot.slane %v1365, 1
      %v1375 = vrot.slane %v1367, 1
      %v1376 = vsel %vm1373, %v1374, %v1375
      %v1377 = vrot.slane %v1366, 1
      %v1378 = vrot.slane %v1368, 1
      %v1379 = vsel %vm1373, %v1377, %v1378
      %v1414 = vunpack.c.l.b16 %v1333
      %v1415 = vunpack.c.h.b16 %v1333
      %v1416 = vunpack.c.l.b16 %v1334
      %v1417 = vunpack.c.h.b16 %v1334
      %v1418 = vunpack.c.l.b16 %v1335
      %v1419 = vunpack.c.h.b16 %v1335
      %v1420 = vunpack.c.l.b16 %v1336
      %v1421 = vunpack.c.h.b16 %v1336
      %v1422 = vunpack.c.l.b16 %v1337
      %v1423 = vunpack.c.h.b16 %v1337
      %v1424 = vunpack.c.l.b16 %v1338
      %v1425 = vunpack.c.h.b16 %v1338
      %v1426 = vunpack.c.l.b16 %v1339
      %v1427 = vunpack.c.h.b16 %v1339
      %v1428 = vunpack.c.l.b16 %v1340
      %v1429 = vunpack.c.h.b16 %v1340
      %v1430 = vunpack.c.l.b16 %v1341
      %v1431 = vunpack.c.h.b16 %v1341
      %v1432 = vunpack.c.l.b16 %v1342
      %v1433 = vunpack.c.h.b16 %v1342
      %v1434 = vunpack.c.l.b16 %v1343
      %v1435 = vunpack.c.h.b16 %v1343
      %v1436 = vunpack.c.l.b16 %v1344
      %v1437 = vunpack.c.h.b16 %v1344
      %v1438 = vunpack.c.l.b16 %v1345
      %v1439 = vunpack.c.h.b16 %v1345
      %v1440 = vunpack.c.l.b16 %v1346
      %v1441 = vunpack.c.h.b16 %v1346
      %v1442 = vunpack.c.l.b16 %v1347
      %v1443 = vunpack.c.h.b16 %v1347
      %v1444 = vunpack.c.l.b16 %v1348
      %v1445 = vunpack.c.h.b16 %v1348
      %v1446 = vunpack.c.l.b16 %v1349
      %v1447 = vunpack.c.h.b16 %v1349
      %v1448 = vunpack.c.l.b16 %v1350
      %v1449 = vunpack.c.h.b16 %v1350
      %v1450 = vunpack.c.l.b16 %v1351
      %v1451 = vunpack.c.h.b16 %v1351
      %v1452 = vunpack.c.l.b16 %v1352
      %v1453 = vunpack.c.h.b16 %v1352
      %v1454 = vunpack.c.l.b16 %v1353
      %v1455 = vunpack.c.h.b16 %v1353
      %v1456 = vunpack.c.l.b16 %v1354
      %v1457 = vunpack.c.h.b16 %v1354
      %v1458 = vunpack.c.l.b16 %v1355
      %v1459 = vunpack.c.h.b16 %v1355
      %v1460 = vunpack.c.l.b16 %v1356
      %v1461 = vunpack.c.h.b16 %v1356
      %v1462 = vunpack.c.l.b16 %v1357
      %v1463 = vunpack.c.h.b16 %v1357
      %v1464 = vunpack.c.l.b16 %v1358
      %v1465 = vunpack.c.h.b16 %v1358
      %v1466 = vunpack.c.l.b16 %v1359
      %v1467 = vunpack.c.h.b16 %v1359
      %v1468 = vunpack.c.l.b16 %v1360
      %v1469 = vunpack.c.h.b16 %v1360
      %v1470 = vunpack.c.l.b16 %v1361
      %v1471 = vunpack.c.h.b16 %v1361
      %v1472 = vunpack.c.l.b16 %v1362
      %v1473 = vunpack.c.h.b16 %v1362
      %v1474 = vunpack.c.l.b16 %v1363
      %v1475 = vunpack.c.h.b16 %v1363
      %v1476 = vunpack.c.l.b16 %v1364
      %v1477 = vunpack.c.h.b16 %v1364
      %v1478 = vpack.c.b16 %v1416, %v1414
      %v1479 = vpack.c.b16 %v1417, %v1415
      %v1480 = vpack.c.b16 %v1420, %v1418
      %v1481 = vpack.c.b16 %v1421, %v1419
      %v1482 = vpack.c.b16 %v1424, %v1422
      %v1483 = vpack.c.b16 %v1425, %v1423
      %v1484 = vpack.c.b16 %v1428, %v1426
      %v1485 = vpack.c.b16 %v1429, %v1427
      %v1486 = vpack.c.b16 %v1432, %v1430
      %v1487 = vpack.c.b16 %v1433, %v1431
      %v1488 = vpack.c.b16 %v1436, %v1434
      %v1489 = vpack.c.b16 %v1437, %v1435
      %v1490 = vpack.c.b16 %v1440, %v1438
      %v1491 = vpack.c.b16 %v1441, %v1439
      %v1492 = vpack.c.b16 %v1444, %v1442
      %v1493 = vpack.c.b16 %v1445, %v1443
      %v1494 = vpack.c.b16 %v1448, %v1446
      %v1495 = vpack.c.b16 %v1449, %v1447
      %v1496 = vpack.c.b16 %v1452, %v1450
      %v1497 = vpack.c.b16 %v1453, %v1451
      %v1498 = vpack.c.b16 %v1456, %v1454
      %v1499 = vpack.c.b16 %v1457, %v1455
      %v1500 = vpack.c.b16 %v1460, %v1458
      %v1501 = vpack.c.b16 %v1461, %v1459
      %v1502 = vpack.c.b16 %v1464, %v1462
      %v1503 = vpack.c.b16 %v1465, %v1463
      %v1504 = vpack.c.b16 %v1468, %v1466
      %v1505 = vpack.c.b16 %v1469, %v1467
      %v1506 = vpack.c.b16 %v1472, %v1470
      %v1507 = vpack.c.b16 %v1473, %v1471
      %v1508 = vpack.c.b16 %v1476, %v1474
      %v1509 = vpack.c.b16 %v1477, %v1475
      %1542 = vmatprep.subr.bf16.mxu0 %v1479
      %1543 = vmatpush1.bf16.msra.mxu0 %v1478
      %1544 = vmatprep.subr.bf16.mxu0 %v1481
      %1545 = vmatpush1.bf16.msra.mxu0 %v1480
      %1546 = vmatprep.subr.bf16.mxu0 %v1483
      %1547 = vmatpush1.bf16.msra.mxu0 %v1482
      %1548 = vmatprep.subr.bf16.mxu0 %v1485
      %1549 = vmatpush1.bf16.msra.mxu0 %v1484
      %1550 = vmatprep.subr.bf16.mxu0 %v1487
      %1551 = vmatpush1.bf16.msra.mxu0 %v1486
      %1552 = vmatprep.subr.bf16.mxu0 %v1489
      %1553 = vmatpush1.bf16.msra.mxu0 %v1488
      %1554 = vmatprep.subr.bf16.mxu0 %v1491
      %1555 = vmatpush1.bf16.msra.mxu0 %v1490
      %1556 = vmatprep.subr.bf16.mxu0 %v1493
      %1557 = vmatpush1.bf16.msra.mxu0 %v1492
      %1558 = vmatprep.subr.bf16.mxu0 %v1495
      %1559 = vmatpush1.bf16.msra.mxu0 %v1494
      %1560 = vmatprep.subr.bf16.mxu0 %v1497
      %1561 = vmatpush1.bf16.msra.mxu0 %v1496
      %1562 = vmatprep.subr.bf16.mxu0 %v1499
      %1563 = vmatpush1.bf16.msra.mxu0 %v1498
      %1564 = vmatprep.subr.bf16.mxu0 %v1501
      %1565 = vmatpush1.bf16.msra.mxu0 %v1500
      %1566 = vmatprep.subr.bf16.mxu0 %v1503
      %1567 = vmatpush1.bf16.msra.mxu0 %v1502
      %1568 = vmatprep.subr.bf16.mxu0 %v1505
      %1569 = vmatpush1.bf16.msra.mxu0 %v1504
      %1570 = vmatprep.subr.bf16.mxu0 %v1507
      %1571 = vmatpush1.bf16.msra.mxu0 %v1506
      %1572 = vmatprep.subr.bf16.mxu0 %v1509
      %1573 = vmatpush1.bf16.msra.mxu0 %v1508
      %1574 = vmatprep.mubr.bf16.mxu0 %v1379
      %1575 = vmatmul.mubr.bf16.gmra.mrb[0].mxu0 %v1376
      %v1576 = vpop.f32.mrb[0].mxu0
      %v1577 = vadd.f32 0.0, %v1576
      %v1578 = vpop.f32.mrb[0].mxu0
      %v1579 = vadd.f32 0.0, %v1578
      %v1580 = vpop.f32.mrb[0].mxu0
      %v1581 = vadd.f32 0.0, %v1580
      %v1582 = vpop.f32.mrb[0].mxu0
      %v1583 = vadd.f32 0.0, %v1582
      %1584 = vdwg.mxu0
      %v1585 = vld [vmem:[#allocation4] sm:$0xff]
      %v1586 = vld [vmem:[#allocation4 + $0x8] sm:$0xff]
      %v1587 = vld [vmem:[#allocation4 + $0x10] sm:$0xff]
      %v1588 = vld [vmem:[#allocation4 + $0x18] sm:$0xff]
      %v1589 = vadd.f32 %v1585, %v1577
      %v1590 = vadd.f32 %v1586, %v1579
      %v1591 = vadd.f32 %v1587, %v1581
      %v1592 = vadd.f32 %v1588, %v1583
      %1593 = vst [vmem:[#allocation4] sm:$0xff] %v1589
      %1594 = vst [vmem:[#allocation4 + $0x8] sm:$0xff] %v1590
      %1595 = vst [vmem:[#allocation4 + $0x10] sm:$0xff] %v1591
      %1596 = vst [vmem:[#allocation4 + $0x18] sm:$0xff] %v1592
      %v1597 = vld [vmem:[#allocation2] sm:$0xf8]
      %v1598 = vld [vmem:[#allocation2 + $0x8] sm:$0xf8]
      %v1599 = vld [vmem:[#allocation2 + $0x10] sm:$0xff]
      %v1600 = vld [vmem:[#allocation2 + $0x18] sm:$0xff]
      %v1601 = vld [vmem:[#allocation2 + $0x20] sm:$0x7]
      %v1602 = vld [vmem:[#allocation2 + $0x28] sm:$0x7]
      %s1603 = scalar_lea.vmem %s3, 768
      %v1604 = vld [vmem:[%s1603] sm:$0xff]
      %v1605 = vld [vmem:[%s1603 + $0x8] sm:$0xff]
      %v1606 = vld [vmem:[%s1603 + $0x10] sm:$0xff]
      %v1607 = vld [vmem:[%s1603 + $0x18] sm:$0xff]
      %v1608 = vld [vmem:[%s1603 + $0x20] sm:$0xff]
      %v1609 = vld [vmem:[%s1603 + $0x28] sm:$0xff]
      %v1610 = vld [vmem:[%s1603 + $0x30] sm:$0xff]
      %v1611 = vld [vmem:[%s1603 + $0x38] sm:$0xff]
      %v1612 = vld [vmem:[%s1603 + $0x40] sm:$0xff]
      %v1613 = vld [vmem:[%s1603 + $0x48] sm:$0xff]
      %v1614 = vld [vmem:[%s1603 + $0x50] sm:$0xff]
      %v1615 = vld [vmem:[%s1603 + $0x58] sm:$0xff]
      %v1616 = vld [vmem:[%s1603 + $0x60] sm:$0xff]
      %v1617 = vld [vmem:[%s1603 + $0x68] sm:$0xff]
      %v1618 = vld [vmem:[%s1603 + $0x70] sm:$0xff]
      %v1619 = vld [vmem:[%s1603 + $0x78] sm:$0xff]
      %v1620 = vld [vmem:[%s1603 + $0x80] sm:$0xff]
      %v1621 = vld [vmem:[%s1603 + $0x88] sm:$0xff]
      %v1622 = vld [vmem:[%s1603 + $0x90] sm:$0xff]
      %v1623 = vld [vmem:[%s1603 + $0x98] sm:$0xff]
      %v1624 = vld [vmem:[%s1603 + $0xa0] sm:$0xff]
      %v1625 = vld [vmem:[%s1603 + $0xa8] sm:$0xff]
      %v1626 = vld [vmem:[%s1603 + $0xb0] sm:$0xff]
      %v1627 = vld [vmem:[%s1603 + $0xb8] sm:$0xff]
      %v1628 = vld [vmem:[%s1603 + $0xc0] sm:$0xff]
      %v1629 = vld [vmem:[%s1603 + $0xc8] sm:$0xff]
      %v1630 = vld [vmem:[%s1603 + $0xd0] sm:$0xff]
      %v1631 = vld [vmem:[%s1603 + $0xd8] sm:$0xff]
      %v1632 = vld [vmem:[%s1603 + $0xe0] sm:$0xff]
      %v1633 = vld [vmem:[%s1603 + $0xe8] sm:$0xff]
      %v1634 = vld [vmem:[%s1603 + $0xf0] sm:$0xff]
      %v1635 = vld [vmem:[%s1603 + $0xf8] sm:$0xff]
      %v1636 = vpack.c.bf16 %v1599, %v1597
      %v1637 = vpack.c.bf16 %v1600, %v1598
      %v1638 = vpack.c.bf16 %v1601, %v1601
      %v1639 = vpack.c.bf16 %v1602, %v1602
      %vm1640 = vsmask.f32 6400
      %v1642 = vshrl.u32 %v1636, 16
      %v1644 = vrot.slane %v1642, 1
      %v1645 = vshll.u32 %v1636, 16
      %v1647 = vrot.slane %v1645, 2
      %v1648 = vor.u32 %v1644, %v1647
      %v1650 = vshrl.u32 %v1638, 16
      %v1652 = vrot.slane %v1650, 1
      %v1653 = vshll.u32 %v1638, 16
      %v1655 = vrot.slane %v1653, 2
      %v1656 = vor.u32 %v1652, %v1655
      %v1657 = vsel %vm1640, %v1648, %v1656
      %v1659 = vshrl.u32 %v1637, 16
      %v1661 = vrot.slane %v1659, 1
      %v1662 = vshll.u32 %v1637, 16
      %v1664 = vrot.slane %v1662, 2
      %v1665 = vor.u32 %v1661, %v1664
      %v1667 = vshrl.u32 %v1639, 16
      %v1669 = vrot.slane %v1667, 1
      %v1670 = vshll.u32 %v1639, 16
      %v1672 = vrot.slane %v1670, 2
      %v1673 = vor.u32 %v1669, %v1672
      %v1674 = vsel %vm1640, %v1665, %v1673
      %v1709 = vunpack.c.l.b16 %v1604
      %v1710 = vunpack.c.h.b16 %v1604
      %v1711 = vunpack.c.l.b16 %v1605
      %v1712 = vunpack.c.h.b16 %v1605
      %v1713 = vunpack.c.l.b16 %v1606
      %v1714 = vunpack.c.h.b16 %v1606
      %v1715 = vunpack.c.l.b16 %v1607
      %v1716 = vunpack.c.h.b16 %v1607
      %v1717 = vunpack.c.l.b16 %v1608
      %v1718 = vunpack.c.h.b16 %v1608
      %v1719 = vunpack.c.l.b16 %v1609
      %v1720 = vunpack.c.h.b16 %v1609
      %v1721 = vunpack.c.l.b16 %v1610
      %v1722 = vunpack.c.h.b16 %v1610
      %v1723 = vunpack.c.l.b16 %v1611
      %v1724 = vunpack.c.h.b16 %v1611
      %v1725 = vunpack.c.l.b16 %v1612
      %v1726 = vunpack.c.h.b16 %v1612
      %v1727 = vunpack.c.l.b16 %v1613
      %v1728 = vunpack.c.h.b16 %v1613
      %v1729 = vunpack.c.l.b16 %v1614
      %v1730 = vunpack.c.h.b16 %v1614
      %v1731 = vunpack.c.l.b16 %v1615
      %v1732 = vunpack.c.h.b16 %v1615
      %v1733 = vunpack.c.l.b16 %v1616
      %v1734 = vunpack.c.h.b16 %v1616
      %v1735 = vunpack.c.l.b16 %v1617
      %v1736 = vunpack.c.h.b16 %v1617
      %v1737 = vunpack.c.l.b16 %v1618
      %v1738 = vunpack.c.h.b16 %v1618
      %v1739 = vunpack.c.l.b16 %v1619
      %v1740 = vunpack.c.h.b16 %v1619
      %v1741 = vunpack.c.l.b16 %v1620
      %v1742 = vunpack.c.h.b16 %v1620
      %v1743 = vunpack.c.l.b16 %v1621
      %v1744 = vunpack.c.h.b16 %v1621
      %v1745 = vunpack.c.l.b16 %v1622
      %v1746 = vunpack.c.h.b16 %v1622
      %v1747 = vunpack.c.l.b16 %v1623
      %v1748 = vunpack.c.h.b16 %v1623
      %v1749 = vunpack.c.l.b16 %v1624
      %v1750 = vunpack.c.h.b16 %v1624
      %v1751 = vunpack.c.l.b16 %v1625
      %v1752 = vunpack.c.h.b16 %v1625
      %v1753 = vunpack.c.l.b16 %v1626
      %v1754 = vunpack.c.h.b16 %v1626
      %v1755 = vunpack.c.l.b16 %v1627
      %v1756 = vunpack.c.h.b16 %v1627
      %v1757 = vunpack.c.l.b16 %v1628
      %v1758 = vunpack.c.h.b16 %v1628
      %v1759 = vunpack.c.l.b16 %v1629
      %v1760 = vunpack.c.h.b16 %v1629
      %v1761 = vunpack.c.l.b16 %v1630
      %v1762 = vunpack.c.h.b16 %v1630
      %v1763 = vunpack.c.l.b16 %v1631
      %v1764 = vunpack.c.h.b16 %v1631
      %v1765 = vunpack.c.l.b16 %v1632
      %v1766 = vunpack.c.h.b16 %v1632
      %v1767 = vunpack.c.l.b16 %v1633
      %v1768 = vunpack.c.h.b16 %v1633
      %v1769 = vunpack.c.l.b16 %v1634
      %v1770 = vunpack.c.h.b16 %v1634
      %v1771 = vunpack.c.l.b16 %v1635
      %v1772 = vunpack.c.h.b16 %v1635
      %v1773 = vpack.c.b16 %v1711, %v1709
      %v1774 = vpack.c.b16 %v1712, %v1710
      %v1775 = vpack.c.b16 %v1715, %v1713
      %v1776 = vpack.c.b16 %v1716, %v1714
      %v1777 = vpack.c.b16 %v1719, %v1717
      %v1778 = vpack.c.b16 %v1720, %v1718
      %v1779 = vpack.c.b16 %v1723, %v1721
      %v1780 = vpack.c.b16 %v1724, %v1722
      %v1781 = vpack.c.b16 %v1727, %v1725
      %v1782 = vpack.c.b16 %v1728, %v1726
      %v1783 = vpack.c.b16 %v1731, %v1729
      %v1784 = vpack.c.b16 %v1732, %v1730
      %v1785 = vpack.c.b16 %v1735, %v1733
      %v1786 = vpack.c.b16 %v1736, %v1734
      %v1787 = vpack.c.b16 %v1739, %v1737
      %v1788 = vpack.c.b16 %v1740, %v1738
      %v1789 = vpack.c.b16 %v1743, %v1741
      %v1790 = vpack.c.b16 %v1744, %v1742
      %v1791 = vpack.c.b16 %v1747, %v1745
      %v1792 = vpack.c.b16 %v1748, %v1746
      %v1793 = vpack.c.b16 %v1751, %v1749
      %v1794 = vpack.c.b16 %v1752, %v1750
      %v1795 = vpack.c.b16 %v1755, %v1753
      %v1796 = vpack.c.b16 %v1756, %v1754
      %v1797 = vpack.c.b16 %v1759, %v1757
      %v1798 = vpack.c.b16 %v1760, %v1758
      %v1799 = vpack.c.b16 %v1763, %v1761
      %v1800 = vpack.c.b16 %v1764, %v1762
      %v1801 = vpack.c.b16 %v1767, %v1765
      %v1802 = vpack.c.b16 %v1768, %v1766
      %v1803 = vpack.c.b16 %v1771, %v1769
      %v1804 = vpack.c.b16 %v1772, %v1770
      %1837 = vmatprep.subr.bf16.mxu0 %v1774
      %1838 = vmatpush1.bf16.msra.mxu0 %v1773
      %1839 = vmatprep.subr.bf16.mxu0 %v1776
      %1840 = vmatpush1.bf16.msra.mxu0 %v1775
      %1841 = vmatprep.subr.bf16.mxu0 %v1778
      %1842 = vmatpush1.bf16.msra.mxu0 %v1777
      %1843 = vmatprep.subr.bf16.mxu0 %v1780
      %1844 = vmatpush1.bf16.msra.mxu0 %v1779
      %1845 = vmatprep.subr.bf16.mxu0 %v1782
      %1846 = vmatpush1.bf16.msra.mxu0 %v1781
      %1847 = vmatprep.subr.bf16.mxu0 %v1784
      %1848 = vmatpush1.bf16.msra.mxu0 %v1783
      %1849 = vmatprep.subr.bf16.mxu0 %v1786
      %1850 = vmatpush1.bf16.msra.mxu0 %v1785
      %1851 = vmatprep.subr.bf16.mxu0 %v1788
      %1852 = vmatpush1.bf16.msra.mxu0 %v1787
      %1853 = vmatprep.subr.bf16.mxu0 %v1790
      %1854 = vmatpush1.bf16.msra.mxu0 %v1789
      %1855 = vmatprep.subr.bf16.mxu0 %v1792
      %1856 = vmatpush1.bf16.msra.mxu0 %v1791
      %1857 = vmatprep.subr.bf16.mxu0 %v1794
      %1858 = vmatpush1.bf16.msra.mxu0 %v1793
      %1859 = vmatprep.subr.bf16.mxu0 %v1796
      %1860 = vmatpush1.bf16.msra.mxu0 %v1795
      %1861 = vmatprep.subr.bf16.mxu0 %v1798
      %1862 = vmatpush1.bf16.msra.mxu0 %v1797
      %1863 = vmatprep.subr.bf16.mxu0 %v1800
      %1864 = vmatpush1.bf16.msra.mxu0 %v1799
      %1865 = vmatprep.subr.bf16.mxu0 %v1802
      %1866 = vmatpush1.bf16.msra.mxu0 %v1801
      %1867 = vmatprep.subr.bf16.mxu0 %v1804
      %1868 = vmatpush1.bf16.msra.mxu0 %v1803
      %1869 = vmatprep.mubr.bf16.mxu0 %v1674
      %1870 = vmatmul.mubr.bf16.gmra.mrb[0].mxu0 %v1657
      %v1871 = vpop.f32.mrb[0].mxu0
      %v1872 = vadd.f32 0.0, %v1871
      %v1873 = vpop.f32.mrb[0].mxu0
      %v1874 = vadd.f32 0.0, %v1873
      %v1875 = vpop.f32.mrb[0].mxu0
      %v1876 = vadd.f32 0.0, %v1875
      %v1877 = vpop.f32.mrb[0].mxu0
      %v1878 = vadd.f32 0.0, %v1877
      %1879 = vdwg.mxu0
      %v1880 = vld [vmem:[#allocation4] sm:$0xff]
      %v1881 = vld [vmem:[#allocation4 + $0x8] sm:$0xff]
      %v1882 = vld [vmem:[#allocation4 + $0x10] sm:$0xff]
      %v1883 = vld [vmem:[#allocation4 + $0x18] sm:$0xff]
      %v1884 = vadd.f32 %v1880, %v1872
      %v1885 = vadd.f32 %v1881, %v1874
      %v1886 = vadd.f32 %v1882, %v1876
      %v1887 = vadd.f32 %v1883, %v1878
      %1888 = vst [vmem:[#allocation4] sm:$0xff] %v1884
      %1889 = vst [vmem:[#allocation4 + $0x8] sm:$0xff] %v1885
      %1890 = vst [vmem:[#allocation4 + $0x10] sm:$0xff] %v1886
      %1891 = vst [vmem:[#allocation4 + $0x18] sm:$0xff] %v1887
      %v1892 = vld [vmem:[#allocation2] sm:$0xf0]
      %v1893 = vld [vmem:[#allocation2 + $0x8] sm:$0xf0]
      %v1894 = vld [vmem:[#allocation2 + $0x10] sm:$0xff]
      %v1895 = vld [vmem:[#allocation2 + $0x18] sm:$0xff]
      %v1896 = vld [vmem:[#allocation2 + $0x20] sm:$0xf]
      %v1897 = vld [vmem:[#allocation2 + $0x28] sm:$0xf]
      %s1898 = scalar_lea.vmem %s3, 1024
      %v1899 = vld [vmem:[%s1898] sm:$0xff]
      %v1900 = vld [vmem:[%s1898 + $0x8] sm:$0xff]
      %v1901 = vld [vmem:[%s1898 + $0x10] sm:$0xff]
      %v1902 = vld [vmem:[%s1898 + $0x18] sm:$0xff]
      %v1903 = vld [vmem:[%s1898 + $0x20] sm:$0xff]
      %v1904 = vld [vmem:[%s1898 + $0x28] sm:$0xff]
      %v1905 = vld [vmem:[%s1898 + $0x30] sm:$0xff]
      %v1906 = vld [vmem:[%s1898 + $0x38] sm:$0xff]
      %v1907 = vld [vmem:[%s1898 + $0x40] sm:$0xff]
      %v1908 = vld [vmem:[%s1898 + $0x48] sm:$0xff]
      %v1909 = vld [vmem:[%s1898 + $0x50] sm:$0xff]
      %v1910 = vld [vmem:[%s1898 + $0x58] sm:$0xff]
      %v1911 = vld [vmem:[%s1898 + $0x60] sm:$0xff]
      %v1912 = vld [vmem:[%s1898 + $0x68] sm:$0xff]
      %v1913 = vld [vmem:[%s1898 + $0x70] sm:$0xff]
      %v1914 = vld [vmem:[%s1898 + $0x78] sm:$0xff]
      %v1915 = vld [vmem:[%s1898 + $0x80] sm:$0xff]
      %v1916 = vld [vmem:[%s1898 + $0x88] sm:$0xff]
      %v1917 = vld [vmem:[%s1898 + $0x90] sm:$0xff]
      %v1918 = vld [vmem:[%s1898 + $0x98] sm:$0xff]
      %v1919 = vld [vmem:[%s1898 + $0xa0] sm:$0xff]
      %v1920 = vld [vmem:[%s1898 + $0xa8] sm:$0xff]
      %v1921 = vld [vmem:[%s1898 + $0xb0] sm:$0xff]
      %v1922 = vld [vmem:[%s1898 + $0xb8] sm:$0xff]
      %v1923 = vld [vmem:[%s1898 + $0xc0] sm:$0xff]
      %v1924 = vld [vmem:[%s1898 + $0xc8] sm:$0xff]
      %v1925 = vld [vmem:[%s1898 + $0xd0] sm:$0xff]
      %v1926 = vld [vmem:[%s1898 + $0xd8] sm:$0xff]
      %v1927 = vld [vmem:[%s1898 + $0xe0] sm:$0xff]
      %v1928 = vld [vmem:[%s1898 + $0xe8] sm:$0xff]
      %v1929 = vld [vmem:[%s1898 + $0xf0] sm:$0xff]
      %v1930 = vld [vmem:[%s1898 + $0xf8] sm:$0xff]
      %v1931 = vpack.c.bf16 %v1894, %v1892
      %v1932 = vpack.c.bf16 %v1895, %v1893
      %v1933 = vpack.c.bf16 %v1896, %v1896
      %v1934 = vpack.c.bf16 %v1897, %v1897
      %vm1939 = vcmask 1045504
      %v1940 = vrot.slane %v1931, 2
      %v1941 = vrot.slane %v1933, 2
      %v1942 = vsel %vm1939, %v1940, %v1941
      %v1943 = vrot.slane %v1932, 2
      %v1944 = vrot.slane %v1934, 2
      %v1945 = vsel %vm1939, %v1943, %v1944
      %v1980 = vunpack.c.l.b16 %v1899
      %v1981 = vunpack.c.h.b16 %v1899
      %v1982 = vunpack.c.l.b16 %v1900
      %v1983 = vunpack.c.h.b16 %v1900
      %v1984 = vunpack.c.l.b16 %v1901
      %v1985 = vunpack.c.h.b16 %v1901
      %v1986 = vunpack.c.l.b16 %v1902
      %v1987 = vunpack.c.h.b16 %v1902
      %v1988 = vunpack.c.l.b16 %v1903
      %v1989 = vunpack.c.h.b16 %v1903
      %v1990 = vunpack.c.l.b16 %v1904
      %v1991 = vunpack.c.h.b16 %v1904
      %v1992 = vunpack.c.l.b16 %v1905
      %v1993 = vunpack.c.h.b16 %v1905
      %v1994 = vunpack.c.l.b16 %v1906
      %v1995 = vunpack.c.h.b16 %v1906
      %v1996 = vunpack.c.l.b16 %v1907
      %v1997 = vunpack.c.h.b16 %v1907
      %v1998 = vunpack.c.l.b16 %v1908
      %v1999 = vunpack.c.h.b16 %v1908
      %v2000 = vunpack.c.l.b16 %v1909
      %v2001 = vunpack.c.h.b16 %v1909
      %v2002 = vunpack.c.l.b16 %v1910
      %v2003 = vunpack.c.h.b16 %v1910
      %v2004 = vunpack.c.l.b16 %v1911
      %v2005 = vunpack.c.h.b16 %v1911
      %v2006 = vunpack.c.l.b16 %v1912
      %v2007 = vunpack.c.h.b16 %v1912
      %v2008 = vunpack.c.l.b16 %v1913
      %v2009 = vunpack.c.h.b16 %v1913
      %v2010 = vunpack.c.l.b16 %v1914
      %v2011 = vunpack.c.h.b16 %v1914
      %v2012 = vunpack.c.l.b16 %v1915
      %v2013 = vunpack.c.h.b16 %v1915
      %v2014 = vunpack.c.l.b16 %v1916
      %v2015 = vunpack.c.h.b16 %v1916
      %v2016 = vunpack.c.l.b16 %v1917
      %v2017 = vunpack.c.h.b16 %v1917
      %v2018 = vunpack.c.l.b16 %v1918
      %v2019 = vunpack.c.h.b16 %v1918
      %v2020 = vunpack.c.l.b16 %v1919
      %v2021 = vunpack.c.h.b16 %v1919
      %v2022 = vunpack.c.l.b16 %v1920
      %v2023 = vunpack.c.h.b16 %v1920
      %v2024 = vunpack.c.l.b16 %v1921
      %v2025 = vunpack.c.h.b16 %v1921
      %v2026 = vunpack.c.l.b16 %v1922
      %v2027 = vunpack.c.h.b16 %v1922
      %v2028 = vunpack.c.l.b16 %v1923
      %v2029 = vunpack.c.h.b16 %v1923
      %v2030 = vunpack.c.l.b16 %v1924
      %v2031 = vunpack.c.h.b16 %v1924
      %v2032 = vunpack.c.l.b16 %v1925
      %v2033 = vunpack.c.h.b16 %v1925
      %v2034 = vunpack.c.l.b16 %v1926
      %v2035 = vunpack.c.h.b16 %v1926
      %v2036 = vunpack.c.l.b16 %v1927
      %v2037 = vunpack.c.h.b16 %v1927
      %v2038 = vunpack.c.l.b16 %v1928
      %v2039 = vunpack.c.h.b16 %v1928
      %v2040 = vunpack.c.l.b16 %v1929
      %v2041 = vunpack.c.h.b16 %v1929
      %v2042 = vunpack.c.l.b16 %v1930
      %v2043 = vunpack.c.h.b16 %v1930
      %v2044 = vpack.c.b16 %v1982, %v1980
      %v2045 = vpack.c.b16 %v1983, %v1981
      %v2046 = vpack.c.b16 %v1986, %v1984
      %v2047 = vpack.c.b16 %v1987, %v1985
      %v2048 = vpack.c.b16 %v1990, %v1988
      %v2049 = vpack.c.b16 %v1991, %v1989
      %v2050 = vpack.c.b16 %v1994, %v1992
      %v2051 = vpack.c.b16 %v1995, %v1993
      %v2052 = vpack.c.b16 %v1998, %v1996
      %v2053 = vpack.c.b16 %v1999, %v1997
      %v2054 = vpack.c.b16 %v2002, %v2000
      %v2055 = vpack.c.b16 %v2003, %v2001
      %v2056 = vpack.c.b16 %v2006, %v2004
      %v2057 = vpack.c.b16 %v2007, %v2005
      %v2058 = vpack.c.b16 %v2010, %v2008
      %v2059 = vpack.c.b16 %v2011, %v2009
      %v2060 = vpack.c.b16 %v2014, %v2012
      %v2061 = vpack.c.b16 %v2015, %v2013
      %v2062 = vpack.c.b16 %v2018, %v2016
      %v2063 = vpack.c.b16 %v2019, %v2017
      %v2064 = vpack.c.b16 %v2022, %v2020
      %v2065 = vpack.c.b16 %v2023, %v2021
      %v2066 = vpack.c.b16 %v2026, %v2024
      %v2067 = vpack.c.b16 %v2027, %v2025
      %v2068 = vpack.c.b16 %v2030, %v2028
      %v2069 = vpack.c.b16 %v2031, %v2029
      %v2070 = vpack.c.b16 %v2034, %v2032
      %v2071 = vpack.c.b16 %v2035, %v2033
      %v2072 = vpack.c.b16 %v2038, %v2036
      %v2073 = vpack.c.b16 %v2039, %v2037
      %v2074 = vpack.c.b16 %v2042, %v2040
      %v2075 = vpack.c.b16 %v2043, %v2041
      %2108 = vmatprep.subr.bf16.mxu0 %v2045
      %2109 = vmatpush1.bf16.msra.mxu0 %v2044
      %2110 = vmatprep.subr.bf16.mxu0 %v2047
      %2111 = vmatpush1.bf16.msra.mxu0 %v2046
      %2112 = vmatprep.subr.bf16.mxu0 %v2049
      %2113 = vmatpush1.bf16.msra.mxu0 %v2048
      %2114 = vmatprep.subr.bf16.mxu0 %v2051
      %2115 = vmatpush1.bf16.msra.mxu0 %v2050
      %2116 = vmatprep.subr.bf16.mxu0 %v2053
      %2117 = vmatpush1.bf16.msra.mxu0 %v2052
      %2118 = vmatprep.subr.bf16.mxu0 %v2055
      %2119 = vmatpush1.bf16.msra.mxu0 %v2054
      %2120 = vmatprep.subr.bf16.mxu0 %v2057
      %2121 = vmatpush1.bf16.msra.mxu0 %v2056
      %2122 = vmatprep.subr.bf16.mxu0 %v2059
      %2123 = vmatpush1.bf16.msra.mxu0 %v2058
      %2124 = vmatprep.subr.bf16.mxu0 %v2061
      %2125 = vmatpush1.bf16.msra.mxu0 %v2060
      %2126 = vmatprep.subr.bf16.mxu0 %v2063
      %2127 = vmatpush1.bf16.msra.mxu0 %v2062
      %2128 = vmatprep.subr.bf16.mxu0 %v2065
      %2129 = vmatpush1.bf16.msra.mxu0 %v2064
      %2130 = vmatprep.subr.bf16.mxu0 %v2067
      %2131 = vmatpush1.bf16.msra.mxu0 %v2066
      %2132 = vmatprep.subr.bf16.mxu0 %v2069
      %2133 = vmatpush1.bf16.msra.mxu0 %v2068
      %2134 = vmatprep.subr.bf16.mxu0 %v2071
      %2135 = vmatpush1.bf16.msra.mxu0 %v2070
      %2136 = vmatprep.subr.bf16.mxu0 %v2073
      %2137 = vmatpush1.bf16.msra.mxu0 %v2072
      %2138 = vmatprep.subr.bf16.mxu0 %v2075
      %2139 = vmatpush1.bf16.msra.mxu0 %v2074
      %2140 = vmatprep.mubr.bf16.mxu0 %v1945
      %2141 = vmatmul.mubr.bf16.gmra.mrb[0].mxu0 %v1942
      %v2142 = vpop.f32.mrb[0].mxu0
      %v2143 = vadd.f32 0.0, %v2142
      %v2144 = vpop.f32.mrb[0].mxu0
      %v2145 = vadd.f32 0.0, %v2144
      %v2146 = vpop.f32.mrb[0].mxu0
      %v2147 = vadd.f32 0.0, %v2146
      %v2148 = vpop.f32.mrb[0].mxu0
      %v2149 = vadd.f32 0.0, %v2148
      %2150 = vdwg.mxu0
      %v2151 = vld [vmem:[#allocation4] sm:$0xff]
      %v2152 = vld [vmem:[#allocation4 + $0x8] sm:$0xff]
      %v2153 = vld [vmem:[#allocation4 + $0x10] sm:$0xff]
      %v2154 = vld [vmem:[#allocation4 + $0x18] sm:$0xff]
      %v2155 = vadd.f32 %v2151, %v2143
      %v2156 = vadd.f32 %v2152, %v2145
      %v2157 = vadd.f32 %v2153, %v2147
      %v2158 = vadd.f32 %v2154, %v2149
      %2159 = vst [vmem:[#allocation4] sm:$0xff] %v2155
      %2160 = vst [vmem:[#allocation4 + $0x8] sm:$0xff] %v2156
      %2161 = vst [vmem:[#allocation4 + $0x10] sm:$0xff] %v2157
      %2162 = vst [vmem:[#allocation4 + $0x18] sm:$0xff] %v2158
      %v2163 = vld [vmem:[#allocation2] sm:$0xe0]
      %v2164 = vld [vmem:[#allocation2 + $0x8] sm:$0xe0]
      %v2165 = vld [vmem:[#allocation2 + $0x10] sm:$0xff]
      %v2166 = vld [vmem:[#allocation2 + $0x18] sm:$0xff]
      %v2167 = vld [vmem:[#allocation2 + $0x20] sm:$0x1f]
      %v2168 = vld [vmem:[#allocation2 + $0x28] sm:$0x1f]
      %s2169 = scalar_lea.vmem %s3, 1280
      %v2170 = vld [vmem:[%s2169] sm:$0xff]
      %v2171 = vld [vmem:[%s2169 + $0x8] sm:$0xff]
      %v2172 = vld [vmem:[%s2169 + $0x10] sm:$0xff]
      %v2173 = vld [vmem:[%s2169 + $0x18] sm:$0xff]
      %v2174 = vld [vmem:[%s2169 + $0x20] sm:$0xff]
      %v2175 = vld [vmem:[%s2169 + $0x28] sm:$0xff]
      %v2176 = vld [vmem:[%s2169 + $0x30] sm:$0xff]
      %v2177 = vld [vmem:[%s2169 + $0x38] sm:$0xff]
      %v2178 = vld [vmem:[%s2169 + $0x40] sm:$0xff]
      %v2179 = vld [vmem:[%s2169 + $0x48] sm:$0xff]
      %v2180 = vld [vmem:[%s2169 + $0x50] sm:$0xff]
      %v2181 = vld [vmem:[%s2169 + $0x58] sm:$0xff]
      %v2182 = vld [vmem:[%s2169 + $0x60] sm:$0xff]
      %v2183 = vld [vmem:[%s2169 + $0x68] sm:$0xff]
      %v2184 = vld [vmem:[%s2169 + $0x70] sm:$0xff]
      %v2185 = vld [vmem:[%s2169 + $0x78] sm:$0xff]
      %v2186 = vld [vmem:[%s2169 + $0x80] sm:$0xff]
      %v2187 = vld [vmem:[%s2169 + $0x88] sm:$0xff]
      %v2188 = vld [vmem:[%s2169 + $0x90] sm:$0xff]
      %v2189 = vld [vmem:[%s2169 + $0x98] sm:$0xff]
      %v2190 = vld [vmem:[%s2169 + $0xa0] sm:$0xff]
      %v2191 = vld [vmem:[%s2169 + $0xa8] sm:$0xff]
      %v2192 = vld [vmem:[%s2169 + $0xb0] sm:$0xff]
      %v2193 = vld [vmem:[%s2169 + $0xb8] sm:$0xff]
      %v2194 = vld [vmem:[%s2169 + $0xc0] sm:$0xff]
      %v2195 = vld [vmem:[%s2169 + $0xc8] sm:$0xff]
      %v2196 = vld [vmem:[%s2169 + $0xd0] sm:$0xff]
      %v2197 = vld [vmem:[%s2169 + $0xd8] sm:$0xff]
      %v2198 = vld [vmem:[%s2169 + $0xe0] sm:$0xff]
      %v2199 = vld [vmem:[%s2169 + $0xe8] sm:$0xff]
      %v2200 = vld [vmem:[%s2169 + $0xf0] sm:$0xff]
      %v2201 = vld [vmem:[%s2169 + $0xf8] sm:$0xff]
      %v2202 = vpack.c.bf16 %v2165, %v2163
      %v2203 = vpack.c.bf16 %v2166, %v2164
      %v2204 = vpack.c.bf16 %v2167, %v2167
      %v2205 = vpack.c.bf16 %v2168, %v2168
      %vm2206 = vsmask.f32 5376
      %v2208 = vshrl.u32 %v2202, 16
      %v2210 = vrot.slane %v2208, 2
      %v2211 = vshll.u32 %v2202, 16
      %v2213 = vrot.slane %v2211, 3
      %v2214 = vor.u32 %v2210, %v2213
      %v2216 = vshrl.u32 %v2204, 16
      %v2218 = vrot.slane %v2216, 2
      %v2219 = vshll.u32 %v2204, 16
      %v2221 = vrot.slane %v2219, 3
      %v2222 = vor.u32 %v2218, %v2221
      %v2223 = vsel %vm2206, %v2214, %v2222
      %v2225 = vshrl.u32 %v2203, 16
      %v2227 = vrot.slane %v2225, 2
      %v2228 = vshll.u32 %v2203, 16
      %v2230 = vrot.slane %v2228, 3
      %v2231 = vor.u32 %v2227, %v2230
      %v2233 = vshrl.u32 %v2205, 16
      %v2235 = vrot.slane %v2233, 2
      %v2236 = vshll.u32 %v2205, 16
      %v2238 = vrot.slane %v2236, 3
      %v2239 = vor.u32 %v2235, %v2238
      %v2240 = vsel %vm2206, %v2231, %v2239
      %v2275 = vunpack.c.l.b16 %v2170
      %v2276 = vunpack.c.h.b16 %v2170
      %v2277 = vunpack.c.l.b16 %v2171
      %v2278 = vunpack.c.h.b16 %v2171
      %v2279 = vunpack.c.l.b16 %v2172
      %v2280 = vunpack.c.h.b16 %v2172
      %v2281 = vunpack.c.l.b16 %v2173
      %v2282 = vunpack.c.h.b16 %v2173
      %v2283 = vunpack.c.l.b16 %v2174
      %v2284 = vunpack.c.h.b16 %v2174
      %v2285 = vunpack.c.l.b16 %v2175
      %v2286 = vunpack.c.h.b16 %v2175
      %v2287 = vunpack.c.l.b16 %v2176
      %v2288 = vunpack.c.h.b16 %v2176
      %v2289 = vunpack.c.l.b16 %v2177
      %v2290 = vunpack.c.h.b16 %v2177
      %v2291 = vunpack.c.l.b16 %v2178
      %v2292 = vunpack.c.h.b16 %v2178
      %v2293 = vunpack.c.l.b16 %v2179
      %v2294 = vunpack.c.h.b16 %v2179
      %v2295 = vunpack.c.l.b16 %v2180
      %v2296 = vunpack.c.h.b16 %v2180
      %v2297 = vunpack.c.l.b16 %v2181
      %v2298 = vunpack.c.h.b16 %v2181
      %v2299 = vunpack.c.l.b16 %v2182
      %v2300 = vunpack.c.h.b16 %v2182
      %v2301 = vunpack.c.l.b16 %v2183
      %v2302 = vunpack.c.h.b16 %v2183
      %v2303 = vunpack.c.l.b16 %v2184
      %v2304 = vunpack.c.h.b16 %v2184
      %v2305 = vunpack.c.l.b16 %v2185
      %v2306 = vunpack.c.h.b16 %v2185
      %v2307 = vunpack.c.l.b16 %v2186
      %v2308 = vunpack.c.h.b16 %v2186
      %v2309 = vunpack.c.l.b16 %v2187
      %v2310 = vunpack.c.h.b16 %v2187
      %v2311 = vunpack.c.l.b16 %v2188
      %v2312 = vunpack.c.h.b16 %v2188
      %v2313 = vunpack.c.l.b16 %v2189
      %v2314 = vunpack.c.h.b16 %v2189
      %v2315 = vunpack.c.l.b16 %v2190
      %v2316 = vunpack.c.h.b16 %v2190
      %v2317 = vunpack.c.l.b16 %v2191
      %v2318 = vunpack.c.h.b16 %v2191
      %v2319 = vunpack.c.l.b16 %v2192
      %v2320 = vunpack.c.h.b16 %v2192
      %v2321 = vunpack.c.l.b16 %v2193
      %v2322 = vunpack.c.h.b16 %v2193
      %v2323 = vunpack.c.l.b16 %v2194
      %v2324 = vunpack.c.h.b16 %v2194
      %v2325 = vunpack.c.l.b16 %v2195
      %v2326 = vunpack.c.h.b16 %v2195
      %v2327 = vunpack.c.l.b16 %v2196
      %v2328 = vunpack.c.h.b16 %v2196
      %v2329 = vunpack.c.l.b16 %v2197
      %v2330 = vunpack.c.h.b16 %v2197
      %v2331 = vunpack.c.l.b16 %v2198
      %v2332 = vunpack.c.h.b16 %v2198
      %v2333 = vunpack.c.l.b16 %v2199
      %v2334 = vunpack.c.h.b16 %v2199
      %v2335 = vunpack.c.l.b16 %v2200
      %v2336 = vunpack.c.h.b16 %v2200
      %v2337 = vunpack.c.l.b16 %v2201
      %v2338 = vunpack.c.h.b16 %v2201
      %v2339 = vpack.c.b16 %v2277, %v2275
      %v2340 = vpack.c.b16 %v2278, %v2276
      %v2341 = vpack.c.b16 %v2281, %v2279
      %v2342 = vpack.c.b16 %v2282, %v2280
      %v2343 = vpack.c.b16 %v2285, %v2283
      %v2344 = vpack.c.b16 %v2286, %v2284
      %v2345 = vpack.c.b16 %v2289, %v2287
      %v2346 = vpack.c.b16 %v2290, %v2288
      %v2347 = vpack.c.b16 %v2293, %v2291
      %v2348 = vpack.c.b16 %v2294, %v2292
      %v2349 = vpack.c.b16 %v2297, %v2295
      %v2350 = vpack.c.b16 %v2298, %v2296
      %v2351 = vpack.c.b16 %v2301, %v2299
      %v2352 = vpack.c.b16 %v2302, %v2300
      %v2353 = vpack.c.b16 %v2305, %v2303
      %v2354 = vpack.c.b16 %v2306, %v2304
      %v2355 = vpack.c.b16 %v2309, %v2307
      %v2356 = vpack.c.b16 %v2310, %v2308
      %v2357 = vpack.c.b16 %v2313, %v2311
      %v2358 = vpack.c.b16 %v2314, %v2312
      %v2359 = vpack.c.b16 %v2317, %v2315
      %v2360 = vpack.c.b16 %v2318, %v2316
      %v2361 = vpack.c.b16 %v2321, %v2319
      %v2362 = vpack.c.b16 %v2322, %v2320
      %v2363 = vpack.c.b16 %v2325, %v2323
      %v2364 = vpack.c.b16 %v2326, %v2324
      %v2365 = vpack.c.b16 %v2329, %v2327
      %v2366 = vpack.c.b16 %v2330, %v2328
      %v2367 = vpack.c.b16 %v2333, %v2331
      %v2368 = vpack.c.b16 %v2334, %v2332
      %v2369 = vpack.c.b16 %v2337, %v2335
      %v2370 = vpack.c.b16 %v2338, %v2336
      %2403 = vmatprep.subr.bf16.mxu0 %v2340
      %2404 = vmatpush1.bf16.msra.mxu0 %v2339
      %2405 = vmatprep.subr.bf16.mxu0 %v2342
      %2406 = vmatpush1.bf16.msra.mxu0 %v2341
      %2407 = vmatprep.subr.bf16.mxu0 %v2344
      %2408 = vmatpush1.bf16.msra.mxu0 %v2343
      %2409 = vmatprep.subr.bf16.mxu0 %v2346
      %2410 = vmatpush1.bf16.msra.mxu0 %v2345
      %2411 = vmatprep.subr.bf16.mxu0 %v2348
      %2412 = vmatpush1.bf16.msra.mxu0 %v2347
      %2413 = vmatprep.subr.bf16.mxu0 %v2350
      %2414 = vmatpush1.bf16.msra.mxu0 %v2349
      %2415 = vmatprep.subr.bf16.mxu0 %v2352
      %2416 = vmatpush1.bf16.msra.mxu0 %v2351
      %2417 = vmatprep.subr.bf16.mxu0 %v2354
      %2418 = vmatpush1.bf16.msra.mxu0 %v2353
      %2419 = vmatprep.subr.bf16.mxu0 %v2356
      %2420 = vmatpush1.bf16.msra.mxu0 %v2355
      %2421 = vmatprep.subr.bf16.mxu0 %v2358
      %2422 = vmatpush1.bf16.msra.mxu0 %v2357
      %2423 = vmatprep.subr.bf16.mxu0 %v2360
      %2424 = vmatpush1.bf16.msra.mxu0 %v2359
      %2425 = vmatprep.subr.bf16.mxu0 %v2362
      %2426 = vmatpush1.bf16.msra.mxu0 %v2361
      %2427 = vmatprep.subr.bf16.mxu0 %v2364
      %2428 = vmatpush1.bf16.msra.mxu0 %v2363
      %2429 = vmatprep.subr.bf16.mxu0 %v2366
      %2430 = vmatpush1.bf16.msra.mxu0 %v2365
      %2431 = vmatprep.subr.bf16.mxu0 %v2368
      %2432 = vmatpush1.bf16.msra.mxu0 %v2367
      %2433 = vmatprep.subr.bf16.mxu0 %v2370
      %2434 = vmatpush1.bf16.msra.mxu0 %v2369
      %2435 = vmatprep.mubr.bf16.mxu0 %v2240
      %2436 = vmatmul.mubr.bf16.gmra.mrb[0].mxu0 %v2223
      %v2437 = vpop.f32.mrb[0].mxu0
      %v2438 = vadd.f32 0.0, %v2437
      %v2439 = vpop.f32.mrb[0].mxu0
      %v2440 = vadd.f32 0.0, %v2439
      %v2441 = vpop.f32.mrb[0].mxu0
      %v2442 = vadd.f32 0.0, %v2441
      %v2443 = vpop.f32.mrb[0].mxu0
      %v2444 = vadd.f32 0.0, %v2443
      %2445 = vdwg.mxu0
      %v2446 = vld [vmem:[#allocation4] sm:$0xff]
      %v2447 = vld [vmem:[#allocation4 + $0x8] sm:$0xff]
      %v2448 = vld [vmem:[#allocation4 + $0x10] sm:$0xff]
      %v2449 = vld [vmem:[#allocation4 + $0x18] sm:$0xff]
      %v2450 = vadd.f32 %v2446, %v2438
      %v2451 = vadd.f32 %v2447, %v2440
      %v2452 = vadd.f32 %v2448, %v2442
      %v2453 = vadd.f32 %v2449, %v2444
      %2454 = vst [vmem:[#allocation4] sm:$0xff] %v2450
      %2455 = vst [vmem:[#allocation4 + $0x8] sm:$0xff] %v2451
      %2456 = vst [vmem:[#allocation4 + $0x10] sm:$0xff] %v2452
      %2457 = vst [vmem:[#allocation4 + $0x18] sm:$0xff] %v2453
      %v2458 = vld [vmem:[#allocation2] sm:$0xc0]
      %v2459 = vld [vmem:[#allocation2 + $0x8] sm:$0xc0]
      %v2460 = vld [vmem:[#allocation2 + $0x10] sm:$0xff]
      %v2461 = vld [vmem:[#allocation2 + $0x18] sm:$0xff]
      %v2462 = vld [vmem:[#allocation2 + $0x20] sm:$0x3f]
      %v2463 = vld [vmem:[#allocation2 + $0x28] sm:$0x3f]
      %s2464 = scalar_lea.vmem %s3, 1536
      %v2465 = vld [vmem:[%s2464] sm:$0xff]
      %v2466 = vld [vmem:[%s2464 + $0x8] sm:$0xff]
      %v2467 = vld [vmem:[%s2464 + $0x10] sm:$0xff]
      %v2468 = vld [vmem:[%s2464 + $0x18] sm:$0xff]
      %v2469 = vld [vmem:[%s2464 + $0x20] sm:$0xff]
      %v2470 = vld [vmem:[%s2464 + $0x28] sm:$0xff]
      %v2471 = vld [vmem:[%s2464 + $0x30] sm:$0xff]
      %v2472 = vld [vmem:[%s2464 + $0x38] sm:$0xff]
      %v2473 = vld [vmem:[%s2464 + $0x40] sm:$0xff]
      %v2474 = vld [vmem:[%s2464 + $0x48] sm:$0xff]
      %v2475 = vld [vmem:[%s2464 + $0x50] sm:$0xff]
      %v2476 = vld [vmem:[%s2464 + $0x58] sm:$0xff]
      %v2477 = vld [vmem:[%s2464 + $0x60] sm:$0xff]
      %v2478 = vld [vmem:[%s2464 + $0x68] sm:$0xff]
      %v2479 = vld [vmem:[%s2464 + $0x70] sm:$0xff]
      %v2480 = vld [vmem:[%s2464 + $0x78] sm:$0xff]
      %v2481 = vld [vmem:[%s2464 + $0x80] sm:$0xff]
      %v2482 = vld [vmem:[%s2464 + $0x88] sm:$0xff]
      %v2483 = vld [vmem:[%s2464 + $0x90] sm:$0xff]
      %v2484 = vld [vmem:[%s2464 + $0x98] sm:$0xff]
      %v2485 = vld [vmem:[%s2464 + $0xa0] sm:$0xff]
      %v2486 = vld [vmem:[%s2464 + $0xa8] sm:$0xff]
      %v2487 = vld [vmem:[%s2464 + $0xb0] sm:$0xff]
      %v2488 = vld [vmem:[%s2464 + $0xb8] sm:$0xff]
      %v2489 = vld [vmem:[%s2464 + $0xc0] sm:$0xff]
      %v2490 = vld [vmem:[%s2464 + $0xc8] sm:$0xff]
      %v2491 = vld [vmem:[%s2464 + $0xd0] sm:$0xff]
      %v2492 = vld [vmem:[%s2464 + $0xd8] sm:$0xff]
      %v2493 = vld [vmem:[%s2464 + $0xe0] sm:$0xff]
      %v2494 = vld [vmem:[%s2464 + $0xe8] sm:$0xff]
      %v2495 = vld [vmem:[%s2464 + $0xf0] sm:$0xff]
      %v2496 = vld [vmem:[%s2464 + $0xf8] sm:$0xff]
      %v2497 = vpack.c.bf16 %v2460, %v2458
      %v2498 = vpack.c.bf16 %v2461, %v2459
      %v2499 = vpack.c.bf16 %v2462, %v2462
      %v2500 = vpack.c.bf16 %v2463, %v2463
      %vm2505 = vcmask 1044480
      %v2506 = vrot.slane %v2497, 3
      %v2507 = vrot.slane %v2499, 3
      %v2508 = vsel %vm2505, %v2506, %v2507
      %v2509 = vrot.slane %v2498, 3
      %v2510 = vrot.slane %v2500, 3
      %v2511 = vsel %vm2505, %v2509, %v2510
      %v2546 = vunpack.c.l.b16 %v2465
      %v2547 = vunpack.c.h.b16 %v2465
      %v2548 = vunpack.c.l.b16 %v2466
      %v2549 = vunpack.c.h.b16 %v2466
      %v2550 = vunpack.c.l.b16 %v2467
      %v2551 = vunpack.c.h.b16 %v2467
      %v2552 = vunpack.c.l.b16 %v2468
      %v2553 = vunpack.c.h.b16 %v2468
      %v2554 = vunpack.c.l.b16 %v2469
      %v2555 = vunpack.c.h.b16 %v2469
      %v2556 = vunpack.c.l.b16 %v2470
      %v2557 = vunpack.c.h.b16 %v2470
      %v2558 = vunpack.c.l.b16 %v2471
      %v2559 = vunpack.c.h.b16 %v2471
      %v2560 = vunpack.c.l.b16 %v2472
      %v2561 = vunpack.c.h.b16 %v2472
      %v2562 = vunpack.c.l.b16 %v2473
      %v2563 = vunpack.c.h.b16 %v2473
      %v2564 = vunpack.c.l.b16 %v2474
      %v2565 = vunpack.c.h.b16 %v2474
      %v2566 = vunpack.c.l.b16 %v2475
      %v2567 = vunpack.c.h.b16 %v2475
      %v2568 = vunpack.c.l.b16 %v2476
      %v2569 = vunpack.c.h.b16 %v2476
      %v2570 = vunpack.c.l.b16 %v2477
      %v2571 = vunpack.c.h.b16 %v2477
      %v2572 = vunpack.c.l.b16 %v2478
      %v2573 = vunpack.c.h.b16 %v2478
      %v2574 = vunpack.c.l.b16 %v2479
      %v2575 = vunpack.c.h.b16 %v2479
      %v2576 = vunpack.c.l.b16 %v2480
      %v2577 = vunpack.c.h.b16 %v2480
      %v2578 = vunpack.c.l.b16 %v2481
      %v2579 = vunpack.c.h.b16 %v2481
      %v2580 = vunpack.c.l.b16 %v2482
      %v2581 = vunpack.c.h.b16 %v2482
      %v2582 = vunpack.c.l.b16 %v2483
      %v2583 = vunpack.c.h.b16 %v2483
      %v2584 = vunpack.c.l.b16 %v2484
      %v2585 = vunpack.c.h.b16 %v2484
      %v2586 = vunpack.c.l.b16 %v2485
      %v2587 = vunpack.c.h.b16 %v2485
      %v2588 = vunpack.c.l.b16 %v2486
      %v2589 = vunpack.c.h.b16 %v2486
      %v2590 = vunpack.c.l.b16 %v2487
      %v2591 = vunpack.c.h.b16 %v2487
      %v2592 = vunpack.c.l.b16 %v2488
      %v2593 = vunpack.c.h.b16 %v2488
      %v2594 = vunpack.c.l.b16 %v2489
      %v2595 = vunpack.c.h.b16 %v2489
      %v2596 = vunpack.c.l.b16 %v2490
      %v2597 = vunpack.c.h.b16 %v2490
      %v2598 = vunpack.c.l.b16 %v2491
      %v2599 = vunpack.c.h.b16 %v2491
      %v2600 = vunpack.c.l.b16 %v2492
      %v2601 = vunpack.c.h.b16 %v2492
      %v2602 = vunpack.c.l.b16 %v2493
      %v2603 = vunpack.c.h.b16 %v2493
      %v2604 = vunpack.c.l.b16 %v2494
      %v2605 = vunpack.c.h.b16 %v2494
      %v2606 = vunpack.c.l.b16 %v2495
      %v2607 = vunpack.c.h.b16 %v2495
      %v2608 = vunpack.c.l.b16 %v2496
      %v2609 = vunpack.c.h.b16 %v2496
      %v2610 = vpack.c.b16 %v2548, %v2546
      %v2611 = vpack.c.b16 %v2549, %v2547
      %v2612 = vpack.c.b16 %v2552, %v2550
      %v2613 = vpack.c.b16 %v2553, %v2551
      %v2614 = vpack.c.b16 %v2556, %v2554
      %v2615 = vpack.c.b16 %v2557, %v2555
      %v2616 = vpack.c.b16 %v2560, %v2558
      %v2617 = vpack.c.b16 %v2561, %v2559
      %v2618 = vpack.c.b16 %v2564, %v2562
      %v2619 = vpack.c.b16 %v2565, %v2563
      %v2620 = vpack.c.b16 %v2568, %v2566
      %v2621 = vpack.c.b16 %v2569, %v2567
      %v2622 = vpack.c.b16 %v2572, %v2570
      %v2623 = vpack.c.b16 %v2573, %v2571
      %v2624 = vpack.c.b16 %v2576, %v2574
      %v2625 = vpack.c.b16 %v2577, %v2575
      %v2626 = vpack.c.b16 %v2580, %v2578
      %v2627 = vpack.c.b16 %v2581, %v2579
      %v2628 = vpack.c.b16 %v2584, %v2582
      %v2629 = vpack.c.b16 %v2585, %v2583
      %v2630 = vpack.c.b16 %v2588, %v2586
      %v2631 = vpack.c.b16 %v2589, %v2587
      %v2632 = vpack.c.b16 %v2592, %v2590
      %v2633 = vpack.c.b16 %v2593, %v2591
      %v2634 = vpack.c.b16 %v2596, %v2594
      %v2635 = vpack.c.b16 %v2597, %v2595
      %v2636 = vpack.c.b16 %v2600, %v2598
      %v2637 = vpack.c.b16 %v2601, %v2599
      %v2638 = vpack.c.b16 %v2604, %v2602
      %v2639 = vpack.c.b16 %v2605, %v2603
      %v2640 = vpack.c.b16 %v2608, %v2606
      %v2641 = vpack.c.b16 %v2609, %v2607
      %2674 = vmatprep.subr.bf16.mxu0 %v2611
      %2675 = vmatpush1.bf16.msra.mxu0 %v2610
      %2676 = vmatprep.subr.bf16.mxu0 %v2613
      %2677 = vmatpush1.bf16.msra.mxu0 %v2612
      %2678 = vmatprep.subr.bf16.mxu0 %v2615
      %2679 = vmatpush1.bf16.msra.mxu0 %v2614
      %2680 = vmatprep.subr.bf16.mxu0 %v2617
      %2681 = vmatpush1.bf16.msra.mxu0 %v2616
      %2682 = vmatprep.subr.bf16.mxu0 %v2619
      %2683 = vmatpush1.bf16.msra.mxu0 %v2618
      %2684 = vmatprep.subr.bf16.mxu0 %v2621
      %2685 = vmatpush1.bf16.msra.mxu0 %v2620
      %2686 = vmatprep.subr.bf16.mxu0 %v2623
      %2687 = vmatpush1.bf16.msra.mxu0 %v2622
      %2688 = vmatprep.subr.bf16.mxu0 %v2625
      %2689 = vmatpush1.bf16.msra.mxu0 %v2624
      %2690 = vmatprep.subr.bf16.mxu0 %v2627
      %2691 = vmatpush1.bf16.msra.mxu0 %v2626
      %2692 = vmatprep.subr.bf16.mxu0 %v2629
      %2693 = vmatpush1.bf16.msra.mxu0 %v2628
      %2694 = vmatprep.subr.bf16.mxu0 %v2631
      %2695 = vmatpush1.bf16.msra.mxu0 %v2630
      %2696 = vmatprep.subr.bf16.mxu0 %v2633
      %2697 = vmatpush1.bf16.msra.mxu0 %v2632
      %2698 = vmatprep.subr.bf16.mxu0 %v2635
      %2699 = vmatpush1.bf16.msra.mxu0 %v2634
      %2700 = vmatprep.subr.bf16.mxu0 %v2637
      %2701 = vmatpush1.bf16.msra.mxu0 %v2636
      %2702 = vmatprep.subr.bf16.mxu0 %v2639
      %2703 = vmatpush1.bf16.msra.mxu0 %v2638
      %2704 = vmatprep.subr.bf16.mxu0 %v2641
      %2705 = vmatpush1.bf16.msra.mxu0 %v2640
      %2706 = vmatprep.mubr.bf16.mxu0 %v2511
      %2707 = vmatmul.mubr.bf16.gmra.mrb[0].mxu0 %v2508
      %v2708 = vpop.f32.mrb[0].mxu0
      %v2709 = vadd.f32 0.0, %v2708
      %v2710 = vpop.f32.mrb[0].mxu0
      %v2711 = vadd.f32 0.0, %v2710
      %v2712 = vpop.f32.mrb[0].mxu0
      %v2713 = vadd.f32 0.0, %v2712
      %v2714 = vpop.f32.mrb[0].mxu0
      %v2715 = vadd.f32 0.0, %v2714
      %2716 = vdwg.mxu0
      %v2717 = vld [vmem:[#allocation4] sm:$0xff]
      %v2718 = vld [vmem:[#allocation4 + $0x8] sm:$0xff]
      %v2719 = vld [vmem:[#allocation4 + $0x10] sm:$0xff]
      %v2720 = vld [vmem:[#allocation4 + $0x18] sm:$0xff]
      %v2721 = vadd.f32 %v2717, %v2709
      %v2722 = vadd.f32 %v2718, %v2711
      %v2723 = vadd.f32 %v2719, %v2713
      %v2724 = vadd.f32 %v2720, %v2715
      %2725 = vst [vmem:[#allocation4] sm:$0xff] %v2721
      %2726 = vst [vmem:[#allocation4 + $0x8] sm:$0xff] %v2722
      %2727 = vst [vmem:[#allocation4 + $0x10] sm:$0xff] %v2723
      %2728 = vst [vmem:[#allocation4 + $0x18] sm:$0xff] %v2724
      %v2729 = vld [vmem:[#allocation2] sm:$0x80]
      %v2730 = vld [vmem:[#allocation2 + $0x8] sm:$0x80]
      %v2731 = vld [vmem:[#allocation2 + $0x10] sm:$0xff]
      %v2732 = vld [vmem:[#allocation2 + $0x18] sm:$0xff]
      %v2733 = vld [vmem:[#allocation2 + $0x20] sm:$0x7f]
      %v2734 = vld [vmem:[#allocation2 + $0x28] sm:$0x7f]
      %s2735 = scalar_lea.vmem %s3, 1792
      %v2736 = vld [vmem:[%s2735] sm:$0xff]
      %v2737 = vld [vmem:[%s2735 + $0x8] sm:$0xff]
      %v2738 = vld [vmem:[%s2735 + $0x10] sm:$0xff]
      %v2739 = vld [vmem:[%s2735 + $0x18] sm:$0xff]
      %v2740 = vld [vmem:[%s2735 + $0x20] sm:$0xff]
      %v2741 = vld [vmem:[%s2735 + $0x28] sm:$0xff]
      %v2742 = vld [vmem:[%s2735 + $0x30] sm:$0xff]
      %v2743 = vld [vmem:[%s2735 + $0x38] sm:$0xff]
      %v2744 = vld [vmem:[%s2735 + $0x40] sm:$0xff]
      %v2745 = vld [vmem:[%s2735 + $0x48] sm:$0xff]
      %v2746 = vld [vmem:[%s2735 + $0x50] sm:$0xff]
      %v2747 = vld [vmem:[%s2735 + $0x58] sm:$0xff]
      %v2748 = vld [vmem:[%s2735 + $0x60] sm:$0xff]
      %v2749 = vld [vmem:[%s2735 + $0x68] sm:$0xff]
      %v2750 = vld [vmem:[%s2735 + $0x70] sm:$0xff]
      %v2751 = vld [vmem:[%s2735 + $0x78] sm:$0xff]
      %v2752 = vld [vmem:[%s2735 + $0x80] sm:$0xff]
      %v2753 = vld [vmem:[%s2735 + $0x88] sm:$0xff]
      %v2754 = vld [vmem:[%s2735 + $0x90] sm:$0xff]
      %v2755 = vld [vmem:[%s2735 + $0x98] sm:$0xff]
      %v2756 = vld [vmem:[%s2735 + $0xa0] sm:$0xff]
      %v2757 = vld [vmem:[%s2735 + $0xa8] sm:$0xff]
      %v2758 = vld [vmem:[%s2735 + $0xb0] sm:$0xff]
      %v2759 = vld [vmem:[%s2735 + $0xb8] sm:$0xff]
      %v2760 = vld [vmem:[%s2735 + $0xc0] sm:$0xff]
      %v2761 = vld [vmem:[%s2735 + $0xc8] sm:$0xff]
      %v2762 = vld [vmem:[%s2735 + $0xd0] sm:$0xff]
      %v2763 = vld [vmem:[%s2735 + $0xd8] sm:$0xff]
      %v2764 = vld [vmem:[%s2735 + $0xe0] sm:$0xff]
      %v2765 = vld [vmem:[%s2735 + $0xe8] sm:$0xff]
      %v2766 = vld [vmem:[%s2735 + $0xf0] sm:$0xff]
      %v2767 = vld [vmem:[%s2735 + $0xf8] sm:$0xff]
      %v2768 = vpack.c.bf16 %v2731, %v2729
      %v2769 = vpack.c.bf16 %v2732, %v2730
      %v2770 = vpack.c.bf16 %v2733, %v2733
      %v2771 = vpack.c.bf16 %v2734, %v2734
      %vm2772 = vsmask.f32 4352
      %v2774 = vshrl.u32 %v2768, 16
      %v2776 = vrot.slane %v2774, 3
      %v2777 = vshll.u32 %v2768, 16
      %v2779 = vrot.slane %v2777, 4
      %v2780 = vor.u32 %v2776, %v2779
      %v2782 = vshrl.u32 %v2770, 16
      %v2784 = vrot.slane %v2782, 3
      %v2785 = vshll.u32 %v2770, 16
      %v2787 = vrot.slane %v2785, 4
      %v2788 = vor.u32 %v2784, %v2787
      %v2789 = vsel %vm2772, %v2780, %v2788
      %v2791 = vshrl.u32 %v2769, 16
      %v2793 = vrot.slane %v2791, 3
      %v2794 = vshll.u32 %v2769, 16
      %v2796 = vrot.slane %v2794, 4
      %v2797 = vor.u32 %v2793, %v2796
      %v2799 = vshrl.u32 %v2771, 16
      %v2801 = vrot.slane %v2799, 3
      %v2802 = vshll.u32 %v2771, 16
      %v2804 = vrot.slane %v2802, 4
      %v2805 = vor.u32 %v2801, %v2804
      %v2806 = vsel %vm2772, %v2797, %v2805
      %v2841 = vunpack.c.l.b16 %v2736
      %v2842 = vunpack.c.h.b16 %v2736
      %v2843 = vunpack.c.l.b16 %v2737
      %v2844 = vunpack.c.h.b16 %v2737
      %v2845 = vunpack.c.l.b16 %v2738
      %v2846 = vunpack.c.h.b16 %v2738
      %v2847 = vunpack.c.l.b16 %v2739
      %v2848 = vunpack.c.h.b16 %v2739
      %v2849 = vunpack.c.l.b16 %v2740
      %v2850 = vunpack.c.h.b16 %v2740
      %v2851 = vunpack.c.l.b16 %v2741
      %v2852 = vunpack.c.h.b16 %v2741
      %v2853 = vunpack.c.l.b16 %v2742
      %v2854 = vunpack.c.h.b16 %v2742
      %v2855 = vunpack.c.l.b16 %v2743
      %v2856 = vunpack.c.h.b16 %v2743
      %v2857 = vunpack.c.l.b16 %v2744
      %v2858 = vunpack.c.h.b16 %v2744
      %v2859 = vunpack.c.l.b16 %v2745
      %v2860 = vunpack.c.h.b16 %v2745
      %v2861 = vunpack.c.l.b16 %v2746
      %v2862 = vunpack.c.h.b16 %v2746
      %v2863 = vunpack.c.l.b16 %v2747
      %v2864 = vunpack.c.h.b16 %v2747
      %v2865 = vunpack.c.l.b16 %v2748
      %v2866 = vunpack.c.h.b16 %v2748
      %v2867 = vunpack.c.l.b16 %v2749
      %v2868 = vunpack.c.h.b16 %v2749
      %v2869 = vunpack.c.l.b16 %v2750
      %v2870 = vunpack.c.h.b16 %v2750
      %v2871 = vunpack.c.l.b16 %v2751
      %v2872 = vunpack.c.h.b16 %v2751
      %v2873 = vunpack.c.l.b16 %v2752
      %v2874 = vunpack.c.h.b16 %v2752
      %v2875 = vunpack.c.l.b16 %v2753
      %v2876 = vunpack.c.h.b16 %v2753
      %v2877 = vunpack.c.l.b16 %v2754
      %v2878 = vunpack.c.h.b16 %v2754
      %v2879 = vunpack.c.l.b16 %v2755
      %v2880 = vunpack.c.h.b16 %v2755
      %v2881 = vunpack.c.l.b16 %v2756
      %v2882 = vunpack.c.h.b16 %v2756
      %v2883 = vunpack.c.l.b16 %v2757
      %v2884 = vunpack.c.h.b16 %v2757
      %v2885 = vunpack.c.l.b16 %v2758
      %v2886 = vunpack.c.h.b16 %v2758
      %v2887 = vunpack.c.l.b16 %v2759
      %v2888 = vunpack.c.h.b16 %v2759
      %v2889 = vunpack.c.l.b16 %v2760
      %v2890 = vunpack.c.h.b16 %v2760
      %v2891 = vunpack.c.l.b16 %v2761
      %v2892 = vunpack.c.h.b16 %v2761
      %v2893 = vunpack.c.l.b16 %v2762
      %v2894 = vunpack.c.h.b16 %v2762
      %v2895 = vunpack.c.l.b16 %v2763
      %v2896 = vunpack.c.h.b16 %v2763
      %v2897 = vunpack.c.l.b16 %v2764
      %v2898 = vunpack.c.h.b16 %v2764
      %v2899 = vunpack.c.l.b16 %v2765
      %v2900 = vunpack.c.h.b16 %v2765
      %v2901 = vunpack.c.l.b16 %v2766
      %v2902 = vunpack.c.h.b16 %v2766
      %v2903 = vunpack.c.l.b16 %v2767
      %v2904 = vunpack.c.h.b16 %v2767
      %v2905 = vpack.c.b16 %v2843, %v2841
      %v2906 = vpack.c.b16 %v2844, %v2842
      %v2907 = vpack.c.b16 %v2847, %v2845
      %v2908 = vpack.c.b16 %v2848, %v2846
      %v2909 = vpack.c.b16 %v2851, %v2849
      %v2910 = vpack.c.b16 %v2852, %v2850
      %v2911 = vpack.c.b16 %v2855, %v2853
      %v2912 = vpack.c.b16 %v2856, %v2854
      %v2913 = vpack.c.b16 %v2859, %v2857
      %v2914 = vpack.c.b16 %v2860, %v2858
      %v2915 = vpack.c.b16 %v2863, %v2861
      %v2916 = vpack.c.b16 %v2864, %v2862
      %v2917 = vpack.c.b16 %v2867, %v2865
      %v2918 = vpack.c.b16 %v2868, %v2866
      %v2919 = vpack.c.b16 %v2871, %v2869
      %v2920 = vpack.c.b16 %v2872, %v2870
      %v2921 = vpack.c.b16 %v2875, %v2873
      %v2922 = vpack.c.b16 %v2876, %v2874
      %v2923 = vpack.c.b16 %v2879, %v2877
      %v2924 = vpack.c.b16 %v2880, %v2878
      %v2925 = vpack.c.b16 %v2883, %v2881
      %v2926 = vpack.c.b16 %v2884, %v2882
      %v2927 = vpack.c.b16 %v2887, %v2885
      %v2928 = vpack.c.b16 %v2888, %v2886
      %v2929 = vpack.c.b16 %v2891, %v2889
      %v2930 = vpack.c.b16 %v2892, %v2890
      %v2931 = vpack.c.b16 %v2895, %v2893
      %v2932 = vpack.c.b16 %v2896, %v2894
      %v2933 = vpack.c.b16 %v2899, %v2897
      %v2934 = vpack.c.b16 %v2900, %v2898
      %v2935 = vpack.c.b16 %v2903, %v2901
      %v2936 = vpack.c.b16 %v2904, %v2902
      %2969 = vmatprep.subr.bf16.mxu0 %v2906
      %2970 = vmatpush1.bf16.msra.mxu0 %v2905
      %2971 = vmatprep.subr.bf16.mxu0 %v2908
      %2972 = vmatpush1.bf16.msra.mxu0 %v2907
      %2973 = vmatprep.subr.bf16.mxu0 %v2910
      %2974 = vmatpush1.bf16.msra.mxu0 %v2909
      %2975 = vmatprep.subr.bf16.mxu0 %v2912
      %2976 = vmatpush1.bf16.msra.mxu0 %v2911
      %2977 = vmatprep.subr.bf16.mxu0 %v2914
      %2978 = vmatpush1.bf16.msra.mxu0 %v2913
      %2979 = vmatprep.subr.bf16.mxu0 %v2916
      %2980 = vmatpush1.bf16.msra.mxu0 %v2915
      %2981 = vmatprep.subr.bf16.mxu0 %v2918
      %2982 = vmatpush1.bf16.msra.mxu0 %v2917
      %2983 = vmatprep.subr.bf16.mxu0 %v2920
      %2984 = vmatpush1.bf16.msra.mxu0 %v2919
      %2985 = vmatprep.subr.bf16.mxu0 %v2922
      %2986 = vmatpush1.bf16.msra.mxu0 %v2921
      %2987 = vmatprep.subr.bf16.mxu0 %v2924
      %2988 = vmatpush1.bf16.msra.mxu0 %v2923
      %2989 = vmatprep.subr.bf16.mxu0 %v2926
      %2990 = vmatpush1.bf16.msra.mxu0 %v2925
      %2991 = vmatprep.subr.bf16.mxu0 %v2928
      %2992 = vmatpush1.bf16.msra.mxu0 %v2927
      %2993 = vmatprep.subr.bf16.mxu0 %v2930
      %2994 = vmatpush1.bf16.msra.mxu0 %v2929
      %2995 = vmatprep.subr.bf16.mxu0 %v2932
      %2996 = vmatpush1.bf16.msra.mxu0 %v2931
      %2997 = vmatprep.subr.bf16.mxu0 %v2934
      %2998 = vmatpush1.bf16.msra.mxu0 %v2933
      %2999 = vmatprep.subr.bf16.mxu0 %v2936
      %3000 = vmatpush1.bf16.msra.mxu0 %v2935
      %3001 = vmatprep.mubr.bf16.mxu0 %v2806
      %3002 = vmatmul.mubr.bf16.gmra.mrb[0].mxu0 %v2789
      %v3003 = vpop.f32.mrb[0].mxu0
      %v3004 = vadd.f32 0.0, %v3003
      %v3005 = vpop.f32.mrb[0].mxu0
      %v3006 = vadd.f32 0.0, %v3005
      %v3007 = vpop.f32.mrb[0].mxu0
      %v3008 = vadd.f32 0.0, %v3007
      %v3009 = vpop.f32.mrb[0].mxu0
      %v3010 = vadd.f32 0.0, %v3009
      %3011 = vdwg.mxu0
      %v3012 = vld [vmem:[#allocation4] sm:$0xff]
      %v3013 = vld [vmem:[#allocation4 + $0x8] sm:$0xff]
      %v3014 = vld [vmem:[#allocation4 + $0x10] sm:$0xff]
      %v3015 = vld [vmem:[#allocation4 + $0x18] sm:$0xff]
      %v3016 = vadd.f32 %v3012, %v3004
      %v3017 = vadd.f32 %v3013, %v3006
      %v3018 = vadd.f32 %v3014, %v3008
      %v3019 = vadd.f32 %v3015, %v3010
      %3020 = vst [vmem:[#allocation4] sm:$0xff] %v3016
      %3021 = vst [vmem:[#allocation4 + $0x8] sm:$0xff] %v3017
      %3022 = vst [vmem:[#allocation4 + $0x10] sm:$0xff] %v3018
      %3023 = vst [vmem:[#allocation4 + $0x18] sm:$0xff] %v3019
      %v3024 = vld [vmem:[#allocation2 + $0x10] sm:$0xff]
      %v3025 = vld [vmem:[#allocation2 + $0x18] sm:$0xff]
      %v3026 = vld [vmem:[#allocation2 + $0x20] sm:$0xff]
      %v3027 = vld [vmem:[#allocation2 + $0x28] sm:$0xff]
      %s3028 = scalar_lea.vmem %s3, 2048
      %v3029 = vld [vmem:[%s3028] sm:$0xff]
      %v3030 = vld [vmem:[%s3028 + $0x8] sm:$0xff]
      %v3031 = vld [vmem:[%s3028 + $0x10] sm:$0xff]
      %v3032 = vld [vmem:[%s3028 + $0x18] sm:$0xff]
      %v3033 = vld [vmem:[%s3028 + $0x20] sm:$0xff]
      %v3034 = vld [vmem:[%s3028 + $0x28] sm:$0xff]
      %v3035 = vld [vmem:[%s3028 + $0x30] sm:$0xff]
      %v3036 = vld [vmem:[%s3028 + $0x38] sm:$0xff]
      %v3037 = vld [vmem:[%s3028 + $0x40] sm:$0xff]
      %v3038 = vld [vmem:[%s3028 + $0x48] sm:$0xff]
      %v3039 = vld [vmem:[%s3028 + $0x50] sm:$0xff]
      %v3040 = vld [vmem:[%s3028 + $0x58] sm:$0xff]
      %v3041 = vld [vmem:[%s3028 + $0x60] sm:$0xff]
      %v3042 = vld [vmem:[%s3028 + $0x68] sm:$0xff]
      %v3043 = vld [vmem:[%s3028 + $0x70] sm:$0xff]
      %v3044 = vld [vmem:[%s3028 + $0x78] sm:$0xff]
      %v3045 = vld [vmem:[%s3028 + $0x80] sm:$0xff]
      %v3046 = vld [vmem:[%s3028 + $0x88] sm:$0xff]
      %v3047 = vld [vmem:[%s3028 + $0x90] sm:$0xff]
      %v3048 = vld [vmem:[%s3028 + $0x98] sm:$0xff]
      %v3049 = vld [vmem:[%s3028 + $0xa0] sm:$0xff]
      %v3050 = vld [vmem:[%s3028 + $0xa8] sm:$0xff]
      %v3051 = vld [vmem:[%s3028 + $0xb0] sm:$0xff]
      %v3052 = vld [vmem:[%s3028 + $0xb8] sm:$0xff]
      %v3053 = vld [vmem:[%s3028 + $0xc0] sm:$0xff]
      %v3054 = vld [vmem:[%s3028 + $0xc8] sm:$0xff]
      %v3055 = vld [vmem:[%s3028 + $0xd0] sm:$0xff]
      %v3056 = vld [vmem:[%s3028 + $0xd8] sm:$0xff]
      %v3057 = vld [vmem:[%s3028 + $0xe0] sm:$0xff]
      %v3058 = vld [vmem:[%s3028 + $0xe8] sm:$0xff]
      %v3059 = vld [vmem:[%s3028 + $0xf0] sm:$0xff]
      %v3060 = vld [vmem:[%s3028 + $0xf8] sm:$0xff]
      %v3061 = vpack.c.bf16 %v3026, %v3024
      %v3062 = vpack.c.bf16 %v3027, %v3025
      %v3095 = vunpack.c.l.b16 %v3029
      %v3096 = vunpack.c.h.b16 %v3029
      %v3097 = vunpack.c.l.b16 %v3030
      %v3098 = vunpack.c.h.b16 %v3030
      %v3099 = vunpack.c.l.b16 %v3031
      %v3100 = vunpack.c.h.b16 %v3031
      %v3101 = vunpack.c.l.b16 %v3032
      %v3102 = vunpack.c.h.b16 %v3032
      %v3103 = vunpack.c.l.b16 %v3033
      %v3104 = vunpack.c.h.b16 %v3033
      %v3105 = vunpack.c.l.b16 %v3034
      %v3106 = vunpack.c.h.b16 %v3034
      %v3107 = vunpack.c.l.b16 %v3035
      %v3108 = vunpack.c.h.b16 %v3035
      %v3109 = vunpack.c.l.b16 %v3036
      %v3110 = vunpack.c.h.b16 %v3036
      %v3111 = vunpack.c.l.b16 %v3037
      %v3112 = vunpack.c.h.b16 %v3037
      %v3113 = vunpack.c.l.b16 %v3038
      %v3114 = vunpack.c.h.b16 %v3038
      %v3115 = vunpack.c.l.b16 %v3039
      %v3116 = vunpack.c.h.b16 %v3039
      %v3117 = vunpack.c.l.b16 %v3040
      %v3118 = vunpack.c.h.b16 %v3040
      %v3119 = vunpack.c.l.b16 %v3041
      %v3120 = vunpack.c.h.b16 %v3041
      %v3121 = vunpack.c.l.b16 %v3042
      %v3122 = vunpack.c.h.b16 %v3042
      %v3123 = vunpack.c.l.b16 %v3043
      %v3124 = vunpack.c.h.b16 %v3043
      %v3125 = vunpack.c.l.b16 %v3044
      %v3126 = vunpack.c.h.b16 %v3044
      %v3127 = vunpack.c.l.b16 %v3045
      %v3128 = vunpack.c.h.b16 %v3045
      %v3129 = vunpack.c.l.b16 %v3046
      %v3130 = vunpack.c.h.b16 %v3046
      %v3131 = vunpack.c.l.b16 %v3047
      %v3132 = vunpack.c.h.b16 %v3047
      %v3133 = vunpack.c.l.b16 %v3048
      %v3134 = vunpack.c.h.b16 %v3048
      %v3135 = vunpack.c.l.b16 %v3049
      %v3136 = vunpack.c.h.b16 %v3049
      %v3137 = vunpack.c.l.b16 %v3050
      %v3138 = vunpack.c.h.b16 %v3050
      %v3139 = vunpack.c.l.b16 %v3051
      %v3140 = vunpack.c.h.b16 %v3051
      %v3141 = vunpack.c.l.b16 %v3052
      %v3142 = vunpack.c.h.b16 %v3052
      %v3143 = vunpack.c.l.b16 %v3053
      %v3144 = vunpack.c.h.b16 %v3053
      %v3145 = vunpack.c.l.b16 %v3054
      %v3146 = vunpack.c.h.b16 %v3054
      %v3147 = vunpack.c.l.b16 %v3055
      %v3148 = vunpack.c.h.b16 %v3055
      %v3149 = vunpack.c.l.b16 %v3056
      %v3150 = vunpack.c.h.b16 %v3056
      %v3151 = vunpack.c.l.b16 %v3057
      %v3152 = vunpack.c.h.b16 %v3057
      %v3153 = vunpack.c.l.b16 %v3058
      %v3154 = vunpack.c.h.b16 %v3058
      %v3155 = vunpack.c.l.b16 %v3059
      %v3156 = vunpack.c.h.b16 %v3059
      %v3157 = vunpack.c.l.b16 %v3060
      %v3158 = vunpack.c.h.b16 %v3060
      %v3159 = vpack.c.b16 %v3097, %v3095
      %v3160 = vpack.c.b16 %v3098, %v3096
      %v3161 = vpack.c.b16 %v3101, %v3099
      %v3162 = vpack.c.b16 %v3102, %v3100
      %v3163 = vpack.c.b16 %v3105, %v3103
      %v3164 = vpack.c.b16 %v3106, %v3104
      %v3165 = vpack.c.b16 %v3109, %v3107
      %v3166 = vpack.c.b16 %v3110, %v3108
      %v3167 = vpack.c.b16 %v3113, %v3111
      %v3168 = vpack.c.b16 %v3114, %v3112
      %v3169 = vpack.c.b16 %v3117, %v3115
      %v3170 = vpack.c.b16 %v3118, %v3116
      %v3171 = vpack.c.b16 %v3121, %v3119
      %v3172 = vpack.c.b16 %v3122, %v3120
      %v3173 = vpack.c.b16 %v3125, %v3123
      %v3174 = vpack.c.b16 %v3126, %v3124
      %v3175 = vpack.c.b16 %v3129, %v3127
      %v3176 = vpack.c.b16 %v3130, %v3128
      %v3177 = vpack.c.b16 %v3133, %v3131
      %v3178 = vpack.c.b16 %v3134, %v3132
      %v3179 = vpack.c.b16 %v3137, %v3135
      %v3180 = vpack.c.b16 %v3138, %v3136
      %v3181 = vpack.c.b16 %v3141, %v3139
      %v3182 = vpack.c.b16 %v3142, %v3140
      %v3183 = vpack.c.b16 %v3145, %v3143
      %v3184 = vpack.c.b16 %v3146, %v3144
      %v3185 = vpack.c.b16 %v3149, %v3147
      %v3186 = vpack.c.b16 %v3150, %v3148
      %v3187 = vpack.c.b16 %v3153, %v3151
      %v3188 = vpack.c.b16 %v3154, %v3152
      %v3189 = vpack.c.b16 %v3157, %v3155
      %v3190 = vpack.c.b16 %v3158, %v3156
      %3223 = vmatprep.subr.bf16.mxu0 %v3160
      %3224 = vmatpush1.bf16.msra.mxu0 %v3159
      %3225 = vmatprep.subr.bf16.mxu0 %v3162
      %3226 = vmatpush1.bf16.msra.mxu0 %v3161
      %3227 = vmatprep.subr.bf16.mxu0 %v3164
      %3228 = vmatpush1.bf16.msra.mxu0 %v3163
      %3229 = vmatprep.subr.bf16.mxu0 %v3166
      %3230 = vmatpush1.bf16.msra.mxu0 %v3165
      %3231 = vmatprep.subr.bf16.mxu0 %v3168
      %3232 = vmatpush1.bf16.msra.mxu0 %v3167
      %3233 = vmatprep.subr.bf16.mxu0 %v3170
      %3234 = vmatpush1.bf16.msra.mxu0 %v3169
      %3235 = vmatprep.subr.bf16.mxu0 %v3172
      %3236 = vmatpush1.bf16.msra.mxu0 %v3171
      %3237 = vmatprep.subr.bf16.mxu0 %v3174
      %3238 = vmatpush1.bf16.msra.mxu0 %v3173
      %3239 = vmatprep.subr.bf16.mxu0 %v3176
      %3240 = vmatpush1.bf16.msra.mxu0 %v3175
      %3241 = vmatprep.subr.bf16.mxu0 %v3178
      %3242 = vmatpush1.bf16.msra.mxu0 %v3177
      %3243 = vmatprep.subr.bf16.mxu0 %v3180
      %3244 = vmatpush1.bf16.msra.mxu0 %v3179
      %3245 = vmatprep.subr.bf16.mxu0 %v3182
      %3246 = vmatpush1.bf16.msra.mxu0 %v3181
      %3247 = vmatprep.subr.bf16.mxu0 %v3184
      %3248 = vmatpush1.bf16.msra.mxu0 %v3183
      %3249 = vmatprep.subr.bf16.mxu0 %v3186
      %3250 = vmatpush1.bf16.msra.mxu0 %v3185
      %3251 = vmatprep.subr.bf16.mxu0 %v3188
      %3252 = vmatpush1.bf16.msra.mxu0 %v3187
      %3253 = vmatprep.subr.bf16.mxu0 %v3190
      %3254 = vmatpush1.bf16.msra.mxu0 %v3189
      %3255 = vmatprep.mubr.bf16.mxu0 %v3062
      %3256 = vmatmul.mubr.bf16.gmra.mrb[0].mxu0 %v3061
      %v3257 = vpop.f32.mrb[0].mxu0
      %v3258 = vadd.f32 0.0, %v3257
      %v3259 = vpop.f32.mrb[0].mxu0
      %v3260 = vadd.f32 0.0, %v3259
      %v3261 = vpop.f32.mrb[0].mxu0
      %v3262 = vadd.f32 0.0, %v3261
      %v3263 = vpop.f32.mrb[0].mxu0
      %v3264 = vadd.f32 0.0, %v3263
      %3265 = vdwg.mxu0
      %v3266 = vld [vmem:[#allocation4] sm:$0xff]
      %v3267 = vld [vmem:[#allocation4 + $0x8] sm:$0xff]
      %v3268 = vld [vmem:[#allocation4 + $0x10] sm:$0xff]
      %v3269 = vld [vmem:[#allocation4 + $0x18] sm:$0xff]
      %v3270 = vadd.f32 %v3266, %v3258
      %v3271 = vadd.f32 %v3267, %v3260
      %v3272 = vadd.f32 %v3268, %v3262
      %v3273 = vadd.f32 %v3269, %v3264
      %3274 = vst [vmem:[#allocation4] sm:$0xff] %v3270
      %3275 = vst [vmem:[#allocation4 + $0x8] sm:$0xff] %v3271
      %3276 = vst [vmem:[#allocation4 + $0x10] sm:$0xff] %v3272
      %3277 = vst [vmem:[#allocation4 + $0x18] sm:$0xff] %v3273
      %v3278 = vld [vmem:[#allocation4] sm:$0xff]
      %v3279 = vld [vmem:[#allocation4 + $0x8] sm:$0xff]
      %v3280 = vld [vmem:[#allocation4 + $0x10] sm:$0xff]
      %v3281 = vld [vmem:[#allocation4 + $0x18] sm:$0xff]
      %v3282 = vld [vmem:[%s4] sm:$0x3]
      %v3284 = vlaneseq
      %v3285 = vshrl.u32 %v3284, 7
      %v3286 = vsub.s32 0, %v3285
      %v3287 = vrot.slane %v3282, %v3286
      %v3288 = vlaneseq
      %v3289 = vshrl.u32 %v3288, 7
      %v3290 = vsub.s32 1, %v3289
      %v3291 = vrot.slane %v3282, %v3290
      %v3294 = vadd.f32 %v3278, %v3287
      %v3295 = vadd.f32 %v3279, %v3291
      %v3296 = vadd.f32 %v3280, %v3287
      %v3297 = vadd.f32 %v3281, %v3291
      %v3298 = vmax.f32 %v3294, 0.0
      %v3299 = vmax.f32 %v3295, 0.0
      %v3300 = vmax.f32 %v3296, 0.0
      %v3301 = vmax.f32 %v3297, 0.0
      %v3302 = vld [vmem:[%s313] sm:$0xff]
      %v3303 = vld [vmem:[%s313 + $0x8] sm:$0xff]
      %v3304 = vld [vmem:[%s313 + $0x10] sm:$0xff]
      %v3305 = vld [vmem:[%s313 + $0x18] sm:$0xff]
      %v3306 = vadd.f32 %v3302, %v3298
      %v3307 = vadd.f32 %v3303, %v3299
      %v3308 = vadd.f32 %v3304, %v3300
      %v3309 = vadd.f32 %v3305, %v3301
      %3310 = vst [vmem:[%s313] sm:$0xff] %v3306
      %3311 = vst [vmem:[%s313 + $0x8] sm:$0xff] %v3307
      %3312 = vst [vmem:[%s313 + $0x10] sm:$0xff] %v3308
      %3313 = vst [vmem:[%s313 + $0x18] sm:$0xff] %v3309
      %v3314 = vld [vmem:[#allocation3] sm:$0xff]
      %v3315 = vld [vmem:[#allocation3 + $0x8] sm:$0xff]
      %v3316 = vld [vmem:[#allocation3 + $0x10] sm:$0xff]
      %v3317 = vld [vmem:[#allocation3 + $0x18] sm:$0xff]
      %v3318 = vld [vmem:[%s5] sm:$0xff]
      %v3319 = vld [vmem:[%s5 + $0x8] sm:$0xff]
      %v3320 = vld [vmem:[%s5 + $0x10] sm:$0xff]
      %v3321 = vld [vmem:[%s5 + $0x18] sm:$0xff]
      %v3322 = vld [vmem:[%s5 + $0x20] sm:$0xff]
      %v3323 = vld [vmem:[%s5 + $0x28] sm:$0xff]
      %v3324 = vld [vmem:[%s5 + $0x30] sm:$0xff]
      %v3325 = vld [vmem:[%s5 + $0x38] sm:$0xff]
      %v3326 = vld [vmem:[%s5 + $0x40] sm:$0xff]
      %v3327 = vld [vmem:[%s5 + $0x48] sm:$0xff]
      %v3328 = vld [vmem:[%s5 + $0x50] sm:$0xff]
      %v3329 = vld [vmem:[%s5 + $0x58] sm:$0xff]
      %v3330 = vld [vmem:[%s5 + $0x60] sm:$0xff]
      %v3331 = vld [vmem:[%s5 + $0x68] sm:$0xff]
      %v3332 = vld [vmem:[%s5 + $0x70] sm:$0xff]
      %v3333 = vld [vmem:[%s5 + $0x78] sm:$0xff]
      %v3334 = vld [vmem:[%s5 + $0x80] sm:$0xff]
      %v3335 = vld [vmem:[%s5 + $0x88] sm:$0xff]
      %v3336 = vld [vmem:[%s5 + $0x90] sm:$0xff]
      %v3337 = vld [vmem:[%s5 + $0x98] sm:$0xff]
      %v3338 = vld [vmem:[%s5 + $0xa0] sm:$0xff]
      %v3339 = vld [vmem:[%s5 + $0xa8] sm:$0xff]
      %v3340 = vld [vmem:[%s5 + $0xb0] sm:$0xff]
      %v3341 = vld [vmem:[%s5 + $0xb8] sm:$0xff]
      %v3342 = vld [vmem:[%s5 + $0xc0] sm:$0xff]
      %v3343 = vld [vmem:[%s5 + $0xc8] sm:$0xff]
      %v3344 = vld [vmem:[%s5 + $0xd0] sm:$0xff]
      %v3345 = vld [vmem:[%s5 + $0xd8] sm:$0xff]
      %v3346 = vld [vmem:[%s5 + $0xe0] sm:$0xff]
      %v3347 = vld [vmem:[%s5 + $0xe8] sm:$0xff]
      %v3348 = vld [vmem:[%s5 + $0xf0] sm:$0xff]
      %v3349 = vld [vmem:[%s5 + $0xf8] sm:$0xff]
      %v3350 = vpack.c.bf16 %v3316, %v3314
      %v3351 = vpack.c.bf16 %v3317, %v3315
      %v3384 = vunpack.c.l.b16 %v3318
      %v3385 = vunpack.c.h.b16 %v3318
      %v3386 = vunpack.c.l.b16 %v3319
      %v3387 = vunpack.c.h.b16 %v3319
      %v3388 = vunpack.c.l.b16 %v3320
      %v3389 = vunpack.c.h.b16 %v3320
      %v3390 = vunpack.c.l.b16 %v3321
      %v3391 = vunpack.c.h.b16 %v3321
      %v3392 = vunpack.c.l.b16 %v3322
      %v3393 = vunpack.c.h.b16 %v3322
      %v3394 = vunpack.c.l.b16 %v3323
      %v3395 = vunpack.c.h.b16 %v3323
      %v3396 = vunpack.c.l.b16 %v3324
      %v3397 = vunpack.c.h.b16 %v3324
      %v3398 = vunpack.c.l.b16 %v3325
      %v3399 = vunpack.c.h.b16 %v3325
      %v3400 = vunpack.c.l.b16 %v3326
      %v3401 = vunpack.c.h.b16 %v3326
      %v3402 = vunpack.c.l.b16 %v3327
      %v3403 = vunpack.c.h.b16 %v3327
      %v3404 = vunpack.c.l.b16 %v3328
      %v3405 = vunpack.c.h.b16 %v3328
      %v3406 = vunpack.c.l.b16 %v3329
      %v3407 = vunpack.c.h.b16 %v3329
      %v3408 = vunpack.c.l.b16 %v3330
      %v3409 = vunpack.c.h.b16 %v3330
      %v3410 = vunpack.c.l.b16 %v3331
      %v3411 = vunpack.c.h.b16 %v3331
      %v3412 = vunpack.c.l.b16 %v3332
      %v3413 = vunpack.c.h.b16 %v3332
      %v3414 = vunpack.c.l.b16 %v3333
      %v3415 = vunpack.c.h.b16 %v3333
      %v3416 = vunpack.c.l.b16 %v3334
      %v3417 = vunpack.c.h.b16 %v3334
      %v3418 = vunpack.c.l.b16 %v3335
      %v3419 = vunpack.c.h.b16 %v3335
      %v3420 = vunpack.c.l.b16 %v3336
      %v3421 = vunpack.c.h.b16 %v3336
      %v3422 = vunpack.c.l.b16 %v3337
      %v3423 = vunpack.c.h.b16 %v3337
      %v3424 = vunpack.c.l.b16 %v3338
      %v3425 = vunpack.c.h.b16 %v3338
      %v3426 = vunpack.c.l.b16 %v3339
      %v3427 = vunpack.c.h.b16 %v3339
      %v3428 = vunpack.c.l.b16 %v3340
      %v3429 = vunpack.c.h.b16 %v3340
      %v3430 = vunpack.c.l.b16 %v3341
      %v3431 = vunpack.c.h.b16 %v3341
      %v3432 = vunpack.c.l.b16 %v3342
      %v3433 = vunpack.c.h.b16 %v3342
      %v3434 = vunpack.c.l.b16 %v3343
      %v3435 = vunpack.c.h.b16 %v3343
      %v3436 = vunpack.c.l.b16 %v3344
      %v3437 = vunpack.c.h.b16 %v3344
      %v3438 = vunpack.c.l.b16 %v3345
      %v3439 = vunpack.c.h.b16 %v3345
      %v3440 = vunpack.c.l.b16 %v3346
      %v3441 = vunpack.c.h.b16 %v3346
      %v3442 = vunpack.c.l.b16 %v3347
      %v3443 = vunpack.c.h.b16 %v3347
      %v3444 = vunpack.c.l.b16 %v3348
      %v3445 = vunpack.c.h.b16 %v3348
      %v3446 = vunpack.c.l.b16 %v3349
      %v3447 = vunpack.c.h.b16 %v3349
      %v3448 = vpack.c.b16 %v3386, %v3384
      %v3449 = vpack.c.b16 %v3387, %v3385
      %v3450 = vpack.c.b16 %v3390, %v3388
      %v3451 = vpack.c.b16 %v3391, %v3389
      %v3452 = vpack.c.b16 %v3394, %v3392
      %v3453 = vpack.c.b16 %v3395, %v3393
      %v3454 = vpack.c.b16 %v3398, %v3396
      %v3455 = vpack.c.b16 %v3399, %v3397
      %v3456 = vpack.c.b16 %v3402, %v3400
      %v3457 = vpack.c.b16 %v3403, %v3401
      %v3458 = vpack.c.b16 %v3406, %v3404
      %v3459 = vpack.c.b16 %v3407, %v3405
      %v3460 = vpack.c.b16 %v3410, %v3408
      %v3461 = vpack.c.b16 %v3411, %v3409
      %v3462 = vpack.c.b16 %v3414, %v3412
      %v3463 = vpack.c.b16 %v3415, %v3413
      %v3464 = vpack.c.b16 %v3418, %v3416
      %v3465 = vpack.c.b16 %v3419, %v3417
      %v3466 = vpack.c.b16 %v3422, %v3420
      %v3467 = vpack.c.b16 %v3423, %v3421
      %v3468 = vpack.c.b16 %v3426, %v3424
      %v3469 = vpack.c.b16 %v3427, %v3425
      %v3470 = vpack.c.b16 %v3430, %v3428
      %v3471 = vpack.c.b16 %v3431, %v3429
      %v3472 = vpack.c.b16 %v3434, %v3432
      %v3473 = vpack.c.b16 %v3435, %v3433
      %v3474 = vpack.c.b16 %v3438, %v3436
      %v3475 = vpack.c.b16 %v3439, %v3437
      %v3476 = vpack.c.b16 %v3442, %v3440
      %v3477 = vpack.c.b16 %v3443, %v3441
      %v3478 = vpack.c.b16 %v3446, %v3444
      %v3479 = vpack.c.b16 %v3447, %v3445
      %3512 = vmatprep.subr.bf16.mxu0 %v3449
      %3513 = vmatpush1.bf16.msra.mxu0 %v3448
      %3514 = vmatprep.subr.bf16.mxu0 %v3451
      %3515 = vmatpush1.bf16.msra.mxu0 %v3450
      %3516 = vmatprep.subr.bf16.mxu0 %v3453
      %3517 = vmatpush1.bf16.msra.mxu0 %v3452
      %3518 = vmatprep.subr.bf16.mxu0 %v3455
      %3519 = vmatpush1.bf16.msra.mxu0 %v3454
      %3520 = vmatprep.subr.bf16.mxu0 %v3457
      %3521 = vmatpush1.bf16.msra.mxu0 %v3456
      %3522 = vmatprep.subr.bf16.mxu0 %v3459
      %3523 = vmatpush1.bf16.msra.mxu0 %v3458
      %3524 = vmatprep.subr.bf16.mxu0 %v3461
      %3525 = vmatpush1.bf16.msra.mxu0 %v3460
      %3526 = vmatprep.subr.bf16.mxu0 %v3463
      %3527 = vmatpush1.bf16.msra.mxu0 %v3462
      %3528 = vmatprep.subr.bf16.mxu0 %v3465
      %3529 = vmatpush1.bf16.msra.mxu0 %v3464
      %3530 = vmatprep.subr.bf16.mxu0 %v3467
      %3531 = vmatpush1.bf16.msra.mxu0 %v3466
      %3532 = vmatprep.subr.bf16.mxu0 %v3469
      %3533 = vmatpush1.bf16.msra.mxu0 %v3468
      %3534 = vmatprep.subr.bf16.mxu0 %v3471
      %3535 = vmatpush1.bf16.msra.mxu0 %v3470
      %3536 = vmatprep.subr.bf16.mxu0 %v3473
      %3537 = vmatpush1.bf16.msra.mxu0 %v3472
      %3538 = vmatprep.subr.bf16.mxu0 %v3475
      %3539 = vmatpush1.bf16.msra.mxu0 %v3474
      %3540 = vmatprep.subr.bf16.mxu0 %v3477
      %3541 = vmatpush1.bf16.msra.mxu0 %v3476
      %3542 = vmatprep.subr.bf16.mxu0 %v3479
      %3543 = vmatpush1.bf16.msra.mxu0 %v3478
      %3544 = vmatprep.mubr.bf16.mxu0 %v3351
      %3545 = vmatmul.mubr.bf16.gmra.mrb[0].mxu0 %v3350
      %v3546 = vpop.f32.mrb[0].mxu0
      %v3547 = vadd.f32 0.0, %v3546
      %v3548 = vpop.f32.mrb[0].mxu0
      %v3549 = vadd.f32 0.0, %v3548
      %v3550 = vpop.f32.mrb[0].mxu0
      %v3551 = vadd.f32 0.0, %v3550
      %v3552 = vpop.f32.mrb[0].mxu0
      %v3553 = vadd.f32 0.0, %v3552
      %3554 = vdwg.mxu0
      %3555 = vst [vmem:[#allocation5] sm:$0xff] %v3547
      %3556 = vst [vmem:[#allocation5 + $0x8] sm:$0xff] %v3549
      %3557 = vst [vmem:[#allocation5 + $0x10] sm:$0xff] %v3551
      %3558 = vst [vmem:[#allocation5 + $0x18] sm:$0xff] %v3553
      %v3559 = vld [vmem:[#allocation3] sm:$0xfe]
      %v3560 = vld [vmem:[#allocation3 + $0x8] sm:$0xfe]
      %v3561 = vld [vmem:[#allocation3 + $0x10] sm:$0xff]
      %v3562 = vld [vmem:[#allocation3 + $0x18] sm:$0xff]
      %v3563 = vld [vmem:[#allocation3 + $0x20] sm:$0x1]
      %v3564 = vld [vmem:[#allocation3 + $0x28] sm:$0x1]
      %s3565 = scalar_lea.vmem %s5, 256
      %v3566 = vld [vmem:[%s3565] sm:$0xff]
      %v3567 = vld [vmem:[%s3565 + $0x8] sm:$0xff]
      %v3568 = vld [vmem:[%s3565 + $0x10] sm:$0xff]
      %v3569 = vld [vmem:[%s3565 + $0x18] sm:$0xff]
      %v3570 = vld [vmem:[%s3565 + $0x20] sm:$0xff]
      %v3571 = vld [vmem:[%s3565 + $0x28] sm:$0xff]
      %v3572 = vld [vmem:[%s3565 + $0x30] sm:$0xff]
      %v3573 = vld [vmem:[%s3565 + $0x38] sm:$0xff]
      %v3574 = vld [vmem:[%s3565 + $0x40] sm:$0xff]
      %v3575 = vld [vmem:[%s3565 + $0x48] sm:$0xff]
      %v3576 = vld [vmem:[%s3565 + $0x50] sm:$0xff]
      %v3577 = vld [vmem:[%s3565 + $0x58] sm:$0xff]
      %v3578 = vld [vmem:[%s3565 + $0x60] sm:$0xff]
      %v3579 = vld [vmem:[%s3565 + $0x68] sm:$0xff]
      %v3580 = vld [vmem:[%s3565 + $0x70] sm:$0xff]
      %v3581 = vld [vmem:[%s3565 + $0x78] sm:$0xff]
      %v3582 = vld [vmem:[%s3565 + $0x80] sm:$0xff]
      %v3583 = vld [vmem:[%s3565 + $0x88] sm:$0xff]
      %v3584 = vld [vmem:[%s3565 + $0x90] sm:$0xff]
      %v3585 = vld [vmem:[%s3565 + $0x98] sm:$0xff]
      %v3586 = vld [vmem:[%s3565 + $0xa0] sm:$0xff]
      %v3587 = vld [vmem:[%s3565 + $0xa8] sm:$0xff]
      %v3588 = vld [vmem:[%s3565 + $0xb0] sm:$0xff]
      %v3589 = vld [vmem:[%s3565 + $0xb8] sm:$0xff]
      %v3590 = vld [vmem:[%s3565 + $0xc0] sm:$0xff]
      %v3591 = vld [vmem:[%s3565 + $0xc8] sm:$0xff]
      %v3592 = vld [vmem:[%s3565 + $0xd0] sm:$0xff]
      %v3593 = vld [vmem:[%s3565 + $0xd8] sm:$0xff]
      %v3594 = vld [vmem:[%s3565 + $0xe0] sm:$0xff]
      %v3595 = vld [vmem:[%s3565 + $0xe8] sm:$0xff]
      %v3596 = vld [vmem:[%s3565 + $0xf0] sm:$0xff]
      %v3597 = vld [vmem:[%s3565 + $0xf8] sm:$0xff]
      %v3598 = vpack.c.bf16 %v3561, %v3559
      %v3599 = vpack.c.bf16 %v3562, %v3560
      %v3600 = vpack.c.bf16 %v3563, %v3563
      %v3601 = vpack.c.bf16 %v3564, %v3564
      %v3603 = vshrl.u32 %v3598, 16
      %v3605 = vshll.u32 %v3598, 16
      %v3607 = vrot.slane %v3605, 1
      %v3608 = vor.u32 %v3603, %v3607
      %v3610 = vshll.u32 %v3600, 16
      %v3612 = vrot.slane %v3610, 1
      %v3613 = vsel %vm1084, %v3608, %v3612
      %v3615 = vshrl.u32 %v3599, 16
      %v3617 = vshll.u32 %v3599, 16
      %v3619 = vrot.slane %v3617, 1
      %v3620 = vor.u32 %v3615, %v3619
      %v3622 = vshll.u32 %v3601, 16
      %v3624 = vrot.slane %v3622, 1
      %v3625 = vsel %vm1084, %v3620, %v3624
      %v3660 = vunpack.c.l.b16 %v3566
      %v3661 = vunpack.c.h.b16 %v3566
      %v3662 = vunpack.c.l.b16 %v3567
      %v3663 = vunpack.c.h.b16 %v3567
      %v3664 = vunpack.c.l.b16 %v3568
      %v3665 = vunpack.c.h.b16 %v3568
      %v3666 = vunpack.c.l.b16 %v3569
      %v3667 = vunpack.c.h.b16 %v3569
      %v3668 = vunpack.c.l.b16 %v3570
      %v3669 = vunpack.c.h.b16 %v3570
      %v3670 = vunpack.c.l.b16 %v3571
      %v3671 = vunpack.c.h.b16 %v3571
      %v3672 = vunpack.c.l.b16 %v3572
      %v3673 = vunpack.c.h.b16 %v3572
      %v3674 = vunpack.c.l.b16 %v3573
      %v3675 = vunpack.c.h.b16 %v3573
      %v3676 = vunpack.c.l.b16 %v3574
      %v3677 = vunpack.c.h.b16 %v3574
      %v3678 = vunpack.c.l.b16 %v3575
      %v3679 = vunpack.c.h.b16 %v3575
      %v3680 = vunpack.c.l.b16 %v3576
      %v3681 = vunpack.c.h.b16 %v3576
      %v3682 = vunpack.c.l.b16 %v3577
      %v3683 = vunpack.c.h.b16 %v3577
      %v3684 = vunpack.c.l.b16 %v3578
      %v3685 = vunpack.c.h.b16 %v3578
      %v3686 = vunpack.c.l.b16 %v3579
      %v3687 = vunpack.c.h.b16 %v3579
      %v3688 = vunpack.c.l.b16 %v3580
      %v3689 = vunpack.c.h.b16 %v3580
      %v3690 = vunpack.c.l.b16 %v3581
      %v3691 = vunpack.c.h.b16 %v3581
      %v3692 = vunpack.c.l.b16 %v3582
      %v3693 = vunpack.c.h.b16 %v3582
      %v3694 = vunpack.c.l.b16 %v3583
      %v3695 = vunpack.c.h.b16 %v3583
      %v3696 = vunpack.c.l.b16 %v3584
      %v3697 = vunpack.c.h.b16 %v3584
      %v3698 = vunpack.c.l.b16 %v3585
      %v3699 = vunpack.c.h.b16 %v3585
      %v3700 = vunpack.c.l.b16 %v3586
      %v3701 = vunpack.c.h.b16 %v3586
      %v3702 = vunpack.c.l.b16 %v3587
      %v3703 = vunpack.c.h.b16 %v3587
      %v3704 = vunpack.c.l.b16 %v3588
      %v3705 = vunpack.c.h.b16 %v3588
      %v3706 = vunpack.c.l.b16 %v3589
      %v3707 = vunpack.c.h.b16 %v3589
      %v3708 = vunpack.c.l.b16 %v3590
      %v3709 = vunpack.c.h.b16 %v3590
      %v3710 = vunpack.c.l.b16 %v3591
      %v3711 = vunpack.c.h.b16 %v3591
      %v3712 = vunpack.c.l.b16 %v3592
      %v3713 = vunpack.c.h.b16 %v3592
      %v3714 = vunpack.c.l.b16 %v3593
      %v3715 = vunpack.c.h.b16 %v3593
      %v3716 = vunpack.c.l.b16 %v3594
      %v3717 = vunpack.c.h.b16 %v3594
      %v3718 = vunpack.c.l.b16 %v3595
      %v3719 = vunpack.c.h.b16 %v3595
      %v3720 = vunpack.c.l.b16 %v3596
      %v3721 = vunpack.c.h.b16 %v3596
      %v3722 = vunpack.c.l.b16 %v3597
      %v3723 = vunpack.c.h.b16 %v3597
      %v3724 = vpack.c.b16 %v3662, %v3660
      %v3725 = vpack.c.b16 %v3663, %v3661
      %v3726 = vpack.c.b16 %v3666, %v3664
      %v3727 = vpack.c.b16 %v3667, %v3665
      %v3728 = vpack.c.b16 %v3670, %v3668
      %v3729 = vpack.c.b16 %v3671, %v3669
      %v3730 = vpack.c.b16 %v3674, %v3672
      %v3731 = vpack.c.b16 %v3675, %v3673
      %v3732 = vpack.c.b16 %v3678, %v3676
      %v3733 = vpack.c.b16 %v3679, %v3677
      %v3734 = vpack.c.b16 %v3682, %v3680
      %v3735 = vpack.c.b16 %v3683, %v3681
      %v3736 = vpack.c.b16 %v3686, %v3684
      %v3737 = vpack.c.b16 %v3687, %v3685
      %v3738 = vpack.c.b16 %v3690, %v3688
      %v3739 = vpack.c.b16 %v3691, %v3689
      %v3740 = vpack.c.b16 %v3694, %v3692
      %v3741 = vpack.c.b16 %v3695, %v3693
      %v3742 = vpack.c.b16 %v3698, %v3696
      %v3743 = vpack.c.b16 %v3699, %v3697
      %v3744 = vpack.c.b16 %v3702, %v3700
      %v3745 = vpack.c.b16 %v3703, %v3701
      %v3746 = vpack.c.b16 %v3706, %v3704
      %v3747 = vpack.c.b16 %v3707, %v3705
      %v3748 = vpack.c.b16 %v3710, %v3708
      %v3749 = vpack.c.b16 %v3711, %v3709
      %v3750 = vpack.c.b16 %v3714, %v3712
      %v3751 = vpack.c.b16 %v3715, %v3713
      %v3752 = vpack.c.b16 %v3718, %v3716
      %v3753 = vpack.c.b16 %v3719, %v3717
      %v3754 = vpack.c.b16 %v3722, %v3720
      %v3755 = vpack.c.b16 %v3723, %v3721
      %3788 = vmatprep.subr.bf16.mxu0 %v3725
      %3789 = vmatpush1.bf16.msra.mxu0 %v3724
      %3790 = vmatprep.subr.bf16.mxu0 %v3727
      %3791 = vmatpush1.bf16.msra.mxu0 %v3726
      %3792 = vmatprep.subr.bf16.mxu0 %v3729
      %3793 = vmatpush1.bf16.msra.mxu0 %v3728
      %3794 = vmatprep.subr.bf16.mxu0 %v3731
      %3795 = vmatpush1.bf16.msra.mxu0 %v3730
      %3796 = vmatprep.subr.bf16.mxu0 %v3733
      %3797 = vmatpush1.bf16.msra.mxu0 %v3732
      %3798 = vmatprep.subr.bf16.mxu0 %v3735
      %3799 = vmatpush1.bf16.msra.mxu0 %v3734
      %3800 = vmatprep.subr.bf16.mxu0 %v3737
      %3801 = vmatpush1.bf16.msra.mxu0 %v3736
      %3802 = vmatprep.subr.bf16.mxu0 %v3739
      %3803 = vmatpush1.bf16.msra.mxu0 %v3738
      %3804 = vmatprep.subr.bf16.mxu0 %v3741
      %3805 = vmatpush1.bf16.msra.mxu0 %v3740
      %3806 = vmatprep.subr.bf16.mxu0 %v3743
      %3807 = vmatpush1.bf16.msra.mxu0 %v3742
      %3808 = vmatprep.subr.bf16.mxu0 %v3745
      %3809 = vmatpush1.bf16.msra.mxu0 %v3744
      %3810 = vmatprep.subr.bf16.mxu0 %v3747
      %3811 = vmatpush1.bf16.msra.mxu0 %v3746
      %3812 = vmatprep.subr.bf16.mxu0 %v3749
      %3813 = vmatpush1.bf16.msra.mxu0 %v3748
      %3814 = vmatprep.subr.bf16.mxu0 %v3751
      %3815 = vmatpush1.bf16.msra.mxu0 %v3750
      %3816 = vmatprep.subr.bf16.mxu0 %v3753
      %3817 = vmatpush1.bf16.msra.mxu0 %v3752
      %3818 = vmatprep.subr.bf16.mxu0 %v3755
      %3819 = vmatpush1.bf16.msra.mxu0 %v3754
      %3820 = vmatprep.mubr.bf16.mxu0 %v3625
      %3821 = vmatmul.mubr.bf16.gmra.mrb[0].mxu0 %v3613
      %v3822 = vpop.f32.mrb[0].mxu0
      %v3823 = vadd.f32 0.0, %v3822
      %v3824 = vpop.f32.mrb[0].mxu0
      %v3825 = vadd.f32 0.0, %v3824
      %v3826 = vpop.f32.mrb[0].mxu0
      %v3827 = vadd.f32 0.0, %v3826
      %v3828 = vpop.f32.mrb[0].mxu0
      %v3829 = vadd.f32 0.0, %v3828
      %3830 = vdwg.mxu0
      %v3831 = vld [vmem:[#allocation5] sm:$0xff]
      %v3832 = vld [vmem:[#allocation5 + $0x8] sm:$0xff]
      %v3833 = vld [vmem:[#allocation5 + $0x10] sm:$0xff]
      %v3834 = vld [vmem:[#allocation5 + $0x18] sm:$0xff]
      %v3835 = vadd.f32 %v3831, %v3823
      %v3836 = vadd.f32 %v3832, %v3825
      %v3837 = vadd.f32 %v3833, %v3827
      %v3838 = vadd.f32 %v3834, %v3829
      %3839 = vst [vmem:[#allocation5] sm:$0xff] %v3835
      %3840 = vst [vmem:[#allocation5 + $0x8] sm:$0xff] %v3836
      %3841 = vst [vmem:[#allocation5 + $0x10] sm:$0xff] %v3837
      %3842 = vst [vmem:[#allocation5 + $0x18] sm:$0xff] %v3838
      %v3843 = vld [vmem:[#allocation3] sm:$0xfc]
      %v3844 = vld [vmem:[#allocation3 + $0x8] sm:$0xfc]
      %v3845 = vld [vmem:[#allocation3 + $0x10] sm:$0xff]
      %v3846 = vld [vmem:[#allocation3 + $0x18] sm:$0xff]
      %v3847 = vld [vmem:[#allocation3 + $0x20] sm:$0x3]
      %v3848 = vld [vmem:[#allocation3 + $0x28] sm:$0x3]
      %s3849 = scalar_lea.vmem %s5, 512
      %v3850 = vld [vmem:[%s3849] sm:$0xff]
      %v3851 = vld [vmem:[%s3849 + $0x8] sm:$0xff]
      %v3852 = vld [vmem:[%s3849 + $0x10] sm:$0xff]
      %v3853 = vld [vmem:[%s3849 + $0x18] sm:$0xff]
      %v3854 = vld [vmem:[%s3849 + $0x20] sm:$0xff]
      %v3855 = vld [vmem:[%s3849 + $0x28] sm:$0xff]
      %v3856 = vld [vmem:[%s3849 + $0x30] sm:$0xff]
      %v3857 = vld [vmem:[%s3849 + $0x38] sm:$0xff]
      %v3858 = vld [vmem:[%s3849 + $0x40] sm:$0xff]
      %v3859 = vld [vmem:[%s3849 + $0x48] sm:$0xff]
      %v3860 = vld [vmem:[%s3849 + $0x50] sm:$0xff]
      %v3861 = vld [vmem:[%s3849 + $0x58] sm:$0xff]
      %v3862 = vld [vmem:[%s3849 + $0x60] sm:$0xff]
      %v3863 = vld [vmem:[%s3849 + $0x68] sm:$0xff]
      %v3864 = vld [vmem:[%s3849 + $0x70] sm:$0xff]
      %v3865 = vld [vmem:[%s3849 + $0x78] sm:$0xff]
      %v3866 = vld [vmem:[%s3849 + $0x80] sm:$0xff]
      %v3867 = vld [vmem:[%s3849 + $0x88] sm:$0xff]
      %v3868 = vld [vmem:[%s3849 + $0x90] sm:$0xff]
      %v3869 = vld [vmem:[%s3849 + $0x98] sm:$0xff]
      %v3870 = vld [vmem:[%s3849 + $0xa0] sm:$0xff]
      %v3871 = vld [vmem:[%s3849 + $0xa8] sm:$0xff]
      %v3872 = vld [vmem:[%s3849 + $0xb0] sm:$0xff]
      %v3873 = vld [vmem:[%s3849 + $0xb8] sm:$0xff]
      %v3874 = vld [vmem:[%s3849 + $0xc0] sm:$0xff]
      %v3875 = vld [vmem:[%s3849 + $0xc8] sm:$0xff]
      %v3876 = vld [vmem:[%s3849 + $0xd0] sm:$0xff]
      %v3877 = vld [vmem:[%s3849 + $0xd8] sm:$0xff]
      %v3878 = vld [vmem:[%s3849 + $0xe0] sm:$0xff]
      %v3879 = vld [vmem:[%s3849 + $0xe8] sm:$0xff]
      %v3880 = vld [vmem:[%s3849 + $0xf0] sm:$0xff]
      %v3881 = vld [vmem:[%s3849 + $0xf8] sm:$0xff]
      %v3882 = vpack.c.bf16 %v3845, %v3843
      %v3883 = vpack.c.bf16 %v3846, %v3844
      %v3884 = vpack.c.bf16 %v3847, %v3847
      %v3885 = vpack.c.bf16 %v3848, %v3848
      %v3890 = vrot.slane %v3882, 1
      %v3891 = vrot.slane %v3884, 1
      %v3892 = vsel %vm1373, %v3890, %v3891
      %v3893 = vrot.slane %v3883, 1
      %v3894 = vrot.slane %v3885, 1
      %v3895 = vsel %vm1373, %v3893, %v3894
      %v3930 = vunpack.c.l.b16 %v3850
      %v3931 = vunpack.c.h.b16 %v3850
      %v3932 = vunpack.c.l.b16 %v3851
      %v3933 = vunpack.c.h.b16 %v3851
      %v3934 = vunpack.c.l.b16 %v3852
      %v3935 = vunpack.c.h.b16 %v3852
      %v3936 = vunpack.c.l.b16 %v3853
      %v3937 = vunpack.c.h.b16 %v3853
      %v3938 = vunpack.c.l.b16 %v3854
      %v3939 = vunpack.c.h.b16 %v3854
      %v3940 = vunpack.c.l.b16 %v3855
      %v3941 = vunpack.c.h.b16 %v3855
      %v3942 = vunpack.c.l.b16 %v3856
      %v3943 = vunpack.c.h.b16 %v3856
      %v3944 = vunpack.c.l.b16 %v3857
      %v3945 = vunpack.c.h.b16 %v3857
      %v3946 = vunpack.c.l.b16 %v3858
      %v3947 = vunpack.c.h.b16 %v3858
      %v3948 = vunpack.c.l.b16 %v3859
      %v3949 = vunpack.c.h.b16 %v3859
      %v3950 = vunpack.c.l.b16 %v3860
      %v3951 = vunpack.c.h.b16 %v3860
      %v3952 = vunpack.c.l.b16 %v3861
      %v3953 = vunpack.c.h.b16 %v3861
      %v3954 = vunpack.c.l.b16 %v3862
      %v3955 = vunpack.c.h.b16 %v3862
      %v3956 = vunpack.c.l.b16 %v3863
      %v3957 = vunpack.c.h.b16 %v3863
      %v3958 = vunpack.c.l.b16 %v3864
      %v3959 = vunpack.c.h.b16 %v3864
      %v3960 = vunpack.c.l.b16 %v3865
      %v3961 = vunpack.c.h.b16 %v3865
      %v3962 = vunpack.c.l.b16 %v3866
      %v3963 = vunpack.c.h.b16 %v3866
      %v3964 = vunpack.c.l.b16 %v3867
      %v3965 = vunpack.c.h.b16 %v3867
      %v3966 = vunpack.c.l.b16 %v3868
      %v3967 = vunpack.c.h.b16 %v3868
      %v3968 = vunpack.c.l.b16 %v3869
      %v3969 = vunpack.c.h.b16 %v3869
      %v3970 = vunpack.c.l.b16 %v3870
      %v3971 = vunpack.c.h.b16 %v3870
      %v3972 = vunpack.c.l.b16 %v3871
      %v3973 = vunpack.c.h.b16 %v3871
      %v3974 = vunpack.c.l.b16 %v3872
      %v3975 = vunpack.c.h.b16 %v3872
      %v3976 = vunpack.c.l.b16 %v3873
      %v3977 = vunpack.c.h.b16 %v3873
      %v3978 = vunpack.c.l.b16 %v3874
      %v3979 = vunpack.c.h.b16 %v3874
      %v3980 = vunpack.c.l.b16 %v3875
      %v3981 = vunpack.c.h.b16 %v3875
      %v3982 = vunpack.c.l.b16 %v3876
      %v3983 = vunpack.c.h.b16 %v3876
      %v3984 = vunpack.c.l.b16 %v3877
      %v3985 = vunpack.c.h.b16 %v3877
      %v3986 = vunpack.c.l.b16 %v3878
      %v3987 = vunpack.c.h.b16 %v3878
      %v3988 = vunpack.c.l.b16 %v3879
      %v3989 = vunpack.c.h.b16 %v3879
      %v3990 = vunpack.c.l.b16 %v3880
      %v3991 = vunpack.c.h.b16 %v3880
      %v3992 = vunpack.c.l.b16 %v3881
      %v3993 = vunpack.c.h.b16 %v3881
      %v3994 = vpack.c.b16 %v3932, %v3930
      %v3995 = vpack.c.b16 %v3933, %v3931
      %v3996 = vpack.c.b16 %v3936, %v3934
      %v3997 = vpack.c.b16 %v3937, %v3935
      %v3998 = vpack.c.b16 %v3940, %v3938
      %v3999 = vpack.c.b16 %v3941, %v3939
      %v4000 = vpack.c.b16 %v3944, %v3942
      %v4001 = vpack.c.b16 %v3945, %v3943
      %v4002 = vpack.c.b16 %v3948, %v3946
      %v4003 = vpack.c.b16 %v3949, %v3947
      %v4004 = vpack.c.b16 %v3952, %v3950
      %v4005 = vpack.c.b16 %v3953, %v3951
      %v4006 = vpack.c.b16 %v3956, %v3954
      %v4007 = vpack.c.b16 %v3957, %v3955
      %v4008 = vpack.c.b16 %v3960, %v3958
      %v4009 = vpack.c.b16 %v3961, %v3959
      %v4010 = vpack.c.b16 %v3964, %v3962
      %v4011 = vpack.c.b16 %v3965, %v3963
      %v4012 = vpack.c.b16 %v3968, %v3966
      %v4013 = vpack.c.b16 %v3969, %v3967
      %v4014 = vpack.c.b16 %v3972, %v3970
      %v4015 = vpack.c.b16 %v3973, %v3971
      %v4016 = vpack.c.b16 %v3976, %v3974
      %v4017 = vpack.c.b16 %v3977, %v3975
      %v4018 = vpack.c.b16 %v3980, %v3978
      %v4019 = vpack.c.b16 %v3981, %v3979
      %v4020 = vpack.c.b16 %v3984, %v3982
      %v4021 = vpack.c.b16 %v3985, %v3983
      %v4022 = vpack.c.b16 %v3988, %v3986
      %v4023 = vpack.c.b16 %v3989, %v3987
      %v4024 = vpack.c.b16 %v3992, %v3990
      %v4025 = vpack.c.b16 %v3993, %v3991
      %4058 = vmatprep.subr.bf16.mxu0 %v3995
      %4059 = vmatpush1.bf16.msra.mxu0 %v3994
      %4060 = vmatprep.subr.bf16.mxu0 %v3997
      %4061 = vmatpush1.bf16.msra.mxu0 %v3996
      %4062 = vmatprep.subr.bf16.mxu0 %v3999
      %4063 = vmatpush1.bf16.msra.mxu0 %v3998
      %4064 = vmatprep.subr.bf16.mxu0 %v4001
      %4065 = vmatpush1.bf16.msra.mxu0 %v4000
      %4066 = vmatprep.subr.bf16.mxu0 %v4003
      %4067 = vmatpush1.bf16.msra.mxu0 %v4002
      %4068 = vmatprep.subr.bf16.mxu0 %v4005
      %4069 = vmatpush1.bf16.msra.mxu0 %v4004
      %4070 = vmatprep.subr.bf16.mxu0 %v4007
      %4071 = vmatpush1.bf16.msra.mxu0 %v4006
      %4072 = vmatprep.subr.bf16.mxu0 %v4009
      %4073 = vmatpush1.bf16.msra.mxu0 %v4008
      %4074 = vmatprep.subr.bf16.mxu0 %v4011
      %4075 = vmatpush1.bf16.msra.mxu0 %v4010
      %4076 = vmatprep.subr.bf16.mxu0 %v4013
      %4077 = vmatpush1.bf16.msra.mxu0 %v4012
      %4078 = vmatprep.subr.bf16.mxu0 %v4015
      %4079 = vmatpush1.bf16.msra.mxu0 %v4014
      %4080 = vmatprep.subr.bf16.mxu0 %v4017
      %4081 = vmatpush1.bf16.msra.mxu0 %v4016
      %4082 = vmatprep.subr.bf16.mxu0 %v4019
      %4083 = vmatpush1.bf16.msra.mxu0 %v4018
      %4084 = vmatprep.subr.bf16.mxu0 %v4021
      %4085 = vmatpush1.bf16.msra.mxu0 %v4020
      %4086 = vmatprep.subr.bf16.mxu0 %v4023
      %4087 = vmatpush1.bf16.msra.mxu0 %v4022
      %4088 = vmatprep.subr.bf16.mxu0 %v4025
      %4089 = vmatpush1.bf16.msra.mxu0 %v4024
      %4090 = vmatprep.mubr.bf16.mxu0 %v3895
      %4091 = vmatmul.mubr.bf16.gmra.mrb[0].mxu0 %v3892
      %v4092 = vpop.f32.mrb[0].mxu0
      %v4093 = vadd.f32 0.0, %v4092
      %v4094 = vpop.f32.mrb[0].mxu0
      %v4095 = vadd.f32 0.0, %v4094
      %v4096 = vpop.f32.mrb[0].mxu0
      %v4097 = vadd.f32 0.0, %v4096
      %v4098 = vpop.f32.mrb[0].mxu0
      %v4099 = vadd.f32 0.0, %v4098
      %4100 = vdwg.mxu0
      %v4101 = vld [vmem:[#allocation5] sm:$0xff]
      %v4102 = vld [vmem:[#allocation5 + $0x8] sm:$0xff]
      %v4103 = vld [vmem:[#allocation5 + $0x10] sm:$0xff]
      %v4104 = vld [vmem:[#allocation5 + $0x18] sm:$0xff]
      %v4105 = vadd.f32 %v4101, %v4093
      %v4106 = vadd.f32 %v4102, %v4095
      %v4107 = vadd.f32 %v4103, %v4097
      %v4108 = vadd.f32 %v4104, %v4099
      %4109 = vst [vmem:[#allocation5] sm:$0xff] %v4105
      %4110 = vst [vmem:[#allocation5 + $0x8] sm:$0xff] %v4106
      %4111 = vst [vmem:[#allocation5 + $0x10] sm:$0xff] %v4107
      %4112 = vst [vmem:[#allocation5 + $0x18] sm:$0xff] %v4108
      %v4113 = vld [vmem:[#allocation3] sm:$0xf8]
      %v4114 = vld [vmem:[#allocation3 + $0x8] sm:$0xf8]
      %v4115 = vld [vmem:[#allocation3 + $0x10] sm:$0xff]
      %v4116 = vld [vmem:[#allocation3 + $0x18] sm:$0xff]
      %v4117 = vld [vmem:[#allocation3 + $0x20] sm:$0x7]
      %v4118 = vld [vmem:[#allocation3 + $0x28] sm:$0x7]
      %s4119 = scalar_lea.vmem %s5, 768
      %v4120 = vld [vmem:[%s4119] sm:$0xff]
      %v4121 = vld [vmem:[%s4119 + $0x8] sm:$0xff]
      %v4122 = vld [vmem:[%s4119 + $0x10] sm:$0xff]
      %v4123 = vld [vmem:[%s4119 + $0x18] sm:$0xff]
      %v4124 = vld [vmem:[%s4119 + $0x20] sm:$0xff]
      %v4125 = vld [vmem:[%s4119 + $0x28] sm:$0xff]
      %v4126 = vld [vmem:[%s4119 + $0x30] sm:$0xff]
      %v4127 = vld [vmem:[%s4119 + $0x38] sm:$0xff]
      %v4128 = vld [vmem:[%s4119 + $0x40] sm:$0xff]
      %v4129 = vld [vmem:[%s4119 + $0x48] sm:$0xff]
      %v4130 = vld [vmem:[%s4119 + $0x50] sm:$0xff]
      %v4131 = vld [vmem:[%s4119 + $0x58] sm:$0xff]
      %v4132 = vld [vmem:[%s4119 + $0x60] sm:$0xff]
      %v4133 = vld [vmem:[%s4119 + $0x68] sm:$0xff]
      %v4134 = vld [vmem:[%s4119 + $0x70] sm:$0xff]
      %v4135 = vld [vmem:[%s4119 + $0x78] sm:$0xff]
      %v4136 = vld [vmem:[%s4119 + $0x80] sm:$0xff]
      %v4137 = vld [vmem:[%s4119 + $0x88] sm:$0xff]
      %v4138 = vld [vmem:[%s4119 + $0x90] sm:$0xff]
      %v4139 = vld [vmem:[%s4119 + $0x98] sm:$0xff]
      %v4140 = vld [vmem:[%s4119 + $0xa0] sm:$0xff]
      %v4141 = vld [vmem:[%s4119 + $0xa8] sm:$0xff]
      %v4142 = vld [vmem:[%s4119 + $0xb0] sm:$0xff]
      %v4143 = vld [vmem:[%s4119 + $0xb8] sm:$0xff]
      %v4144 = vld [vmem:[%s4119 + $0xc0] sm:$0xff]
      %v4145 = vld [vmem:[%s4119 + $0xc8] sm:$0xff]
      %v4146 = vld [vmem:[%s4119 + $0xd0] sm:$0xff]
      %v4147 = vld [vmem:[%s4119 + $0xd8] sm:$0xff]
      %v4148 = vld [vmem:[%s4119 + $0xe0] sm:$0xff]
      %v4149 = vld [vmem:[%s4119 + $0xe8] sm:$0xff]
      %v4150 = vld [vmem:[%s4119 + $0xf0] sm:$0xff]
      %v4151 = vld [vmem:[%s4119 + $0xf8] sm:$0xff]
      %v4152 = vpack.c.bf16 %v4115, %v4113
      %v4153 = vpack.c.bf16 %v4116, %v4114
      %v4154 = vpack.c.bf16 %v4117, %v4117
      %v4155 = vpack.c.bf16 %v4118, %v4118
      %v4157 = vshrl.u32 %v4152, 16
      %v4159 = vrot.slane %v4157, 1
      %v4160 = vshll.u32 %v4152, 16
      %v4162 = vrot.slane %v4160, 2
      %v4163 = vor.u32 %v4159, %v4162
      %v4165 = vshrl.u32 %v4154, 16
      %v4167 = vrot.slane %v4165, 1
      %v4168 = vshll.u32 %v4154, 16
      %v4170 = vrot.slane %v4168, 2
      %v4171 = vor.u32 %v4167, %v4170
      %v4172 = vsel %vm1640, %v4163, %v4171
      %v4174 = vshrl.u32 %v4153, 16
      %v4176 = vrot.slane %v4174, 1
      %v4177 = vshll.u32 %v4153, 16
      %v4179 = vrot.slane %v4177, 2
      %v4180 = vor.u32 %v4176, %v4179
      %v4182 = vshrl.u32 %v4155, 16
      %v4184 = vrot.slane %v4182, 1
      %v4185 = vshll.u32 %v4155, 16
      %v4187 = vrot.slane %v4185, 2
      %v4188 = vor.u32 %v4184, %v4187
      %v4189 = vsel %vm1640, %v4180, %v4188
      %v4224 = vunpack.c.l.b16 %v4120
      %v4225 = vunpack.c.h.b16 %v4120
      %v4226 = vunpack.c.l.b16 %v4121
      %v4227 = vunpack.c.h.b16 %v4121
      %v4228 = vunpack.c.l.b16 %v4122
      %v4229 = vunpack.c.h.b16 %v4122
      %v4230 = vunpack.c.l.b16 %v4123
      %v4231 = vunpack.c.h.b16 %v4123
      %v4232 = vunpack.c.l.b16 %v4124
      %v4233 = vunpack.c.h.b16 %v4124
      %v4234 = vunpack.c.l.b16 %v4125
      %v4235 = vunpack.c.h.b16 %v4125
      %v4236 = vunpack.c.l.b16 %v4126
      %v4237 = vunpack.c.h.b16 %v4126
      %v4238 = vunpack.c.l.b16 %v4127
      %v4239 = vunpack.c.h.b16 %v4127
      %v4240 = vunpack.c.l.b16 %v4128
      %v4241 = vunpack.c.h.b16 %v4128
      %v4242 = vunpack.c.l.b16 %v4129
      %v4243 = vunpack.c.h.b16 %v4129
      %v4244 = vunpack.c.l.b16 %v4130
      %v4245 = vunpack.c.h.b16 %v4130
      %v4246 = vunpack.c.l.b16 %v4131
      %v4247 = vunpack.c.h.b16 %v4131
      %v4248 = vunpack.c.l.b16 %v4132
      %v4249 = vunpack.c.h.b16 %v4132
      %v4250 = vunpack.c.l.b16 %v4133
      %v4251 = vunpack.c.h.b16 %v4133
      %v4252 = vunpack.c.l.b16 %v4134
      %v4253 = vunpack.c.h.b16 %v4134
      %v4254 = vunpack.c.l.b16 %v4135
      %v4255 = vunpack.c.h.b16 %v4135
      %v4256 = vunpack.c.l.b16 %v4136
      %v4257 = vunpack.c.h.b16 %v4136
      %v4258 = vunpack.c.l.b16 %v4137
      %v4259 = vunpack.c.h.b16 %v4137
      %v4260 = vunpack.c.l.b16 %v4138
      %v4261 = vunpack.c.h.b16 %v4138
      %v4262 = vunpack.c.l.b16 %v4139
      %v4263 = vunpack.c.h.b16 %v4139
      %v4264 = vunpack.c.l.b16 %v4140
      %v4265 = vunpack.c.h.b16 %v4140
      %v4266 = vunpack.c.l.b16 %v4141
      %v4267 = vunpack.c.h.b16 %v4141
      %v4268 = vunpack.c.l.b16 %v4142
      %v4269 = vunpack.c.h.b16 %v4142
      %v4270 = vunpack.c.l.b16 %v4143
      %v4271 = vunpack.c.h.b16 %v4143
      %v4272 = vunpack.c.l.b16 %v4144
      %v4273 = vunpack.c.h.b16 %v4144
      %v4274 = vunpack.c.l.b16 %v4145
      %v4275 = vunpack.c.h.b16 %v4145
      %v4276 = vunpack.c.l.b16 %v4146
      %v4277 = vunpack.c.h.b16 %v4146
      %v4278 = vunpack.c.l.b16 %v4147
      %v4279 = vunpack.c.h.b16 %v4147
      %v4280 = vunpack.c.l.b16 %v4148
      %v4281 = vunpack.c.h.b16 %v4148
      %v4282 = vunpack.c.l.b16 %v4149
      %v4283 = vunpack.c.h.b16 %v4149
      %v4284 = vunpack.c.l.b16 %v4150
      %v4285 = vunpack.c.h.b16 %v4150
      %v4286 = vunpack.c.l.b16 %v4151
      %v4287 = vunpack.c.h.b16 %v4151
      %v4288 = vpack.c.b16 %v4226, %v4224
      %v4289 = vpack.c.b16 %v4227, %v4225
      %v4290 = vpack.c.b16 %v4230, %v4228
      %v4291 = vpack.c.b16 %v4231, %v4229
      %v4292 = vpack.c.b16 %v4234, %v4232
      %v4293 = vpack.c.b16 %v4235, %v4233
      %v4294 = vpack.c.b16 %v4238, %v4236
      %v4295 = vpack.c.b16 %v4239, %v4237
      %v4296 = vpack.c.b16 %v4242, %v4240
      %v4297 = vpack.c.b16 %v4243, %v4241
      %v4298 = vpack.c.b16 %v4246, %v4244
      %v4299 = vpack.c.b16 %v4247, %v4245
      %v4300 = vpack.c.b16 %v4250, %v4248
      %v4301 = vpack.c.b16 %v4251, %v4249
      %v4302 = vpack.c.b16 %v4254, %v4252
      %v4303 = vpack.c.b16 %v4255, %v4253
      %v4304 = vpack.c.b16 %v4258, %v4256
      %v4305 = vpack.c.b16 %v4259, %v4257
      %v4306 = vpack.c.b16 %v4262, %v4260
      %v4307 = vpack.c.b16 %v4263, %v4261
      %v4308 = vpack.c.b16 %v4266, %v4264
      %v4309 = vpack.c.b16 %v4267, %v4265
      %v4310 = vpack.c.b16 %v4270, %v4268
      %v4311 = vpack.c.b16 %v4271, %v4269
      %v4312 = vpack.c.b16 %v4274, %v4272
      %v4313 = vpack.c.b16 %v4275, %v4273
      %v4314 = vpack.c.b16 %v4278, %v4276
      %v4315 = vpack.c.b16 %v4279, %v4277
      %v4316 = vpack.c.b16 %v4282, %v4280
      %v4317 = vpack.c.b16 %v4283, %v4281
      %v4318 = vpack.c.b16 %v4286, %v4284
      %v4319 = vpack.c.b16 %v4287, %v4285
      %4352 = vmatprep.subr.bf16.mxu0 %v4289
      %4353 = vmatpush1.bf16.msra.mxu0 %v4288
      %4354 = vmatprep.subr.bf16.mxu0 %v4291
      %4355 = vmatpush1.bf16.msra.mxu0 %v4290
      %4356 = vmatprep.subr.bf16.mxu0 %v4293
      %4357 = vmatpush1.bf16.msra.mxu0 %v4292
      %4358 = vmatprep.subr.bf16.mxu0 %v4295
      %4359 = vmatpush1.bf16.msra.mxu0 %v4294
      %4360 = vmatprep.subr.bf16.mxu0 %v4297
      %4361 = vmatpush1.bf16.msra.mxu0 %v4296
      %4362 = vmatprep.subr.bf16.mxu0 %v4299
      %4363 = vmatpush1.bf16.msra.mxu0 %v4298
      %4364 = vmatprep.subr.bf16.mxu0 %v4301
      %4365 = vmatpush1.bf16.msra.mxu0 %v4300
      %4366 = vmatprep.subr.bf16.mxu0 %v4303
      %4367 = vmatpush1.bf16.msra.mxu0 %v4302
      %4368 = vmatprep.subr.bf16.mxu0 %v4305
      %4369 = vmatpush1.bf16.msra.mxu0 %v4304
      %4370 = vmatprep.subr.bf16.mxu0 %v4307
      %4371 = vmatpush1.bf16.msra.mxu0 %v4306
      %4372 = vmatprep.subr.bf16.mxu0 %v4309
      %4373 = vmatpush1.bf16.msra.mxu0 %v4308
      %4374 = vmatprep.subr.bf16.mxu0 %v4311
      %4375 = vmatpush1.bf16.msra.mxu0 %v4310
      %4376 = vmatprep.subr.bf16.mxu0 %v4313
      %4377 = vmatpush1.bf16.msra.mxu0 %v4312
      %4378 = vmatprep.subr.bf16.mxu0 %v4315
      %4379 = vmatpush1.bf16.msra.mxu0 %v4314
      %4380 = vmatprep.subr.bf16.mxu0 %v4317
      %4381 = vmatpush1.bf16.msra.mxu0 %v4316
      %4382 = vmatprep.subr.bf16.mxu0 %v4319
      %4383 = vmatpush1.bf16.msra.mxu0 %v4318
      %4384 = vmatprep.mubr.bf16.mxu0 %v4189
      %4385 = vmatmul.mubr.bf16.gmra.mrb[0].mxu0 %v4172
      %v4386 = vpop.f32.mrb[0].mxu0
      %v4387 = vadd.f32 0.0, %v4386
      %v4388 = vpop.f32.mrb[0].mxu0
      %v4389 = vadd.f32 0.0, %v4388
      %v4390 = vpop.f32.mrb[0].mxu0
      %v4391 = vadd.f32 0.0, %v4390
      %v4392 = vpop.f32.mrb[0].mxu0
      %v4393 = vadd.f32 0.0, %v4392
      %4394 = vdwg.mxu0
      %v4395 = vld [vmem:[#allocation5] sm:$0xff]
      %v4396 = vld [vmem:[#allocation5 + $0x8] sm:$0xff]
      %v4397 = vld [vmem:[#allocation5 + $0x10] sm:$0xff]
      %v4398 = vld [vmem:[#allocation5 + $0x18] sm:$0xff]
      %v4399 = vadd.f32 %v4395, %v4387
      %v4400 = vadd.f32 %v4396, %v4389
      %v4401 = vadd.f32 %v4397, %v4391
      %v4402 = vadd.f32 %v4398, %v4393
      %4403 = vst [vmem:[#allocation5] sm:$0xff] %v4399
      %4404 = vst [vmem:[#allocation5 + $0x8] sm:$0xff] %v4400
      %4405 = vst [vmem:[#allocation5 + $0x10] sm:$0xff] %v4401
      %4406 = vst [vmem:[#allocation5 + $0x18] sm:$0xff] %v4402
      %v4407 = vld [vmem:[#allocation3] sm:$0xf0]
      %v4408 = vld [vmem:[#allocation3 + $0x8] sm:$0xf0]
      %v4409 = vld [vmem:[#allocation3 + $0x10] sm:$0xff]
      %v4410 = vld [vmem:[#allocation3 + $0x18] sm:$0xff]
      %v4411 = vld [vmem:[#allocation3 + $0x20] sm:$0xf]
      %v4412 = vld [vmem:[#allocation3 + $0x28] sm:$0xf]
      %s4413 = scalar_lea.vmem %s5, 1024
      %v4414 = vld [vmem:[%s4413] sm:$0xff]
      %v4415 = vld [vmem:[%s4413 + $0x8] sm:$0xff]
      %v4416 = vld [vmem:[%s4413 + $0x10] sm:$0xff]
      %v4417 = vld [vmem:[%s4413 + $0x18] sm:$0xff]
      %v4418 = vld [vmem:[%s4413 + $0x20] sm:$0xff]
      %v4419 = vld [vmem:[%s4413 + $0x28] sm:$0xff]
      %v4420 = vld [vmem:[%s4413 + $0x30] sm:$0xff]
      %v4421 = vld [vmem:[%s4413 + $0x38] sm:$0xff]
      %v4422 = vld [vmem:[%s4413 + $0x40] sm:$0xff]
      %v4423 = vld [vmem:[%s4413 + $0x48] sm:$0xff]
      %v4424 = vld [vmem:[%s4413 + $0x50] sm:$0xff]
      %v4425 = vld [vmem:[%s4413 + $0x58] sm:$0xff]
      %v4426 = vld [vmem:[%s4413 + $0x60] sm:$0xff]
      %v4427 = vld [vmem:[%s4413 + $0x68] sm:$0xff]
      %v4428 = vld [vmem:[%s4413 + $0x70] sm:$0xff]
      %v4429 = vld [vmem:[%s4413 + $0x78] sm:$0xff]
      %v4430 = vld [vmem:[%s4413 + $0x80] sm:$0xff]
      %v4431 = vld [vmem:[%s4413 + $0x88] sm:$0xff]
      %v4432 = vld [vmem:[%s4413 + $0x90] sm:$0xff]
      %v4433 = vld [vmem:[%s4413 + $0x98] sm:$0xff]
      %v4434 = vld [vmem:[%s4413 + $0xa0] sm:$0xff]
      %v4435 = vld [vmem:[%s4413 + $0xa8] sm:$0xff]
      %v4436 = vld [vmem:[%s4413 + $0xb0] sm:$0xff]
      %v4437 = vld [vmem:[%s4413 + $0xb8] sm:$0xff]
      %v4438 = vld [vmem:[%s4413 + $0xc0] sm:$0xff]
      %v4439 = vld [vmem:[%s4413 + $0xc8] sm:$0xff]
      %v4440 = vld [vmem:[%s4413 + $0xd0] sm:$0xff]
      %v4441 = vld [vmem:[%s4413 + $0xd8] sm:$0xff]
      %v4442 = vld [vmem:[%s4413 + $0xe0] sm:$0xff]
      %v4443 = vld [vmem:[%s4413 + $0xe8] sm:$0xff]
      %v4444 = vld [vmem:[%s4413 + $0xf0] sm:$0xff]
      %v4445 = vld [vmem:[%s4413 + $0xf8] sm:$0xff]
      %v4446 = vpack.c.bf16 %v4409, %v4407
      %v4447 = vpack.c.bf16 %v4410, %v4408
      %v4448 = vpack.c.bf16 %v4411, %v4411
      %v4449 = vpack.c.bf16 %v4412, %v4412
      %v4454 = vrot.slane %v4446, 2
      %v4455 = vrot.slane %v4448, 2
      %v4456 = vsel %vm1939, %v4454, %v4455
      %v4457 = vrot.slane %v4447, 2
      %v4458 = vrot.slane %v4449, 2
      %v4459 = vsel %vm1939, %v4457, %v4458
      %v4494 = vunpack.c.l.b16 %v4414
      %v4495 = vunpack.c.h.b16 %v4414
      %v4496 = vunpack.c.l.b16 %v4415
      %v4497 = vunpack.c.h.b16 %v4415
      %v4498 = vunpack.c.l.b16 %v4416
      %v4499 = vunpack.c.h.b16 %v4416
      %v4500 = vunpack.c.l.b16 %v4417
      %v4501 = vunpack.c.h.b16 %v4417
      %v4502 = vunpack.c.l.b16 %v4418
      %v4503 = vunpack.c.h.b16 %v4418
      %v4504 = vunpack.c.l.b16 %v4419
      %v4505 = vunpack.c.h.b16 %v4419
      %v4506 = vunpack.c.l.b16 %v4420
      %v4507 = vunpack.c.h.b16 %v4420
      %v4508 = vunpack.c.l.b16 %v4421
      %v4509 = vunpack.c.h.b16 %v4421
      %v4510 = vunpack.c.l.b16 %v4422
      %v4511 = vunpack.c.h.b16 %v4422
      %v4512 = vunpack.c.l.b16 %v4423
      %v4513 = vunpack.c.h.b16 %v4423
      %v4514 = vunpack.c.l.b16 %v4424
      %v4515 = vunpack.c.h.b16 %v4424
      %v4516 = vunpack.c.l.b16 %v4425
      %v4517 = vunpack.c.h.b16 %v4425
      %v4518 = vunpack.c.l.b16 %v4426
      %v4519 = vunpack.c.h.b16 %v4426
      %v4520 = vunpack.c.l.b16 %v4427
      %v4521 = vunpack.c.h.b16 %v4427
      %v4522 = vunpack.c.l.b16 %v4428
      %v4523 = vunpack.c.h.b16 %v4428
      %v4524 = vunpack.c.l.b16 %v4429
      %v4525 = vunpack.c.h.b16 %v4429
      %v4526 = vunpack.c.l.b16 %v4430
      %v4527 = vunpack.c.h.b16 %v4430
      %v4528 = vunpack.c.l.b16 %v4431
      %v4529 = vunpack.c.h.b16 %v4431
      %v4530 = vunpack.c.l.b16 %v4432
      %v4531 = vunpack.c.h.b16 %v4432
      %v4532 = vunpack.c.l.b16 %v4433
      %v4533 = vunpack.c.h.b16 %v4433
      %v4534 = vunpack.c.l.b16 %v4434
      %v4535 = vunpack.c.h.b16 %v4434
      %v4536 = vunpack.c.l.b16 %v4435
      %v4537 = vunpack.c.h.b16 %v4435
      %v4538 = vunpack.c.l.b16 %v4436
      %v4539 = vunpack.c.h.b16 %v4436
      %v4540 = vunpack.c.l.b16 %v4437
      %v4541 = vunpack.c.h.b16 %v4437
      %v4542 = vunpack.c.l.b16 %v4438
      %v4543 = vunpack.c.h.b16 %v4438
      %v4544 = vunpack.c.l.b16 %v4439
      %v4545 = vunpack.c.h.b16 %v4439
      %v4546 = vunpack.c.l.b16 %v4440
      %v4547 = vunpack.c.h.b16 %v4440
      %v4548 = vunpack.c.l.b16 %v4441
      %v4549 = vunpack.c.h.b16 %v4441
      %v4550 = vunpack.c.l.b16 %v4442
      %v4551 = vunpack.c.h.b16 %v4442
      %v4552 = vunpack.c.l.b16 %v4443
      %v4553 = vunpack.c.h.b16 %v4443
      %v4554 = vunpack.c.l.b16 %v4444
      %v4555 = vunpack.c.h.b16 %v4444
      %v4556 = vunpack.c.l.b16 %v4445
      %v4557 = vunpack.c.h.b16 %v4445
      %v4558 = vpack.c.b16 %v4496, %v4494
      %v4559 = vpack.c.b16 %v4497, %v4495
      %v4560 = vpack.c.b16 %v4500, %v4498
      %v4561 = vpack.c.b16 %v4501, %v4499
      %v4562 = vpack.c.b16 %v4504, %v4502
      %v4563 = vpack.c.b16 %v4505, %v4503
      %v4564 = vpack.c.b16 %v4508, %v4506
      %v4565 = vpack.c.b16 %v4509, %v4507
      %v4566 = vpack.c.b16 %v4512, %v4510
      %v4567 = vpack.c.b16 %v4513, %v4511
      %v4568 = vpack.c.b16 %v4516, %v4514
      %v4569 = vpack.c.b16 %v4517, %v4515
      %v4570 = vpack.c.b16 %v4520, %v4518
      %v4571 = vpack.c.b16 %v4521, %v4519
      %v4572 = vpack.c.b16 %v4524, %v4522
      %v4573 = vpack.c.b16 %v4525, %v4523
      %v4574 = vpack.c.b16 %v4528, %v4526
      %v4575 = vpack.c.b16 %v4529, %v4527
      %v4576 = vpack.c.b16 %v4532, %v4530
      %v4577 = vpack.c.b16 %v4533, %v4531
      %v4578 = vpack.c.b16 %v4536, %v4534
      %v4579 = vpack.c.b16 %v4537, %v4535
      %v4580 = vpack.c.b16 %v4540, %v4538
      %v4581 = vpack.c.b16 %v4541, %v4539
      %v4582 = vpack.c.b16 %v4544, %v4542
      %v4583 = vpack.c.b16 %v4545, %v4543
      %v4584 = vpack.c.b16 %v4548, %v4546
      %v4585 = vpack.c.b16 %v4549, %v4547
      %v4586 = vpack.c.b16 %v4552, %v4550
      %v4587 = vpack.c.b16 %v4553, %v4551
      %v4588 = vpack.c.b16 %v4556, %v4554
      %v4589 = vpack.c.b16 %v4557, %v4555
      %4622 = vmatprep.subr.bf16.mxu0 %v4559
      %4623 = vmatpush1.bf16.msra.mxu0 %v4558
      %4624 = vmatprep.subr.bf16.mxu0 %v4561
      %4625 = vmatpush1.bf16.msra.mxu0 %v4560
      %4626 = vmatprep.subr.bf16.mxu0 %v4563
      %4627 = vmatpush1.bf16.msra.mxu0 %v4562
      %4628 = vmatprep.subr.bf16.mxu0 %v4565
      %4629 = vmatpush1.bf16.msra.mxu0 %v4564
      %4630 = vmatprep.subr.bf16.mxu0 %v4567
      %4631 = vmatpush1.bf16.msra.mxu0 %v4566
      %4632 = vmatprep.subr.bf16.mxu0 %v4569
      %4633 = vmatpush1.bf16.msra.mxu0 %v4568
      %4634 = vmatprep.subr.bf16.mxu0 %v4571
      %4635 = vmatpush1.bf16.msra.mxu0 %v4570
      %4636 = vmatprep.subr.bf16.mxu0 %v4573
      %4637 = vmatpush1.bf16.msra.mxu0 %v4572
      %4638 = vmatprep.subr.bf16.mxu0 %v4575
      %4639 = vmatpush1.bf16.msra.mxu0 %v4574
      %4640 = vmatprep.subr.bf16.mxu0 %v4577
      %4641 = vmatpush1.bf16.msra.mxu0 %v4576
      %4642 = vmatprep.subr.bf16.mxu0 %v4579
      %4643 = vmatpush1.bf16.msra.mxu0 %v4578
      %4644 = vmatprep.subr.bf16.mxu0 %v4581
      %4645 = vmatpush1.bf16.msra.mxu0 %v4580
      %4646 = vmatprep.subr.bf16.mxu0 %v4583
      %4647 = vmatpush1.bf16.msra.mxu0 %v4582
      %4648 = vmatprep.subr.bf16.mxu0 %v4585
      %4649 = vmatpush1.bf16.msra.mxu0 %v4584
      %4650 = vmatprep.subr.bf16.mxu0 %v4587
      %4651 = vmatpush1.bf16.msra.mxu0 %v4586
      %4652 = vmatprep.subr.bf16.mxu0 %v4589
      %4653 = vmatpush1.bf16.msra.mxu0 %v4588
      %4654 = vmatprep.mubr.bf16.mxu0 %v4459
      %4655 = vmatmul.mubr.bf16.gmra.mrb[0].mxu0 %v4456
      %v4656 = vpop.f32.mrb[0].mxu0
      %v4657 = vadd.f32 0.0, %v4656
      %v4658 = vpop.f32.mrb[0].mxu0
      %v4659 = vadd.f32 0.0, %v4658
      %v4660 = vpop.f32.mrb[0].mxu0
      %v4661 = vadd.f32 0.0, %v4660
      %v4662 = vpop.f32.mrb[0].mxu0
      %v4663 = vadd.f32 0.0, %v4662
      %4664 = vdwg.mxu0
      %v4665 = vld [vmem:[#allocation5] sm:$0xff]
      %v4666 = vld [vmem:[#allocation5 + $0x8] sm:$0xff]
      %v4667 = vld [vmem:[#allocation5 + $0x10] sm:$0xff]
      %v4668 = vld [vmem:[#allocation5 + $0x18] sm:$0xff]
      %v4669 = vadd.f32 %v4665, %v4657
      %v4670 = vadd.f32 %v4666, %v4659
      %v4671 = vadd.f32 %v4667, %v4661
      %v4672 = vadd.f32 %v4668, %v4663
      %4673 = vst [vmem:[#allocation5] sm:$0xff] %v4669
      %4674 = vst [vmem:[#allocation5 + $0x8] sm:$0xff] %v4670
      %4675 = vst [vmem:[#allocation5 + $0x10] sm:$0xff] %v4671
      %4676 = vst [vmem:[#allocation5 + $0x18] sm:$0xff] %v4672
      %v4677 = vld [vmem:[#allocation3] sm:$0xe0]
      %v4678 = vld [vmem:[#allocation3 + $0x8] sm:$0xe0]
      %v4679 = vld [vmem:[#allocation3 + $0x10] sm:$0xff]
      %v4680 = vld [vmem:[#allocation3 + $0x18] sm:$0xff]
      %v4681 = vld [vmem:[#allocation3 + $0x20] sm:$0x1f]
      %v4682 = vld [vmem:[#allocation3 + $0x28] sm:$0x1f]
      %s4683 = scalar_lea.vmem %s5, 1280
      %v4684 = vld [vmem:[%s4683] sm:$0xff]
      %v4685 = vld [vmem:[%s4683 + $0x8] sm:$0xff]
      %v4686 = vld [vmem:[%s4683 + $0x10] sm:$0xff]
      %v4687 = vld [vmem:[%s4683 + $0x18] sm:$0xff]
      %v4688 = vld [vmem:[%s4683 + $0x20] sm:$0xff]
      %v4689 = vld [vmem:[%s4683 + $0x28] sm:$0xff]
      %v4690 = vld [vmem:[%s4683 + $0x30] sm:$0xff]
      %v4691 = vld [vmem:[%s4683 + $0x38] sm:$0xff]
      %v4692 = vld [vmem:[%s4683 + $0x40] sm:$0xff]
      %v4693 = vld [vmem:[%s4683 + $0x48] sm:$0xff]
      %v4694 = vld [vmem:[%s4683 + $0x50] sm:$0xff]
      %v4695 = vld [vmem:[%s4683 + $0x58] sm:$0xff]
      %v4696 = vld [vmem:[%s4683 + $0x60] sm:$0xff]
      %v4697 = vld [vmem:[%s4683 + $0x68] sm:$0xff]
      %v4698 = vld [vmem:[%s4683 + $0x70] sm:$0xff]
      %v4699 = vld [vmem:[%s4683 + $0x78] sm:$0xff]
      %v4700 = vld [vmem:[%s4683 + $0x80] sm:$0xff]
      %v4701 = vld [vmem:[%s4683 + $0x88] sm:$0xff]
      %v4702 = vld [vmem:[%s4683 + $0x90] sm:$0xff]
      %v4703 = vld [vmem:[%s4683 + $0x98] sm:$0xff]
      %v4704 = vld [vmem:[%s4683 + $0xa0] sm:$0xff]
      %v4705 = vld [vmem:[%s4683 + $0xa8] sm:$0xff]
      %v4706 = vld [vmem:[%s4683 + $0xb0] sm:$0xff]
      %v4707 = vld [vmem:[%s4683 + $0xb8] sm:$0xff]
      %v4708 = vld [vmem:[%s4683 + $0xc0] sm:$0xff]
      %v4709 = vld [vmem:[%s4683 + $0xc8] sm:$0xff]
      %v4710 = vld [vmem:[%s4683 + $0xd0] sm:$0xff]
      %v4711 = vld [vmem:[%s4683 + $0xd8] sm:$0xff]
      %v4712 = vld [vmem:[%s4683 + $0xe0] sm:$0xff]
      %v4713 = vld [vmem:[%s4683 + $0xe8] sm:$0xff]
      %v4714 = vld [vmem:[%s4683 + $0xf0] sm:$0xff]
      %v4715 = vld [vmem:[%s4683 + $0xf8] sm:$0xff]
      %v4716 = vpack.c.bf16 %v4679, %v4677
      %v4717 = vpack.c.bf16 %v4680, %v4678
      %v4718 = vpack.c.bf16 %v4681, %v4681
      %v4719 = vpack.c.bf16 %v4682, %v4682
      %v4721 = vshrl.u32 %v4716, 16
      %v4723 = vrot.slane %v4721, 2
      %v4724 = vshll.u32 %v4716, 16
      %v4726 = vrot.slane %v4724, 3
      %v4727 = vor.u32 %v4723, %v4726
      %v4729 = vshrl.u32 %v4718, 16
      %v4731 = vrot.slane %v4729, 2
      %v4732 = vshll.u32 %v4718, 16
      %v4734 = vrot.slane %v4732, 3
      %v4735 = vor.u32 %v4731, %v4734
      %v4736 = vsel %vm2206, %v4727, %v4735
      %v4738 = vshrl.u32 %v4717, 16
      %v4740 = vrot.slane %v4738, 2
      %v4741 = vshll.u32 %v4717, 16
      %v4743 = vrot.slane %v4741, 3
      %v4744 = vor.u32 %v4740, %v4743
      %v4746 = vshrl.u32 %v4719, 16
      %v4748 = vrot.slane %v4746, 2
      %v4749 = vshll.u32 %v4719, 16
      %v4751 = vrot.slane %v4749, 3
      %v4752 = vor.u32 %v4748, %v4751
      %v4753 = vsel %vm2206, %v4744, %v4752
      %v4788 = vunpack.c.l.b16 %v4684
      %v4789 = vunpack.c.h.b16 %v4684
      %v4790 = vunpack.c.l.b16 %v4685
      %v4791 = vunpack.c.h.b16 %v4685
      %v4792 = vunpack.c.l.b16 %v4686
      %v4793 = vunpack.c.h.b16 %v4686
      %v4794 = vunpack.c.l.b16 %v4687
      %v4795 = vunpack.c.h.b16 %v4687
      %v4796 = vunpack.c.l.b16 %v4688
      %v4797 = vunpack.c.h.b16 %v4688
      %v4798 = vunpack.c.l.b16 %v4689
      %v4799 = vunpack.c.h.b16 %v4689
      %v4800 = vunpack.c.l.b16 %v4690
      %v4801 = vunpack.c.h.b16 %v4690
      %v4802 = vunpack.c.l.b16 %v4691
      %v4803 = vunpack.c.h.b16 %v4691
      %v4804 = vunpack.c.l.b16 %v4692
      %v4805 = vunpack.c.h.b16 %v4692
      %v4806 = vunpack.c.l.b16 %v4693
      %v4807 = vunpack.c.h.b16 %v4693
      %v4808 = vunpack.c.l.b16 %v4694
      %v4809 = vunpack.c.h.b16 %v4694
      %v4810 = vunpack.c.l.b16 %v4695
      %v4811 = vunpack.c.h.b16 %v4695
      %v4812 = vunpack.c.l.b16 %v4696
      %v4813 = vunpack.c.h.b16 %v4696
      %v4814 = vunpack.c.l.b16 %v4697
      %v4815 = vunpack.c.h.b16 %v4697
      %v4816 = vunpack.c.l.b16 %v4698
      %v4817 = vunpack.c.h.b16 %v4698
      %v4818 = vunpack.c.l.b16 %v4699
      %v4819 = vunpack.c.h.b16 %v4699
      %v4820 = vunpack.c.l.b16 %v4700
      %v4821 = vunpack.c.h.b16 %v4700
      %v4822 = vunpack.c.l.b16 %v4701
      %v4823 = vunpack.c.h.b16 %v4701
      %v4824 = vunpack.c.l.b16 %v4702
      %v4825 = vunpack.c.h.b16 %v4702
      %v4826 = vunpack.c.l.b16 %v4703
      %v4827 = vunpack.c.h.b16 %v4703
      %v4828 = vunpack.c.l.b16 %v4704
      %v4829 = vunpack.c.h.b16 %v4704
      %v4830 = vunpack.c.l.b16 %v4705
      %v4831 = vunpack.c.h.b16 %v4705
      %v4832 = vunpack.c.l.b16 %v4706
      %v4833 = vunpack.c.h.b16 %v4706
      %v4834 = vunpack.c.l.b16 %v4707
      %v4835 = vunpack.c.h.b16 %v4707
      %v4836 = vunpack.c.l.b16 %v4708
      %v4837 = vunpack.c.h.b16 %v4708
      %v4838 = vunpack.c.l.b16 %v4709
      %v4839 = vunpack.c.h.b16 %v4709
      %v4840 = vunpack.c.l.b16 %v4710
      %v4841 = vunpack.c.h.b16 %v4710
      %v4842 = vunpack.c.l.b16 %v4711
      %v4843 = vunpack.c.h.b16 %v4711
      %v4844 = vunpack.c.l.b16 %v4712
      %v4845 = vunpack.c.h.b16 %v4712
      %v4846 = vunpack.c.l.b16 %v4713
      %v4847 = vunpack.c.h.b16 %v4713
      %v4848 = vunpack.c.l.b16 %v4714
      %v4849 = vunpack.c.h.b16 %v4714
      %v4850 = vunpack.c.l.b16 %v4715
      %v4851 = vunpack.c.h.b16 %v4715
      %v4852 = vpack.c.b16 %v4790, %v4788
      %v4853 = vpack.c.b16 %v4791, %v4789
      %v4854 = vpack.c.b16 %v4794, %v4792
      %v4855 = vpack.c.b16 %v4795, %v4793
      %v4856 = vpack.c.b16 %v4798, %v4796
      %v4857 = vpack.c.b16 %v4799, %v4797
      %v4858 = vpack.c.b16 %v4802, %v4800
      %v4859 = vpack.c.b16 %v4803, %v4801
      %v4860 = vpack.c.b16 %v4806, %v4804
      %v4861 = vpack.c.b16 %v4807, %v4805
      %v4862 = vpack.c.b16 %v4810, %v4808
      %v4863 = vpack.c.b16 %v4811, %v4809
      %v4864 = vpack.c.b16 %v4814, %v4812
      %v4865 = vpack.c.b16 %v4815, %v4813
      %v4866 = vpack.c.b16 %v4818, %v4816
      %v4867 = vpack.c.b16 %v4819, %v4817
      %v4868 = vpack.c.b16 %v4822, %v4820
      %v4869 = vpack.c.b16 %v4823, %v4821
      %v4870 = vpack.c.b16 %v4826, %v4824
      %v4871 = vpack.c.b16 %v4827, %v4825
      %v4872 = vpack.c.b16 %v4830, %v4828
      %v4873 = vpack.c.b16 %v4831, %v4829
      %v4874 = vpack.c.b16 %v4834, %v4832
      %v4875 = vpack.c.b16 %v4835, %v4833
      %v4876 = vpack.c.b16 %v4838, %v4836
      %v4877 = vpack.c.b16 %v4839, %v4837
      %v4878 = vpack.c.b16 %v4842, %v4840
      %v4879 = vpack.c.b16 %v4843, %v4841
      %v4880 = vpack.c.b16 %v4846, %v4844
      %v4881 = vpack.c.b16 %v4847, %v4845
      %v4882 = vpack.c.b16 %v4850, %v4848
      %v4883 = vpack.c.b16 %v4851, %v4849
      %4916 = vmatprep.subr.bf16.mxu0 %v4853
      %4917 = vmatpush1.bf16.msra.mxu0 %v4852
      %4918 = vmatprep.subr.bf16.mxu0 %v4855
      %4919 = vmatpush1.bf16.msra.mxu0 %v4854
      %4920 = vmatprep.subr.bf16.mxu0 %v4857
      %4921 = vmatpush1.bf16.msra.mxu0 %v4856
      %4922 = vmatprep.subr.bf16.mxu0 %v4859
      %4923 = vmatpush1.bf16.msra.mxu0 %v4858
      %4924 = vmatprep.subr.bf16.mxu0 %v4861
      %4925 = vmatpush1.bf16.msra.mxu0 %v4860
      %4926 = vmatprep.subr.bf16.mxu0 %v4863
      %4927 = vmatpush1.bf16.msra.mxu0 %v4862
      %4928 = vmatprep.subr.bf16.mxu0 %v4865
      %4929 = vmatpush1.bf16.msra.mxu0 %v4864
      %4930 = vmatprep.subr.bf16.mxu0 %v4867
      %4931 = vmatpush1.bf16.msra.mxu0 %v4866
      %4932 = vmatprep.subr.bf16.mxu0 %v4869
      %4933 = vmatpush1.bf16.msra.mxu0 %v4868
      %4934 = vmatprep.subr.bf16.mxu0 %v4871
      %4935 = vmatpush1.bf16.msra.mxu0 %v4870
      %4936 = vmatprep.subr.bf16.mxu0 %v4873
      %4937 = vmatpush1.bf16.msra.mxu0 %v4872
      %4938 = vmatprep.subr.bf16.mxu0 %v4875
      %4939 = vmatpush1.bf16.msra.mxu0 %v4874
      %4940 = vmatprep.subr.bf16.mxu0 %v4877
      %4941 = vmatpush1.bf16.msra.mxu0 %v4876
      %4942 = vmatprep.subr.bf16.mxu0 %v4879
      %4943 = vmatpush1.bf16.msra.mxu0 %v4878
      %4944 = vmatprep.subr.bf16.mxu0 %v4881
      %4945 = vmatpush1.bf16.msra.mxu0 %v4880
      %4946 = vmatprep.subr.bf16.mxu0 %v4883
      %4947 = vmatpush1.bf16.msra.mxu0 %v4882
      %4948 = vmatprep.mubr.bf16.mxu0 %v4753
      %4949 = vmatmul.mubr.bf16.gmra.mrb[0].mxu0 %v4736
      %v4950 = vpop.f32.mrb[0].mxu0
      %v4951 = vadd.f32 0.0, %v4950
      %v4952 = vpop.f32.mrb[0].mxu0
      %v4953 = vadd.f32 0.0, %v4952
      %v4954 = vpop.f32.mrb[0].mxu0
      %v4955 = vadd.f32 0.0, %v4954
      %v4956 = vpop.f32.mrb[0].mxu0
      %v4957 = vadd.f32 0.0, %v4956
      %4958 = vdwg.mxu0
      %v4959 = vld [vmem:[#allocation5] sm:$0xff]
      %v4960 = vld [vmem:[#allocation5 + $0x8] sm:$0xff]
      %v4961 = vld [vmem:[#allocation5 + $0x10] sm:$0xff]
      %v4962 = vld [vmem:[#allocation5 + $0x18] sm:$0xff]
      %v4963 = vadd.f32 %v4959, %v4951
      %v4964 = vadd.f32 %v4960, %v4953
      %v4965 = vadd.f32 %v4961, %v4955
      %v4966 = vadd.f32 %v4962, %v4957
      %4967 = vst [vmem:[#allocation5] sm:$0xff] %v4963
      %4968 = vst [vmem:[#allocation5 + $0x8] sm:$0xff] %v4964
      %4969 = vst [vmem:[#allocation5 + $0x10] sm:$0xff] %v4965
      %4970 = vst [vmem:[#allocation5 + $0x18] sm:$0xff] %v4966
      %v4971 = vld [vmem:[#allocation3] sm:$0xc0]
      %v4972 = vld [vmem:[#allocation3 + $0x8] sm:$0xc0]
      %v4973 = vld [vmem:[#allocation3 + $0x10] sm:$0xff]
      %v4974 = vld [vmem:[#allocation3 + $0x18] sm:$0xff]
      %v4975 = vld [vmem:[#allocation3 + $0x20] sm:$0x3f]
      %v4976 = vld [vmem:[#allocation3 + $0x28] sm:$0x3f]
      %s4977 = scalar_lea.vmem %s5, 1536
      %v4978 = vld [vmem:[%s4977] sm:$0xff]
      %v4979 = vld [vmem:[%s4977 + $0x8] sm:$0xff]
      %v4980 = vld [vmem:[%s4977 + $0x10] sm:$0xff]
      %v4981 = vld [vmem:[%s4977 + $0x18] sm:$0xff]
      %v4982 = vld [vmem:[%s4977 + $0x20] sm:$0xff]
      %v4983 = vld [vmem:[%s4977 + $0x28] sm:$0xff]
      %v4984 = vld [vmem:[%s4977 + $0x30] sm:$0xff]
      %v4985 = vld [vmem:[%s4977 + $0x38] sm:$0xff]
      %v4986 = vld [vmem:[%s4977 + $0x40] sm:$0xff]
      %v4987 = vld [vmem:[%s4977 + $0x48] sm:$0xff]
      %v4988 = vld [vmem:[%s4977 + $0x50] sm:$0xff]
      %v4989 = vld [vmem:[%s4977 + $0x58] sm:$0xff]
      %v4990 = vld [vmem:[%s4977 + $0x60] sm:$0xff]
      %v4991 = vld [vmem:[%s4977 + $0x68] sm:$0xff]
      %v4992 = vld [vmem:[%s4977 + $0x70] sm:$0xff]
      %v4993 = vld [vmem:[%s4977 + $0x78] sm:$0xff]
      %v4994 = vld [vmem:[%s4977 + $0x80] sm:$0xff]
      %v4995 = vld [vmem:[%s4977 + $0x88] sm:$0xff]
      %v4996 = vld [vmem:[%s4977 + $0x90] sm:$0xff]
      %v4997 = vld [vmem:[%s4977 + $0x98] sm:$0xff]
      %v4998 = vld [vmem:[%s4977 + $0xa0] sm:$0xff]
      %v4999 = vld [vmem:[%s4977 + $0xa8] sm:$0xff]
      %v5000 = vld [vmem:[%s4977 + $0xb0] sm:$0xff]
      %v5001 = vld [vmem:[%s4977 + $0xb8] sm:$0xff]
      %v5002 = vld [vmem:[%s4977 + $0xc0] sm:$0xff]
      %v5003 = vld [vmem:[%s4977 + $0xc8] sm:$0xff]
      %v5004 = vld [vmem:[%s4977 + $0xd0] sm:$0xff]
      %v5005 = vld [vmem:[%s4977 + $0xd8] sm:$0xff]
      %v5006 = vld [vmem:[%s4977 + $0xe0] sm:$0xff]
      %v5007 = vld [vmem:[%s4977 + $0xe8] sm:$0xff]
      %v5008 = vld [vmem:[%s4977 + $0xf0] sm:$0xff]
      %v5009 = vld [vmem:[%s4977 + $0xf8] sm:$0xff]
      %v5010 = vpack.c.bf16 %v4973, %v4971
      %v5011 = vpack.c.bf16 %v4974, %v4972
      %v5012 = vpack.c.bf16 %v4975, %v4975
      %v5013 = vpack.c.bf16 %v4976, %v4976
      %v5018 = vrot.slane %v5010, 3
      %v5019 = vrot.slane %v5012, 3
      %v5020 = vsel %vm2505, %v5018, %v5019
      %v5021 = vrot.slane %v5011, 3
      %v5022 = vrot.slane %v5013, 3
      %v5023 = vsel %vm2505, %v5021, %v5022
      %v5058 = vunpack.c.l.b16 %v4978
      %v5059 = vunpack.c.h.b16 %v4978
      %v5060 = vunpack.c.l.b16 %v4979
      %v5061 = vunpack.c.h.b16 %v4979
      %v5062 = vunpack.c.l.b16 %v4980
      %v5063 = vunpack.c.h.b16 %v4980
      %v5064 = vunpack.c.l.b16 %v4981
      %v5065 = vunpack.c.h.b16 %v4981
      %v5066 = vunpack.c.l.b16 %v4982
      %v5067 = vunpack.c.h.b16 %v4982
      %v5068 = vunpack.c.l.b16 %v4983
      %v5069 = vunpack.c.h.b16 %v4983
      %v5070 = vunpack.c.l.b16 %v4984
      %v5071 = vunpack.c.h.b16 %v4984
      %v5072 = vunpack.c.l.b16 %v4985
      %v5073 = vunpack.c.h.b16 %v4985
      %v5074 = vunpack.c.l.b16 %v4986
      %v5075 = vunpack.c.h.b16 %v4986
      %v5076 = vunpack.c.l.b16 %v4987
      %v5077 = vunpack.c.h.b16 %v4987
      %v5078 = vunpack.c.l.b16 %v4988
      %v5079 = vunpack.c.h.b16 %v4988
      %v5080 = vunpack.c.l.b16 %v4989
      %v5081 = vunpack.c.h.b16 %v4989
      %v5082 = vunpack.c.l.b16 %v4990
      %v5083 = vunpack.c.h.b16 %v4990
      %v5084 = vunpack.c.l.b16 %v4991
      %v5085 = vunpack.c.h.b16 %v4991
      %v5086 = vunpack.c.l.b16 %v4992
      %v5087 = vunpack.c.h.b16 %v4992
      %v5088 = vunpack.c.l.b16 %v4993
      %v5089 = vunpack.c.h.b16 %v4993
      %v5090 = vunpack.c.l.b16 %v4994
      %v5091 = vunpack.c.h.b16 %v4994
      %v5092 = vunpack.c.l.b16 %v4995
      %v5093 = vunpack.c.h.b16 %v4995
      %v5094 = vunpack.c.l.b16 %v4996
      %v5095 = vunpack.c.h.b16 %v4996
      %v5096 = vunpack.c.l.b16 %v4997
      %v5097 = vunpack.c.h.b16 %v4997
      %v5098 = vunpack.c.l.b16 %v4998
      %v5099 = vunpack.c.h.b16 %v4998
      %v5100 = vunpack.c.l.b16 %v4999
      %v5101 = vunpack.c.h.b16 %v4999
      %v5102 = vunpack.c.l.b16 %v5000
      %v5103 = vunpack.c.h.b16 %v5000
      %v5104 = vunpack.c.l.b16 %v5001
      %v5105 = vunpack.c.h.b16 %v5001
      %v5106 = vunpack.c.l.b16 %v5002
      %v5107 = vunpack.c.h.b16 %v5002
      %v5108 = vunpack.c.l.b16 %v5003
      %v5109 = vunpack.c.h.b16 %v5003
      %v5110 = vunpack.c.l.b16 %v5004
      %v5111 = vunpack.c.h.b16 %v5004
      %v5112 = vunpack.c.l.b16 %v5005
      %v5113 = vunpack.c.h.b16 %v5005
      %v5114 = vunpack.c.l.b16 %v5006
      %v5115 = vunpack.c.h.b16 %v5006
      %v5116 = vunpack.c.l.b16 %v5007
      %v5117 = vunpack.c.h.b16 %v5007
      %v5118 = vunpack.c.l.b16 %v5008
      %v5119 = vunpack.c.h.b16 %v5008
      %v5120 = vunpack.c.l.b16 %v5009
      %v5121 = vunpack.c.h.b16 %v5009
      %v5122 = vpack.c.b16 %v5060, %v5058
      %v5123 = vpack.c.b16 %v5061, %v5059
      %v5124 = vpack.c.b16 %v5064, %v5062
      %v5125 = vpack.c.b16 %v5065, %v5063
      %v5126 = vpack.c.b16 %v5068, %v5066
      %v5127 = vpack.c.b16 %v5069, %v5067
      %v5128 = vpack.c.b16 %v5072, %v5070
      %v5129 = vpack.c.b16 %v5073, %v5071
      %v5130 = vpack.c.b16 %v5076, %v5074
      %v5131 = vpack.c.b16 %v5077, %v5075
      %v5132 = vpack.c.b16 %v5080, %v5078
      %v5133 = vpack.c.b16 %v5081, %v5079
      %v5134 = vpack.c.b16 %v5084, %v5082
      %v5135 = vpack.c.b16 %v5085, %v5083
      %v5136 = vpack.c.b16 %v5088, %v5086
      %v5137 = vpack.c.b16 %v5089, %v5087
      %v5138 = vpack.c.b16 %v5092, %v5090
      %v5139 = vpack.c.b16 %v5093, %v5091
      %v5140 = vpack.c.b16 %v5096, %v5094
      %v5141 = vpack.c.b16 %v5097, %v5095
      %v5142 = vpack.c.b16 %v5100, %v5098
      %v5143 = vpack.c.b16 %v5101, %v5099
      %v5144 = vpack.c.b16 %v5104, %v5102
      %v5145 = vpack.c.b16 %v5105, %v5103
      %v5146 = vpack.c.b16 %v5108, %v5106
      %v5147 = vpack.c.b16 %v5109, %v5107
      %v5148 = vpack.c.b16 %v5112, %v5110
      %v5149 = vpack.c.b16 %v5113, %v5111
      %v5150 = vpack.c.b16 %v5116, %v5114
      %v5151 = vpack.c.b16 %v5117, %v5115
      %v5152 = vpack.c.b16 %v5120, %v5118
      %v5153 = vpack.c.b16 %v5121, %v5119
      %5186 = vmatprep.subr.bf16.mxu0 %v5123
      %5187 = vmatpush1.bf16.msra.mxu0 %v5122
      %5188 = vmatprep.subr.bf16.mxu0 %v5125
      %5189 = vmatpush1.bf16.msra.mxu0 %v5124
      %5190 = vmatprep.subr.bf16.mxu0 %v5127
      %5191 = vmatpush1.bf16.msra.mxu0 %v5126
      %5192 = vmatprep.subr.bf16.mxu0 %v5129
      %5193 = vmatpush1.bf16.msra.mxu0 %v5128
      %5194 = vmatprep.subr.bf16.mxu0 %v5131
      %5195 = vmatpush1.bf16.msra.mxu0 %v5130
      %5196 = vmatprep.subr.bf16.mxu0 %v5133
      %5197 = vmatpush1.bf16.msra.mxu0 %v5132
      %5198 = vmatprep.subr.bf16.mxu0 %v5135
      %5199 = vmatpush1.bf16.msra.mxu0 %v5134
      %5200 = vmatprep.subr.bf16.mxu0 %v5137
      %5201 = vmatpush1.bf16.msra.mxu0 %v5136
      %5202 = vmatprep.subr.bf16.mxu0 %v5139
      %5203 = vmatpush1.bf16.msra.mxu0 %v5138
      %5204 = vmatprep.subr.bf16.mxu0 %v5141
      %5205 = vmatpush1.bf16.msra.mxu0 %v5140
      %5206 = vmatprep.subr.bf16.mxu0 %v5143
      %5207 = vmatpush1.bf16.msra.mxu0 %v5142
      %5208 = vmatprep.subr.bf16.mxu0 %v5145
      %5209 = vmatpush1.bf16.msra.mxu0 %v5144
      %5210 = vmatprep.subr.bf16.mxu0 %v5147
      %5211 = vmatpush1.bf16.msra.mxu0 %v5146
      %5212 = vmatprep.subr.bf16.mxu0 %v5149
      %5213 = vmatpush1.bf16.msra.mxu0 %v5148
      %5214 = vmatprep.subr.bf16.mxu0 %v5151
      %5215 = vmatpush1.bf16.msra.mxu0 %v5150
      %5216 = vmatprep.subr.bf16.mxu0 %v5153
      %5217 = vmatpush1.bf16.msra.mxu0 %v5152
      %5218 = vmatprep.mubr.bf16.mxu0 %v5023
      %5219 = vmatmul.mubr.bf16.gmra.mrb[0].mxu0 %v5020
      %v5220 = vpop.f32.mrb[0].mxu0
      %v5221 = vadd.f32 0.0, %v5220
      %v5222 = vpop.f32.mrb[0].mxu0
      %v5223 = vadd.f32 0.0, %v5222
      %v5224 = vpop.f32.mrb[0].mxu0
      %v5225 = vadd.f32 0.0, %v5224
      %v5226 = vpop.f32.mrb[0].mxu0
      %v5227 = vadd.f32 0.0, %v5226
      %5228 = vdwg.mxu0
      %v5229 = vld [vmem:[#allocation5] sm:$0xff]
      %v5230 = vld [vmem:[#allocation5 + $0x8] sm:$0xff]
      %v5231 = vld [vmem:[#allocation5 + $0x10] sm:$0xff]
      %v5232 = vld [vmem:[#allocation5 + $0x18] sm:$0xff]
      %v5233 = vadd.f32 %v5229, %v5221
      %v5234 = vadd.f32 %v5230, %v5223
      %v5235 = vadd.f32 %v5231, %v5225
      %v5236 = vadd.f32 %v5232, %v5227
      %5237 = vst [vmem:[#allocation5] sm:$0xff] %v5233
      %5238 = vst [vmem:[#allocation5 + $0x8] sm:$0xff] %v5234
      %5239 = vst [vmem:[#allocation5 + $0x10] sm:$0xff] %v5235
      %5240 = vst [vmem:[#allocation5 + $0x18] sm:$0xff] %v5236
      %v5241 = vld [vmem:[#allocation3] sm:$0x80]
      %v5242 = vld [vmem:[#allocation3 + $0x8] sm:$0x80]
      %v5243 = vld [vmem:[#allocation3 + $0x10] sm:$0xff]
      %v5244 = vld [vmem:[#allocation3 + $0x18] sm:$0xff]
      %v5245 = vld [vmem:[#allocation3 + $0x20] sm:$0x7f]
      %v5246 = vld [vmem:[#allocation3 + $0x28] sm:$0x7f]
      %s5247 = scalar_lea.vmem %s5, 1792
      %v5248 = vld [vmem:[%s5247] sm:$0xff]
      %v5249 = vld [vmem:[%s5247 + $0x8] sm:$0xff]
      %v5250 = vld [vmem:[%s5247 + $0x10] sm:$0xff]
      %v5251 = vld [vmem:[%s5247 + $0x18] sm:$0xff]
      %v5252 = vld [vmem:[%s5247 + $0x20] sm:$0xff]
      %v5253 = vld [vmem:[%s5247 + $0x28] sm:$0xff]
      %v5254 = vld [vmem:[%s5247 + $0x30] sm:$0xff]
      %v5255 = vld [vmem:[%s5247 + $0x38] sm:$0xff]
      %v5256 = vld [vmem:[%s5247 + $0x40] sm:$0xff]
      %v5257 = vld [vmem:[%s5247 + $0x48] sm:$0xff]
      %v5258 = vld [vmem:[%s5247 + $0x50] sm:$0xff]
      %v5259 = vld [vmem:[%s5247 + $0x58] sm:$0xff]
      %v5260 = vld [vmem:[%s5247 + $0x60] sm:$0xff]
      %v5261 = vld [vmem:[%s5247 + $0x68] sm:$0xff]
      %v5262 = vld [vmem:[%s5247 + $0x70] sm:$0xff]
      %v5263 = vld [vmem:[%s5247 + $0x78] sm:$0xff]
      %v5264 = vld [vmem:[%s5247 + $0x80] sm:$0xff]
      %v5265 = vld [vmem:[%s5247 + $0x88] sm:$0xff]
      %v5266 = vld [vmem:[%s5247 + $0x90] sm:$0xff]
      %v5267 = vld [vmem:[%s5247 + $0x98] sm:$0xff]
      %v5268 = vld [vmem:[%s5247 + $0xa0] sm:$0xff]
      %v5269 = vld [vmem:[%s5247 + $0xa8] sm:$0xff]
      %v5270 = vld [vmem:[%s5247 + $0xb0] sm:$0xff]
      %v5271 = vld [vmem:[%s5247 + $0xb8] sm:$0xff]
      %v5272 = vld [vmem:[%s5247 + $0xc0] sm:$0xff]
      %v5273 = vld [vmem:[%s5247 + $0xc8] sm:$0xff]
      %v5274 = vld [vmem:[%s5247 + $0xd0] sm:$0xff]
      %v5275 = vld [vmem:[%s5247 + $0xd8] sm:$0xff]
      %v5276 = vld [vmem:[%s5247 + $0xe0] sm:$0xff]
      %v5277 = vld [vmem:[%s5247 + $0xe8] sm:$0xff]
      %v5278 = vld [vmem:[%s5247 + $0xf0] sm:$0xff]
      %v5279 = vld [vmem:[%s5247 + $0xf8] sm:$0xff]
      %v5280 = vpack.c.bf16 %v5243, %v5241
      %v5281 = vpack.c.bf16 %v5244, %v5242
      %v5282 = vpack.c.bf16 %v5245, %v5245
      %v5283 = vpack.c.bf16 %v5246, %v5246
      %v5285 = vshrl.u32 %v5280, 16
      %v5287 = vrot.slane %v5285, 3
      %v5288 = vshll.u32 %v5280, 16
      %v5290 = vrot.slane %v5288, 4
      %v5291 = vor.u32 %v5287, %v5290
      %v5293 = vshrl.u32 %v5282, 16
      %v5295 = vrot.slane %v5293, 3
      %v5296 = vshll.u32 %v5282, 16
      %v5298 = vrot.slane %v5296, 4
      %v5299 = vor.u32 %v5295, %v5298
      %v5300 = vsel %vm2772, %v5291, %v5299
      %v5302 = vshrl.u32 %v5281, 16
      %v5304 = vrot.slane %v5302, 3
      %v5305 = vshll.u32 %v5281, 16
      %v5307 = vrot.slane %v5305, 4
      %v5308 = vor.u32 %v5304, %v5307
      %v5310 = vshrl.u32 %v5283, 16
      %v5312 = vrot.slane %v5310, 3
      %v5313 = vshll.u32 %v5283, 16
      %v5315 = vrot.slane %v5313, 4
      %v5316 = vor.u32 %v5312, %v5315
      %v5317 = vsel %vm2772, %v5308, %v5316
      %v5352 = vunpack.c.l.b16 %v5248
      %v5353 = vunpack.c.h.b16 %v5248
      %v5354 = vunpack.c.l.b16 %v5249
      %v5355 = vunpack.c.h.b16 %v5249
      %v5356 = vunpack.c.l.b16 %v5250
      %v5357 = vunpack.c.h.b16 %v5250
      %v5358 = vunpack.c.l.b16 %v5251
      %v5359 = vunpack.c.h.b16 %v5251
      %v5360 = vunpack.c.l.b16 %v5252
      %v5361 = vunpack.c.h.b16 %v5252
      %v5362 = vunpack.c.l.b16 %v5253
      %v5363 = vunpack.c.h.b16 %v5253
      %v5364 = vunpack.c.l.b16 %v5254
      %v5365 = vunpack.c.h.b16 %v5254
      %v5366 = vunpack.c.l.b16 %v5255
      %v5367 = vunpack.c.h.b16 %v5255
      %v5368 = vunpack.c.l.b16 %v5256
      %v5369 = vunpack.c.h.b16 %v5256
      %v5370 = vunpack.c.l.b16 %v5257
      %v5371 = vunpack.c.h.b16 %v5257
      %v5372 = vunpack.c.l.b16 %v5258
      %v5373 = vunpack.c.h.b16 %v5258
      %v5374 = vunpack.c.l.b16 %v5259
      %v5375 = vunpack.c.h.b16 %v5259
      %v5376 = vunpack.c.l.b16 %v5260
      %v5377 = vunpack.c.h.b16 %v5260
      %v5378 = vunpack.c.l.b16 %v5261
      %v5379 = vunpack.c.h.b16 %v5261
      %v5380 = vunpack.c.l.b16 %v5262
      %v5381 = vunpack.c.h.b16 %v5262
      %v5382 = vunpack.c.l.b16 %v5263
      %v5383 = vunpack.c.h.b16 %v5263
      %v5384 = vunpack.c.l.b16 %v5264
      %v5385 = vunpack.c.h.b16 %v5264
      %v5386 = vunpack.c.l.b16 %v5265
      %v5387 = vunpack.c.h.b16 %v5265
      %v5388 = vunpack.c.l.b16 %v5266
      %v5389 = vunpack.c.h.b16 %v5266
      %v5390 = vunpack.c.l.b16 %v5267
      %v5391 = vunpack.c.h.b16 %v5267
      %v5392 = vunpack.c.l.b16 %v5268
      %v5393 = vunpack.c.h.b16 %v5268
      %v5394 = vunpack.c.l.b16 %v5269
      %v5395 = vunpack.c.h.b16 %v5269
      %v5396 = vunpack.c.l.b16 %v5270
      %v5397 = vunpack.c.h.b16 %v5270
      %v5398 = vunpack.c.l.b16 %v5271
      %v5399 = vunpack.c.h.b16 %v5271
      %v5400 = vunpack.c.l.b16 %v5272
      %v5401 = vunpack.c.h.b16 %v5272
      %v5402 = vunpack.c.l.b16 %v5273
      %v5403 = vunpack.c.h.b16 %v5273
      %v5404 = vunpack.c.l.b16 %v5274
      %v5405 = vunpack.c.h.b16 %v5274
      %v5406 = vunpack.c.l.b16 %v5275
      %v5407 = vunpack.c.h.b16 %v5275
      %v5408 = vunpack.c.l.b16 %v5276
      %v5409 = vunpack.c.h.b16 %v5276
      %v5410 = vunpack.c.l.b16 %v5277
      %v5411 = vunpack.c.h.b16 %v5277
      %v5412 = vunpack.c.l.b16 %v5278
      %v5413 = vunpack.c.h.b16 %v5278
      %v5414 = vunpack.c.l.b16 %v5279
      %v5415 = vunpack.c.h.b16 %v5279
      %v5416 = vpack.c.b16 %v5354, %v5352
      %v5417 = vpack.c.b16 %v5355, %v5353
      %v5418 = vpack.c.b16 %v5358, %v5356
      %v5419 = vpack.c.b16 %v5359, %v5357
      %v5420 = vpack.c.b16 %v5362, %v5360
      %v5421 = vpack.c.b16 %v5363, %v5361
      %v5422 = vpack.c.b16 %v5366, %v5364
      %v5423 = vpack.c.b16 %v5367, %v5365
      %v5424 = vpack.c.b16 %v5370, %v5368
      %v5425 = vpack.c.b16 %v5371, %v5369
      %v5426 = vpack.c.b16 %v5374, %v5372
      %v5427 = vpack.c.b16 %v5375, %v5373
      %v5428 = vpack.c.b16 %v5378, %v5376
      %v5429 = vpack.c.b16 %v5379, %v5377
      %v5430 = vpack.c.b16 %v5382, %v5380
      %v5431 = vpack.c.b16 %v5383, %v5381
      %v5432 = vpack.c.b16 %v5386, %v5384
      %v5433 = vpack.c.b16 %v5387, %v5385
      %v5434 = vpack.c.b16 %v5390, %v5388
      %v5435 = vpack.c.b16 %v5391, %v5389
      %v5436 = vpack.c.b16 %v5394, %v5392
      %v5437 = vpack.c.b16 %v5395, %v5393
      %v5438 = vpack.c.b16 %v5398, %v5396
      %v5439 = vpack.c.b16 %v5399, %v5397
      %v5440 = vpack.c.b16 %v5402, %v5400
      %v5441 = vpack.c.b16 %v5403, %v5401
      %v5442 = vpack.c.b16 %v5406, %v5404
      %v5443 = vpack.c.b16 %v5407, %v5405
      %v5444 = vpack.c.b16 %v5410, %v5408
      %v5445 = vpack.c.b16 %v5411, %v5409
      %v5446 = vpack.c.b16 %v5414, %v5412
      %v5447 = vpack.c.b16 %v5415, %v5413
      %5480 = vmatprep.subr.bf16.mxu0 %v5417
      %5481 = vmatpush1.bf16.msra.mxu0 %v5416
      %5482 = vmatprep.subr.bf16.mxu0 %v5419
      %5483 = vmatpush1.bf16.msra.mxu0 %v5418
      %5484 = vmatprep.subr.bf16.mxu0 %v5421
      %5485 = vmatpush1.bf16.msra.mxu0 %v5420
      %5486 = vmatprep.subr.bf16.mxu0 %v5423
      %5487 = vmatpush1.bf16.msra.mxu0 %v5422
      %5488 = vmatprep.subr.bf16.mxu0 %v5425
      %5489 = vmatpush1.bf16.msra.mxu0 %v5424
      %5490 = vmatprep.subr.bf16.mxu0 %v5427
      %5491 = vmatpush1.bf16.msra.mxu0 %v5426
      %5492 = vmatprep.subr.bf16.mxu0 %v5429
      %5493 = vmatpush1.bf16.msra.mxu0 %v5428
      %5494 = vmatprep.subr.bf16.mxu0 %v5431
      %5495 = vmatpush1.bf16.msra.mxu0 %v5430
      %5496 = vmatprep.subr.bf16.mxu0 %v5433
      %5497 = vmatpush1.bf16.msra.mxu0 %v5432
      %5498 = vmatprep.subr.bf16.mxu0 %v5435
      %5499 = vmatpush1.bf16.msra.mxu0 %v5434
      %5500 = vmatprep.subr.bf16.mxu0 %v5437
      %5501 = vmatpush1.bf16.msra.mxu0 %v5436
      %5502 = vmatprep.subr.bf16.mxu0 %v5439
      %5503 = vmatpush1.bf16.msra.mxu0 %v5438
      %5504 = vmatprep.subr.bf16.mxu0 %v5441
      %5505 = vmatpush1.bf16.msra.mxu0 %v5440
      %5506 = vmatprep.subr.bf16.mxu0 %v5443
      %5507 = vmatpush1.bf16.msra.mxu0 %v5442
      %5508 = vmatprep.subr.bf16.mxu0 %v5445
      %5509 = vmatpush1.bf16.msra.mxu0 %v5444
      %5510 = vmatprep.subr.bf16.mxu0 %v5447
      %5511 = vmatpush1.bf16.msra.mxu0 %v5446
      %5512 = vmatprep.mubr.bf16.mxu0 %v5317
      %5513 = vmatmul.mubr.bf16.gmra.mrb[0].mxu0 %v5300
      %v5514 = vpop.f32.mrb[0].mxu0
      %v5515 = vadd.f32 0.0, %v5514
      %v5516 = vpop.f32.mrb[0].mxu0
      %v5517 = vadd.f32 0.0, %v5516
      %v5518 = vpop.f32.mrb[0].mxu0
      %v5519 = vadd.f32 0.0, %v5518
      %v5520 = vpop.f32.mrb[0].mxu0
      %v5521 = vadd.f32 0.0, %v5520
      %5522 = vdwg.mxu0
      %v5523 = vld [vmem:[#allocation5] sm:$0xff]
      %v5524 = vld [vmem:[#allocation5 + $0x8] sm:$0xff]
      %v5525 = vld [vmem:[#allocation5 + $0x10] sm:$0xff]
      %v5526 = vld [vmem:[#allocation5 + $0x18] sm:$0xff]
      %v5527 = vadd.f32 %v5523, %v5515
      %v5528 = vadd.f32 %v5524, %v5517
      %v5529 = vadd.f32 %v5525, %v5519
      %v5530 = vadd.f32 %v5526, %v5521
      %5531 = vst [vmem:[#allocation5] sm:$0xff] %v5527
      %5532 = vst [vmem:[#allocation5 + $0x8] sm:$0xff] %v5528
      %5533 = vst [vmem:[#allocation5 + $0x10] sm:$0xff] %v5529
      %5534 = vst [vmem:[#allocation5 + $0x18] sm:$0xff] %v5530
      %v5535 = vld [vmem:[#allocation3 + $0x10] sm:$0xff]
      %v5536 = vld [vmem:[#allocation3 + $0x18] sm:$0xff]
      %v5537 = vld [vmem:[#allocation3 + $0x20] sm:$0xff]
      %v5538 = vld [vmem:[#allocation3 + $0x28] sm:$0xff]
      %s5539 = scalar_lea.vmem %s5, 2048
      %v5540 = vld [vmem:[%s5539] sm:$0xff]
      %v5541 = vld [vmem:[%s5539 + $0x8] sm:$0xff]
      %v5542 = vld [vmem:[%s5539 + $0x10] sm:$0xff]
      %v5543 = vld [vmem:[%s5539 + $0x18] sm:$0xff]
      %v5544 = vld [vmem:[%s5539 + $0x20] sm:$0xff]
      %v5545 = vld [vmem:[%s5539 + $0x28] sm:$0xff]
      %v5546 = vld [vmem:[%s5539 + $0x30] sm:$0xff]
      %v5547 = vld [vmem:[%s5539 + $0x38] sm:$0xff]
      %v5548 = vld [vmem:[%s5539 + $0x40] sm:$0xff]
      %v5549 = vld [vmem:[%s5539 + $0x48] sm:$0xff]
      %v5550 = vld [vmem:[%s5539 + $0x50] sm:$0xff]
      %v5551 = vld [vmem:[%s5539 + $0x58] sm:$0xff]
      %v5552 = vld [vmem:[%s5539 + $0x60] sm:$0xff]
      %v5553 = vld [vmem:[%s5539 + $0x68] sm:$0xff]
      %v5554 = vld [vmem:[%s5539 + $0x70] sm:$0xff]
      %v5555 = vld [vmem:[%s5539 + $0x78] sm:$0xff]
      %v5556 = vld [vmem:[%s5539 + $0x80] sm:$0xff]
      %v5557 = vld [vmem:[%s5539 + $0x88] sm:$0xff]
      %v5558 = vld [vmem:[%s5539 + $0x90] sm:$0xff]
      %v5559 = vld [vmem:[%s5539 + $0x98] sm:$0xff]
      %v5560 = vld [vmem:[%s5539 + $0xa0] sm:$0xff]
      %v5561 = vld [vmem:[%s5539 + $0xa8] sm:$0xff]
      %v5562 = vld [vmem:[%s5539 + $0xb0] sm:$0xff]
      %v5563 = vld [vmem:[%s5539 + $0xb8] sm:$0xff]
      %v5564 = vld [vmem:[%s5539 + $0xc0] sm:$0xff]
      %v5565 = vld [vmem:[%s5539 + $0xc8] sm:$0xff]
      %v5566 = vld [vmem:[%s5539 + $0xd0] sm:$0xff]
      %v5567 = vld [vmem:[%s5539 + $0xd8] sm:$0xff]
      %v5568 = vld [vmem:[%s5539 + $0xe0] sm:$0xff]
      %v5569 = vld [vmem:[%s5539 + $0xe8] sm:$0xff]
      %v5570 = vld [vmem:[%s5539 + $0xf0] sm:$0xff]
      %v5571 = vld [vmem:[%s5539 + $0xf8] sm:$0xff]
      %v5572 = vpack.c.bf16 %v5537, %v5535
      %v5573 = vpack.c.bf16 %v5538, %v5536
      %v5606 = vunpack.c.l.b16 %v5540
      %v5607 = vunpack.c.h.b16 %v5540
      %v5608 = vunpack.c.l.b16 %v5541
      %v5609 = vunpack.c.h.b16 %v5541
      %v5610 = vunpack.c.l.b16 %v5542
      %v5611 = vunpack.c.h.b16 %v5542
      %v5612 = vunpack.c.l.b16 %v5543
      %v5613 = vunpack.c.h.b16 %v5543
      %v5614 = vunpack.c.l.b16 %v5544
      %v5615 = vunpack.c.h.b16 %v5544
      %v5616 = vunpack.c.l.b16 %v5545
      %v5617 = vunpack.c.h.b16 %v5545
      %v5618 = vunpack.c.l.b16 %v5546
      %v5619 = vunpack.c.h.b16 %v5546
      %v5620 = vunpack.c.l.b16 %v5547
      %v5621 = vunpack.c.h.b16 %v5547
      %v5622 = vunpack.c.l.b16 %v5548
      %v5623 = vunpack.c.h.b16 %v5548
      %v5624 = vunpack.c.l.b16 %v5549
      %v5625 = vunpack.c.h.b16 %v5549
      %v5626 = vunpack.c.l.b16 %v5550
      %v5627 = vunpack.c.h.b16 %v5550
      %v5628 = vunpack.c.l.b16 %v5551
      %v5629 = vunpack.c.h.b16 %v5551
      %v5630 = vunpack.c.l.b16 %v5552
      %v5631 = vunpack.c.h.b16 %v5552
      %v5632 = vunpack.c.l.b16 %v5553
      %v5633 = vunpack.c.h.b16 %v5553
      %v5634 = vunpack.c.l.b16 %v5554
      %v5635 = vunpack.c.h.b16 %v5554
      %v5636 = vunpack.c.l.b16 %v5555
      %v5637 = vunpack.c.h.b16 %v5555
      %v5638 = vunpack.c.l.b16 %v5556
      %v5639 = vunpack.c.h.b16 %v5556
      %v5640 = vunpack.c.l.b16 %v5557
      %v5641 = vunpack.c.h.b16 %v5557
      %v5642 = vunpack.c.l.b16 %v5558
      %v5643 = vunpack.c.h.b16 %v5558
      %v5644 = vunpack.c.l.b16 %v5559
      %v5645 = vunpack.c.h.b16 %v5559
      %v5646 = vunpack.c.l.b16 %v5560
      %v5647 = vunpack.c.h.b16 %v5560
      %v5648 = vunpack.c.l.b16 %v5561
      %v5649 = vunpack.c.h.b16 %v5561
      %v5650 = vunpack.c.l.b16 %v5562
      %v5651 = vunpack.c.h.b16 %v5562
      %v5652 = vunpack.c.l.b16 %v5563
      %v5653 = vunpack.c.h.b16 %v5563
      %v5654 = vunpack.c.l.b16 %v5564
      %v5655 = vunpack.c.h.b16 %v5564
      %v5656 = vunpack.c.l.b16 %v5565
      %v5657 = vunpack.c.h.b16 %v5565
      %v5658 = vunpack.c.l.b16 %v5566
      %v5659 = vunpack.c.h.b16 %v5566
      %v5660 = vunpack.c.l.b16 %v5567
      %v5661 = vunpack.c.h.b16 %v5567
      %v5662 = vunpack.c.l.b16 %v5568
      %v5663 = vunpack.c.h.b16 %v5568
      %v5664 = vunpack.c.l.b16 %v5569
      %v5665 = vunpack.c.h.b16 %v5569
      %v5666 = vunpack.c.l.b16 %v5570
      %v5667 = vunpack.c.h.b16 %v5570
      %v5668 = vunpack.c.l.b16 %v5571
      %v5669 = vunpack.c.h.b16 %v5571
      %v5670 = vpack.c.b16 %v5608, %v5606
      %v5671 = vpack.c.b16 %v5609, %v5607
      %v5672 = vpack.c.b16 %v5612, %v5610
      %v5673 = vpack.c.b16 %v5613, %v5611
      %v5674 = vpack.c.b16 %v5616, %v5614
      %v5675 = vpack.c.b16 %v5617, %v5615
      %v5676 = vpack.c.b16 %v5620, %v5618
      %v5677 = vpack.c.b16 %v5621, %v5619
      %v5678 = vpack.c.b16 %v5624, %v5622
      %v5679 = vpack.c.b16 %v5625, %v5623
      %v5680 = vpack.c.b16 %v5628, %v5626
      %v5681 = vpack.c.b16 %v5629, %v5627
      %v5682 = vpack.c.b16 %v5632, %v5630
      %v5683 = vpack.c.b16 %v5633, %v5631
      %v5684 = vpack.c.b16 %v5636, %v5634
      %v5685 = vpack.c.b16 %v5637, %v5635
      %v5686 = vpack.c.b16 %v5640, %v5638
      %v5687 = vpack.c.b16 %v5641, %v5639
      %v5688 = vpack.c.b16 %v5644, %v5642
      %v5689 = vpack.c.b16 %v5645, %v5643
      %v5690 = vpack.c.b16 %v5648, %v5646
      %v5691 = vpack.c.b16 %v5649, %v5647
      %v5692 = vpack.c.b16 %v5652, %v5650
      %v5693 = vpack.c.b16 %v5653, %v5651
      %v5694 = vpack.c.b16 %v5656, %v5654
      %v5695 = vpack.c.b16 %v5657, %v5655
      %v5696 = vpack.c.b16 %v5660, %v5658
      %v5697 = vpack.c.b16 %v5661, %v5659
      %v5698 = vpack.c.b16 %v5664, %v5662
      %v5699 = vpack.c.b16 %v5665, %v5663
      %v5700 = vpack.c.b16 %v5668, %v5666
      %v5701 = vpack.c.b16 %v5669, %v5667
      %5734 = vmatprep.subr.bf16.mxu0 %v5671
      %5735 = vmatpush1.bf16.msra.mxu0 %v5670
      %5736 = vmatprep.subr.bf16.mxu0 %v5673
      %5737 = vmatpush1.bf16.msra.mxu0 %v5672
      %5738 = vmatprep.subr.bf16.mxu0 %v5675
      %5739 = vmatpush1.bf16.msra.mxu0 %v5674
      %5740 = vmatprep.subr.bf16.mxu0 %v5677
      %5741 = vmatpush1.bf16.msra.mxu0 %v5676
      %5742 = vmatprep.subr.bf16.mxu0 %v5679
      %5743 = vmatpush1.bf16.msra.mxu0 %v5678
      %5744 = vmatprep.subr.bf16.mxu0 %v5681
      %5745 = vmatpush1.bf16.msra.mxu0 %v5680
      %5746 = vmatprep.subr.bf16.mxu0 %v5683
      %5747 = vmatpush1.bf16.msra.mxu0 %v5682
      %5748 = vmatprep.subr.bf16.mxu0 %v5685
      %5749 = vmatpush1.bf16.msra.mxu0 %v5684
      %5750 = vmatprep.subr.bf16.mxu0 %v5687
      %5751 = vmatpush1.bf16.msra.mxu0 %v5686
      %5752 = vmatprep.subr.bf16.mxu0 %v5689
      %5753 = vmatpush1.bf16.msra.mxu0 %v5688
      %5754 = vmatprep.subr.bf16.mxu0 %v5691
      %5755 = vmatpush1.bf16.msra.mxu0 %v5690
      %5756 = vmatprep.subr.bf16.mxu0 %v5693
      %5757 = vmatpush1.bf16.msra.mxu0 %v5692
      %5758 = vmatprep.subr.bf16.mxu0 %v5695
      %5759 = vmatpush1.bf16.msra.mxu0 %v5694
      %5760 = vmatprep.subr.bf16.mxu0 %v5697
      %5761 = vmatpush1.bf16.msra.mxu0 %v5696
      %5762 = vmatprep.subr.bf16.mxu0 %v5699
      %5763 = vmatpush1.bf16.msra.mxu0 %v5698
      %5764 = vmatprep.subr.bf16.mxu0 %v5701
      %5765 = vmatpush1.bf16.msra.mxu0 %v5700
      %5766 = vmatprep.mubr.bf16.mxu0 %v5573
      %5767 = vmatmul.mubr.bf16.gmra.mrb[0].mxu0 %v5572
      %v5768 = vpop.f32.mrb[0].mxu0
      %v5769 = vadd.f32 0.0, %v5768
      %v5770 = vpop.f32.mrb[0].mxu0
      %v5771 = vadd.f32 0.0, %v5770
      %v5772 = vpop.f32.mrb[0].mxu0
      %v5773 = vadd.f32 0.0, %v5772
      %v5774 = vpop.f32.mrb[0].mxu0
      %v5775 = vadd.f32 0.0, %v5774
      %5776 = vdwg.mxu0
      %v5777 = vld [vmem:[#allocation5] sm:$0xff]
      %v5778 = vld [vmem:[#allocation5 + $0x8] sm:$0xff]
      %v5779 = vld [vmem:[#allocation5 + $0x10] sm:$0xff]
      %v5780 = vld [vmem:[#allocation5 + $0x18] sm:$0xff]
      %v5781 = vadd.f32 %v5777, %v5769
      %v5782 = vadd.f32 %v5778, %v5771
      %v5783 = vadd.f32 %v5779, %v5773
      %v5784 = vadd.f32 %v5780, %v5775
      %5785 = vst [vmem:[#allocation5] sm:$0xff] %v5781
      %5786 = vst [vmem:[#allocation5 + $0x8] sm:$0xff] %v5782
      %5787 = vst [vmem:[#allocation5 + $0x10] sm:$0xff] %v5783
      %5788 = vst [vmem:[#allocation5 + $0x18] sm:$0xff] %v5784
      %v5789 = vld [vmem:[#allocation3 + $0x10] sm:$0xfe]
      %v5790 = vld [vmem:[#allocation3 + $0x18] sm:$0xfe]
      %v5791 = vld [vmem:[#allocation3 + $0x20] sm:$0xff]
      %v5792 = vld [vmem:[#allocation3 + $0x28] sm:$0xff]
      %v5793 = vld [vmem:[#allocation3 + $0x30] sm:$0x1]
      %v5794 = vld [vmem:[#allocation3 + $0x38] sm:$0x1]
      %s5795 = scalar_lea.vmem %s5, 2304
      %v5796 = vld [vmem:[%s5795] sm:$0xff]
      %v5797 = vld [vmem:[%s5795 + $0x8] sm:$0xff]
      %v5798 = vld [vmem:[%s5795 + $0x10] sm:$0xff]
      %v5799 = vld [vmem:[%s5795 + $0x18] sm:$0xff]
      %v5800 = vld [vmem:[%s5795 + $0x20] sm:$0xff]
      %v5801 = vld [vmem:[%s5795 + $0x28] sm:$0xff]
      %v5802 = vld [vmem:[%s5795 + $0x30] sm:$0xff]
      %v5803 = vld [vmem:[%s5795 + $0x38] sm:$0xff]
      %v5804 = vld [vmem:[%s5795 + $0x40] sm:$0xff]
      %v5805 = vld [vmem:[%s5795 + $0x48] sm:$0xff]
      %v5806 = vld [vmem:[%s5795 + $0x50] sm:$0xff]
      %v5807 = vld [vmem:[%s5795 + $0x58] sm:$0xff]
      %v5808 = vld [vmem:[%s5795 + $0x60] sm:$0xff]
      %v5809 = vld [vmem:[%s5795 + $0x68] sm:$0xff]
      %v5810 = vld [vmem:[%s5795 + $0x70] sm:$0xff]
      %v5811 = vld [vmem:[%s5795 + $0x78] sm:$0xff]
      %v5812 = vld [vmem:[%s5795 + $0x80] sm:$0xff]
      %v5813 = vld [vmem:[%s5795 + $0x88] sm:$0xff]
      %v5814 = vld [vmem:[%s5795 + $0x90] sm:$0xff]
      %v5815 = vld [vmem:[%s5795 + $0x98] sm:$0xff]
      %v5816 = vld [vmem:[%s5795 + $0xa0] sm:$0xff]
      %v5817 = vld [vmem:[%s5795 + $0xa8] sm:$0xff]
      %v5818 = vld [vmem:[%s5795 + $0xb0] sm:$0xff]
      %v5819 = vld [vmem:[%s5795 + $0xb8] sm:$0xff]
      %v5820 = vld [vmem:[%s5795 + $0xc0] sm:$0xff]
      %v5821 = vld [vmem:[%s5795 + $0xc8] sm:$0xff]
      %v5822 = vld [vmem:[%s5795 + $0xd0] sm:$0xff]
      %v5823 = vld [vmem:[%s5795 + $0xd8] sm:$0xff]
      %v5824 = vld [vmem:[%s5795 + $0xe0] sm:$0xff]
      %v5825 = vld [vmem:[%s5795 + $0xe8] sm:$0xff]
      %v5826 = vld [vmem:[%s5795 + $0xf0] sm:$0xff]
      %v5827 = vld [vmem:[%s5795 + $0xf8] sm:$0xff]
      %v5828 = vpack.c.bf16 %v5791, %v5789
      %v5829 = vpack.c.bf16 %v5792, %v5790
      %v5830 = vpack.c.bf16 %v5793, %v5793
      %v5831 = vpack.c.bf16 %v5794, %v5794
      %v5833 = vshrl.u32 %v5828, 16
      %v5835 = vshll.u32 %v5828, 16
      %v5837 = vrot.slane %v5835, 1
      %v5838 = vor.u32 %v5833, %v5837
      %v5840 = vshll.u32 %v5830, 16
      %v5842 = vrot.slane %v5840, 1
      %v5843 = vsel %vm1084, %v5838, %v5842
      %v5845 = vshrl.u32 %v5829, 16
      %v5847 = vshll.u32 %v5829, 16
      %v5849 = vrot.slane %v5847, 1
      %v5850 = vor.u32 %v5845, %v5849
      %v5852 = vshll.u32 %v5831, 16
      %v5854 = vrot.slane %v5852, 1
      %v5855 = vsel %vm1084, %v5850, %v5854
      %v5890 = vunpack.c.l.b16 %v5796
      %v5891 = vunpack.c.h.b16 %v5796
      %v5892 = vunpack.c.l.b16 %v5797
      %v5893 = vunpack.c.h.b16 %v5797
      %v5894 = vunpack.c.l.b16 %v5798
      %v5895 = vunpack.c.h.b16 %v5798
      %v5896 = vunpack.c.l.b16 %v5799
      %v5897 = vunpack.c.h.b16 %v5799
      %v5898 = vunpack.c.l.b16 %v5800
      %v5899 = vunpack.c.h.b16 %v5800
      %v5900 = vunpack.c.l.b16 %v5801
      %v5901 = vunpack.c.h.b16 %v5801
      %v5902 = vunpack.c.l.b16 %v5802
      %v5903 = vunpack.c.h.b16 %v5802
      %v5904 = vunpack.c.l.b16 %v5803
      %v5905 = vunpack.c.h.b16 %v5803
      %v5906 = vunpack.c.l.b16 %v5804
      %v5907 = vunpack.c.h.b16 %v5804
      %v5908 = vunpack.c.l.b16 %v5805
      %v5909 = vunpack.c.h.b16 %v5805
      %v5910 = vunpack.c.l.b16 %v5806
      %v5911 = vunpack.c.h.b16 %v5806
      %v5912 = vunpack.c.l.b16 %v5807
      %v5913 = vunpack.c.h.b16 %v5807
      %v5914 = vunpack.c.l.b16 %v5808
      %v5915 = vunpack.c.h.b16 %v5808
      %v5916 = vunpack.c.l.b16 %v5809
      %v5917 = vunpack.c.h.b16 %v5809
      %v5918 = vunpack.c.l.b16 %v5810
      %v5919 = vunpack.c.h.b16 %v5810
      %v5920 = vunpack.c.l.b16 %v5811
      %v5921 = vunpack.c.h.b16 %v5811
      %v5922 = vunpack.c.l.b16 %v5812
      %v5923 = vunpack.c.h.b16 %v5812
      %v5924 = vunpack.c.l.b16 %v5813
      %v5925 = vunpack.c.h.b16 %v5813
      %v5926 = vunpack.c.l.b16 %v5814
      %v5927 = vunpack.c.h.b16 %v5814
      %v5928 = vunpack.c.l.b16 %v5815
      %v5929 = vunpack.c.h.b16 %v5815
      %v5930 = vunpack.c.l.b16 %v5816
      %v5931 = vunpack.c.h.b16 %v5816
      %v5932 = vunpack.c.l.b16 %v5817
      %v5933 = vunpack.c.h.b16 %v5817
      %v5934 = vunpack.c.l.b16 %v5818
      %v5935 = vunpack.c.h.b16 %v5818
      %v5936 = vunpack.c.l.b16 %v5819
      %v5937 = vunpack.c.h.b16 %v5819
      %v5938 = vunpack.c.l.b16 %v5820
      %v5939 = vunpack.c.h.b16 %v5820
      %v5940 = vunpack.c.l.b16 %v5821
      %v5941 = vunpack.c.h.b16 %v5821
      %v5942 = vunpack.c.l.b16 %v5822
      %v5943 = vunpack.c.h.b16 %v5822
      %v5944 = vunpack.c.l.b16 %v5823
      %v5945 = vunpack.c.h.b16 %v5823
      %v5946 = vunpack.c.l.b16 %v5824
      %v5947 = vunpack.c.h.b16 %v5824
      %v5948 = vunpack.c.l.b16 %v5825
      %v5949 = vunpack.c.h.b16 %v5825
      %v5950 = vunpack.c.l.b16 %v5826
      %v5951 = vunpack.c.h.b16 %v5826
      %v5952 = vunpack.c.l.b16 %v5827
      %v5953 = vunpack.c.h.b16 %v5827
      %v5954 = vpack.c.b16 %v5892, %v5890
      %v5955 = vpack.c.b16 %v5893, %v5891
      %v5956 = vpack.c.b16 %v5896, %v5894
      %v5957 = vpack.c.b16 %v5897, %v5895
      %v5958 = vpack.c.b16 %v5900, %v5898
      %v5959 = vpack.c.b16 %v5901, %v5899
      %v5960 = vpack.c.b16 %v5904, %v5902
      %v5961 = vpack.c.b16 %v5905, %v5903
      %v5962 = vpack.c.b16 %v5908, %v5906
      %v5963 = vpack.c.b16 %v5909, %v5907
      %v5964 = vpack.c.b16 %v5912, %v5910
      %v5965 = vpack.c.b16 %v5913, %v5911
      %v5966 = vpack.c.b16 %v5916, %v5914
      %v5967 = vpack.c.b16 %v5917, %v5915
      %v5968 = vpack.c.b16 %v5920, %v5918
      %v5969 = vpack.c.b16 %v5921, %v5919
      %v5970 = vpack.c.b16 %v5924, %v5922
      %v5971 = vpack.c.b16 %v5925, %v5923
      %v5972 = vpack.c.b16 %v5928, %v5926
      %v5973 = vpack.c.b16 %v5929, %v5927
      %v5974 = vpack.c.b16 %v5932, %v5930
      %v5975 = vpack.c.b16 %v5933, %v5931
      %v5976 = vpack.c.b16 %v5936, %v5934
      %v5977 = vpack.c.b16 %v5937, %v5935
      %v5978 = vpack.c.b16 %v5940, %v5938
      %v5979 = vpack.c.b16 %v5941, %v5939
      %v5980 = vpack.c.b16 %v5944, %v5942
      %v5981 = vpack.c.b16 %v5945, %v5943
      %v5982 = vpack.c.b16 %v5948, %v5946
      %v5983 = vpack.c.b16 %v5949, %v5947
      %v5984 = vpack.c.b16 %v5952, %v5950
      %v5985 = vpack.c.b16 %v5953, %v5951
      %6018 = vmatprep.subr.bf16.mxu0 %v5955
      %6019 = vmatpush1.bf16.msra.mxu0 %v5954
      %6020 = vmatprep.subr.bf16.mxu0 %v5957
      %6021 = vmatpush1.bf16.msra.mxu0 %v5956
      %6022 = vmatprep.subr.bf16.mxu0 %v5959
      %6023 = vmatpush1.bf16.msra.mxu0 %v5958
      %6024 = vmatprep.subr.bf16.mxu0 %v5961
      %6025 = vmatpush1.bf16.msra.mxu0 %v5960
      %6026 = vmatprep.subr.bf16.mxu0 %v5963
      %6027 = vmatpush1.bf16.msra.mxu0 %v5962
      %6028 = vmatprep.subr.bf16.mxu0 %v5965
      %6029 = vmatpush1.bf16.msra.mxu0 %v5964
      %6030 = vmatprep.subr.bf16.mxu0 %v5967
      %6031 = vmatpush1.bf16.msra.mxu0 %v5966
      %6032 = vmatprep.subr.bf16.mxu0 %v5969
      %6033 = vmatpush1.bf16.msra.mxu0 %v5968
      %6034 = vmatprep.subr.bf16.mxu0 %v5971
      %6035 = vmatpush1.bf16.msra.mxu0 %v5970
      %6036 = vmatprep.subr.bf16.mxu0 %v5973
      %6037 = vmatpush1.bf16.msra.mxu0 %v5972
      %6038 = vmatprep.subr.bf16.mxu0 %v5975
      %6039 = vmatpush1.bf16.msra.mxu0 %v5974
      %6040 = vmatprep.subr.bf16.mxu0 %v5977
      %6041 = vmatpush1.bf16.msra.mxu0 %v5976
      %6042 = vmatprep.subr.bf16.mxu0 %v5979
      %6043 = vmatpush1.bf16.msra.mxu0 %v5978
      %6044 = vmatprep.subr.bf16.mxu0 %v5981
      %6045 = vmatpush1.bf16.msra.mxu0 %v5980
      %6046 = vmatprep.subr.bf16.mxu0 %v5983
      %6047 = vmatpush1.bf16.msra.mxu0 %v5982
      %6048 = vmatprep.subr.bf16.mxu0 %v5985
      %6049 = vmatpush1.bf16.msra.mxu0 %v5984
      %6050 = vmatprep.mubr.bf16.mxu0 %v5855
      %6051 = vmatmul.mubr.bf16.gmra.mrb[0].mxu0 %v5843
      %v6052 = vpop.f32.mrb[0].mxu0
      %v6053 = vadd.f32 0.0, %v6052
      %v6054 = vpop.f32.mrb[0].mxu0
      %v6055 = vadd.f32 0.0, %v6054
      %v6056 = vpop.f32.mrb[0].mxu0
      %v6057 = vadd.f32 0.0, %v6056
      %v6058 = vpop.f32.mrb[0].mxu0
      %v6059 = vadd.f32 0.0, %v6058
      %6060 = vdwg.mxu0
      %v6061 = vld [vmem:[#allocation5] sm:$0xff]
      %v6062 = vld [vmem:[#allocation5 + $0x8] sm:$0xff]
      %v6063 = vld [vmem:[#allocation5 + $0x10] sm:$0xff]
      %v6064 = vld [vmem:[#allocation5 + $0x18] sm:$0xff]
      %v6065 = vadd.f32 %v6061, %v6053
      %v6066 = vadd.f32 %v6062, %v6055
      %v6067 = vadd.f32 %v6063, %v6057
      %v6068 = vadd.f32 %v6064, %v6059
      %6069 = vst [vmem:[#allocation5] sm:$0xff] %v6065
      %6070 = vst [vmem:[#allocation5 + $0x8] sm:$0xff] %v6066
      %6071 = vst [vmem:[#allocation5 + $0x10] sm:$0xff] %v6067
      %6072 = vst [vmem:[#allocation5 + $0x18] sm:$0xff] %v6068
      %v6073 = vld [vmem:[#allocation3 + $0x10] sm:$0xfc]
      %v6074 = vld [vmem:[#allocation3 + $0x18] sm:$0xfc]
      %v6075 = vld [vmem:[#allocation3 + $0x20] sm:$0xff]
      %v6076 = vld [vmem:[#allocation3 + $0x28] sm:$0xff]
      %v6077 = vld [vmem:[#allocation3 + $0x30] sm:$0x3]
      %v6078 = vld [vmem:[#allocation3 + $0x38] sm:$0x3]
      %s6079 = scalar_lea.vmem %s5, 2560
      %v6080 = vld [vmem:[%s6079] sm:$0xff]
      %v6081 = vld [vmem:[%s6079 + $0x8] sm:$0xff]
      %v6082 = vld [vmem:[%s6079 + $0x10] sm:$0xff]
      %v6083 = vld [vmem:[%s6079 + $0x18] sm:$0xff]
      %v6084 = vld [vmem:[%s6079 + $0x20] sm:$0xff]
      %v6085 = vld [vmem:[%s6079 + $0x28] sm:$0xff]
      %v6086 = vld [vmem:[%s6079 + $0x30] sm:$0xff]
      %v6087 = vld [vmem:[%s6079 + $0x38] sm:$0xff]
      %v6088 = vld [vmem:[%s6079 + $0x40] sm:$0xff]
      %v6089 = vld [vmem:[%s6079 + $0x48] sm:$0xff]
      %v6090 = vld [vmem:[%s6079 + $0x50] sm:$0xff]
      %v6091 = vld [vmem:[%s6079 + $0x58] sm:$0xff]
      %v6092 = vld [vmem:[%s6079 + $0x60] sm:$0xff]
      %v6093 = vld [vmem:[%s6079 + $0x68] sm:$0xff]
      %v6094 = vld [vmem:[%s6079 + $0x70] sm:$0xff]
      %v6095 = vld [vmem:[%s6079 + $0x78] sm:$0xff]
      %v6096 = vld [vmem:[%s6079 + $0x80] sm:$0xff]
      %v6097 = vld [vmem:[%s6079 + $0x88] sm:$0xff]
      %v6098 = vld [vmem:[%s6079 + $0x90] sm:$0xff]
      %v6099 = vld [vmem:[%s6079 + $0x98] sm:$0xff]
      %v6100 = vld [vmem:[%s6079 + $0xa0] sm:$0xff]
      %v6101 = vld [vmem:[%s6079 + $0xa8] sm:$0xff]
      %v6102 = vld [vmem:[%s6079 + $0xb0] sm:$0xff]
      %v6103 = vld [vmem:[%s6079 + $0xb8] sm:$0xff]
      %v6104 = vld [vmem:[%s6079 + $0xc0] sm:$0xff]
      %v6105 = vld [vmem:[%s6079 + $0xc8] sm:$0xff]
      %v6106 = vld [vmem:[%s6079 + $0xd0] sm:$0xff]
      %v6107 = vld [vmem:[%s6079 + $0xd8] sm:$0xff]
      %v6108 = vld [vmem:[%s6079 + $0xe0] sm:$0xff]
      %v6109 = vld [vmem:[%s6079 + $0xe8] sm:$0xff]
      %v6110 = vld [vmem:[%s6079 + $0xf0] sm:$0xff]
      %v6111 = vld [vmem:[%s6079 + $0xf8] sm:$0xff]
      %v6112 = vpack.c.bf16 %v6075, %v6073
      %v6113 = vpack.c.bf16 %v6076, %v6074
      %v6114 = vpack.c.bf16 %v6077, %v6077
      %v6115 = vpack.c.bf16 %v6078, %v6078
      %v6120 = vrot.slane %v6112, 1
      %v6121 = vrot.slane %v6114, 1
      %v6122 = vsel %vm1373, %v6120, %v6121
      %v6123 = vrot.slane %v6113, 1
      %v6124 = vrot.slane %v6115, 1
      %v6125 = vsel %vm1373, %v6123, %v6124
      %v6160 = vunpack.c.l.b16 %v6080
      %v6161 = vunpack.c.h.b16 %v6080
      %v6162 = vunpack.c.l.b16 %v6081
      %v6163 = vunpack.c.h.b16 %v6081
      %v6164 = vunpack.c.l.b16 %v6082
      %v6165 = vunpack.c.h.b16 %v6082
      %v6166 = vunpack.c.l.b16 %v6083
      %v6167 = vunpack.c.h.b16 %v6083
      %v6168 = vunpack.c.l.b16 %v6084
      %v6169 = vunpack.c.h.b16 %v6084
      %v6170 = vunpack.c.l.b16 %v6085
      %v6171 = vunpack.c.h.b16 %v6085
      %v6172 = vunpack.c.l.b16 %v6086
      %v6173 = vunpack.c.h.b16 %v6086
      %v6174 = vunpack.c.l.b16 %v6087
      %v6175 = vunpack.c.h.b16 %v6087
      %v6176 = vunpack.c.l.b16 %v6088
      %v6177 = vunpack.c.h.b16 %v6088
      %v6178 = vunpack.c.l.b16 %v6089
      %v6179 = vunpack.c.h.b16 %v6089
      %v6180 = vunpack.c.l.b16 %v6090
      %v6181 = vunpack.c.h.b16 %v6090
      %v6182 = vunpack.c.l.b16 %v6091
      %v6183 = vunpack.c.h.b16 %v6091
      %v6184 = vunpack.c.l.b16 %v6092
      %v6185 = vunpack.c.h.b16 %v6092
      %v6186 = vunpack.c.l.b16 %v6093
      %v6187 = vunpack.c.h.b16 %v6093
      %v6188 = vunpack.c.l.b16 %v6094
      %v6189 = vunpack.c.h.b16 %v6094
      %v6190 = vunpack.c.l.b16 %v6095
      %v6191 = vunpack.c.h.b16 %v6095
      %v6192 = vunpack.c.l.b16 %v6096
      %v6193 = vunpack.c.h.b16 %v6096
      %v6194 = vunpack.c.l.b16 %v6097
      %v6195 = vunpack.c.h.b16 %v6097
      %v6196 = vunpack.c.l.b16 %v6098
      %v6197 = vunpack.c.h.b16 %v6098
      %v6198 = vunpack.c.l.b16 %v6099
      %v6199 = vunpack.c.h.b16 %v6099
      %v6200 = vunpack.c.l.b16 %v6100
      %v6201 = vunpack.c.h.b16 %v6100
      %v6202 = vunpack.c.l.b16 %v6101
      %v6203 = vunpack.c.h.b16 %v6101
      %v6204 = vunpack.c.l.b16 %v6102
      %v6205 = vunpack.c.h.b16 %v6102
      %v6206 = vunpack.c.l.b16 %v6103
      %v6207 = vunpack.c.h.b16 %v6103
      %v6208 = vunpack.c.l.b16 %v6104
      %v6209 = vunpack.c.h.b16 %v6104
      %v6210 = vunpack.c.l.b16 %v6105
      %v6211 = vunpack.c.h.b16 %v6105
      %v6212 = vunpack.c.l.b16 %v6106
      %v6213 = vunpack.c.h.b16 %v6106
      %v6214 = vunpack.c.l.b16 %v6107
      %v6215 = vunpack.c.h.b16 %v6107
      %v6216 = vunpack.c.l.b16 %v6108
      %v6217 = vunpack.c.h.b16 %v6108
      %v6218 = vunpack.c.l.b16 %v6109
      %v6219 = vunpack.c.h.b16 %v6109
      %v6220 = vunpack.c.l.b16 %v6110
      %v6221 = vunpack.c.h.b16 %v6110
      %v6222 = vunpack.c.l.b16 %v6111
      %v6223 = vunpack.c.h.b16 %v6111
      %v6224 = vpack.c.b16 %v6162, %v6160
      %v6225 = vpack.c.b16 %v6163, %v6161
      %v6226 = vpack.c.b16 %v6166, %v6164
      %v6227 = vpack.c.b16 %v6167, %v6165
      %v6228 = vpack.c.b16 %v6170, %v6168
      %v6229 = vpack.c.b16 %v6171, %v6169
      %v6230 = vpack.c.b16 %v6174, %v6172
      %v6231 = vpack.c.b16 %v6175, %v6173
      %v6232 = vpack.c.b16 %v6178, %v6176
      %v6233 = vpack.c.b16 %v6179, %v6177
      %v6234 = vpack.c.b16 %v6182, %v6180
      %v6235 = vpack.c.b16 %v6183, %v6181
      %v6236 = vpack.c.b16 %v6186, %v6184
      %v6237 = vpack.c.b16 %v6187, %v6185
      %v6238 = vpack.c.b16 %v6190, %v6188
      %v6239 = vpack.c.b16 %v6191, %v6189
      %v6240 = vpack.c.b16 %v6194, %v6192
      %v6241 = vpack.c.b16 %v6195, %v6193
      %v6242 = vpack.c.b16 %v6198, %v6196
      %v6243 = vpack.c.b16 %v6199, %v6197
      %v6244 = vpack.c.b16 %v6202, %v6200
      %v6245 = vpack.c.b16 %v6203, %v6201
      %v6246 = vpack.c.b16 %v6206, %v6204
      %v6247 = vpack.c.b16 %v6207, %v6205
      %v6248 = vpack.c.b16 %v6210, %v6208
      %v6249 = vpack.c.b16 %v6211, %v6209
      %v6250 = vpack.c.b16 %v6214, %v6212
      %v6251 = vpack.c.b16 %v6215, %v6213
      %v6252 = vpack.c.b16 %v6218, %v6216
      %v6253 = vpack.c.b16 %v6219, %v6217
      %v6254 = vpack.c.b16 %v6222, %v6220
      %v6255 = vpack.c.b16 %v6223, %v6221
      %6288 = vmatprep.subr.bf16.mxu0 %v6225
      %6289 = vmatpush1.bf16.msra.mxu0 %v6224
      %6290 = vmatprep.subr.bf16.mxu0 %v6227
      %6291 = vmatpush1.bf16.msra.mxu0 %v6226
      %6292 = vmatprep.subr.bf16.mxu0 %v6229
      %6293 = vmatpush1.bf16.msra.mxu0 %v6228
      %6294 = vmatprep.subr.bf16.mxu0 %v6231
      %6295 = vmatpush1.bf16.msra.mxu0 %v6230
      %6296 = vmatprep.subr.bf16.mxu0 %v6233
      %6297 = vmatpush1.bf16.msra.mxu0 %v6232
      %6298 = vmatprep.subr.bf16.mxu0 %v6235
      %6299 = vmatpush1.bf16.msra.mxu0 %v6234
      %6300 = vmatprep.subr.bf16.mxu0 %v6237
      %6301 = vmatpush1.bf16.msra.mxu0 %v6236
      %6302 = vmatprep.subr.bf16.mxu0 %v6239
      %6303 = vmatpush1.bf16.msra.mxu0 %v6238
      %6304 = vmatprep.subr.bf16.mxu0 %v6241
      %6305 = vmatpush1.bf16.msra.mxu0 %v6240
      %6306 = vmatprep.subr.bf16.mxu0 %v6243
      %6307 = vmatpush1.bf16.msra.mxu0 %v6242
      %6308 = vmatprep.subr.bf16.mxu0 %v6245
      %6309 = vmatpush1.bf16.msra.mxu0 %v6244
      %6310 = vmatprep.subr.bf16.mxu0 %v6247
      %6311 = vmatpush1.bf16.msra.mxu0 %v6246
      %6312 = vmatprep.subr.bf16.mxu0 %v6249
      %6313 = vmatpush1.bf16.msra.mxu0 %v6248
      %6314 = vmatprep.subr.bf16.mxu0 %v6251
      %6315 = vmatpush1.bf16.msra.mxu0 %v6250
      %6316 = vmatprep.subr.bf16.mxu0 %v6253
      %6317 = vmatpush1.bf16.msra.mxu0 %v6252
      %6318 = vmatprep.subr.bf16.mxu0 %v6255
      %6319 = vmatpush1.bf16.msra.mxu0 %v6254
      %6320 = vmatprep.mubr.bf16.mxu0 %v6125
      %6321 = vmatmul.mubr.bf16.gmra.mrb[0].mxu0 %v6122
      %v6322 = vpop.f32.mrb[0].mxu0
      %v6323 = vadd.f32 0.0, %v6322
      %v6324 = vpop.f32.mrb[0].mxu0
      %v6325 = vadd.f32 0.0, %v6324
      %v6326 = vpop.f32.mrb[0].mxu0
      %v6327 = vadd.f32 0.0, %v6326
      %v6328 = vpop.f32.mrb[0].mxu0
      %v6329 = vadd.f32 0.0, %v6328
      %6330 = vdwg.mxu0
      %v6331 = vld [vmem:[#allocation5] sm:$0xff]
      %v6332 = vld [vmem:[#allocation5 + $0x8] sm:$0xff]
      %v6333 = vld [vmem:[#allocation5 + $0x10] sm:$0xff]
      %v6334 = vld [vmem:[#allocation5 + $0x18] sm:$0xff]
      %v6335 = vadd.f32 %v6331, %v6323
      %v6336 = vadd.f32 %v6332, %v6325
      %v6337 = vadd.f32 %v6333, %v6327
      %v6338 = vadd.f32 %v6334, %v6329
      %6339 = vst [vmem:[#allocation5] sm:$0xff] %v6335
      %6340 = vst [vmem:[#allocation5 + $0x8] sm:$0xff] %v6336
      %6341 = vst [vmem:[#allocation5 + $0x10] sm:$0xff] %v6337
      %6342 = vst [vmem:[#allocation5 + $0x18] sm:$0xff] %v6338
      %v6343 = vld [vmem:[#allocation3 + $0x10] sm:$0xf8]
      %v6344 = vld [vmem:[#allocation3 + $0x18] sm:$0xf8]
      %v6345 = vld [vmem:[#allocation3 + $0x20] sm:$0xff]
      %v6346 = vld [vmem:[#allocation3 + $0x28] sm:$0xff]
      %v6347 = vld [vmem:[#allocation3 + $0x30] sm:$0x7]
      %v6348 = vld [vmem:[#allocation3 + $0x38] sm:$0x7]
      %s6349 = scalar_lea.vmem %s5, 2816
      %v6350 = vld [vmem:[%s6349] sm:$0xff]
      %v6351 = vld [vmem:[%s6349 + $0x8] sm:$0xff]
      %v6352 = vld [vmem:[%s6349 + $0x10] sm:$0xff]
      %v6353 = vld [vmem:[%s6349 + $0x18] sm:$0xff]
      %v6354 = vld [vmem:[%s6349 + $0x20] sm:$0xff]
      %v6355 = vld [vmem:[%s6349 + $0x28] sm:$0xff]
      %v6356 = vld [vmem:[%s6349 + $0x30] sm:$0xff]
      %v6357 = vld [vmem:[%s6349 + $0x38] sm:$0xff]
      %v6358 = vld [vmem:[%s6349 + $0x40] sm:$0xff]
      %v6359 = vld [vmem:[%s6349 + $0x48] sm:$0xff]
      %v6360 = vld [vmem:[%s6349 + $0x50] sm:$0xff]
      %v6361 = vld [vmem:[%s6349 + $0x58] sm:$0xff]
      %v6362 = vld [vmem:[%s6349 + $0x60] sm:$0xff]
      %v6363 = vld [vmem:[%s6349 + $0x68] sm:$0xff]
      %v6364 = vld [vmem:[%s6349 + $0x70] sm:$0xff]
      %v6365 = vld [vmem:[%s6349 + $0x78] sm:$0xff]
      %v6366 = vld [vmem:[%s6349 + $0x80] sm:$0xff]
      %v6367 = vld [vmem:[%s6349 + $0x88] sm:$0xff]
      %v6368 = vld [vmem:[%s6349 + $0x90] sm:$0xff]
      %v6369 = vld [vmem:[%s6349 + $0x98] sm:$0xff]
      %v6370 = vld [vmem:[%s6349 + $0xa0] sm:$0xff]
      %v6371 = vld [vmem:[%s6349 + $0xa8] sm:$0xff]
      %v6372 = vld [vmem:[%s6349 + $0xb0] sm:$0xff]
      %v6373 = vld [vmem:[%s6349 + $0xb8] sm:$0xff]
      %v6374 = vld [vmem:[%s6349 + $0xc0] sm:$0xff]
      %v6375 = vld [vmem:[%s6349 + $0xc8] sm:$0xff]
      %v6376 = vld [vmem:[%s6349 + $0xd0] sm:$0xff]
      %v6377 = vld [vmem:[%s6349 + $0xd8] sm:$0xff]
      %v6378 = vld [vmem:[%s6349 + $0xe0] sm:$0xff]
      %v6379 = vld [vmem:[%s6349 + $0xe8] sm:$0xff]
      %v6380 = vld [vmem:[%s6349 + $0xf0] sm:$0xff]
      %v6381 = vld [vmem:[%s6349 + $0xf8] sm:$0xff]
      %v6382 = vpack.c.bf16 %v6345, %v6343
      %v6383 = vpack.c.bf16 %v6346, %v6344
      %v6384 = vpack.c.bf16 %v6347, %v6347
      %v6385 = vpack.c.bf16 %v6348, %v6348
      %v6387 = vshrl.u32 %v6382, 16
      %v6389 = vrot.slane %v6387, 1
      %v6390 = vshll.u32 %v6382, 16
      %v6392 = vrot.slane %v6390, 2
      %v6393 = vor.u32 %v6389, %v6392
      %v6395 = vshrl.u32 %v6384, 16
      %v6397 = vrot.slane %v6395, 1
      %v6398 = vshll.u32 %v6384, 16
      %v6400 = vrot.slane %v6398, 2
      %v6401 = vor.u32 %v6397, %v6400
      %v6402 = vsel %vm1640, %v6393, %v6401
      %v6404 = vshrl.u32 %v6383, 16
      %v6406 = vrot.slane %v6404, 1
      %v6407 = vshll.u32 %v6383, 16
      %v6409 = vrot.slane %v6407, 2
      %v6410 = vor.u32 %v6406, %v6409
      %v6412 = vshrl.u32 %v6385, 16
      %v6414 = vrot.slane %v6412, 1
      %v6415 = vshll.u32 %v6385, 16
      %v6417 = vrot.slane %v6415, 2
      %v6418 = vor.u32 %v6414, %v6417
      %v6419 = vsel %vm1640, %v6410, %v6418
      %v6454 = vunpack.c.l.b16 %v6350
      %v6455 = vunpack.c.h.b16 %v6350
      %v6456 = vunpack.c.l.b16 %v6351
      %v6457 = vunpack.c.h.b16 %v6351
      %v6458 = vunpack.c.l.b16 %v6352
      %v6459 = vunpack.c.h.b16 %v6352
      %v6460 = vunpack.c.l.b16 %v6353
      %v6461 = vunpack.c.h.b16 %v6353
      %v6462 = vunpack.c.l.b16 %v6354
      %v6463 = vunpack.c.h.b16 %v6354
      %v6464 = vunpack.c.l.b16 %v6355
      %v6465 = vunpack.c.h.b16 %v6355
      %v6466 = vunpack.c.l.b16 %v6356
      %v6467 = vunpack.c.h.b16 %v6356
      %v6468 = vunpack.c.l.b16 %v6357
      %v6469 = vunpack.c.h.b16 %v6357
      %v6470 = vunpack.c.l.b16 %v6358
      %v6471 = vunpack.c.h.b16 %v6358
      %v6472 = vunpack.c.l.b16 %v6359
      %v6473 = vunpack.c.h.b16 %v6359
      %v6474 = vunpack.c.l.b16 %v6360
      %v6475 = vunpack.c.h.b16 %v6360
      %v6476 = vunpack.c.l.b16 %v6361
      %v6477 = vunpack.c.h.b16 %v6361
      %v6478 = vunpack.c.l.b16 %v6362
      %v6479 = vunpack.c.h.b16 %v6362
      %v6480 = vunpack.c.l.b16 %v6363
      %v6481 = vunpack.c.h.b16 %v6363
      %v6482 = vunpack.c.l.b16 %v6364
      %v6483 = vunpack.c.h.b16 %v6364
      %v6484 = vunpack.c.l.b16 %v6365
      %v6485 = vunpack.c.h.b16 %v6365
      %v6486 = vunpack.c.l.b16 %v6366
      %v6487 = vunpack.c.h.b16 %v6366
      %v6488 = vunpack.c.l.b16 %v6367
      %v6489 = vunpack.c.h.b16 %v6367
      %v6490 = vunpack.c.l.b16 %v6368
      %v6491 = vunpack.c.h.b16 %v6368
      %v6492 = vunpack.c.l.b16 %v6369
      %v6493 = vunpack.c.h.b16 %v6369
      %v6494 = vunpack.c.l.b16 %v6370
      %v6495 = vunpack.c.h.b16 %v6370
      %v6496 = vunpack.c.l.b16 %v6371
      %v6497 = vunpack.c.h.b16 %v6371
      %v6498 = vunpack.c.l.b16 %v6372
      %v6499 = vunpack.c.h.b16 %v6372
      %v6500 = vunpack.c.l.b16 %v6373
      %v6501 = vunpack.c.h.b16 %v6373
      %v6502 = vunpack.c.l.b16 %v6374
      %v6503 = vunpack.c.h.b16 %v6374
      %v6504 = vunpack.c.l.b16 %v6375
      %v6505 = vunpack.c.h.b16 %v6375
      %v6506 = vunpack.c.l.b16 %v6376
      %v6507 = vunpack.c.h.b16 %v6376
      %v6508 = vunpack.c.l.b16 %v6377
      %v6509 = vunpack.c.h.b16 %v6377
      %v6510 = vunpack.c.l.b16 %v6378
      %v6511 = vunpack.c.h.b16 %v6378
      %v6512 = vunpack.c.l.b16 %v6379
      %v6513 = vunpack.c.h.b16 %v6379
      %v6514 = vunpack.c.l.b16 %v6380
      %v6515 = vunpack.c.h.b16 %v6380
      %v6516 = vunpack.c.l.b16 %v6381
      %v6517 = vunpack.c.h.b16 %v6381
      %v6518 = vpack.c.b16 %v6456, %v6454
      %v6519 = vpack.c.b16 %v6457, %v6455
      %v6520 = vpack.c.b16 %v6460, %v6458
      %v6521 = vpack.c.b16 %v6461, %v6459
      %v6522 = vpack.c.b16 %v6464, %v6462
      %v6523 = vpack.c.b16 %v6465, %v6463
      %v6524 = vpack.c.b16 %v6468, %v6466
      %v6525 = vpack.c.b16 %v6469, %v6467
      %v6526 = vpack.c.b16 %v6472, %v6470
      %v6527 = vpack.c.b16 %v6473, %v6471
      %v6528 = vpack.c.b16 %v6476, %v6474
      %v6529 = vpack.c.b16 %v6477, %v6475
      %v6530 = vpack.c.b16 %v6480, %v6478
      %v6531 = vpack.c.b16 %v6481, %v6479
      %v6532 = vpack.c.b16 %v6484, %v6482
      %v6533 = vpack.c.b16 %v6485, %v6483
      %v6534 = vpack.c.b16 %v6488, %v6486
      %v6535 = vpack.c.b16 %v6489, %v6487
      %v6536 = vpack.c.b16 %v6492, %v6490
      %v6537 = vpack.c.b16 %v6493, %v6491
      %v6538 = vpack.c.b16 %v6496, %v6494
      %v6539 = vpack.c.b16 %v6497, %v6495
      %v6540 = vpack.c.b16 %v6500, %v6498
      %v6541 = vpack.c.b16 %v6501, %v6499
      %v6542 = vpack.c.b16 %v6504, %v6502
      %v6543 = vpack.c.b16 %v6505, %v6503
      %v6544 = vpack.c.b16 %v6508, %v6506
      %v6545 = vpack.c.b16 %v6509, %v6507
      %v6546 = vpack.c.b16 %v6512, %v6510
      %v6547 = vpack.c.b16 %v6513, %v6511
      %v6548 = vpack.c.b16 %v6516, %v6514
      %v6549 = vpack.c.b16 %v6517, %v6515
      %6582 = vmatprep.subr.bf16.mxu0 %v6519
      %6583 = vmatpush1.bf16.msra.mxu0 %v6518
      %6584 = vmatprep.subr.bf16.mxu0 %v6521
      %6585 = vmatpush1.bf16.msra.mxu0 %v6520
      %6586 = vmatprep.subr.bf16.mxu0 %v6523
      %6587 = vmatpush1.bf16.msra.mxu0 %v6522
      %6588 = vmatprep.subr.bf16.mxu0 %v6525
      %6589 = vmatpush1.bf16.msra.mxu0 %v6524
      %6590 = vmatprep.subr.bf16.mxu0 %v6527
      %6591 = vmatpush1.bf16.msra.mxu0 %v6526
      %6592 = vmatprep.subr.bf16.mxu0 %v6529
      %6593 = vmatpush1.bf16.msra.mxu0 %v6528
      %6594 = vmatprep.subr.bf16.mxu0 %v6531
      %6595 = vmatpush1.bf16.msra.mxu0 %v6530
      %6596 = vmatprep.subr.bf16.mxu0 %v6533
      %6597 = vmatpush1.bf16.msra.mxu0 %v6532
      %6598 = vmatprep.subr.bf16.mxu0 %v6535
      %6599 = vmatpush1.bf16.msra.mxu0 %v6534
      %6600 = vmatprep.subr.bf16.mxu0 %v6537
      %6601 = vmatpush1.bf16.msra.mxu0 %v6536
      %6602 = vmatprep.subr.bf16.mxu0 %v6539
      %6603 = vmatpush1.bf16.msra.mxu0 %v6538
      %6604 = vmatprep.subr.bf16.mxu0 %v6541
      %6605 = vmatpush1.bf16.msra.mxu0 %v6540
      %6606 = vmatprep.subr.bf16.mxu0 %v6543
      %6607 = vmatpush1.bf16.msra.mxu0 %v6542
      %6608 = vmatprep.subr.bf16.mxu0 %v6545
      %6609 = vmatpush1.bf16.msra.mxu0 %v6544
      %6610 = vmatprep.subr.bf16.mxu0 %v6547
      %6611 = vmatpush1.bf16.msra.mxu0 %v6546
      %6612 = vmatprep.subr.bf16.mxu0 %v6549
      %6613 = vmatpush1.bf16.msra.mxu0 %v6548
      %6614 = vmatprep.mubr.bf16.mxu0 %v6419
      %6615 = vmatmul.mubr.bf16.gmra.mrb[0].mxu0 %v6402
      %v6616 = vpop.f32.mrb[0].mxu0
      %v6617 = vadd.f32 0.0, %v6616
      %v6618 = vpop.f32.mrb[0].mxu0
      %v6619 = vadd.f32 0.0, %v6618
      %v6620 = vpop.f32.mrb[0].mxu0
      %v6621 = vadd.f32 0.0, %v6620
      %v6622 = vpop.f32.mrb[0].mxu0
      %v6623 = vadd.f32 0.0, %v6622
      %6624 = vdwg.mxu0
      %v6625 = vld [vmem:[#allocation5] sm:$0xff]
      %v6626 = vld [vmem:[#allocation5 + $0x8] sm:$0xff]
      %v6627 = vld [vmem:[#allocation5 + $0x10] sm:$0xff]
      %v6628 = vld [vmem:[#allocation5 + $0x18] sm:$0xff]
      %v6629 = vadd.f32 %v6625, %v6617
      %v6630 = vadd.f32 %v6626, %v6619
      %v6631 = vadd.f32 %v6627, %v6621
      %v6632 = vadd.f32 %v6628, %v6623
      %6633 = vst [vmem:[#allocation5] sm:$0xff] %v6629
      %6634 = vst [vmem:[#allocation5 + $0x8] sm:$0xff] %v6630
      %6635 = vst [vmem:[#allocation5 + $0x10] sm:$0xff] %v6631
      %6636 = vst [vmem:[#allocation5 + $0x18] sm:$0xff] %v6632
      %v6637 = vld [vmem:[#allocation3 + $0x10] sm:$0xf0]
      %v6638 = vld [vmem:[#allocation3 + $0x18] sm:$0xf0]
      %v6639 = vld [vmem:[#allocation3 + $0x20] sm:$0xff]
      %v6640 = vld [vmem:[#allocation3 + $0x28] sm:$0xff]
      %v6641 = vld [vmem:[#allocation3 + $0x30] sm:$0xf]
      %v6642 = vld [vmem:[#allocation3 + $0x38] sm:$0xf]
      %s6643 = scalar_lea.vmem %s5, 3072
      %v6644 = vld [vmem:[%s6643] sm:$0xff]
      %v6645 = vld [vmem:[%s6643 + $0x8] sm:$0xff]
      %v6646 = vld [vmem:[%s6643 + $0x10] sm:$0xff]
      %v6647 = vld [vmem:[%s6643 + $0x18] sm:$0xff]
      %v6648 = vld [vmem:[%s6643 + $0x20] sm:$0xff]
      %v6649 = vld [vmem:[%s6643 + $0x28] sm:$0xff]
      %v6650 = vld [vmem:[%s6643 + $0x30] sm:$0xff]
      %v6651 = vld [vmem:[%s6643 + $0x38] sm:$0xff]
      %v6652 = vld [vmem:[%s6643 + $0x40] sm:$0xff]
      %v6653 = vld [vmem:[%s6643 + $0x48] sm:$0xff]
      %v6654 = vld [vmem:[%s6643 + $0x50] sm:$0xff]
      %v6655 = vld [vmem:[%s6643 + $0x58] sm:$0xff]
      %v6656 = vld [vmem:[%s6643 + $0x60] sm:$0xff]
      %v6657 = vld [vmem:[%s6643 + $0x68] sm:$0xff]
      %v6658 = vld [vmem:[%s6643 + $0x70] sm:$0xff]
      %v6659 = vld [vmem:[%s6643 + $0x78] sm:$0xff]
      %v6660 = vld [vmem:[%s6643 + $0x80] sm:$0xff]
      %v6661 = vld [vmem:[%s6643 + $0x88] sm:$0xff]
      %v6662 = vld [vmem:[%s6643 + $0x90] sm:$0xff]
      %v6663 = vld [vmem:[%s6643 + $0x98] sm:$0xff]
      %v6664 = vld [vmem:[%s6643 + $0xa0] sm:$0xff]
      %v6665 = vld [vmem:[%s6643 + $0xa8] sm:$0xff]
      %v6666 = vld [vmem:[%s6643 + $0xb0] sm:$0xff]
      %v6667 = vld [vmem:[%s6643 + $0xb8] sm:$0xff]
      %v6668 = vld [vmem:[%s6643 + $0xc0] sm:$0xff]
      %v6669 = vld [vmem:[%s6643 + $0xc8] sm:$0xff]
      %v6670 = vld [vmem:[%s6643 + $0xd0] sm:$0xff]
      %v6671 = vld [vmem:[%s6643 + $0xd8] sm:$0xff]
      %v6672 = vld [vmem:[%s6643 + $0xe0] sm:$0xff]
      %v6673 = vld [vmem:[%s6643 + $0xe8] sm:$0xff]
      %v6674 = vld [vmem:[%s6643 + $0xf0] sm:$0xff]
      %v6675 = vld [vmem:[%s6643 + $0xf8] sm:$0xff]
      %v6676 = vpack.c.bf16 %v6639, %v6637
      %v6677 = vpack.c.bf16 %v6640, %v6638
      %v6678 = vpack.c.bf16 %v6641, %v6641
      %v6679 = vpack.c.bf16 %v6642, %v6642
      %v6684 = vrot.slane %v6676, 2
      %v6685 = vrot.slane %v6678, 2
      %v6686 = vsel %vm1939, %v6684, %v6685
      %v6687 = vrot.slane %v6677, 2
      %v6688 = vrot.slane %v6679, 2
      %v6689 = vsel %vm1939, %v6687, %v6688
      %v6724 = vunpack.c.l.b16 %v6644
      %v6725 = vunpack.c.h.b16 %v6644
      %v6726 = vunpack.c.l.b16 %v6645
      %v6727 = vunpack.c.h.b16 %v6645
      %v6728 = vunpack.c.l.b16 %v6646
      %v6729 = vunpack.c.h.b16 %v6646
      %v6730 = vunpack.c.l.b16 %v6647
      %v6731 = vunpack.c.h.b16 %v6647
      %v6732 = vunpack.c.l.b16 %v6648
      %v6733 = vunpack.c.h.b16 %v6648
      %v6734 = vunpack.c.l.b16 %v6649
      %v6735 = vunpack.c.h.b16 %v6649
      %v6736 = vunpack.c.l.b16 %v6650
      %v6737 = vunpack.c.h.b16 %v6650
      %v6738 = vunpack.c.l.b16 %v6651
      %v6739 = vunpack.c.h.b16 %v6651
      %v6740 = vunpack.c.l.b16 %v6652
      %v6741 = vunpack.c.h.b16 %v6652
      %v6742 = vunpack.c.l.b16 %v6653
      %v6743 = vunpack.c.h.b16 %v6653
      %v6744 = vunpack.c.l.b16 %v6654
      %v6745 = vunpack.c.h.b16 %v6654
      %v6746 = vunpack.c.l.b16 %v6655
      %v6747 = vunpack.c.h.b16 %v6655
      %v6748 = vunpack.c.l.b16 %v6656
      %v6749 = vunpack.c.h.b16 %v6656
      %v6750 = vunpack.c.l.b16 %v6657
      %v6751 = vunpack.c.h.b16 %v6657
      %v6752 = vunpack.c.l.b16 %v6658
      %v6753 = vunpack.c.h.b16 %v6658
      %v6754 = vunpack.c.l.b16 %v6659
      %v6755 = vunpack.c.h.b16 %v6659
      %v6756 = vunpack.c.l.b16 %v6660
      %v6757 = vunpack.c.h.b16 %v6660
      %v6758 = vunpack.c.l.b16 %v6661
      %v6759 = vunpack.c.h.b16 %v6661
      %v6760 = vunpack.c.l.b16 %v6662
      %v6761 = vunpack.c.h.b16 %v6662
      %v6762 = vunpack.c.l.b16 %v6663
      %v6763 = vunpack.c.h.b16 %v6663
      %v6764 = vunpack.c.l.b16 %v6664
      %v6765 = vunpack.c.h.b16 %v6664
      %v6766 = vunpack.c.l.b16 %v6665
      %v6767 = vunpack.c.h.b16 %v6665
      %v6768 = vunpack.c.l.b16 %v6666
      %v6769 = vunpack.c.h.b16 %v6666
      %v6770 = vunpack.c.l.b16 %v6667
      %v6771 = vunpack.c.h.b16 %v6667
      %v6772 = vunpack.c.l.b16 %v6668
      %v6773 = vunpack.c.h.b16 %v6668
      %v6774 = vunpack.c.l.b16 %v6669
      %v6775 = vunpack.c.h.b16 %v6669
      %v6776 = vunpack.c.l.b16 %v6670
      %v6777 = vunpack.c.h.b16 %v6670
      %v6778 = vunpack.c.l.b16 %v6671
      %v6779 = vunpack.c.h.b16 %v6671
      %v6780 = vunpack.c.l.b16 %v6672
      %v6781 = vunpack.c.h.b16 %v6672
      %v6782 = vunpack.c.l.b16 %v6673
      %v6783 = vunpack.c.h.b16 %v6673
      %v6784 = vunpack.c.l.b16 %v6674
      %v6785 = vunpack.c.h.b16 %v6674
      %v6786 = vunpack.c.l.b16 %v6675
      %v6787 = vunpack.c.h.b16 %v6675
      %v6788 = vpack.c.b16 %v6726, %v6724
      %v6789 = vpack.c.b16 %v6727, %v6725
      %v6790 = vpack.c.b16 %v6730, %v6728
      %v6791 = vpack.c.b16 %v6731, %v6729
      %v6792 = vpack.c.b16 %v6734, %v6732
      %v6793 = vpack.c.b16 %v6735, %v6733
      %v6794 = vpack.c.b16 %v6738, %v6736
      %v6795 = vpack.c.b16 %v6739, %v6737
      %v6796 = vpack.c.b16 %v6742, %v6740
      %v6797 = vpack.c.b16 %v6743, %v6741
      %v6798 = vpack.c.b16 %v6746, %v6744
      %v6799 = vpack.c.b16 %v6747, %v6745
      %v6800 = vpack.c.b16 %v6750, %v6748
      %v6801 = vpack.c.b16 %v6751, %v6749
      %v6802 = vpack.c.b16 %v6754, %v6752
      %v6803 = vpack.c.b16 %v6755, %v6753
      %v6804 = vpack.c.b16 %v6758, %v6756
      %v6805 = vpack.c.b16 %v6759, %v6757
      %v6806 = vpack.c.b16 %v6762, %v6760
      %v6807 = vpack.c.b16 %v6763, %v6761
      %v6808 = vpack.c.b16 %v6766, %v6764
      %v6809 = vpack.c.b16 %v6767, %v6765
      %v6810 = vpack.c.b16 %v6770, %v6768
      %v6811 = vpack.c.b16 %v6771, %v6769
      %v6812 = vpack.c.b16 %v6774, %v6772
      %v6813 = vpack.c.b16 %v6775, %v6773
      %v6814 = vpack.c.b16 %v6778, %v6776
      %v6815 = vpack.c.b16 %v6779, %v6777
      %v6816 = vpack.c.b16 %v6782, %v6780
      %v6817 = vpack.c.b16 %v6783, %v6781
      %v6818 = vpack.c.b16 %v6786, %v6784
      %v6819 = vpack.c.b16 %v6787, %v6785
      %6852 = vmatprep.subr.bf16.mxu0 %v6789
      %6853 = vmatpush1.bf16.msra.mxu0 %v6788
      %6854 = vmatprep.subr.bf16.mxu0 %v6791
      %6855 = vmatpush1.bf16.msra.mxu0 %v6790
      %6856 = vmatprep.subr.bf16.mxu0 %v6793
      %6857 = vmatpush1.bf16.msra.mxu0 %v6792
      %6858 = vmatprep.subr.bf16.mxu0 %v6795
      %6859 = vmatpush1.bf16.msra.mxu0 %v6794
      %6860 = vmatprep.subr.bf16.mxu0 %v6797
      %6861 = vmatpush1.bf16.msra.mxu0 %v6796
      %6862 = vmatprep.subr.bf16.mxu0 %v6799
      %6863 = vmatpush1.bf16.msra.mxu0 %v6798
      %6864 = vmatprep.subr.bf16.mxu0 %v6801
      %6865 = vmatpush1.bf16.msra.mxu0 %v6800
      %6866 = vmatprep.subr.bf16.mxu0 %v6803
      %6867 = vmatpush1.bf16.msra.mxu0 %v6802
      %6868 = vmatprep.subr.bf16.mxu0 %v6805
      %6869 = vmatpush1.bf16.msra.mxu0 %v6804
      %6870 = vmatprep.subr.bf16.mxu0 %v6807
      %6871 = vmatpush1.bf16.msra.mxu0 %v6806
      %6872 = vmatprep.subr.bf16.mxu0 %v6809
      %6873 = vmatpush1.bf16.msra.mxu0 %v6808
      %6874 = vmatprep.subr.bf16.mxu0 %v6811
      %6875 = vmatpush1.bf16.msra.mxu0 %v6810
      %6876 = vmatprep.subr.bf16.mxu0 %v6813
      %6877 = vmatpush1.bf16.msra.mxu0 %v6812
      %6878 = vmatprep.subr.bf16.mxu0 %v6815
      %6879 = vmatpush1.bf16.msra.mxu0 %v6814
      %6880 = vmatprep.subr.bf16.mxu0 %v6817
      %6881 = vmatpush1.bf16.msra.mxu0 %v6816
      %6882 = vmatprep.subr.bf16.mxu0 %v6819
      %6883 = vmatpush1.bf16.msra.mxu0 %v6818
      %6884 = vmatprep.mubr.bf16.mxu0 %v6689
      %6885 = vmatmul.mubr.bf16.gmra.mrb[0].mxu0 %v6686
      %v6886 = vpop.f32.mrb[0].mxu0
      %v6887 = vadd.f32 0.0, %v6886
      %v6888 = vpop.f32.mrb[0].mxu0
      %v6889 = vadd.f32 0.0, %v6888
      %v6890 = vpop.f32.mrb[0].mxu0
      %v6891 = vadd.f32 0.0, %v6890
      %v6892 = vpop.f32.mrb[0].mxu0
      %v6893 = vadd.f32 0.0, %v6892
      %6894 = vdwg.mxu0
      %v6895 = vld [vmem:[#allocation5] sm:$0xff]
      %v6896 = vld [vmem:[#allocation5 + $0x8] sm:$0xff]
      %v6897 = vld [vmem:[#allocation5 + $0x10] sm:$0xff]
      %v6898 = vld [vmem:[#allocation5 + $0x18] sm:$0xff]
      %v6899 = vadd.f32 %v6895, %v6887
      %v6900 = vadd.f32 %v6896, %v6889
      %v6901 = vadd.f32 %v6897, %v6891
      %v6902 = vadd.f32 %v6898, %v6893
      %6903 = vst [vmem:[#allocation5] sm:$0xff] %v6899
      %6904 = vst [vmem:[#allocation5 + $0x8] sm:$0xff] %v6900
      %6905 = vst [vmem:[#allocation5 + $0x10] sm:$0xff] %v6901
      %6906 = vst [vmem:[#allocation5 + $0x18] sm:$0xff] %v6902
      %v6907 = vld [vmem:[#allocation3 + $0x10] sm:$0xe0]
      %v6908 = vld [vmem:[#allocation3 + $0x18] sm:$0xe0]
      %v6909 = vld [vmem:[#allocation3 + $0x20] sm:$0xff]
      %v6910 = vld [vmem:[#allocation3 + $0x28] sm:$0xff]
      %v6911 = vld [vmem:[#allocation3 + $0x30] sm:$0x1f]
      %v6912 = vld [vmem:[#allocation3 + $0x38] sm:$0x1f]
      %s6913 = scalar_lea.vmem %s5, 3328
      %v6914 = vld [vmem:[%s6913] sm:$0xff]
      %v6915 = vld [vmem:[%s6913 + $0x8] sm:$0xff]
      %v6916 = vld [vmem:[%s6913 + $0x10] sm:$0xff]
      %v6917 = vld [vmem:[%s6913 + $0x18] sm:$0xff]
      %v6918 = vld [vmem:[%s6913 + $0x20] sm:$0xff]
      %v6919 = vld [vmem:[%s6913 + $0x28] sm:$0xff]
      %v6920 = vld [vmem:[%s6913 + $0x30] sm:$0xff]
      %v6921 = vld [vmem:[%s6913 + $0x38] sm:$0xff]
      %v6922 = vld [vmem:[%s6913 + $0x40] sm:$0xff]
      %v6923 = vld [vmem:[%s6913 + $0x48] sm:$0xff]
      %v6924 = vld [vmem:[%s6913 + $0x50] sm:$0xff]
      %v6925 = vld [vmem:[%s6913 + $0x58] sm:$0xff]
      %v6926 = vld [vmem:[%s6913 + $0x60] sm:$0xff]
      %v6927 = vld [vmem:[%s6913 + $0x68] sm:$0xff]
      %v6928 = vld [vmem:[%s6913 + $0x70] sm:$0xff]
      %v6929 = vld [vmem:[%s6913 + $0x78] sm:$0xff]
      %v6930 = vld [vmem:[%s6913 + $0x80] sm:$0xff]
      %v6931 = vld [vmem:[%s6913 + $0x88] sm:$0xff]
      %v6932 = vld [vmem:[%s6913 + $0x90] sm:$0xff]
      %v6933 = vld [vmem:[%s6913 + $0x98] sm:$0xff]
      %v6934 = vld [vmem:[%s6913 + $0xa0] sm:$0xff]
      %v6935 = vld [vmem:[%s6913 + $0xa8] sm:$0xff]
      %v6936 = vld [vmem:[%s6913 + $0xb0] sm:$0xff]
      %v6937 = vld [vmem:[%s6913 + $0xb8] sm:$0xff]
      %v6938 = vld [vmem:[%s6913 + $0xc0] sm:$0xff]
      %v6939 = vld [vmem:[%s6913 + $0xc8] sm:$0xff]
      %v6940 = vld [vmem:[%s6913 + $0xd0] sm:$0xff]
      %v6941 = vld [vmem:[%s6913 + $0xd8] sm:$0xff]
      %v6942 = vld [vmem:[%s6913 + $0xe0] sm:$0xff]
      %v6943 = vld [vmem:[%s6913 + $0xe8] sm:$0xff]
      %v6944 = vld [vmem:[%s6913 + $0xf0] sm:$0xff]
      %v6945 = vld [vmem:[%s6913 + $0xf8] sm:$0xff]
      %v6946 = vpack.c.bf16 %v6909, %v6907
      %v6947 = vpack.c.bf16 %v6910, %v6908
      %v6948 = vpack.c.bf16 %v6911, %v6911
      %v6949 = vpack.c.bf16 %v6912, %v6912
      %v6951 = vshrl.u32 %v6946, 16
      %v6953 = vrot.slane %v6951, 2
      %v6954 = vshll.u32 %v6946, 16
      %v6956 = vrot.slane %v6954, 3
      %v6957 = vor.u32 %v6953, %v6956
      %v6959 = vshrl.u32 %v6948, 16
      %v6961 = vrot.slane %v6959, 2
      %v6962 = vshll.u32 %v6948, 16
      %v6964 = vrot.slane %v6962, 3
      %v6965 = vor.u32 %v6961, %v6964
      %v6966 = vsel %vm2206, %v6957, %v6965
      %v6968 = vshrl.u32 %v6947, 16
      %v6970 = vrot.slane %v6968, 2
      %v6971 = vshll.u32 %v6947, 16
      %v6973 = vrot.slane %v6971, 3
      %v6974 = vor.u32 %v6970, %v6973
      %v6976 = vshrl.u32 %v6949, 16
      %v6978 = vrot.slane %v6976, 2
      %v6979 = vshll.u32 %v6949, 16
      %v6981 = vrot.slane %v6979, 3
      %v6982 = vor.u32 %v6978, %v6981
      %v6983 = vsel %vm2206, %v6974, %v6982
      %v7018 = vunpack.c.l.b16 %v6914
      %v7019 = vunpack.c.h.b16 %v6914
      %v7020 = vunpack.c.l.b16 %v6915
      %v7021 = vunpack.c.h.b16 %v6915
      %v7022 = vunpack.c.l.b16 %v6916
      %v7023 = vunpack.c.h.b16 %v6916
      %v7024 = vunpack.c.l.b16 %v6917
      %v7025 = vunpack.c.h.b16 %v6917
      %v7026 = vunpack.c.l.b16 %v6918
      %v7027 = vunpack.c.h.b16 %v6918
      %v7028 = vunpack.c.l.b16 %v6919
      %v7029 = vunpack.c.h.b16 %v6919
      %v7030 = vunpack.c.l.b16 %v6920
      %v7031 = vunpack.c.h.b16 %v6920
      %v7032 = vunpack.c.l.b16 %v6921
      %v7033 = vunpack.c.h.b16 %v6921
      %v7034 = vunpack.c.l.b16 %v6922
      %v7035 = vunpack.c.h.b16 %v6922
      %v7036 = vunpack.c.l.b16 %v6923
      %v7037 = vunpack.c.h.b16 %v6923
      %v7038 = vunpack.c.l.b16 %v6924
      %v7039 = vunpack.c.h.b16 %v6924
      %v7040 = vunpack.c.l.b16 %v6925
      %v7041 = vunpack.c.h.b16 %v6925
      %v7042 = vunpack.c.l.b16 %v6926
      %v7043 = vunpack.c.h.b16 %v6926
      %v7044 = vunpack.c.l.b16 %v6927
      %v7045 = vunpack.c.h.b16 %v6927
      %v7046 = vunpack.c.l.b16 %v6928
      %v7047 = vunpack.c.h.b16 %v6928
      %v7048 = vunpack.c.l.b16 %v6929
      %v7049 = vunpack.c.h.b16 %v6929
      %v7050 = vunpack.c.l.b16 %v6930
      %v7051 = vunpack.c.h.b16 %v6930
      %v7052 = vunpack.c.l.b16 %v6931
      %v7053 = vunpack.c.h.b16 %v6931
      %v7054 = vunpack.c.l.b16 %v6932
      %v7055 = vunpack.c.h.b16 %v6932
      %v7056 = vunpack.c.l.b16 %v6933
      %v7057 = vunpack.c.h.b16 %v6933
      %v7058 = vunpack.c.l.b16 %v6934
      %v7059 = vunpack.c.h.b16 %v6934
      %v7060 = vunpack.c.l.b16 %v6935
      %v7061 = vunpack.c.h.b16 %v6935
      %v7062 = vunpack.c.l.b16 %v6936
      %v7063 = vunpack.c.h.b16 %v6936
      %v7064 = vunpack.c.l.b16 %v6937
      %v7065 = vunpack.c.h.b16 %v6937
      %v7066 = vunpack.c.l.b16 %v6938
      %v7067 = vunpack.c.h.b16 %v6938
      %v7068 = vunpack.c.l.b16 %v6939
      %v7069 = vunpack.c.h.b16 %v6939
      %v7070 = vunpack.c.l.b16 %v6940
      %v7071 = vunpack.c.h.b16 %v6940
      %v7072 = vunpack.c.l.b16 %v6941
      %v7073 = vunpack.c.h.b16 %v6941
      %v7074 = vunpack.c.l.b16 %v6942
      %v7075 = vunpack.c.h.b16 %v6942
      %v7076 = vunpack.c.l.b16 %v6943
      %v7077 = vunpack.c.h.b16 %v6943
      %v7078 = vunpack.c.l.b16 %v6944
      %v7079 = vunpack.c.h.b16 %v6944
      %v7080 = vunpack.c.l.b16 %v6945
      %v7081 = vunpack.c.h.b16 %v6945
      %v7082 = vpack.c.b16 %v7020, %v7018
      %v7083 = vpack.c.b16 %v7021, %v7019
      %v7084 = vpack.c.b16 %v7024, %v7022
      %v7085 = vpack.c.b16 %v7025, %v7023
      %v7086 = vpack.c.b16 %v7028, %v7026
      %v7087 = vpack.c.b16 %v7029, %v7027
      %v7088 = vpack.c.b16 %v7032, %v7030
      %v7089 = vpack.c.b16 %v7033, %v7031
      %v7090 = vpack.c.b16 %v7036, %v7034
      %v7091 = vpack.c.b16 %v7037, %v7035
      %v7092 = vpack.c.b16 %v7040, %v7038
      %v7093 = vpack.c.b16 %v7041, %v7039
      %v7094 = vpack.c.b16 %v7044, %v7042
      %v7095 = vpack.c.b16 %v7045, %v7043
      %v7096 = vpack.c.b16 %v7048, %v7046
      %v7097 = vpack.c.b16 %v7049, %v7047
      %v7098 = vpack.c.b16 %v7052, %v7050
      %v7099 = vpack.c.b16 %v7053, %v7051
      %v7100 = vpack.c.b16 %v7056, %v7054
      %v7101 = vpack.c.b16 %v7057, %v7055
      %v7102 = vpack.c.b16 %v7060, %v7058
      %v7103 = vpack.c.b16 %v7061, %v7059
      %v7104 = vpack.c.b16 %v7064, %v7062
      %v7105 = vpack.c.b16 %v7065, %v7063
      %v7106 = vpack.c.b16 %v7068, %v7066
      %v7107 = vpack.c.b16 %v7069, %v7067
      %v7108 = vpack.c.b16 %v7072, %v7070
      %v7109 = vpack.c.b16 %v7073, %v7071
      %v7110 = vpack.c.b16 %v7076, %v7074
      %v7111 = vpack.c.b16 %v7077, %v7075
      %v7112 = vpack.c.b16 %v7080, %v7078
      %v7113 = vpack.c.b16 %v7081, %v7079
      %7146 = vmatprep.subr.bf16.mxu0 %v7083
      %7147 = vmatpush1.bf16.msra.mxu0 %v7082
      %7148 = vmatprep.subr.bf16.mxu0 %v7085
      %7149 = vmatpush1.bf16.msra.mxu0 %v7084
      %7150 = vmatprep.subr.bf16.mxu0 %v7087
      %7151 = vmatpush1.bf16.msra.mxu0 %v7086
      %7152 = vmatprep.subr.bf16.mxu0 %v7089
      %7153 = vmatpush1.bf16.msra.mxu0 %v7088
      %7154 = vmatprep.subr.bf16.mxu0 %v7091
      %7155 = vmatpush1.bf16.msra.mxu0 %v7090
      %7156 = vmatprep.subr.bf16.mxu0 %v7093
      %7157 = vmatpush1.bf16.msra.mxu0 %v7092
      %7158 = vmatprep.subr.bf16.mxu0 %v7095
      %7159 = vmatpush1.bf16.msra.mxu0 %v7094
      %7160 = vmatprep.subr.bf16.mxu0 %v7097
      %7161 = vmatpush1.bf16.msra.mxu0 %v7096
      %7162 = vmatprep.subr.bf16.mxu0 %v7099
      %7163 = vmatpush1.bf16.msra.mxu0 %v7098
      %7164 = vmatprep.subr.bf16.mxu0 %v7101
      %7165 = vmatpush1.bf16.msra.mxu0 %v7100
      %7166 = vmatprep.subr.bf16.mxu0 %v7103
      %7167 = vmatpush1.bf16.msra.mxu0 %v7102
      %7168 = vmatprep.subr.bf16.mxu0 %v7105
      %7169 = vmatpush1.bf16.msra.mxu0 %v7104
      %7170 = vmatprep.subr.bf16.mxu0 %v7107
      %7171 = vmatpush1.bf16.msra.mxu0 %v7106
      %7172 = vmatprep.subr.bf16.mxu0 %v7109
      %7173 = vmatpush1.bf16.msra.mxu0 %v7108
      %7174 = vmatprep.subr.bf16.mxu0 %v7111
      %7175 = vmatpush1.bf16.msra.mxu0 %v7110
      %7176 = vmatprep.subr.bf16.mxu0 %v7113
      %7177 = vmatpush1.bf16.msra.mxu0 %v7112
      %7178 = vmatprep.mubr.bf16.mxu0 %v6983
      %7179 = vmatmul.mubr.bf16.gmra.mrb[0].mxu0 %v6966
      %v7180 = vpop.f32.mrb[0].mxu0
      %v7181 = vadd.f32 0.0, %v7180
      %v7182 = vpop.f32.mrb[0].mxu0
      %v7183 = vadd.f32 0.0, %v7182
      %v7184 = vpop.f32.mrb[0].mxu0
      %v7185 = vadd.f32 0.0, %v7184
      %v7186 = vpop.f32.mrb[0].mxu0
      %v7187 = vadd.f32 0.0, %v7186
      %7188 = vdwg.mxu0
      %v7189 = vld [vmem:[#allocation5] sm:$0xff]
      %v7190 = vld [vmem:[#allocation5 + $0x8] sm:$0xff]
      %v7191 = vld [vmem:[#allocation5 + $0x10] sm:$0xff]
      %v7192 = vld [vmem:[#allocation5 + $0x18] sm:$0xff]
      %v7193 = vadd.f32 %v7189, %v7181
      %v7194 = vadd.f32 %v7190, %v7183
      %v7195 = vadd.f32 %v7191, %v7185
      %v7196 = vadd.f32 %v7192, %v7187
      %7197 = vst [vmem:[#allocation5] sm:$0xff] %v7193
      %7198 = vst [vmem:[#allocation5 + $0x8] sm:$0xff] %v7194
      %7199 = vst [vmem:[#allocation5 + $0x10] sm:$0xff] %v7195
      %7200 = vst [vmem:[#allocation5 + $0x18] sm:$0xff] %v7196
      %v7201 = vld [vmem:[#allocation3 + $0x10] sm:$0xc0]
      %v7202 = vld [vmem:[#allocation3 + $0x18] sm:$0xc0]
      %v7203 = vld [vmem:[#allocation3 + $0x20] sm:$0xff]
      %v7204 = vld [vmem:[#allocation3 + $0x28] sm:$0xff]
      %v7205 = vld [vmem:[#allocation3 + $0x30] sm:$0x3f]
      %v7206 = vld [vmem:[#allocation3 + $0x38] sm:$0x3f]
      %s7207 = scalar_lea.vmem %s5, 3584
      %v7208 = vld [vmem:[%s7207] sm:$0xff]
      %v7209 = vld [vmem:[%s7207 + $0x8] sm:$0xff]
      %v7210 = vld [vmem:[%s7207 + $0x10] sm:$0xff]
      %v7211 = vld [vmem:[%s7207 + $0x18] sm:$0xff]
      %v7212 = vld [vmem:[%s7207 + $0x20] sm:$0xff]
      %v7213 = vld [vmem:[%s7207 + $0x28] sm:$0xff]
      %v7214 = vld [vmem:[%s7207 + $0x30] sm:$0xff]
      %v7215 = vld [vmem:[%s7207 + $0x38] sm:$0xff]
      %v7216 = vld [vmem:[%s7207 + $0x40] sm:$0xff]
      %v7217 = vld [vmem:[%s7207 + $0x48] sm:$0xff]
      %v7218 = vld [vmem:[%s7207 + $0x50] sm:$0xff]
      %v7219 = vld [vmem:[%s7207 + $0x58] sm:$0xff]
      %v7220 = vld [vmem:[%s7207 + $0x60] sm:$0xff]
      %v7221 = vld [vmem:[%s7207 + $0x68] sm:$0xff]
      %v7222 = vld [vmem:[%s7207 + $0x70] sm:$0xff]
      %v7223 = vld [vmem:[%s7207 + $0x78] sm:$0xff]
      %v7224 = vld [vmem:[%s7207 + $0x80] sm:$0xff]
      %v7225 = vld [vmem:[%s7207 + $0x88] sm:$0xff]
      %v7226 = vld [vmem:[%s7207 + $0x90] sm:$0xff]
      %v7227 = vld [vmem:[%s7207 + $0x98] sm:$0xff]
      %v7228 = vld [vmem:[%s7207 + $0xa0] sm:$0xff]
      %v7229 = vld [vmem:[%s7207 + $0xa8] sm:$0xff]
      %v7230 = vld [vmem:[%s7207 + $0xb0] sm:$0xff]
      %v7231 = vld [vmem:[%s7207 + $0xb8] sm:$0xff]
      %v7232 = vld [vmem:[%s7207 + $0xc0] sm:$0xff]
      %v7233 = vld [vmem:[%s7207 + $0xc8] sm:$0xff]
      %v7234 = vld [vmem:[%s7207 + $0xd0] sm:$0xff]
      %v7235 = vld [vmem:[%s7207 + $0xd8] sm:$0xff]
      %v7236 = vld [vmem:[%s7207 + $0xe0] sm:$0xff]
      %v7237 = vld [vmem:[%s7207 + $0xe8] sm:$0xff]
      %v7238 = vld [vmem:[%s7207 + $0xf0] sm:$0xff]
      %v7239 = vld [vmem:[%s7207 + $0xf8] sm:$0xff]
      %v7240 = vpack.c.bf16 %v7203, %v7201
      %v7241 = vpack.c.bf16 %v7204, %v7202
      %v7242 = vpack.c.bf16 %v7205, %v7205
      %v7243 = vpack.c.bf16 %v7206, %v7206
      %v7248 = vrot.slane %v7240, 3
      %v7249 = vrot.slane %v7242, 3
      %v7250 = vsel %vm2505, %v7248, %v7249
      %v7251 = vrot.slane %v7241, 3
      %v7252 = vrot.slane %v7243, 3
      %v7253 = vsel %vm2505, %v7251, %v7252
      %v7288 = vunpack.c.l.b16 %v7208
      %v7289 = vunpack.c.h.b16 %v7208
      %v7290 = vunpack.c.l.b16 %v7209
      %v7291 = vunpack.c.h.b16 %v7209
      %v7292 = vunpack.c.l.b16 %v7210
      %v7293 = vunpack.c.h.b16 %v7210
      %v7294 = vunpack.c.l.b16 %v7211
      %v7295 = vunpack.c.h.b16 %v7211
      %v7296 = vunpack.c.l.b16 %v7212
      %v7297 = vunpack.c.h.b16 %v7212
      %v7298 = vunpack.c.l.b16 %v7213
      %v7299 = vunpack.c.h.b16 %v7213
      %v7300 = vunpack.c.l.b16 %v7214
      %v7301 = vunpack.c.h.b16 %v7214
      %v7302 = vunpack.c.l.b16 %v7215
      %v7303 = vunpack.c.h.b16 %v7215
      %v7304 = vunpack.c.l.b16 %v7216
      %v7305 = vunpack.c.h.b16 %v7216
      %v7306 = vunpack.c.l.b16 %v7217
      %v7307 = vunpack.c.h.b16 %v7217
      %v7308 = vunpack.c.l.b16 %v7218
      %v7309 = vunpack.c.h.b16 %v7218
      %v7310 = vunpack.c.l.b16 %v7219
      %v7311 = vunpack.c.h.b16 %v7219
      %v7312 = vunpack.c.l.b16 %v7220
      %v7313 = vunpack.c.h.b16 %v7220
      %v7314 = vunpack.c.l.b16 %v7221
      %v7315 = vunpack.c.h.b16 %v7221
      %v7316 = vunpack.c.l.b16 %v7222
      %v7317 = vunpack.c.h.b16 %v7222
      %v7318 = vunpack.c.l.b16 %v7223
      %v7319 = vunpack.c.h.b16 %v7223
      %v7320 = vunpack.c.l.b16 %v7224
      %v7321 = vunpack.c.h.b16 %v7224
      %v7322 = vunpack.c.l.b16 %v7225
      %v7323 = vunpack.c.h.b16 %v7225
      %v7324 = vunpack.c.l.b16 %v7226
      %v7325 = vunpack.c.h.b16 %v7226
      %v7326 = vunpack.c.l.b16 %v7227
      %v7327 = vunpack.c.h.b16 %v7227
      %v7328 = vunpack.c.l.b16 %v7228
      %v7329 = vunpack.c.h.b16 %v7228
      %v7330 = vunpack.c.l.b16 %v7229
      %v7331 = vunpack.c.h.b16 %v7229
      %v7332 = vunpack.c.l.b16 %v7230
      %v7333 = vunpack.c.h.b16 %v7230
      %v7334 = vunpack.c.l.b16 %v7231
      %v7335 = vunpack.c.h.b16 %v7231
      %v7336 = vunpack.c.l.b16 %v7232
      %v7337 = vunpack.c.h.b16 %v7232
      %v7338 = vunpack.c.l.b16 %v7233
      %v7339 = vunpack.c.h.b16 %v7233
      %v7340 = vunpack.c.l.b16 %v7234
      %v7341 = vunpack.c.h.b16 %v7234
      %v7342 = vunpack.c.l.b16 %v7235
      %v7343 = vunpack.c.h.b16 %v7235
      %v7344 = vunpack.c.l.b16 %v7236
      %v7345 = vunpack.c.h.b16 %v7236
      %v7346 = vunpack.c.l.b16 %v7237
      %v7347 = vunpack.c.h.b16 %v7237
      %v7348 = vunpack.c.l.b16 %v7238
      %v7349 = vunpack.c.h.b16 %v7238
      %v7350 = vunpack.c.l.b16 %v7239
      %v7351 = vunpack.c.h.b16 %v7239
      %v7352 = vpack.c.b16 %v7290, %v7288
      %v7353 = vpack.c.b16 %v7291, %v7289
      %v7354 = vpack.c.b16 %v7294, %v7292
      %v7355 = vpack.c.b16 %v7295, %v7293
      %v7356 = vpack.c.b16 %v7298, %v7296
      %v7357 = vpack.c.b16 %v7299, %v7297
      %v7358 = vpack.c.b16 %v7302, %v7300
      %v7359 = vpack.c.b16 %v7303, %v7301
      %v7360 = vpack.c.b16 %v7306, %v7304
      %v7361 = vpack.c.b16 %v7307, %v7305
      %v7362 = vpack.c.b16 %v7310, %v7308
      %v7363 = vpack.c.b16 %v7311, %v7309
      %v7364 = vpack.c.b16 %v7314, %v7312
      %v7365 = vpack.c.b16 %v7315, %v7313
      %v7366 = vpack.c.b16 %v7318, %v7316
      %v7367 = vpack.c.b16 %v7319, %v7317
      %v7368 = vpack.c.b16 %v7322, %v7320
      %v7369 = vpack.c.b16 %v7323, %v7321
      %v7370 = vpack.c.b16 %v7326, %v7324
      %v7371 = vpack.c.b16 %v7327, %v7325
      %v7372 = vpack.c.b16 %v7330, %v7328
      %v7373 = vpack.c.b16 %v7331, %v7329
      %v7374 = vpack.c.b16 %v7334, %v7332
      %v7375 = vpack.c.b16 %v7335, %v7333
      %v7376 = vpack.c.b16 %v7338, %v7336
      %v7377 = vpack.c.b16 %v7339, %v7337
      %v7378 = vpack.c.b16 %v7342, %v7340
      %v7379 = vpack.c.b16 %v7343, %v7341
      %v7380 = vpack.c.b16 %v7346, %v7344
      %v7381 = vpack.c.b16 %v7347, %v7345
      %v7382 = vpack.c.b16 %v7350, %v7348
      %v7383 = vpack.c.b16 %v7351, %v7349
      %7416 = vmatprep.subr.bf16.mxu0 %v7353
      %7417 = vmatpush1.bf16.msra.mxu0 %v7352
      %7418 = vmatprep.subr.bf16.mxu0 %v7355
      %7419 = vmatpush1.bf16.msra.mxu0 %v7354
      %7420 = vmatprep.subr.bf16.mxu0 %v7357
      %7421 = vmatpush1.bf16.msra.mxu0 %v7356
      %7422 = vmatprep.subr.bf16.mxu0 %v7359
      %7423 = vmatpush1.bf16.msra.mxu0 %v7358
      %7424 = vmatprep.subr.bf16.mxu0 %v7361
      %7425 = vmatpush1.bf16.msra.mxu0 %v7360
      %7426 = vmatprep.subr.bf16.mxu0 %v7363
      %7427 = vmatpush1.bf16.msra.mxu0 %v7362
      %7428 = vmatprep.subr.bf16.mxu0 %v7365
      %7429 = vmatpush1.bf16.msra.mxu0 %v7364
      %7430 = vmatprep.subr.bf16.mxu0 %v7367
      %7431 = vmatpush1.bf16.msra.mxu0 %v7366
      %7432 = vmatprep.subr.bf16.mxu0 %v7369
      %7433 = vmatpush1.bf16.msra.mxu0 %v7368
      %7434 = vmatprep.subr.bf16.mxu0 %v7371
      %7435 = vmatpush1.bf16.msra.mxu0 %v7370
      %7436 = vmatprep.subr.bf16.mxu0 %v7373
      %7437 = vmatpush1.bf16.msra.mxu0 %v7372
      %7438 = vmatprep.subr.bf16.mxu0 %v7375
      %7439 = vmatpush1.bf16.msra.mxu0 %v7374
      %7440 = vmatprep.subr.bf16.mxu0 %v7377
      %7441 = vmatpush1.bf16.msra.mxu0 %v7376
      %7442 = vmatprep.subr.bf16.mxu0 %v7379
      %7443 = vmatpush1.bf16.msra.mxu0 %v7378
      %7444 = vmatprep.subr.bf16.mxu0 %v7381
      %7445 = vmatpush1.bf16.msra.mxu0 %v7380
      %7446 = vmatprep.subr.bf16.mxu0 %v7383
      %7447 = vmatpush1.bf16.msra.mxu0 %v7382
      %7448 = vmatprep.mubr.bf16.mxu0 %v7253
      %7449 = vmatmul.mubr.bf16.gmra.mrb[0].mxu0 %v7250
      %v7450 = vpop.f32.mrb[0].mxu0
      %v7451 = vadd.f32 0.0, %v7450
      %v7452 = vpop.f32.mrb[0].mxu0
      %v7453 = vadd.f32 0.0, %v7452
      %v7454 = vpop.f32.mrb[0].mxu0
      %v7455 = vadd.f32 0.0, %v7454
      %v7456 = vpop.f32.mrb[0].mxu0
      %v7457 = vadd.f32 0.0, %v7456
      %7458 = vdwg.mxu0
      %v7459 = vld [vmem:[#allocation5] sm:$0xff]
      %v7460 = vld [vmem:[#allocation5 + $0x8] sm:$0xff]
      %v7461 = vld [vmem:[#allocation5 + $0x10] sm:$0xff]
      %v7462 = vld [vmem:[#allocation5 + $0x18] sm:$0xff]
      %v7463 = vadd.f32 %v7459, %v7451
      %v7464 = vadd.f32 %v7460, %v7453
      %v7465 = vadd.f32 %v7461, %v7455
      %v7466 = vadd.f32 %v7462, %v7457
      %7467 = vst [vmem:[#allocation5] sm:$0xff] %v7463
      %7468 = vst [vmem:[#allocation5 + $0x8] sm:$0xff] %v7464
      %7469 = vst [vmem:[#allocation5 + $0x10] sm:$0xff] %v7465
      %7470 = vst [vmem:[#allocation5 + $0x18] sm:$0xff] %v7466
      %v7471 = vld [vmem:[#allocation3 + $0x10] sm:$0x80]
      %v7472 = vld [vmem:[#allocation3 + $0x18] sm:$0x80]
      %v7473 = vld [vmem:[#allocation3 + $0x20] sm:$0xff]
      %v7474 = vld [vmem:[#allocation3 + $0x28] sm:$0xff]
      %v7475 = vld [vmem:[#allocation3 + $0x30] sm:$0x7f]
      %v7476 = vld [vmem:[#allocation3 + $0x38] sm:$0x7f]
      %s7477 = scalar_lea.vmem %s5, 3840
      %v7478 = vld [vmem:[%s7477] sm:$0xff]
      %v7479 = vld [vmem:[%s7477 + $0x8] sm:$0xff]
      %v7480 = vld [vmem:[%s7477 + $0x10] sm:$0xff]
      %v7481 = vld [vmem:[%s7477 + $0x18] sm:$0xff]
      %v7482 = vld [vmem:[%s7477 + $0x20] sm:$0xff]
      %v7483 = vld [vmem:[%s7477 + $0x28] sm:$0xff]
      %v7484 = vld [vmem:[%s7477 + $0x30] sm:$0xff]
      %v7485 = vld [vmem:[%s7477 + $0x38] sm:$0xff]
      %v7486 = vld [vmem:[%s7477 + $0x40] sm:$0xff]
      %v7487 = vld [vmem:[%s7477 + $0x48] sm:$0xff]
      %v7488 = vld [vmem:[%s7477 + $0x50] sm:$0xff]
      %v7489 = vld [vmem:[%s7477 + $0x58] sm:$0xff]
      %v7490 = vld [vmem:[%s7477 + $0x60] sm:$0xff]
      %v7491 = vld [vmem:[%s7477 + $0x68] sm:$0xff]
      %v7492 = vld [vmem:[%s7477 + $0x70] sm:$0xff]
      %v7493 = vld [vmem:[%s7477 + $0x78] sm:$0xff]
      %v7494 = vld [vmem:[%s7477 + $0x80] sm:$0xff]
      %v7495 = vld [vmem:[%s7477 + $0x88] sm:$0xff]
      %v7496 = vld [vmem:[%s7477 + $0x90] sm:$0xff]
      %v7497 = vld [vmem:[%s7477 + $0x98] sm:$0xff]
      %v7498 = vld [vmem:[%s7477 + $0xa0] sm:$0xff]
      %v7499 = vld [vmem:[%s7477 + $0xa8] sm:$0xff]
      %v7500 = vld [vmem:[%s7477 + $0xb0] sm:$0xff]
      %v7501 = vld [vmem:[%s7477 + $0xb8] sm:$0xff]
      %v7502 = vld [vmem:[%s7477 + $0xc0] sm:$0xff]
      %v7503 = vld [vmem:[%s7477 + $0xc8] sm:$0xff]
      %v7504 = vld [vmem:[%s7477 + $0xd0] sm:$0xff]
      %v7505 = vld [vmem:[%s7477 + $0xd8] sm:$0xff]
      %v7506 = vld [vmem:[%s7477 + $0xe0] sm:$0xff]
      %v7507 = vld [vmem:[%s7477 + $0xe8] sm:$0xff]
      %v7508 = vld [vmem:[%s7477 + $0xf0] sm:$0xff]
      %v7509 = vld [vmem:[%s7477 + $0xf8] sm:$0xff]
      %v7510 = vpack.c.bf16 %v7473, %v7471
      %v7511 = vpack.c.bf16 %v7474, %v7472
      %v7512 = vpack.c.bf16 %v7475, %v7475
      %v7513 = vpack.c.bf16 %v7476, %v7476
      %v7515 = vshrl.u32 %v7510, 16
      %v7517 = vrot.slane %v7515, 3
      %v7518 = vshll.u32 %v7510, 16
      %v7520 = vrot.slane %v7518, 4
      %v7521 = vor.u32 %v7517, %v7520
      %v7523 = vshrl.u32 %v7512, 16
      %v7525 = vrot.slane %v7523, 3
      %v7526 = vshll.u32 %v7512, 16
      %v7528 = vrot.slane %v7526, 4
      %v7529 = vor.u32 %v7525, %v7528
      %v7530 = vsel %vm2772, %v7521, %v7529
      %v7532 = vshrl.u32 %v7511, 16
      %v7534 = vrot.slane %v7532, 3
      %v7535 = vshll.u32 %v7511, 16
      %v7537 = vrot.slane %v7535, 4
      %v7538 = vor.u32 %v7534, %v7537
      %v7540 = vshrl.u32 %v7513, 16
      %v7542 = vrot.slane %v7540, 3
      %v7543 = vshll.u32 %v7513, 16
      %v7545 = vrot.slane %v7543, 4
      %v7546 = vor.u32 %v7542, %v7545
      %v7547 = vsel %vm2772, %v7538, %v7546
      %v7582 = vunpack.c.l.b16 %v7478
      %v7583 = vunpack.c.h.b16 %v7478
      %v7584 = vunpack.c.l.b16 %v7479
      %v7585 = vunpack.c.h.b16 %v7479
      %v7586 = vunpack.c.l.b16 %v7480
      %v7587 = vunpack.c.h.b16 %v7480
      %v7588 = vunpack.c.l.b16 %v7481
      %v7589 = vunpack.c.h.b16 %v7481
      %v7590 = vunpack.c.l.b16 %v7482
      %v7591 = vunpack.c.h.b16 %v7482
      %v7592 = vunpack.c.l.b16 %v7483
      %v7593 = vunpack.c.h.b16 %v7483
      %v7594 = vunpack.c.l.b16 %v7484
      %v7595 = vunpack.c.h.b16 %v7484
      %v7596 = vunpack.c.l.b16 %v7485
      %v7597 = vunpack.c.h.b16 %v7485
      %v7598 = vunpack.c.l.b16 %v7486
      %v7599 = vunpack.c.h.b16 %v7486
      %v7600 = vunpack.c.l.b16 %v7487
      %v7601 = vunpack.c.h.b16 %v7487
      %v7602 = vunpack.c.l.b16 %v7488
      %v7603 = vunpack.c.h.b16 %v7488
      %v7604 = vunpack.c.l.b16 %v7489
      %v7605 = vunpack.c.h.b16 %v7489
      %v7606 = vunpack.c.l.b16 %v7490
      %v7607 = vunpack.c.h.b16 %v7490
      %v7608 = vunpack.c.l.b16 %v7491
      %v7609 = vunpack.c.h.b16 %v7491
      %v7610 = vunpack.c.l.b16 %v7492
      %v7611 = vunpack.c.h.b16 %v7492
      %v7612 = vunpack.c.l.b16 %v7493
      %v7613 = vunpack.c.h.b16 %v7493
      %v7614 = vunpack.c.l.b16 %v7494
      %v7615 = vunpack.c.h.b16 %v7494
      %v7616 = vunpack.c.l.b16 %v7495
      %v7617 = vunpack.c.h.b16 %v7495
      %v7618 = vunpack.c.l.b16 %v7496
      %v7619 = vunpack.c.h.b16 %v7496
      %v7620 = vunpack.c.l.b16 %v7497
      %v7621 = vunpack.c.h.b16 %v7497
      %v7622 = vunpack.c.l.b16 %v7498
      %v7623 = vunpack.c.h.b16 %v7498
      %v7624 = vunpack.c.l.b16 %v7499
      %v7625 = vunpack.c.h.b16 %v7499
      %v7626 = vunpack.c.l.b16 %v7500
      %v7627 = vunpack.c.h.b16 %v7500
      %v7628 = vunpack.c.l.b16 %v7501
      %v7629 = vunpack.c.h.b16 %v7501
      %v7630 = vunpack.c.l.b16 %v7502
      %v7631 = vunpack.c.h.b16 %v7502
      %v7632 = vunpack.c.l.b16 %v7503
      %v7633 = vunpack.c.h.b16 %v7503
      %v7634 = vunpack.c.l.b16 %v7504
      %v7635 = vunpack.c.h.b16 %v7504
      %v7636 = vunpack.c.l.b16 %v7505
      %v7637 = vunpack.c.h.b16 %v7505
      %v7638 = vunpack.c.l.b16 %v7506
      %v7639 = vunpack.c.h.b16 %v7506
      %v7640 = vunpack.c.l.b16 %v7507
      %v7641 = vunpack.c.h.b16 %v7507
      %v7642 = vunpack.c.l.b16 %v7508
      %v7643 = vunpack.c.h.b16 %v7508
      %v7644 = vunpack.c.l.b16 %v7509
      %v7645 = vunpack.c.h.b16 %v7509
      %v7646 = vpack.c.b16 %v7584, %v7582
      %v7647 = vpack.c.b16 %v7585, %v7583
      %v7648 = vpack.c.b16 %v7588, %v7586
      %v7649 = vpack.c.b16 %v7589, %v7587
      %v7650 = vpack.c.b16 %v7592, %v7590
      %v7651 = vpack.c.b16 %v7593, %v7591
      %v7652 = vpack.c.b16 %v7596, %v7594
      %v7653 = vpack.c.b16 %v7597, %v7595
      %v7654 = vpack.c.b16 %v7600, %v7598
      %v7655 = vpack.c.b16 %v7601, %v7599
      %v7656 = vpack.c.b16 %v7604, %v7602
      %v7657 = vpack.c.b16 %v7605, %v7603
      %v7658 = vpack.c.b16 %v7608, %v7606
      %v7659 = vpack.c.b16 %v7609, %v7607
      %v7660 = vpack.c.b16 %v7612, %v7610
      %v7661 = vpack.c.b16 %v7613, %v7611
      %v7662 = vpack.c.b16 %v7616, %v7614
      %v7663 = vpack.c.b16 %v7617, %v7615
      %v7664 = vpack.c.b16 %v7620, %v7618
      %v7665 = vpack.c.b16 %v7621, %v7619
      %v7666 = vpack.c.b16 %v7624, %v7622
      %v7667 = vpack.c.b16 %v7625, %v7623
      %v7668 = vpack.c.b16 %v7628, %v7626
      %v7669 = vpack.c.b16 %v7629, %v7627
      %v7670 = vpack.c.b16 %v7632, %v7630
      %v7671 = vpack.c.b16 %v7633, %v7631
      %v7672 = vpack.c.b16 %v7636, %v7634
      %v7673 = vpack.c.b16 %v7637, %v7635
      %v7674 = vpack.c.b16 %v7640, %v7638
      %v7675 = vpack.c.b16 %v7641, %v7639
      %v7676 = vpack.c.b16 %v7644, %v7642
      %v7677 = vpack.c.b16 %v7645, %v7643
      %7710 = vmatprep.subr.bf16.mxu0 %v7647
      %7711 = vmatpush1.bf16.msra.mxu0 %v7646
      %7712 = vmatprep.subr.bf16.mxu0 %v7649
      %7713 = vmatpush1.bf16.msra.mxu0 %v7648
      %7714 = vmatprep.subr.bf16.mxu0 %v7651
      %7715 = vmatpush1.bf16.msra.mxu0 %v7650
      %7716 = vmatprep.subr.bf16.mxu0 %v7653
      %7717 = vmatpush1.bf16.msra.mxu0 %v7652
      %7718 = vmatprep.subr.bf16.mxu0 %v7655
      %7719 = vmatpush1.bf16.msra.mxu0 %v7654
      %7720 = vmatprep.subr.bf16.mxu0 %v7657
      %7721 = vmatpush1.bf16.msra.mxu0 %v7656
      %7722 = vmatprep.subr.bf16.mxu0 %v7659
      %7723 = vmatpush1.bf16.msra.mxu0 %v7658
      %7724 = vmatprep.subr.bf16.mxu0 %v7661
      %7725 = vmatpush1.bf16.msra.mxu0 %v7660
      %7726 = vmatprep.subr.bf16.mxu0 %v7663
      %7727 = vmatpush1.bf16.msra.mxu0 %v7662
      %7728 = vmatprep.subr.bf16.mxu0 %v7665
      %7729 = vmatpush1.bf16.msra.mxu0 %v7664
      %7730 = vmatprep.subr.bf16.mxu0 %v7667
      %7731 = vmatpush1.bf16.msra.mxu0 %v7666
      %7732 = vmatprep.subr.bf16.mxu0 %v7669
      %7733 = vmatpush1.bf16.msra.mxu0 %v7668
      %7734 = vmatprep.subr.bf16.mxu0 %v7671
      %7735 = vmatpush1.bf16.msra.mxu0 %v7670
      %7736 = vmatprep.subr.bf16.mxu0 %v7673
      %7737 = vmatpush1.bf16.msra.mxu0 %v7672
      %7738 = vmatprep.subr.bf16.mxu0 %v7675
      %7739 = vmatpush1.bf16.msra.mxu0 %v7674
      %7740 = vmatprep.subr.bf16.mxu0 %v7677
      %7741 = vmatpush1.bf16.msra.mxu0 %v7676
      %7742 = vmatprep.mubr.bf16.mxu0 %v7547
      %7743 = vmatmul.mubr.bf16.gmra.mrb[0].mxu0 %v7530
      %v7744 = vpop.f32.mrb[0].mxu0
      %v7745 = vadd.f32 0.0, %v7744
      %v7746 = vpop.f32.mrb[0].mxu0
      %v7747 = vadd.f32 0.0, %v7746
      %v7748 = vpop.f32.mrb[0].mxu0
      %v7749 = vadd.f32 0.0, %v7748
      %v7750 = vpop.f32.mrb[0].mxu0
      %v7751 = vadd.f32 0.0, %v7750
      %7752 = vdwg.mxu0
      %v7753 = vld [vmem:[#allocation5] sm:$0xff]
      %v7754 = vld [vmem:[#allocation5 + $0x8] sm:$0xff]
      %v7755 = vld [vmem:[#allocation5 + $0x10] sm:$0xff]
      %v7756 = vld [vmem:[#allocation5 + $0x18] sm:$0xff]
      %v7757 = vadd.f32 %v7753, %v7745
      %v7758 = vadd.f32 %v7754, %v7747
      %v7759 = vadd.f32 %v7755, %v7749
      %v7760 = vadd.f32 %v7756, %v7751
      %7761 = vst [vmem:[#allocation5] sm:$0xff] %v7757
      %7762 = vst [vmem:[#allocation5 + $0x8] sm:$0xff] %v7758
      %7763 = vst [vmem:[#allocation5 + $0x10] sm:$0xff] %v7759
      %7764 = vst [vmem:[#allocation5 + $0x18] sm:$0xff] %v7760
      %v7765 = vld [vmem:[#allocation3 + $0x20] sm:$0xff]
      %v7766 = vld [vmem:[#allocation3 + $0x28] sm:$0xff]
      %v7767 = vld [vmem:[#allocation3 + $0x30] sm:$0xff]
      %v7768 = vld [vmem:[#allocation3 + $0x38] sm:$0xff]
      %s7769 = scalar_lea.vmem %s5, 4096
      %v7770 = vld [vmem:[%s7769] sm:$0xff]
      %v7771 = vld [vmem:[%s7769 + $0x8] sm:$0xff]
      %v7772 = vld [vmem:[%s7769 + $0x10] sm:$0xff]
      %v7773 = vld [vmem:[%s7769 + $0x18] sm:$0xff]
      %v7774 = vld [vmem:[%s7769 + $0x20] sm:$0xff]
      %v7775 = vld [vmem:[%s7769 + $0x28] sm:$0xff]
      %v7776 = vld [vmem:[%s7769 + $0x30] sm:$0xff]
      %v7777 = vld [vmem:[%s7769 + $0x38] sm:$0xff]
      %v7778 = vld [vmem:[%s7769 + $0x40] sm:$0xff]
      %v7779 = vld [vmem:[%s7769 + $0x48] sm:$0xff]
      %v7780 = vld [vmem:[%s7769 + $0x50] sm:$0xff]
      %v7781 = vld [vmem:[%s7769 + $0x58] sm:$0xff]
      %v7782 = vld [vmem:[%s7769 + $0x60] sm:$0xff]
      %v7783 = vld [vmem:[%s7769 + $0x68] sm:$0xff]
      %v7784 = vld [vmem:[%s7769 + $0x70] sm:$0xff]
      %v7785 = vld [vmem:[%s7769 + $0x78] sm:$0xff]
      %v7786 = vld [vmem:[%s7769 + $0x80] sm:$0xff]
      %v7787 = vld [vmem:[%s7769 + $0x88] sm:$0xff]
      %v7788 = vld [vmem:[%s7769 + $0x90] sm:$0xff]
      %v7789 = vld [vmem:[%s7769 + $0x98] sm:$0xff]
      %v7790 = vld [vmem:[%s7769 + $0xa0] sm:$0xff]
      %v7791 = vld [vmem:[%s7769 + $0xa8] sm:$0xff]
      %v7792 = vld [vmem:[%s7769 + $0xb0] sm:$0xff]
      %v7793 = vld [vmem:[%s7769 + $0xb8] sm:$0xff]
      %v7794 = vld [vmem:[%s7769 + $0xc0] sm:$0xff]
      %v7795 = vld [vmem:[%s7769 + $0xc8] sm:$0xff]
      %v7796 = vld [vmem:[%s7769 + $0xd0] sm:$0xff]
      %v7797 = vld [vmem:[%s7769 + $0xd8] sm:$0xff]
      %v7798 = vld [vmem:[%s7769 + $0xe0] sm:$0xff]
      %v7799 = vld [vmem:[%s7769 + $0xe8] sm:$0xff]
      %v7800 = vld [vmem:[%s7769 + $0xf0] sm:$0xff]
      %v7801 = vld [vmem:[%s7769 + $0xf8] sm:$0xff]
      %v7802 = vpack.c.bf16 %v7767, %v7765
      %v7803 = vpack.c.bf16 %v7768, %v7766
      %v7836 = vunpack.c.l.b16 %v7770
      %v7837 = vunpack.c.h.b16 %v7770
      %v7838 = vunpack.c.l.b16 %v7771
      %v7839 = vunpack.c.h.b16 %v7771
      %v7840 = vunpack.c.l.b16 %v7772
      %v7841 = vunpack.c.h.b16 %v7772
      %v7842 = vunpack.c.l.b16 %v7773
      %v7843 = vunpack.c.h.b16 %v7773
      %v7844 = vunpack.c.l.b16 %v7774
      %v7845 = vunpack.c.h.b16 %v7774
      %v7846 = vunpack.c.l.b16 %v7775
      %v7847 = vunpack.c.h.b16 %v7775
      %v7848 = vunpack.c.l.b16 %v7776
      %v7849 = vunpack.c.h.b16 %v7776
      %v7850 = vunpack.c.l.b16 %v7777
      %v7851 = vunpack.c.h.b16 %v7777
      %v7852 = vunpack.c.l.b16 %v7778
      %v7853 = vunpack.c.h.b16 %v7778
      %v7854 = vunpack.c.l.b16 %v7779
      %v7855 = vunpack.c.h.b16 %v7779
      %v7856 = vunpack.c.l.b16 %v7780
      %v7857 = vunpack.c.h.b16 %v7780
      %v7858 = vunpack.c.l.b16 %v7781
      %v7859 = vunpack.c.h.b16 %v7781
      %v7860 = vunpack.c.l.b16 %v7782
      %v7861 = vunpack.c.h.b16 %v7782
      %v7862 = vunpack.c.l.b16 %v7783
      %v7863 = vunpack.c.h.b16 %v7783
      %v7864 = vunpack.c.l.b16 %v7784
      %v7865 = vunpack.c.h.b16 %v7784
      %v7866 = vunpack.c.l.b16 %v7785
      %v7867 = vunpack.c.h.b16 %v7785
      %v7868 = vunpack.c.l.b16 %v7786
      %v7869 = vunpack.c.h.b16 %v7786
      %v7870 = vunpack.c.l.b16 %v7787
      %v7871 = vunpack.c.h.b16 %v7787
      %v7872 = vunpack.c.l.b16 %v7788
      %v7873 = vunpack.c.h.b16 %v7788
      %v7874 = vunpack.c.l.b16 %v7789
      %v7875 = vunpack.c.h.b16 %v7789
      %v7876 = vunpack.c.l.b16 %v7790
      %v7877 = vunpack.c.h.b16 %v7790
      %v7878 = vunpack.c.l.b16 %v7791
      %v7879 = vunpack.c.h.b16 %v7791
      %v7880 = vunpack.c.l.b16 %v7792
      %v7881 = vunpack.c.h.b16 %v7792
      %v7882 = vunpack.c.l.b16 %v7793
      %v7883 = vunpack.c.h.b16 %v7793
      %v7884 = vunpack.c.l.b16 %v7794
      %v7885 = vunpack.c.h.b16 %v7794
      %v7886 = vunpack.c.l.b16 %v7795
      %v7887 = vunpack.c.h.b16 %v7795
      %v7888 = vunpack.c.l.b16 %v7796
      %v7889 = vunpack.c.h.b16 %v7796
      %v7890 = vunpack.c.l.b16 %v7797
      %v7891 = vunpack.c.h.b16 %v7797
      %v7892 = vunpack.c.l.b16 %v7798
      %v7893 = vunpack.c.h.b16 %v7798
      %v7894 = vunpack.c.l.b16 %v7799
      %v7895 = vunpack.c.h.b16 %v7799
      %v7896 = vunpack.c.l.b16 %v7800
      %v7897 = vunpack.c.h.b16 %v7800
      %v7898 = vunpack.c.l.b16 %v7801
      %v7899 = vunpack.c.h.b16 %v7801
      %v7900 = vpack.c.b16 %v7838, %v7836
      %v7901 = vpack.c.b16 %v7839, %v7837
      %v7902 = vpack.c.b16 %v7842, %v7840
      %v7903 = vpack.c.b16 %v7843, %v7841
      %v7904 = vpack.c.b16 %v7846, %v7844
      %v7905 = vpack.c.b16 %v7847, %v7845
      %v7906 = vpack.c.b16 %v7850, %v7848
      %v7907 = vpack.c.b16 %v7851, %v7849
      %v7908 = vpack.c.b16 %v7854, %v7852
      %v7909 = vpack.c.b16 %v7855, %v7853
      %v7910 = vpack.c.b16 %v7858, %v7856
      %v7911 = vpack.c.b16 %v7859, %v7857
      %v7912 = vpack.c.b16 %v7862, %v7860
      %v7913 = vpack.c.b16 %v7863, %v7861
      %v7914 = vpack.c.b16 %v7866, %v7864
      %v7915 = vpack.c.b16 %v7867, %v7865
      %v7916 = vpack.c.b16 %v7870, %v7868
      %v7917 = vpack.c.b16 %v7871, %v7869
      %v7918 = vpack.c.b16 %v7874, %v7872
      %v7919 = vpack.c.b16 %v7875, %v7873
      %v7920 = vpack.c.b16 %v7878, %v7876
      %v7921 = vpack.c.b16 %v7879, %v7877
      %v7922 = vpack.c.b16 %v7882, %v7880
      %v7923 = vpack.c.b16 %v7883, %v7881
      %v7924 = vpack.c.b16 %v7886, %v7884
      %v7925 = vpack.c.b16 %v7887, %v7885
      %v7926 = vpack.c.b16 %v7890, %v7888
      %v7927 = vpack.c.b16 %v7891, %v7889
      %v7928 = vpack.c.b16 %v7894, %v7892
      %v7929 = vpack.c.b16 %v7895, %v7893
      %v7930 = vpack.c.b16 %v7898, %v7896
      %v7931 = vpack.c.b16 %v7899, %v7897
      %7964 = vmatprep.subr.bf16.mxu0 %v7901
      %7965 = vmatpush1.bf16.msra.mxu0 %v7900
      %7966 = vmatprep.subr.bf16.mxu0 %v7903
      %7967 = vmatpush1.bf16.msra.mxu0 %v7902
      %7968 = vmatprep.subr.bf16.mxu0 %v7905
      %7969 = vmatpush1.bf16.msra.mxu0 %v7904
      %7970 = vmatprep.subr.bf16.mxu0 %v7907
      %7971 = vmatpush1.bf16.msra.mxu0 %v7906
      %7972 = vmatprep.subr.bf16.mxu0 %v7909
      %7973 = vmatpush1.bf16.msra.mxu0 %v7908
      %7974 = vmatprep.subr.bf16.mxu0 %v7911
      %7975 = vmatpush1.bf16.msra.mxu0 %v7910
      %7976 = vmatprep.subr.bf16.mxu0 %v7913
      %7977 = vmatpush1.bf16.msra.mxu0 %v7912
      %7978 = vmatprep.subr.bf16.mxu0 %v7915
      %7979 = vmatpush1.bf16.msra.mxu0 %v7914
      %7980 = vmatprep.subr.bf16.mxu0 %v7917
      %7981 = vmatpush1.bf16.msra.mxu0 %v7916
      %7982 = vmatprep.subr.bf16.mxu0 %v7919
      %7983 = vmatpush1.bf16.msra.mxu0 %v7918
      %7984 = vmatprep.subr.bf16.mxu0 %v7921
      %7985 = vmatpush1.bf16.msra.mxu0 %v7920
      %7986 = vmatprep.subr.bf16.mxu0 %v7923
      %7987 = vmatpush1.bf16.msra.mxu0 %v7922
      %7988 = vmatprep.subr.bf16.mxu0 %v7925
      %7989 = vmatpush1.bf16.msra.mxu0 %v7924
      %7990 = vmatprep.subr.bf16.mxu0 %v7927
      %7991 = vmatpush1.bf16.msra.mxu0 %v7926
      %7992 = vmatprep.subr.bf16.mxu0 %v7929
      %7993 = vmatpush1.bf16.msra.mxu0 %v7928
      %7994 = vmatprep.subr.bf16.mxu0 %v7931
      %7995 = vmatpush1.bf16.msra.mxu0 %v7930
      %7996 = vmatprep.mubr.bf16.mxu0 %v7803
      %7997 = vmatmul.mubr.bf16.gmra.mrb[0].mxu0 %v7802
      %v7998 = vpop.f32.mrb[0].mxu0
      %v7999 = vadd.f32 0.0, %v7998
      %v8000 = vpop.f32.mrb[0].mxu0
      %v8001 = vadd.f32 0.0, %v8000
      %v8002 = vpop.f32.mrb[0].mxu0
      %v8003 = vadd.f32 0.0, %v8002
      %v8004 = vpop.f32.mrb[0].mxu0
      %v8005 = vadd.f32 0.0, %v8004
      %8006 = vdwg.mxu0
      %v8007 = vld [vmem:[#allocation5] sm:$0xff]
      %v8008 = vld [vmem:[#allocation5 + $0x8] sm:$0xff]
      %v8009 = vld [vmem:[#allocation5 + $0x10] sm:$0xff]
      %v8010 = vld [vmem:[#allocation5 + $0x18] sm:$0xff]
      %v8011 = vadd.f32 %v8007, %v7999
      %v8012 = vadd.f32 %v8008, %v8001
      %v8013 = vadd.f32 %v8009, %v8003
      %v8014 = vadd.f32 %v8010, %v8005
      %8015 = vst [vmem:[#allocation5] sm:$0xff] %v8011
      %8016 = vst [vmem:[#allocation5 + $0x8] sm:$0xff] %v8012
      %8017 = vst [vmem:[#allocation5 + $0x10] sm:$0xff] %v8013
      %8018 = vst [vmem:[#allocation5 + $0x18] sm:$0xff] %v8014
      %v8019 = vld [vmem:[#allocation5] sm:$0xff]
      %v8020 = vld [vmem:[#allocation5 + $0x8] sm:$0xff]
      %v8021 = vld [vmem:[#allocation5 + $0x10] sm:$0xff]
      %v8022 = vld [vmem:[#allocation5 + $0x18] sm:$0xff]
      %v8023 = vld [vmem:[%s6] sm:$0x3]
      %v8025 = vlaneseq
      %v8026 = vshrl.u32 %v8025, 7
      %v8027 = vsub.s32 0, %v8026
      %v8028 = vrot.slane %v8023, %v8027
      %v8029 = vlaneseq
      %v8030 = vshrl.u32 %v8029, 7
      %v8031 = vsub.s32 1, %v8030
      %v8032 = vrot.slane %v8023, %v8031
      %v8035 = vadd.f32 %v8019, %v8028
      %v8036 = vadd.f32 %v8020, %v8032
      %v8037 = vadd.f32 %v8021, %v8028
      %v8038 = vadd.f32 %v8022, %v8032
      %v8039 = vmax.f32 %v8035, 0.0
      %v8040 = vmax.f32 %v8036, 0.0
      %v8041 = vmax.f32 %v8037, 0.0
      %v8042 = vmax.f32 %v8038, 0.0
      %v8043 = vld [vmem:[%s318] sm:$0xff]
      %v8044 = vld [vmem:[%s318 + $0x8] sm:$0xff]
      %v8045 = vld [vmem:[%s318 + $0x10] sm:$0xff]
      %v8046 = vld [vmem:[%s318 + $0x18] sm:$0xff]
      %v8047 = vadd.f32 %v8043, %v8039
      %v8048 = vadd.f32 %v8044, %v8040
      %v8049 = vadd.f32 %v8045, %v8041
      %v8050 = vadd.f32 %v8046, %v8042
      %8051 = vst [vmem:[%s318] sm:$0xff] %v8047
      %8052 = vst [vmem:[%s318 + $0x8] sm:$0xff] %v8048
      %8053 = vst [vmem:[%s318 + $0x10] sm:$0xff] %v8049
      %8054 = vst [vmem:[%s318 + $0x18] sm:$0xff] %v8050
      %p8055 = scmp.lt.s32.totalorder %s20, 1
      %s8056 = scalar_select %p8055, %s20, 1
      %s8057 = smul.addr %s8056, 4
      %s8058 = smul.addr %s8057, 8
      %s8059 = scalar_lea.vmem %s7, %s8058
      %p8060 = scmp.lt.s32.totalorder %s20, 1
      %s8061 = scalar_select %p8060, %s20, 1
      %s8062 = smul.addr %s8061, 4
      %s8063 = smul.addr %s8062, 8
      %s8064 = scalar_lea.vmem %s8, %s8063
      // Predicated region
      $region49: #{tcn_gcn_unit_multiscale.1} parent=47 // pred_check
        %p8065 = pneg %p190
      $region50: #{tcn_gcn_unit_multiscale.1} parent=47 // pred_check_branch
        %8067 = sbr.rel (%p8065) target = $region52
      $region51: #{tcn_gcn_unit_multiscale.1} parent=47 // pred_region
        _
      $region52: #{tcn_gcn_unit_multiscale.1} parent=47 // pred_fallthru
        _
      // Predicated region
      $region53: #{tcn_gcn_unit_multiscale.1} parent=47 // pred_check
        %p8068 = pneg %p216
      $region54: #{tcn_gcn_unit_multiscale.1} parent=47 // pred_check_branch
        %8070 = sbr.rel (%p8068) target = $region56
      $region55: #{tcn_gcn_unit_multiscale.1} parent=47 // pred_region
        _
      $region56: #{tcn_gcn_unit_multiscale.1} parent=47 // pred_fallthru
        _
    $region48: #{tcn_gcn_unit_multiscale.1} parent=5 // pred_fallthru
      _
    %p8071 = scmp.le.s32.totalorder 2, %s15
    // Predicated region
    $region57: #{tcn_gcn_unit_multiscale.1} parent=5 // pred_check
      %p8072 = pneg %p8071
    $region58: #{tcn_gcn_unit_multiscale.1} parent=5 // pred_check_branch
      %8074 = sbr.rel (%p8072) target = $region60
    $region59: #{tcn_gcn_unit_multiscale.1} parent=5 // pred_region
      %s8075 = ssub.s32 %s15, 2
      // Predicated region
      $region61: #{tcn_gcn_unit_multiscale.1} parent=59 // pred_check
        %p8076 = pneg %p196
      $region62: #{tcn_gcn_unit_multiscale.1} parent=59 // pred_check_branch
        %8078 = sbr.rel (%p8076) target = $region64
      $region63: #{tcn_gcn_unit_multiscale.1} parent=59 // pred_region
        %p8079 = scmp.lt.s32.totalorder %s21, 1
        %s8080 = scalar_select %p8079, %s21, 1
        %s8081 = smul.addr %s8080, 4
        %s8082 = smul.addr %s8081, 8
        %s8083 = scalar_lea.vmem %s7, %s8082
      $region64: #{tcn_gcn_unit_multiscale.1} parent=59 // pred_fallthru
        _
      // Predicated region
      $region65: #{tcn_gcn_unit_multiscale.1} parent=59 // pred_check
        %p8084 = pneg %p222
      $region66: #{tcn_gcn_unit_multiscale.1} parent=59 // pred_check_branch
        %8086 = sbr.rel (%p8084) target = $region68
      $region67: #{tcn_gcn_unit_multiscale.1} parent=59 // pred_region
        %p8087 = scmp.lt.s32.totalorder %s21, 1
        %s8088 = scalar_select %p8087, %s21, 1
        %s8089 = smul.addr %s8088, 4
        %s8090 = smul.addr %s8089, 8
        %s8091 = scalar_lea.vmem %s8, %s8090
      $region68: #{tcn_gcn_unit_multiscale.1} parent=59 // pred_fallthru
        _
    $region60: #{tcn_gcn_unit_multiscale.1} parent=5 // pred_fallthru
      _
  $region6: #{tcn_gcn_unit_multiscale.1} parent=0 // loop_footer
    %s19 = sadd.s32 1, %s15
  $region7: #{tcn_gcn_unit_multiscale.1} parent=0 // loop_footer_branch
    %14 = sbr.rel target = $region3
  $region8: #{tcn_gcn_unit_multiscale.1} parent=0 // loop_exit
    _

</llo_original>
